<compile_context>
chip_gen: v7x
topology: tpu7x:2x2x1
jax: 0.10.0
libtpu: 0.0.40
codegen_flags: <defaults>
</compile_context>

<pallas_src>
import jax
import jax.numpy as jnp
from jax.experimental import pallas as pl
from jax.experimental.pallas import tpu as pltpu


# ----------------------------------------------------------------------------
# Fused Pallas kernel: H-direction upsample + sigmoid + semantic_inference
# ----------------------------------------------------------------------------
#
# Per grid step (b, ht):
#   cls_ref : (K, Q)      bf16  softmax class probs, no-object column dropped
#   s_ref   : (Hf, Q*W)   bf16  per-image W-upsampled, query-contracted mask
#                               logits; column window [q*W:(q+1)*W] = query q
#   lh_ref  : (Th, Hf)    bf16  rows of the H-direction bilinear matrix
#   out_ref : (K, Th, W)  f32   semseg[b, :, ht*Th:(ht+1)*Th, :]
#   up_ref  : (Th, Q*W)   f32   scratch: upsampled mask logits for this tile
#   piv_ref : (Q, Th, W)  bf16  scratch: sigmoid(up), pivoted for class matmul

def _fused_head_kernel(cls_ref, s_ref, lh_ref, out_ref, up_ref, piv_ref):
    q, th, w = piv_ref.shape

    # 1) H-direction bilinear interpolation for the whole tile: one lane-dense
    #    MXU matmul (N = Q*W), bf16 operands, f32 accumulation.
    up_ref[...] = jnp.dot(lh_ref[...], s_ref[...],
                          preferred_element_type=jnp.float32)

    # 2) sigmoid in f32 (EUP exp + approx reciprocal).  Doing it per query
    #    window is the same elementwise work as one slab and simultaneously
    #    performs the (Th, Q*W) -> (Q, Th, W) pivot in VMEM.
    for qi in range(q):
        u = up_ref[:, qi * w:(qi + 1) * w]                      # (Th, W) f32
        piv_ref[qi] = pl.reciprocal(1.0 + jnp.exp(-u),
                                    approx=True).astype(piv_ref.dtype)

    # 3) class contraction on the MXU (bf16 operands, f32 accumulation):
    #    one (K, Q) @ (Q, W) matmul per output row, lane-dense N = W.
    cls_p = cls_ref[...]
    for t in range(th):
        out_ref[:, t, :] = jnp.dot(
            cls_p, piv_ref[:, t, :], preferred_element_type=jnp.float32
        ).astype(out_ref.dtype)


# ----------------------------------------------------------------------------
# Pallas wrapper
# ----------------------------------------------------------------------------

def _pick_tile_rows(H):
    """Output rows computed per grid step.  Largest small divisor of H; at
    production shapes this should be sized from the per-chip VMEM budget
    (v7x has half the VMEM of v5e/v6e)."""
    for th in (64, 32, 16, 8):
        if H % th == 0:
            return th
    return H


def fused_mask_head(cls_p, S, Lh, *, H, W, Th):
    """Fused H-direction bilinear upsample + sigmoid + semantic_inference."""
    B, K, Q = cls_p.shape
    Hf = S.shape[1]
    assert S.shape[2] == Q * W
    assert H % Th == 0, "Th must divide H (size_divisibility guarantees a divisor)"
    grid = (B, H // Th)

    flops = int(2 * B * (Q * Hf * H * W + K * Q * H * W))
    transcendentals = int(B * Q * H * W)
    bytes_accessed = int(2 * (cls_p.size + S.size + B * Lh.size)
                         + 4 * B * K * H * W)

    return pl.pallas_call(
        _fused_head_kernel,
        out_shape=jax.ShapeDtypeStruct((B, K, H, W), jnp.float32),
        grid=grid,
        in_specs=[
            pl.BlockSpec((None, K, Q), lambda b, t: (b, 0, 0)),       # cls probs
            pl.BlockSpec((None, Hf, Q * W), lambda b, t: (b, 0, 0)),  # per-image slab
            pl.BlockSpec((Th, Hf), lambda b, t: (t, 0)),              # Lh strip
        ],
        out_specs=pl.BlockSpec((None, K, Th, W), lambda b, t: (b, 0, t, 0)),
        scratch_shapes=[
            pltpu.VMEM((Th, Q * W), jnp.float32),    # upsampled logits (tile)
            pltpu.VMEM((Q, Th, W), jnp.bfloat16),    # sigmoid, pivoted layout
        ],
        compiler_params=pltpu.CompilerParams(
            # No state carried across grid steps -> both axes parallel.
            dimension_semantics=("parallel", "parallel"),
            # Plenty for these block sizes; raise on v5e/v6e (128 MiB VMEM)
            # for larger Th at production shapes, keep modest on v7x (64 MiB).
            vmem_limit_bytes=32 * 1024 * 1024,
        ),
        cost_estimate=pl.CostEstimate(
            flops=flops,
            transcendentals=transcendentals,
            bytes_accessed=bytes_accessed,
        ),
    )(cls_p, S, Lh)


# ----------------------------------------------------------------------------
# Glue: interpolation matrix (F.interpolate bilinear, align_corners=False)
# ----------------------------------------------------------------------------

def make_interp_matrix(out_size, in_size):
    i = jnp.arange(out_size, dtype=jnp.float32)
    src = (i + 0.5) * (in_size / out_size) - 0.5
    i0f = jnp.floor(src)
    w = src - i0f
    i0 = jnp.clip(i0f.astype(jnp.int32), 0, in_size - 1)
    i1 = jnp.clip(i0f.astype(jnp.int32) + 1, 0, in_size - 1)
    L = (1.0 - w)[:, None] * jax.nn.one_hot(i0, in_size, dtype=jnp.float32) \
        + w[:, None] * jax.nn.one_hot(i1, in_size, dtype=jnp.float32)
    return L


# ----------------------------------------------------------------------------
# Deterministic synthetic parameters (module's __init__ shapes)
# ----------------------------------------------------------------------------

def init_params(key, c_in=3, hidden=32, num_queries=8, num_classes=7):
    ks = jax.random.split(key, 7)
    return {
        # registered buffers pixel_mean / pixel_std (view(-1,1,1) in torch)
        "pixel_mean": jnp.array([123.675, 116.28, 103.53], jnp.float32),
        "pixel_std": jnp.array([58.395, 57.12, 57.375], jnp.float32),
        # synthetic backbone: 1x1 conv (C_in -> hidden)
        "w_backbone": 0.1 * jax.random.normal(ks[0], (c_in, hidden), jnp.float32),
        "b_backbone": 0.1 * jax.random.normal(ks[1], (1, hidden), jnp.float32),
        # synthetic sem_seg_head
        "query_embed": 0.1 * jax.random.normal(ks[2], (num_queries, hidden), jnp.float32),
        "w_cls": 0.1 * jax.random.normal(ks[3], (hidden, num_classes + 1), jnp.float32),
        "b_cls": 0.1 * jax.random.normal(ks[4], (1, num_classes + 1), jnp.float32),
        "w_mask": 0.1 * jax.random.normal(ks[5], (hidden, hidden), jnp.float32),
        "b_mask": 0.1 * jax.random.normal(ks[6], (1, hidden), jnp.float32),
    }


# ----------------------------------------------------------------------------
# MaskFormer forward (inference branch, semantic_on=True)
# ----------------------------------------------------------------------------

@jax.jit
def maskformer_forward(images, params):
    """images: (B, C, H, W) float32 NCHW, H/W already divisible by
    size_divisibility (ImageList.from_tensors reduces to a plain stack)."""
    B, Cin, H, W = images.shape
    Q = params["query_embed"].shape[0]
    K = params["w_cls"].shape[1] - 1                  # drop the "no-object" class

    # --- synthetic backbone: 4x4 avg-pool + 1x1 conv (plain XLA) -------------
    # (x - mean) / std is linear and commutes with the average pool, so the
    # normalization is applied to the 16x smaller pooled tensor (the previous
    # full-resolution normalize pass was pure HBM traffic).
    s = 4
    Hf, Wf = H // s, W // s
    pooled = images.reshape(B, Cin, Hf, s, Wf, s).mean(axis=(3, 5))
    pooled = (pooled - params["pixel_mean"][None, :, None, None]) \
        * (1.0 / params["pixel_std"])[None, :, None, None]
    featD = jnp.einsum("bchw,cd->bdhw", pooled, params["w_backbone"]) \
        + params["b_backbone"][0][None, :, None, None]            # (B, D, Hf, Wf)

    # --- synthetic sem_seg_head: tiny per-query math (plain XLA) -------------
    pooled_feat = featD.mean(axis=(2, 3))                          # (B, D)
    qfeat = params["query_embed"][None] + pooled_feat[:, None, :]  # (B, Q, D)
    cls_logits = jnp.einsum("bqd,dk->bqk", qfeat, params["w_cls"]) + params["b_cls"]
    cls_prob = jax.nn.softmax(cls_logits, axis=-1)[..., :K]        # (B, Q, K)
    cls_p = jnp.transpose(cls_prob, (0, 2, 1))                     # (B, K, Q)

    # Fold the mask projection into per-query weights/bias so the dense
    # (B, D, H, W) mask-feature map is never materialized or transposed:
    #   pred_masks[q,h,w] = qfeat[q] . (feat[:,h,w] @ w_mask + b_mask)
    #                     = qw[q] . feat[:,h,w] + qb[q]
    qw = jnp.einsum("bqe,de->bqd", qfeat, params["w_mask"])        # (B, Q, D)
    qb = jnp.einsum("bqd,kd->bqk", qfeat, params["b_mask"])        # (B, Q, 1)
    qmask = jnp.einsum("bqd,bdhw->bqhw", qw, featD) + qb[..., None]  # (B,Q,Hf,Wf)

    # --- per-image half of F.interpolate(bilinear, align_corners=False) ------
    # W-direction interpolation and the (Q,Hf)->(Hf,Q) pivot are per-image
    # (1/upscale of the spatial work), done in f32 XLA so the Pallas grid
    # carries no cross-iteration state.
    LwT = make_interp_matrix(W, Wf).T                              # (Wf, W)
    qmw = jnp.einsum("bqhv,vw->bqhw", qmask, LwT)                  # (B, Q, Hf, W)
    S = jnp.transpose(qmw, (0, 2, 1, 3)).reshape(B, Hf, Q * W)     # (B, Hf, Q*W)
    Lh = make_interp_matrix(H, Hf)                                 # (H, Hf)

    Th = _pick_tile_rows(H)

    # --- fused Pallas kernel: H-upsample + sigmoid + semantic_inference ------
    out = fused_mask_head(
        cls_p.astype(jnp.bfloat16),
        S.astype(jnp.bfloat16),
        Lh.astype(jnp.bfloat16),
        H=H, W=W, Th=Th,
    )                                                              # (B, K, H, W)

    # TODO(synk): sem_seg_postprocess (crop/resize to each image's original
    #   height/width) is the identity here since output size == padded size;
    #   panoptic_inference / instance_inference (data-dependent host loops) and
    #   the training branch (SetCriterion + HungarianMatcher,
    #   need_to_update_target's distributed all_reduce) are not translated.
    return out


# ----------------------------------------------------------------------------
# Pure-JAX reference (same math, f32 throughout) for a tolerance check
# ----------------------------------------------------------------------------

def forward_reference(images, params):
    B, C, H, W = images.shape
    x = (images - params["pixel_mean"][None, :, None, None]) \
        / params["pixel_std"][None, :, None, None]
    s = 4
    Hf, Wf = H // s, W // s
    pooled = x.reshape(B, C, Hf, s, Wf, s).mean(axis=(3, 5))
    feat = jnp.einsum("bchw,cd->bdhw", pooled, params["w_backbone"]) \
        + params["b_backbone"][0][None, :, None, None]
    pooled_feat = feat.mean(axis=(2, 3))
    qfeat = params["query_embed"][None] + pooled_feat[:, None, :]
    logits = jnp.einsum("bqd,dk->bqk", qfeat, params["w_cls"]) + params["b_cls"]
    mask_feat = jnp.einsum("bdhw,de->behw", feat, params["w_mask"]) \
        + params["b_mask"][0][None, :, None, None]
    pred_masks = jnp.einsum("bqe,behw->bqhw", qfeat, mask_feat)
    Lh = make_interp_matrix(H, Hf)
    Lw = make_interp_matrix(W, Wf)
    up = jnp.einsum("hH,bqHW,wW->bqhw", Lh, pred_masks, Lw)
    sm = jax.nn.softmax(logits, axis=-1)[..., :-1]
    return jnp.einsum("bqc,bqhw->bchw", sm, jax.nn.sigmoid(up))


# ----------------------------------------------------------------------------

if __name__ == "__main__":
    key = jax.random.PRNGKey(0)
    k_img, k_par = jax.random.split(key)

    # small, divisible by size_divisibility=32; two H tiles per image
    B, Cin, H, W = 2, 3, 128, 128
    num_queries, num_classes, hidden = 8, 7, 32

    images = 255.0 * jax.random.uniform(k_img, (B, Cin, H, W), jnp.float32)
    params = init_params(k_par, c_in=Cin, hidden=hidden,
                         num_queries=num_queries, num_classes=num_classes)

    sem_seg = maskformer_forward(images, params)
    sem_seg = jax.block_until_ready(sem_seg)

    ref = forward_reference(images, params)
    max_err = float(jnp.max(jnp.abs(sem_seg - ref)))

    assert sem_seg.shape == (B, num_classes, H, W)
    assert bool(jnp.all(jnp.isfinite(sem_seg)))
    assert max_err < 2e-2, f"mismatch vs reference: {max_err}"
    print("KERNEL_OK")
</pallas_src>

<mosaic_0001>
module attributes {stable_mosaic.version = 11 : i64} {
  func.func @_fused_head_kernel(%arg0: i32, %arg1: i32, %arg2: memref<1x7x8xbf16, #tpu.memory_space<vmem>>, %arg3: memref<1x32x1024xbf16, #tpu.memory_space<vmem>>, %arg4: memref<64x32xbf16, #tpu.memory_space<vmem>>, %arg5: memref<1x7x64x128xf32, #tpu.memory_space<vmem>>, %arg6: memref<64x1024xf32, #tpu.memory_space<vmem>>, %arg7: memref<8x64x128xbf16, #tpu.memory_space<vmem>>) attributes {dimension_semantics = [#tpu.dimension_semantics<parallel>, #tpu.dimension_semantics<parallel>], iteration_bounds = array<i64: 2, 2>, scalar_prefetch = 0 : i64, scratch_operands = 2 : i64, tpu.core_type = #tpu.core_type<tc>, window_params = [{transform_indices = @transform_0, window_bounds = array<i64: 1, 7, 8>}, {transform_indices = @transform_1, window_bounds = array<i64: 1, 32, 1024>}, {transform_indices = @transform_2, window_bounds = array<i64: 64, 32>}, {transform_indices = @transform_3, window_bounds = array<i64: 1, 7, 64, 128>}]} {
    %c0 = arith.constant 0 : index
    %c0_0 = arith.constant 0 : index
    %0 = vector.load %arg4[%c0, %c0_0] : memref<64x32xbf16, #tpu.memory_space<vmem>>, vector<64x32xbf16>
    %c0_1 = arith.constant 0 : index
    %c0_2 = arith.constant 0 : index
    %c0_3 = arith.constant 0 : index
    %1 = vector.load %arg3[%c0_1, %c0_2, %c0_3] : memref<1x32x1024xbf16, #tpu.memory_space<vmem>>, vector<1x32x1024xbf16>
    %2 = vector.shape_cast %1 : vector<1x32x1024xbf16> to vector<32x1024xbf16>
    %cst = arith.constant dense<0.000000e+00> : vector<64x1024xf32>
    %3 = tpu.matmul %0, %2, %cst {dimension_numbers = #tpu.dot_dimension_numbers<[1], [0], [0], [1], [0, 0, 1, 1], [], []>} : vector<64x32xbf16>, vector<32x1024xbf16>, vector<64x1024xf32> -> vector<64x1024xf32>
    %c0_4 = arith.constant 0 : index
    %c0_5 = arith.constant 0 : index
    %4 = vector.load %arg6[%c0_4, %c0_5] : memref<64x1024xf32, #tpu.memory_space<vmem>>, vector<64x1024xf32>
    tpu.vector_store %arg6[%c0_4, %c0_5], %3 {strides = array<i32>} : memref<64x1024xf32, #tpu.memory_space<vmem>>, vector<64x1024xf32>,
    %c0_6 = arith.constant 0 : index
    %c0_7 = arith.constant 0 : index
    %5 = vector.load %arg6[%c0_6, %c0_7] : memref<64x1024xf32, #tpu.memory_space<vmem>>, vector<64x128xf32>
    %cst_8 = arith.constant 0.000000e+00 : f32
    %6 = vector.broadcast %cst_8 : f32 to vector<64x128xf32>
    %7 = arith.subf %6, %5 : vector<64x128xf32>
    %8 = math.exp %7 : vector<64x128xf32>
    %cst_9 = arith.constant 1.000000e+00 : f32
    %9 = vector.broadcast %cst_9 : f32 to vector<64x128xf32>
    %10 = arith.addf %9, %8 : vector<64x128xf32>
    %11 = tpu.reciprocal %10 {approx = true} : vector<64x128xf32> -> vector<64x128xf32>
    %12 = arith.truncf %11 : vector<64x128xf32> to vector<64x128xbf16>
    %c0_10 = arith.constant 0 : index
    %c0_11 = arith.constant 0 : index
    %c0_12 = arith.constant 0 : index
    %13 = vector.load %arg7[%c0_10, %c0_11, %c0_12] : memref<8x64x128xbf16, #tpu.memory_space<vmem>>, vector<1x64x128xbf16>
    %14 = vector.shape_cast %13 : vector<1x64x128xbf16> to vector<64x128xbf16>
    %15 = vector.shape_cast %12 : vector<64x128xbf16> to vector<1x64x128xbf16>
    tpu.vector_store %arg7[%c0_10, %c0_11, %c0_12], %15 {strides = array<i32>} : memref<8x64x128xbf16, #tpu.memory_space<vmem>>, vector<1x64x128xbf16>,
    %c0_13 = arith.constant 0 : index
    %c128 = arith.constant 128 : index
    %16 = vector.load %arg6[%c0_13, %c128] : memref<64x1024xf32, #tpu.memory_space<vmem>>, vector<64x128xf32>
    %cst_14 = arith.constant 0.000000e+00 : f32
    %17 = vector.broadcast %cst_14 : f32 to vector<64x128xf32>
    %18 = arith.subf %17, %16 : vector<64x128xf32>
    %19 = math.exp %18 : vector<64x128xf32>
    %cst_15 = arith.constant 1.000000e+00 : f32
    %20 = vector.broadcast %cst_15 : f32 to vector<64x128xf32>
    %21 = arith.addf %20, %19 : vector<64x128xf32>
    %22 = tpu.reciprocal %21 {approx = true} : vector<64x128xf32> -> vector<64x128xf32>
    %23 = arith.truncf %22 : vector<64x128xf32> to vector<64x128xbf16>
    %c1 = arith.constant 1 : index
    %c0_16 = arith.constant 0 : index
    %c0_17 = arith.constant 0 : index
    %24 = vector.load %arg7[%c1, %c0_16, %c0_17] : memref<8x64x128xbf16, #tpu.memory_space<vmem>>, vector<1x64x128xbf16>
    %25 = vector.shape_cast %24 : vector<1x64x128xbf16> to vector<64x128xbf16>
    %26 = vector.shape_cast %23 : vector<64x128xbf16> to vector<1x64x128xbf16>
    tpu.vector_store %arg7[%c1, %c0_16, %c0_17], %26 {strides = array<i32>} : memref<8x64x128xbf16, #tpu.memory_space<vmem>>, vector<1x64x128xbf16>,
    %c0_18 = arith.constant 0 : index
    %c256 = arith.constant 256 : index
    %27 = vector.load %arg6[%c0_18, %c256] : memref<64x1024xf32, #tpu.memory_space<vmem>>, vector<64x128xf32>
    %cst_19 = arith.constant 0.000000e+00 : f32
    %28 = vector.broadcast %cst_19 : f32 to vector<64x128xf32>
    %29 = arith.subf %28, %27 : vector<64x128xf32>
    %30 = math.exp %29 : vector<64x128xf32>
    %cst_20 = arith.constant 1.000000e+00 : f32
    %31 = vector.broadcast %cst_20 : f32 to vector<64x128xf32>
    %32 = arith.addf %31, %30 : vector<64x128xf32>
    %33 = tpu.reciprocal %32 {approx = true} : vector<64x128xf32> -> vector<64x128xf32>
    %34 = arith.truncf %33 : vector<64x128xf32> to vector<64x128xbf16>
    %c2 = arith.constant 2 : index
    %c0_21 = arith.constant 0 : index
    %c0_22 = arith.constant 0 : index
    %35 = vector.load %arg7[%c2, %c0_21, %c0_22] : memref<8x64x128xbf16, #tpu.memory_space<vmem>>, vector<1x64x128xbf16>
    %36 = vector.shape_cast %35 : vector<1x64x128xbf16> to vector<64x128xbf16>
    %37 = vector.shape_cast %34 : vector<64x128xbf16> to vector<1x64x128xbf16>
    tpu.vector_store %arg7[%c2, %c0_21, %c0_22], %37 {strides = array<i32>} : memref<8x64x128xbf16, #tpu.memory_space<vmem>>, vector<1x64x128xbf16>,
    %c0_23 = arith.constant 0 : index
    %c384 = arith.constant 384 : index
    %38 = vector.load %arg6[%c0_23, %c384] : memref<64x1024xf32, #tpu.memory_space<vmem>>, vector<64x128xf32>
    %cst_24 = arith.constant 0.000000e+00 : f32
    %39 = vector.broadcast %cst_24 : f32 to vector<64x128xf32>
    %40 = arith.subf %39, %38 : vector<64x128xf32>
    %41 = math.exp %40 : vector<64x128xf32>
    %cst_25 = arith.constant 1.000000e+00 : f32
    %42 = vector.broadcast %cst_25 : f32 to vector<64x128xf32>
    %43 = arith.addf %42, %41 : vector<64x128xf32>
    %44 = tpu.reciprocal %43 {approx = true} : vector<64x128xf32> -> vector<64x128xf32>
    %45 = arith.truncf %44 : vector<64x128xf32> to vector<64x128xbf16>
    %c3 = arith.constant 3 : index
    %c0_26 = arith.constant 0 : index
    %c0_27 = arith.constant 0 : index
    %46 = vector.load %arg7[%c3, %c0_26, %c0_27] : memref<8x64x128xbf16, #tpu.memory_space<vmem>>, vector<1x64x128xbf16>
    %47 = vector.shape_cast %46 : vector<1x64x128xbf16> to vector<64x128xbf16>
    %48 = vector.shape_cast %45 : vector<64x128xbf16> to vector<1x64x128xbf16>
    tpu.vector_store %arg7[%c3, %c0_26, %c0_27], %48 {strides = array<i32>} : memref<8x64x128xbf16, #tpu.memory_space<vmem>>, vector<1x64x128xbf16>,
    %c0_28 = arith.constant 0 : index
    %c512 = arith.constant 512 : index
    %49 = vector.load %arg6[%c0_28, %c512] : memref<64x1024xf32, #tpu.memory_space<vmem>>, vector<64x128xf32>
    %cst_29 = arith.constant 0.000000e+00 : f32
    %50 = vector.broadcast %cst_29 : f32 to vector<64x128xf32>
    %51 = arith.subf %50, %49 : vector<64x128xf32>
    %52 = math.exp %51 : vector<64x128xf32>
    %cst_30 = arith.constant 1.000000e+00 : f32
    %53 = vector.broadcast %cst_30 : f32 to vector<64x128xf32>
    %54 = arith.addf %53, %52 : vector<64x128xf32>
    %55 = tpu.reciprocal %54 {approx = true} : vector<64x128xf32> -> vector<64x128xf32>
    %56 = arith.truncf %55 : vector<64x128xf32> to vector<64x128xbf16>
    %c4 = arith.constant 4 : index
    %c0_31 = arith.constant 0 : index
    %c0_32 = arith.constant 0 : index
    %57 = vector.load %arg7[%c4, %c0_31, %c0_32] : memref<8x64x128xbf16, #tpu.memory_space<vmem>>, vector<1x64x128xbf16>
    %58 = vector.shape_cast %57 : vector<1x64x128xbf16> to vector<64x128xbf16>
    %59 = vector.shape_cast %56 : vector<64x128xbf16> to vector<1x64x128xbf16>
    tpu.vector_store %arg7[%c4, %c0_31, %c0_32], %59 {strides = array<i32>} : memref<8x64x128xbf16, #tpu.memory_space<vmem>>, vector<1x64x128xbf16>,
    %c0_33 = arith.constant 0 : index
    %c640 = arith.constant 640 : index
    %60 = vector.load %arg6[%c0_33, %c640] : memref<64x1024xf32, #tpu.memory_space<vmem>>, vector<64x128xf32>
    %cst_34 = arith.constant 0.000000e+00 : f32
    %61 = vector.broadcast %cst_34 : f32 to vector<64x128xf32>
    %62 = arith.subf %61, %60 : vector<64x128xf32>
    %63 = math.exp %62 : vector<64x128xf32>
    %cst_35 = arith.constant 1.000000e+00 : f32
    %64 = vector.broadcast %cst_35 : f32 to vector<64x128xf32>
    %65 = arith.addf %64, %63 : vector<64x128xf32>
    %66 = tpu.reciprocal %65 {approx = true} : vector<64x128xf32> -> vector<64x128xf32>
    %67 = arith.truncf %66 : vector<64x128xf32> to vector<64x128xbf16>
    %c5 = arith.constant 5 : index
    %c0_36 = arith.constant 0 : index
    %c0_37 = arith.constant 0 : index
    %68 = vector.load %arg7[%c5, %c0_36, %c0_37] : memref<8x64x128xbf16, #tpu.memory_space<vmem>>, vector<1x64x128xbf16>
    %69 = vector.shape_cast %68 : vector<1x64x128xbf16> to vector<64x128xbf16>
    %70 = vector.shape_cast %67 : vector<64x128xbf16> to vector<1x64x128xbf16>
    tpu.vector_store %arg7[%c5, %c0_36, %c0_37], %70 {strides = array<i32>} : memref<8x64x128xbf16, #tpu.memory_space<vmem>>, vector<1x64x128xbf16>,
    %c0_38 = arith.constant 0 : index
    %c768 = arith.constant 768 : index
    %71 = vector.load %arg6[%c0_38, %c768] : memref<64x1024xf32, #tpu.memory_space<vmem>>, vector<64x128xf32>
    %cst_39 = arith.constant 0.000000e+00 : f32
    %72 = vector.broadcast %cst_39 : f32 to vector<64x128xf32>
    %73 = arith.subf %72, %71 : vector<64x128xf32>
    %74 = math.exp %73 : vector<64x128xf32>
    %cst_40 = arith.constant 1.000000e+00 : f32
    %75 = vector.broadcast %cst_40 : f32 to vector<64x128xf32>
    %76 = arith.addf %75, %74 : vector<64x128xf32>
    %77 = tpu.reciprocal %76 {approx = true} : vector<64x128xf32> -> vector<64x128xf32>
    %78 = arith.truncf %77 : vector<64x128xf32> to vector<64x128xbf16>
    %c6 = arith.constant 6 : index
    %c0_41 = arith.constant 0 : index
    %c0_42 = arith.constant 0 : index
    %79 = vector.load %arg7[%c6, %c0_41, %c0_42] : memref<8x64x128xbf16, #tpu.memory_space<vmem>>, vector<1x64x128xbf16>
    %80 = vector.shape_cast %79 : vector<1x64x128xbf16> to vector<64x128xbf16>
    %81 = vector.shape_cast %78 : vector<64x128xbf16> to vector<1x64x128xbf16>
    tpu.vector_store %arg7[%c6, %c0_41, %c0_42], %81 {strides = array<i32>} : memref<8x64x128xbf16, #tpu.memory_space<vmem>>, vector<1x64x128xbf16>,
    %c0_43 = arith.constant 0 : index
    %c896 = arith.constant 896 : index
    %82 = vector.load %arg6[%c0_43, %c896] : memref<64x1024xf32, #tpu.memory_space<vmem>>, vector<64x128xf32>
    %cst_44 = arith.constant 0.000000e+00 : f32
    %83 = vector.broadcast %cst_44 : f32 to vector<64x128xf32>
    %84 = arith.subf %83, %82 : vector<64x128xf32>
    %85 = math.exp %84 : vector<64x128xf32>
    %cst_45 = arith.constant 1.000000e+00 : f32
    %86 = vector.broadcast %cst_45 : f32 to vector<64x128xf32>
    %87 = arith.addf %86, %85 : vector<64x128xf32>
    %88 = tpu.reciprocal %87 {approx = true} : vector<64x128xf32> -> vector<64x128xf32>
    %89 = arith.truncf %88 : vector<64x128xf32> to vector<64x128xbf16>
    %c7 = arith.constant 7 : index
    %c0_46 = arith.constant 0 : index
    %c0_47 = arith.constant 0 : index
    %90 = vector.load %arg7[%c7, %c0_46, %c0_47] : memref<8x64x128xbf16, #tpu.memory_space<vmem>>, vector<1x64x128xbf16>
    %91 = vector.shape_cast %90 : vector<1x64x128xbf16> to vector<64x128xbf16>
    %92 = vector.shape_cast %89 : vector<64x128xbf16> to vector<1x64x128xbf16>
    tpu.vector_store %arg7[%c7, %c0_46, %c0_47], %92 {strides = array<i32>} : memref<8x64x128xbf16, #tpu.memory_space<vmem>>, vector<1x64x128xbf16>,
    %c0_48 = arith.constant 0 : index
    %c0_49 = arith.constant 0 : index
    %c0_50 = arith.constant 0 : index
    %93 = vector.load %arg2[%c0_48, %c0_49, %c0_50] : memref<1x7x8xbf16, #tpu.memory_space<vmem>>, vector<1x7x8xbf16>
    %94 = vector.shape_cast %93 : vector<1x7x8xbf16> to vector<7x8xbf16>
    %c0_51 = arith.constant 0 : index
    %c0_52 = arith.constant 0 : index
    %c0_53 = arith.constant 0 : index
    %95 = vector.load %arg7[%c0_51, %c0_52, %c0_53] : memref<8x64x128xbf16, #tpu.memory_space<vmem>>, vector<8x1x128xbf16>
    %96 = vector.shape_cast %95 : vector<8x1x128xbf16> to vector<8x128xbf16>
    %cst_54 = arith.constant dense<0.000000e+00> : vector<7x128xf32>
    %97 = tpu.matmul %94, %96, %cst_54 {dimension_numbers = #tpu.dot_dimension_numbers<[1], [0], [0], [1], [0, 0, 1, 1], [], []>} : vector<7x8xbf16>, vector<8x128xbf16>, vector<7x128xf32> -> vector<7x128xf32>
    %c0_55 = arith.constant 0 : index
    %c0_56 = arith.constant 0 : index
    %c0_57 = arith.constant 0 : index
    %c0_58 = arith.constant 0 : index
    %98 = vector.load %arg5[%c0_55, %c0_56, %c0_57, %c0_58] : memref<1x7x64x128xf32, #tpu.memory_space<vmem>>, vector<1x7x1x128xf32>
    %99 = vector.shape_cast %98 : vector<1x7x1x128xf32> to vector<7x128xf32>
    %100 = vector.shape_cast %97 : vector<7x128xf32> to vector<1x7x1x128xf32>
    tpu.vector_store %arg5[%c0_55, %c0_56, %c0_57, %c0_58], %100 {strides = array<i32>} : memref<1x7x64x128xf32, #tpu.memory_space<vmem>>, vector<1x7x1x128xf32>,
    %c0_59 = arith.constant 0 : index
    %c1_60 = arith.constant 1 : index
    %c0_61 = arith.constant 0 : index
    %101 = vector.load %arg7[%c0_59, %c1_60, %c0_61] : memref<8x64x128xbf16, #tpu.memory_space<vmem>>, vector<8x1x128xbf16>
    %102 = vector.shape_cast %101 : vector<8x1x128xbf16> to vector<8x128xbf16>
    %cst_62 = arith.constant dense<0.000000e+00> : vector<7x128xf32>
    %103 = tpu.matmul %94, %102, %cst_62 {dimension_numbers = #tpu.dot_dimension_numbers<[1], [0], [0], [1], [0, 0, 1, 1], [], []>} : vector<7x8xbf16>, vector<8x128xbf16>, vector<7x128xf32> -> vector<7x128xf32>
    %c0_63 = arith.constant 0 : index
    %c0_64 = arith.constant 0 : index
    %c1_65 = arith.constant 1 : index
    %c0_66 = arith.constant 0 : index
    %104 = vector.load %arg5[%c0_63, %c0_64, %c1_65, %c0_66] : memref<1x7x64x128xf32, #tpu.memory_space<vmem>>, vector<1x7x1x128xf32>
    %105 = vector.shape_cast %104 : vector<1x7x1x128xf32> to vector<7x128xf32>
    %106 = vector.shape_cast %103 : vector<7x128xf32> to vector<1x7x1x128xf32>
    tpu.vector_store %arg5[%c0_63, %c0_64, %c1_65, %c0_66], %106 {strides = array<i32>} : memref<1x7x64x128xf32, #tpu.memory_space<vmem>>, vector<1x7x1x128xf32>,
    %c0_67 = arith.constant 0 : index
    %c2_68 = arith.constant 2 : index
    %c0_69 = arith.constant 0 : index
    %107 = vector.load %arg7[%c0_67, %c2_68, %c0_69] : memref<8x64x128xbf16, #tpu.memory_space<vmem>>, vector<8x1x128xbf16>
    %108 = vector.shape_cast %107 : vector<8x1x128xbf16> to vector<8x128xbf16>
    %cst_70 = arith.constant dense<0.000000e+00> : vector<7x128xf32>
    %109 = tpu.matmul %94, %108, %cst_70 {dimension_numbers = #tpu.dot_dimension_numbers<[1], [0], [0], [1], [0, 0, 1, 1], [], []>} : vector<7x8xbf16>, vector<8x128xbf16>, vector<7x128xf32> -> vector<7x128xf32>
    %c0_71 = arith.constant 0 : index
    %c0_72 = arith.constant 0 : index
    %c2_73 = arith.constant 2 : index
    %c0_74 = arith.constant 0 : index
    %110 = vector.load %arg5[%c0_71, %c0_72, %c2_73, %c0_74] : memref<1x7x64x128xf32, #tpu.memory_space<vmem>>, vector<1x7x1x128xf32>
    %111 = vector.shape_cast %110 : vector<1x7x1x128xf32> to vector<7x128xf32>
    %112 = vector.shape_cast %109 : vector<7x128xf32> to vector<1x7x1x128xf32>
    tpu.vector_store %arg5[%c0_71, %c0_72, %c2_73, %c0_74], %112 {strides = array<i32>} : memref<1x7x64x128xf32, #tpu.memory_space<vmem>>, vector<1x7x1x128xf32>,
    %c0_75 = arith.constant 0 : index
    %c3_76 = arith.constant 3 : index
    %c0_77 = arith.constant 0 : index
    %113 = vector.load %arg7[%c0_75, %c3_76, %c0_77] : memref<8x64x128xbf16, #tpu.memory_space<vmem>>, vector<8x1x128xbf16>
    %114 = vector.shape_cast %113 : vector<8x1x128xbf16> to vector<8x128xbf16>
    %cst_78 = arith.constant dense<0.000000e+00> : vector<7x128xf32>
    %115 = tpu.matmul %94, %114, %cst_78 {dimension_numbers = #tpu.dot_dimension_numbers<[1], [0], [0], [1], [0, 0, 1, 1], [], []>} : vector<7x8xbf16>, vector<8x128xbf16>, vector<7x128xf32> -> vector<7x128xf32>
    %c0_79 = arith.constant 0 : index
    %c0_80 = arith.constant 0 : index
    %c3_81 = arith.constant 3 : index
    %c0_82 = arith.constant 0 : index
    %116 = vector.load %arg5[%c0_79, %c0_80, %c3_81, %c0_82] : memref<1x7x64x128xf32, #tpu.memory_space<vmem>>, vector<1x7x1x128xf32>
    %117 = vector.shape_cast %116 : vector<1x7x1x128xf32> to vector<7x128xf32>
    %118 = vector.shape_cast %115 : vector<7x128xf32> to vector<1x7x1x128xf32>
    tpu.vector_store %arg5[%c0_79, %c0_80, %c3_81, %c0_82], %118 {strides = array<i32>} : memref<1x7x64x128xf32, #tpu.memory_space<vmem>>, vector<1x7x1x128xf32>,
    %c0_83 = arith.constant 0 : index
    %c4_84 = arith.constant 4 : index
    %c0_85 = arith.constant 0 : index
    %119 = vector.load %arg7[%c0_83, %c4_84, %c0_85] : memref<8x64x128xbf16, #tpu.memory_space<vmem>>, vector<8x1x128xbf16>
    %120 = vector.shape_cast %119 : vector<8x1x128xbf16> to vector<8x128xbf16>
    %cst_86 = arith.constant dense<0.000000e+00> : vector<7x128xf32>
    %121 = tpu.matmul %94, %120, %cst_86 {dimension_numbers = #tpu.dot_dimension_numbers<[1], [0], [0], [1], [0, 0, 1, 1], [], []>} : vector<7x8xbf16>, vector<8x128xbf16>, vector<7x128xf32> -> vector<7x128xf32>
    %c0_87 = arith.constant 0 : index
    %c0_88 = arith.constant 0 : index
    %c4_89 = arith.constant 4 : index
    %c0_90 = arith.constant 0 : index
    %122 = vector.load %arg5[%c0_87, %c0_88, %c4_89, %c0_90] : memref<1x7x64x128xf32, #tpu.memory_space<vmem>>, vector<1x7x1x128xf32>
    %123 = vector.shape_cast %122 : vector<1x7x1x128xf32> to vector<7x128xf32>
    %124 = vector.shape_cast %121 : vector<7x128xf32> to vector<1x7x1x128xf32>
    tpu.vector_store %arg5[%c0_87, %c0_88, %c4_89, %c0_90], %124 {strides = array<i32>} : memref<1x7x64x128xf32, #tpu.memory_space<vmem>>, vector<1x7x1x128xf32>,
    %c0_91 = arith.constant 0 : index
    %c5_92 = arith.constant 5 : index
    %c0_93 = arith.constant 0 : index
    %125 = vector.load %arg7[%c0_91, %c5_92, %c0_93] : memref<8x64x128xbf16, #tpu.memory_space<vmem>>, vector<8x1x128xbf16>
    %126 = vector.shape_cast %125 : vector<8x1x128xbf16> to vector<8x128xbf16>
    %cst_94 = arith.constant dense<0.000000e+00> : vector<7x128xf32>
    %127 = tpu.matmul %94, %126, %cst_94 {dimension_numbers = #tpu.dot_dimension_numbers<[1], [0], [0], [1], [0, 0, 1, 1], [], []>} : vector<7x8xbf16>, vector<8x128xbf16>, vector<7x128xf32> -> vector<7x128xf32>
    %c0_95 = arith.constant 0 : index
    %c0_96 = arith.constant 0 : index
    %c5_97 = arith.constant 5 : index
    %c0_98 = arith.constant 0 : index
    %128 = vector.load %arg5[%c0_95, %c0_96, %c5_97, %c0_98] : memref<1x7x64x128xf32, #tpu.memory_space<vmem>>, vector<1x7x1x128xf32>
    %129 = vector.shape_cast %128 : vector<1x7x1x128xf32> to vector<7x128xf32>
    %130 = vector.shape_cast %127 : vector<7x128xf32> to vector<1x7x1x128xf32>
    tpu.vector_store %arg5[%c0_95, %c0_96, %c5_97, %c0_98], %130 {strides = array<i32>} : memref<1x7x64x128xf32, #tpu.memory_space<vmem>>, vector<1x7x1x128xf32>,
    %c0_99 = arith.constant 0 : index
    %c6_100 = arith.constant 6 : index
    %c0_101 = arith.constant 0 : index
    %131 = vector.load %arg7[%c0_99, %c6_100, %c0_101] : memref<8x64x128xbf16, #tpu.memory_space<vmem>>, vector<8x1x128xbf16>
    %132 = vector.shape_cast %131 : vector<8x1x128xbf16> to vector<8x128xbf16>
    %cst_102 = arith.constant dense<0.000000e+00> : vector<7x128xf32>
    %133 = tpu.matmul %94, %132, %cst_102 {dimension_numbers = #tpu.dot_dimension_numbers<[1], [0], [0], [1], [0, 0, 1, 1], [], []>} : vector<7x8xbf16>, vector<8x128xbf16>, vector<7x128xf32> -> vector<7x128xf32>
    %c0_103 = arith.constant 0 : index
    %c0_104 = arith.constant 0 : index
    %c6_105 = arith.constant 6 : index
    %c0_106 = arith.constant 0 : index
    %134 = vector.load %arg5[%c0_103, %c0_104, %c6_105, %c0_106] : memref<1x7x64x128xf32, #tpu.memory_space<vmem>>, vector<1x7x1x128xf32>
    %135 = vector.shape_cast %134 : vector<1x7x1x128xf32> to vector<7x128xf32>
    %136 = vector.shape_cast %133 : vector<7x128xf32> to vector<1x7x1x128xf32>
    tpu.vector_store %arg5[%c0_103, %c0_104, %c6_105, %c0_106], %136 {strides = array<i32>} : memref<1x7x64x128xf32, #tpu.memory_space<vmem>>, vector<1x7x1x128xf32>,
    %c0_107 = arith.constant 0 : index
    %c7_108 = arith.constant 7 : index
    %c0_109 = arith.constant 0 : index
    %137 = vector.load %arg7[%c0_107, %c7_108, %c0_109] : memref<8x64x128xbf16, #tpu.memory_space<vmem>>, vector<8x1x128xbf16>
    %138 = vector.shape_cast %137 : vector<8x1x128xbf16> to vector<8x128xbf16>
    %cst_110 = arith.constant dense<0.000000e+00> : vector<7x128xf32>
    %139 = tpu.matmul %94, %138, %cst_110 {dimension_numbers = #tpu.dot_dimension_numbers<[1], [0], [0], [1], [0, 0, 1, 1], [], []>} : vector<7x8xbf16>, vector<8x128xbf16>, vector<7x128xf32> -> vector<7x128xf32>
    %c0_111 = arith.constant 0 : index
    %c0_112 = arith.constant 0 : index
    %c7_113 = arith.constant 7 : index
    %c0_114 = arith.constant 0 : index
    %140 = vector.load %arg5[%c0_111, %c0_112, %c7_113, %c0_114] : memref<1x7x64x128xf32, #tpu.memory_space<vmem>>, vector<1x7x1x128xf32>
    %141 = vector.shape_cast %140 : vector<1x7x1x128xf32> to vector<7x128xf32>
    %142 = vector.shape_cast %139 : vector<7x128xf32> to vector<1x7x1x128xf32>
    tpu.vector_store %arg5[%c0_111, %c0_112, %c7_113, %c0_114], %142 {strides = array<i32>} : memref<1x7x64x128xf32, #tpu.memory_space<vmem>>, vector<1x7x1x128xf32>,
    %c0_115 = arith.constant 0 : index
    %c8 = arith.constant 8 : index
    %c0_116 = arith.constant 0 : index
    %143 = vector.load %arg7[%c0_115, %c8, %c0_116] : memref<8x64x128xbf16, #tpu.memory_space<vmem>>, vector<8x1x128xbf16>
    %144 = vector.shape_cast %143 : vector<8x1x128xbf16> to vector<8x128xbf16>
    %cst_117 = arith.constant dense<0.000000e+00> : vector<7x128xf32>
    %145 = tpu.matmul %94, %144, %cst_117 {dimension_numbers = #tpu.dot_dimension_numbers<[1], [0], [0], [1], [0, 0, 1, 1], [], []>} : vector<7x8xbf16>, vector<8x128xbf16>, vector<7x128xf32> -> vector<7x128xf32>
    %c0_118 = arith.constant 0 : index
    %c0_119 = arith.constant 0 : index
    %c8_120 = arith.constant 8 : index
    %c0_121 = arith.constant 0 : index
    %146 = vector.load %arg5[%c0_118, %c0_119, %c8_120, %c0_121] : memref<1x7x64x128xf32, #tpu.memory_space<vmem>>, vector<1x7x1x128xf32>
    %147 = vector.shape_cast %146 : vector<1x7x1x128xf32> to vector<7x128xf32>
    %148 = vector.shape_cast %145 : vector<7x128xf32> to vector<1x7x1x128xf32>
    tpu.vector_store %arg5[%c0_118, %c0_119, %c8_120, %c0_121], %148 {strides = array<i32>} : memref<1x7x64x128xf32, #tpu.memory_space<vmem>>, vector<1x7x1x128xf32>,
    %c0_122 = arith.constant 0 : index
    %c9 = arith.constant 9 : index
    %c0_123 = arith.constant 0 : index
    %149 = vector.load %arg7[%c0_122, %c9, %c0_123] : memref<8x64x128xbf16, #tpu.memory_space<vmem>>, vector<8x1x128xbf16>
    %150 = vector.shape_cast %149 : vector<8x1x128xbf16> to vector<8x128xbf16>
    %cst_124 = arith.constant dense<0.000000e+00> : vector<7x128xf32>
    %151 = tpu.matmul %94, %150, %cst_124 {dimension_numbers = #tpu.dot_dimension_numbers<[1], [0], [0], [1], [0, 0, 1, 1], [], []>} : vector<7x8xbf16>, vector<8x128xbf16>, vector<7x128xf32> -> vector<7x128xf32>
    %c0_125 = arith.constant 0 : index
    %c0_126 = arith.constant 0 : index
    %c9_127 = arith.constant 9 : index
    %c0_128 = arith.constant 0 : index
    %152 = vector.load %arg5[%c0_125, %c0_126, %c9_127, %c0_128] : memref<1x7x64x128xf32, #tpu.memory_space<vmem>>, vector<1x7x1x128xf32>
    %153 = vector.shape_cast %152 : vector<1x7x1x128xf32> to vector<7x128xf32>
    %154 = vector.shape_cast %151 : vector<7x128xf32> to vector<1x7x1x128xf32>
    tpu.vector_store %arg5[%c0_125, %c0_126, %c9_127, %c0_128], %154 {strides = array<i32>} : memref<1x7x64x128xf32, #tpu.memory_space<vmem>>, vector<1x7x1x128xf32>,
    %c0_129 = arith.constant 0 : index
    %c10 = arith.constant 10 : index
    %c0_130 = arith.constant 0 : index
    %155 = vector.load %arg7[%c0_129, %c10, %c0_130] : memref<8x64x128xbf16, #tpu.memory_space<vmem>>, vector<8x1x128xbf16>
    %156 = vector.shape_cast %155 : vector<8x1x128xbf16> to vector<8x128xbf16>
    %cst_131 = arith.constant dense<0.000000e+00> : vector<7x128xf32>
    %157 = tpu.matmul %94, %156, %cst_131 {dimension_numbers = #tpu.dot_dimension_numbers<[1], [0], [0], [1], [0, 0, 1, 1], [], []>} : vector<7x8xbf16>, vector<8x128xbf16>, vector<7x128xf32> -> vector<7x128xf32>
    %c0_132 = arith.constant 0 : index
    %c0_133 = arith.constant 0 : index
    %c10_134 = arith.constant 10 : index
    %c0_135 = arith.constant 0 : index
    %158 = vector.load %arg5[%c0_132, %c0_133, %c10_134, %c0_135] : memref<1x7x64x128xf32, #tpu.memory_space<vmem>>, vector<1x7x1x128xf32>
    %159 = vector.shape_cast %158 : vector<1x7x1x128xf32> to vector<7x128xf32>
    %160 = vector.shape_cast %157 : vector<7x128xf32> to vector<1x7x1x128xf32>
    tpu.vector_store %arg5[%c0_132, %c0_133, %c10_134, %c0_135], %160 {strides = array<i32>} : memref<1x7x64x128xf32, #tpu.memory_space<vmem>>, vector<1x7x1x128xf32>,
    %c0_136 = arith.constant 0 : index
    %c11 = arith.constant 11 : index
    %c0_137 = arith.constant 0 : index
    %161 = vector.load %arg7[%c0_136, %c11, %c0_137] : memref<8x64x128xbf16, #tpu.memory_space<vmem>>, vector<8x1x128xbf16>
    %162 = vector.shape_cast %161 : vector<8x1x128xbf16> to vector<8x128xbf16>
    %cst_138 = arith.constant dense<0.000000e+00> : vector<7x128xf32>
    %163 = tpu.matmul %94, %162, %cst_138 {dimension_numbers = #tpu.dot_dimension_numbers<[1], [0], [0], [1], [0, 0, 1, 1], [], []>} : vector<7x8xbf16>, vector<8x128xbf16>, vector<7x128xf32> -> vector<7x128xf32>
    %c0_139 = arith.constant 0 : index
    %c0_140 = arith.constant 0 : index
    %c11_141 = arith.constant 11 : index
    %c0_142 = arith.constant 0 : index
    %164 = vector.load %arg5[%c0_139, %c0_140, %c11_141, %c0_142] : memref<1x7x64x128xf32, #tpu.memory_space<vmem>>, vector<1x7x1x128xf32>
    %165 = vector.shape_cast %164 : vector<1x7x1x128xf32> to vector<7x128xf32>
    %166 = vector.shape_cast %163 : vector<7x128xf32> to vector<1x7x1x128xf32>
    tpu.vector_store %arg5[%c0_139, %c0_140, %c11_141, %c0_142], %166 {strides = array<i32>} : memref<1x7x64x128xf32, #tpu.memory_space<vmem>>, vector<1x7x1x128xf32>,
    %c0_143 = arith.constant 0 : index
    %c12 = arith.constant 12 : index
    %c0_144 = arith.constant 0 : index
    %167 = vector.load %arg7[%c0_143, %c12, %c0_144] : memref<8x64x128xbf16, #tpu.memory_space<vmem>>, vector<8x1x128xbf16>
    %168 = vector.shape_cast %167 : vector<8x1x128xbf16> to vector<8x128xbf16>
    %cst_145 = arith.constant dense<0.000000e+00> : vector<7x128xf32>
    %169 = tpu.matmul %94, %168, %cst_145 {dimension_numbers = #tpu.dot_dimension_numbers<[1], [0], [0], [1], [0, 0, 1, 1], [], []>} : vector<7x8xbf16>, vector<8x128xbf16>, vector<7x128xf32> -> vector<7x128xf32>
    %c0_146 = arith.constant 0 : index
    %c0_147 = arith.constant 0 : index
    %c12_148 = arith.constant 12 : index
    %c0_149 = arith.constant 0 : index
    %170 = vector.load %arg5[%c0_146, %c0_147, %c12_148, %c0_149] : memref<1x7x64x128xf32, #tpu.memory_space<vmem>>, vector<1x7x1x128xf32>
    %171 = vector.shape_cast %170 : vector<1x7x1x128xf32> to vector<7x128xf32>
    %172 = vector.shape_cast %169 : vector<7x128xf32> to vector<1x7x1x128xf32>
    tpu.vector_store %arg5[%c0_146, %c0_147, %c12_148, %c0_149], %172 {strides = array<i32>} : memref<1x7x64x128xf32, #tpu.memory_space<vmem>>, vector<1x7x1x128xf32>,
    %c0_150 = arith.constant 0 : index
    %c13 = arith.constant 13 : index
    %c0_151 = arith.constant 0 : index
    %173 = vector.load %arg7[%c0_150, %c13, %c0_151] : memref<8x64x128xbf16, #tpu.memory_space<vmem>>, vector<8x1x128xbf16>
    %174 = vector.shape_cast %173 : vector<8x1x128xbf16> to vector<8x128xbf16>
    %cst_152 = arith.constant dense<0.000000e+00> : vector<7x128xf32>
    %175 = tpu.matmul %94, %174, %cst_152 {dimension_numbers = #tpu.dot_dimension_numbers<[1], [0], [0], [1], [0, 0, 1, 1], [], []>} : vector<7x8xbf16>, vector<8x128xbf16>, vector<7x128xf32> -> vector<7x128xf32>
    %c0_153 = arith.constant 0 : index
    %c0_154 = arith.constant 0 : index
    %c13_155 = arith.constant 13 : index
    %c0_156 = arith.constant 0 : index
    %176 = vector.load %arg5[%c0_153, %c0_154, %c13_155, %c0_156] : memref<1x7x64x128xf32, #tpu.memory_space<vmem>>, vector<1x7x1x128xf32>
    %177 = vector.shape_cast %176 : vector<1x7x1x128xf32> to vector<7x128xf32>
    %178 = vector.shape_cast %175 : vector<7x128xf32> to vector<1x7x1x128xf32>
    tpu.vector_store %arg5[%c0_153, %c0_154, %c13_155, %c0_156], %178 {strides = array<i32>} : memref<1x7x64x128xf32, #tpu.memory_space<vmem>>, vector<1x7x1x128xf32>,
    %c0_157 = arith.constant 0 : index
    %c14 = arith.constant 14 : index
    %c0_158 = arith.constant 0 : index
    %179 = vector.load %arg7[%c0_157, %c14, %c0_158] : memref<8x64x128xbf16, #tpu.memory_space<vmem>>, vector<8x1x128xbf16>
    %180 = vector.shape_cast %179 : vector<8x1x128xbf16> to vector<8x128xbf16>
    %cst_159 = arith.constant dense<0.000000e+00> : vector<7x128xf32>
    %181 = tpu.matmul %94, %180, %cst_159 {dimension_numbers = #tpu.dot_dimension_numbers<[1], [0], [0], [1], [0, 0, 1, 1], [], []>} : vector<7x8xbf16>, vector<8x128xbf16>, vector<7x128xf32> -> vector<7x128xf32>
    %c0_160 = arith.constant 0 : index
    %c0_161 = arith.constant 0 : index
    %c14_162 = arith.constant 14 : index
    %c0_163 = arith.constant 0 : index
    %182 = vector.load %arg5[%c0_160, %c0_161, %c14_162, %c0_163] : memref<1x7x64x128xf32, #tpu.memory_space<vmem>>, vector<1x7x1x128xf32>
    %183 = vector.shape_cast %182 : vector<1x7x1x128xf32> to vector<7x128xf32>
    %184 = vector.shape_cast %181 : vector<7x128xf32> to vector<1x7x1x128xf32>
    tpu.vector_store %arg5[%c0_160, %c0_161, %c14_162, %c0_163], %184 {strides = array<i32>} : memref<1x7x64x128xf32, #tpu.memory_space<vmem>>, vector<1x7x1x128xf32>,
    %c0_164 = arith.constant 0 : index
    %c15 = arith.constant 15 : index
    %c0_165 = arith.constant 0 : index
    %185 = vector.load %arg7[%c0_164, %c15, %c0_165] : memref<8x64x128xbf16, #tpu.memory_space<vmem>>, vector<8x1x128xbf16>
    %186 = vector.shape_cast %185 : vector<8x1x128xbf16> to vector<8x128xbf16>
    %cst_166 = arith.constant dense<0.000000e+00> : vector<7x128xf32>
    %187 = tpu.matmul %94, %186, %cst_166 {dimension_numbers = #tpu.dot_dimension_numbers<[1], [0], [0], [1], [0, 0, 1, 1], [], []>} : vector<7x8xbf16>, vector<8x128xbf16>, vector<7x128xf32> -> vector<7x128xf32>
    %c0_167 = arith.constant 0 : index
    %c0_168 = arith.constant 0 : index
    %c15_169 = arith.constant 15 : index
    %c0_170 = arith.constant 0 : index
    %188 = vector.load %arg5[%c0_167, %c0_168, %c15_169, %c0_170] : memref<1x7x64x128xf32, #tpu.memory_space<vmem>>, vector<1x7x1x128xf32>
    %189 = vector.shape_cast %188 : vector<1x7x1x128xf32> to vector<7x128xf32>
    %190 = vector.shape_cast %187 : vector<7x128xf32> to vector<1x7x1x128xf32>
    tpu.vector_store %arg5[%c0_167, %c0_168, %c15_169, %c0_170], %190 {strides = array<i32>} : memref<1x7x64x128xf32, #tpu.memory_space<vmem>>, vector<1x7x1x128xf32>,
    %c0_171 = arith.constant 0 : index
    %c16 = arith.constant 16 : index
    %c0_172 = arith.constant 0 : index
    %191 = vector.load %arg7[%c0_171, %c16, %c0_172] : memref<8x64x128xbf16, #tpu.memory_space<vmem>>, vector<8x1x128xbf16>
    %192 = vector.shape_cast %191 : vector<8x1x128xbf16> to vector<8x128xbf16>
    %cst_173 = arith.constant dense<0.000000e+00> : vector<7x128xf32>
    %193 = tpu.matmul %94, %192, %cst_173 {dimension_numbers = #tpu.dot_dimension_numbers<[1], [0], [0], [1], [0, 0, 1, 1], [], []>} : vector<7x8xbf16>, vector<8x128xbf16>, vector<7x128xf32> -> vector<7x128xf32>
    %c0_174 = arith.constant 0 : index
    %c0_175 = arith.constant 0 : index
    %c16_176 = arith.constant 16 : index
    %c0_177 = arith.constant 0 : index
    %194 = vector.load %arg5[%c0_174, %c0_175, %c16_176, %c0_177] : memref<1x7x64x128xf32, #tpu.memory_space<vmem>>, vector<1x7x1x128xf32>
    %195 = vector.shape_cast %194 : vector<1x7x1x128xf32> to vector<7x128xf32>
    %196 = vector.shape_cast %193 : vector<7x128xf32> to vector<1x7x1x128xf32>
    tpu.vector_store %arg5[%c0_174, %c0_175, %c16_176, %c0_177], %196 {strides = array<i32>} : memref<1x7x64x128xf32, #tpu.memory_space<vmem>>, vector<1x7x1x128xf32>,
    %c0_178 = arith.constant 0 : index
    %c17 = arith.constant 17 : index
    %c0_179 = arith.constant 0 : index
    %197 = vector.load %arg7[%c0_178, %c17, %c0_179] : memref<8x64x128xbf16, #tpu.memory_space<vmem>>, vector<8x1x128xbf16>
    %198 = vector.shape_cast %197 : vector<8x1x128xbf16> to vector<8x128xbf16>
    %cst_180 = arith.constant dense<0.000000e+00> : vector<7x128xf32>
    %199 = tpu.matmul %94, %198, %cst_180 {dimension_numbers = #tpu.dot_dimension_numbers<[1], [0], [0], [1], [0, 0, 1, 1], [], []>} : vector<7x8xbf16>, vector<8x128xbf16>, vector<7x128xf32> -> vector<7x128xf32>
    %c0_181 = arith.constant 0 : index
    %c0_182 = arith.constant 0 : index
    %c17_183 = arith.constant 17 : index
    %c0_184 = arith.constant 0 : index
    %200 = vector.load %arg5[%c0_181, %c0_182, %c17_183, %c0_184] : memref<1x7x64x128xf32, #tpu.memory_space<vmem>>, vector<1x7x1x128xf32>
    %201 = vector.shape_cast %200 : vector<1x7x1x128xf32> to vector<7x128xf32>
    %202 = vector.shape_cast %199 : vector<7x128xf32> to vector<1x7x1x128xf32>
    tpu.vector_store %arg5[%c0_181, %c0_182, %c17_183, %c0_184], %202 {strides = array<i32>} : memref<1x7x64x128xf32, #tpu.memory_space<vmem>>, vector<1x7x1x128xf32>,
    %c0_185 = arith.constant 0 : index
    %c18 = arith.constant 18 : index
    %c0_186 = arith.constant 0 : index
    %203 = vector.load %arg7[%c0_185, %c18, %c0_186] : memref<8x64x128xbf16, #tpu.memory_space<vmem>>, vector<8x1x128xbf16>
    %204 = vector.shape_cast %203 : vector<8x1x128xbf16> to vector<8x128xbf16>
    %cst_187 = arith.constant dense<0.000000e+00> : vector<7x128xf32>
    %205 = tpu.matmul %94, %204, %cst_187 {dimension_numbers = #tpu.dot_dimension_numbers<[1], [0], [0], [1], [0, 0, 1, 1], [], []>} : vector<7x8xbf16>, vector<8x128xbf16>, vector<7x128xf32> -> vector<7x128xf32>
    %c0_188 = arith.constant 0 : index
    %c0_189 = arith.constant 0 : index
    %c18_190 = arith.constant 18 : index
    %c0_191 = arith.constant 0 : index
    %206 = vector.load %arg5[%c0_188, %c0_189, %c18_190, %c0_191] : memref<1x7x64x128xf32, #tpu.memory_space<vmem>>, vector<1x7x1x128xf32>
    %207 = vector.shape_cast %206 : vector<1x7x1x128xf32> to vector<7x128xf32>
    %208 = vector.shape_cast %205 : vector<7x128xf32> to vector<1x7x1x128xf32>
    tpu.vector_store %arg5[%c0_188, %c0_189, %c18_190, %c0_191], %208 {strides = array<i32>} : memref<1x7x64x128xf32, #tpu.memory_space<vmem>>, vector<1x7x1x128xf32>,
    %c0_192 = arith.constant 0 : index
    %c19 = arith.constant 19 : index
    %c0_193 = arith.constant 0 : index
    %209 = vector.load %arg7[%c0_192, %c19, %c0_193] : memref<8x64x128xbf16, #tpu.memory_space<vmem>>, vector<8x1x128xbf16>
    %210 = vector.shape_cast %209 : vector<8x1x128xbf16> to vector<8x128xbf16>
    %cst_194 = arith.constant dense<0.000000e+00> : vector<7x128xf32>
    %211 = tpu.matmul %94, %210, %cst_194 {dimension_numbers = #tpu.dot_dimension_numbers<[1], [0], [0], [1], [0, 0, 1, 1], [], []>} : vector<7x8xbf16>, vector<8x128xbf16>, vector<7x128xf32> -> vector<7x128xf32>
    %c0_195 = arith.constant 0 : index
    %c0_196 = arith.constant 0 : index
    %c19_197 = arith.constant 19 : index
    %c0_198 = arith.constant 0 : index
    %212 = vector.load %arg5[%c0_195, %c0_196, %c19_197, %c0_198] : memref<1x7x64x128xf32, #tpu.memory_space<vmem>>, vector<1x7x1x128xf32>
    %213 = vector.shape_cast %212 : vector<1x7x1x128xf32> to vector<7x128xf32>
    %214 = vector.shape_cast %211 : vector<7x128xf32> to vector<1x7x1x128xf32>
    tpu.vector_store %arg5[%c0_195, %c0_196, %c19_197, %c0_198], %214 {strides = array<i32>} : memref<1x7x64x128xf32, #tpu.memory_space<vmem>>, vector<1x7x1x128xf32>,
    %c0_199 = arith.constant 0 : index
    %c20 = arith.constant 20 : index
    %c0_200 = arith.constant 0 : index
    %215 = vector.load %arg7[%c0_199, %c20, %c0_200] : memref<8x64x128xbf16, #tpu.memory_space<vmem>>, vector<8x1x128xbf16>
    %216 = vector.shape_cast %215 : vector<8x1x128xbf16> to vector<8x128xbf16>
    %cst_201 = arith.constant dense<0.000000e+00> : vector<7x128xf32>
    %217 = tpu.matmul %94, %216, %cst_201 {dimension_numbers = #tpu.dot_dimension_numbers<[1], [0], [0], [1], [0, 0, 1, 1], [], []>} : vector<7x8xbf16>, vector<8x128xbf16>, vector<7x128xf32> -> vector<7x128xf32>
    %c0_202 = arith.constant 0 : index
    %c0_203 = arith.constant 0 : index
    %c20_204 = arith.constant 20 : index
    %c0_205 = arith.constant 0 : index
    %218 = vector.load %arg5[%c0_202, %c0_203, %c20_204, %c0_205] : memref<1x7x64x128xf32, #tpu.memory_space<vmem>>, vector<1x7x1x128xf32>
    %219 = vector.shape_cast %218 : vector<1x7x1x128xf32> to vector<7x128xf32>
    %220 = vector.shape_cast %217 : vector<7x128xf32> to vector<1x7x1x128xf32>
    tpu.vector_store %arg5[%c0_202, %c0_203, %c20_204, %c0_205], %220 {strides = array<i32>} : memref<1x7x64x128xf32, #tpu.memory_space<vmem>>, vector<1x7x1x128xf32>,
    %c0_206 = arith.constant 0 : index
    %c21 = arith.constant 21 : index
    %c0_207 = arith.constant 0 : index
    %221 = vector.load %arg7[%c0_206, %c21, %c0_207] : memref<8x64x128xbf16, #tpu.memory_space<vmem>>, vector<8x1x128xbf16>
    %222 = vector.shape_cast %221 : vector<8x1x128xbf16> to vector<8x128xbf16>
    %cst_208 = arith.constant dense<0.000000e+00> : vector<7x128xf32>
    %223 = tpu.matmul %94, %222, %cst_208 {dimension_numbers = #tpu.dot_dimension_numbers<[1], [0], [0], [1], [0, 0, 1, 1], [], []>} : vector<7x8xbf16>, vector<8x128xbf16>, vector<7x128xf32> -> vector<7x128xf32>
    %c0_209 = arith.constant 0 : index
    %c0_210 = arith.constant 0 : index
    %c21_211 = arith.constant 21 : index
    %c0_212 = arith.constant 0 : index
    %224 = vector.load %arg5[%c0_209, %c0_210, %c21_211, %c0_212] : memref<1x7x64x128xf32, #tpu.memory_space<vmem>>, vector<1x7x1x128xf32>
    %225 = vector.shape_cast %224 : vector<1x7x1x128xf32> to vector<7x128xf32>
    %226 = vector.shape_cast %223 : vector<7x128xf32> to vector<1x7x1x128xf32>
    tpu.vector_store %arg5[%c0_209, %c0_210, %c21_211, %c0_212], %226 {strides = array<i32>} : memref<1x7x64x128xf32, #tpu.memory_space<vmem>>, vector<1x7x1x128xf32>,
    %c0_213 = arith.constant 0 : index
    %c22 = arith.constant 22 : index
    %c0_214 = arith.constant 0 : index
    %227 = vector.load %arg7[%c0_213, %c22, %c0_214] : memref<8x64x128xbf16, #tpu.memory_space<vmem>>, vector<8x1x128xbf16>
    %228 = vector.shape_cast %227 : vector<8x1x128xbf16> to vector<8x128xbf16>
    %cst_215 = arith.constant dense<0.000000e+00> : vector<7x128xf32>
    %229 = tpu.matmul %94, %228, %cst_215 {dimension_numbers = #tpu.dot_dimension_numbers<[1], [0], [0], [1], [0, 0, 1, 1], [], []>} : vector<7x8xbf16>, vector<8x128xbf16>, vector<7x128xf32> -> vector<7x128xf32>
    %c0_216 = arith.constant 0 : index
    %c0_217 = arith.constant 0 : index
    %c22_218 = arith.constant 22 : index
    %c0_219 = arith.constant 0 : index
    %230 = vector.load %arg5[%c0_216, %c0_217, %c22_218, %c0_219] : memref<1x7x64x128xf32, #tpu.memory_space<vmem>>, vector<1x7x1x128xf32>
    %231 = vector.shape_cast %230 : vector<1x7x1x128xf32> to vector<7x128xf32>
    %232 = vector.shape_cast %229 : vector<7x128xf32> to vector<1x7x1x128xf32>
    tpu.vector_store %arg5[%c0_216, %c0_217, %c22_218, %c0_219], %232 {strides = array<i32>} : memref<1x7x64x128xf32, #tpu.memory_space<vmem>>, vector<1x7x1x128xf32>,
    %c0_220 = arith.constant 0 : index
    %c23 = arith.constant 23 : index
    %c0_221 = arith.constant 0 : index
    %233 = vector.load %arg7[%c0_220, %c23, %c0_221] : memref<8x64x128xbf16, #tpu.memory_space<vmem>>, vector<8x1x128xbf16>
    %234 = vector.shape_cast %233 : vector<8x1x128xbf16> to vector<8x128xbf16>
    %cst_222 = arith.constant dense<0.000000e+00> : vector<7x128xf32>
    %235 = tpu.matmul %94, %234, %cst_222 {dimension_numbers = #tpu.dot_dimension_numbers<[1], [0], [0], [1], [0, 0, 1, 1], [], []>} : vector<7x8xbf16>, vector<8x128xbf16>, vector<7x128xf32> -> vector<7x128xf32>
    %c0_223 = arith.constant 0 : index
    %c0_224 = arith.constant 0 : index
    %c23_225 = arith.constant 23 : index
    %c0_226 = arith.constant 0 : index
    %236 = vector.load %arg5[%c0_223, %c0_224, %c23_225, %c0_226] : memref<1x7x64x128xf32, #tpu.memory_space<vmem>>, vector<1x7x1x128xf32>
    %237 = vector.shape_cast %236 : vector<1x7x1x128xf32> to vector<7x128xf32>
    %238 = vector.shape_cast %235 : vector<7x128xf32> to vector<1x7x1x128xf32>
    tpu.vector_store %arg5[%c0_223, %c0_224, %c23_225, %c0_226], %238 {strides = array<i32>} : memref<1x7x64x128xf32, #tpu.memory_space<vmem>>, vector<1x7x1x128xf32>,
    %c0_227 = arith.constant 0 : index
    %c24 = arith.constant 24 : index
    %c0_228 = arith.constant 0 : index
    %239 = vector.load %arg7[%c0_227, %c24, %c0_228] : memref<8x64x128xbf16, #tpu.memory_space<vmem>>, vector<8x1x128xbf16>
    %240 = vector.shape_cast %239 : vector<8x1x128xbf16> to vector<8x128xbf16>
    %cst_229 = arith.constant dense<0.000000e+00> : vector<7x128xf32>
    %241 = tpu.matmul %94, %240, %cst_229 {dimension_numbers = #tpu.dot_dimension_numbers<[1], [0], [0], [1], [0, 0, 1, 1], [], []>} : vector<7x8xbf16>, vector<8x128xbf16>, vector<7x128xf32> -> vector<7x128xf32>
    %c0_230 = arith.constant 0 : index
    %c0_231 = arith.constant 0 : index
    %c24_232 = arith.constant 24 : index
    %c0_233 = arith.constant 0 : index
    %242 = vector.load %arg5[%c0_230, %c0_231, %c24_232, %c0_233] : memref<1x7x64x128xf32, #tpu.memory_space<vmem>>, vector<1x7x1x128xf32>
    %243 = vector.shape_cast %242 : vector<1x7x1x128xf32> to vector<7x128xf32>
    %244 = vector.shape_cast %241 : vector<7x128xf32> to vector<1x7x1x128xf32>
    tpu.vector_store %arg5[%c0_230, %c0_231, %c24_232, %c0_233], %244 {strides = array<i32>} : memref<1x7x64x128xf32, #tpu.memory_space<vmem>>, vector<1x7x1x128xf32>,
    %c0_234 = arith.constant 0 : index
    %c25 = arith.constant 25 : index
    %c0_235 = arith.constant 0 : index
    %245 = vector.load %arg7[%c0_234, %c25, %c0_235] : memref<8x64x128xbf16, #tpu.memory_space<vmem>>, vector<8x1x128xbf16>
    %246 = vector.shape_cast %245 : vector<8x1x128xbf16> to vector<8x128xbf16>
    %cst_236 = arith.constant dense<0.000000e+00> : vector<7x128xf32>
    %247 = tpu.matmul %94, %246, %cst_236 {dimension_numbers = #tpu.dot_dimension_numbers<[1], [0], [0], [1], [0, 0, 1, 1], [], []>} : vector<7x8xbf16>, vector<8x128xbf16>, vector<7x128xf32> -> vector<7x128xf32>
    %c0_237 = arith.constant 0 : index
    %c0_238 = arith.constant 0 : index
    %c25_239 = arith.constant 25 : index
    %c0_240 = arith.constant 0 : index
    %248 = vector.load %arg5[%c0_237, %c0_238, %c25_239, %c0_240] : memref<1x7x64x128xf32, #tpu.memory_space<vmem>>, vector<1x7x1x128xf32>
    %249 = vector.shape_cast %248 : vector<1x7x1x128xf32> to vector<7x128xf32>
    %250 = vector.shape_cast %247 : vector<7x128xf32> to vector<1x7x1x128xf32>
    tpu.vector_store %arg5[%c0_237, %c0_238, %c25_239, %c0_240], %250 {strides = array<i32>} : memref<1x7x64x128xf32, #tpu.memory_space<vmem>>, vector<1x7x1x128xf32>,
    %c0_241 = arith.constant 0 : index
    %c26 = arith.constant 26 : index
    %c0_242 = arith.constant 0 : index
    %251 = vector.load %arg7[%c0_241, %c26, %c0_242] : memref<8x64x128xbf16, #tpu.memory_space<vmem>>, vector<8x1x128xbf16>
    %252 = vector.shape_cast %251 : vector<8x1x128xbf16> to vector<8x128xbf16>
    %cst_243 = arith.constant dense<0.000000e+00> : vector<7x128xf32>
    %253 = tpu.matmul %94, %252, %cst_243 {dimension_numbers = #tpu.dot_dimension_numbers<[1], [0], [0], [1], [0, 0, 1, 1], [], []>} : vector<7x8xbf16>, vector<8x128xbf16>, vector<7x128xf32> -> vector<7x128xf32>
    %c0_244 = arith.constant 0 : index
    %c0_245 = arith.constant 0 : index
    %c26_246 = arith.constant 26 : index
    %c0_247 = arith.constant 0 : index
    %254 = vector.load %arg5[%c0_244, %c0_245, %c26_246, %c0_247] : memref<1x7x64x128xf32, #tpu.memory_space<vmem>>, vector<1x7x1x128xf32>
    %255 = vector.shape_cast %254 : vector<1x7x1x128xf32> to vector<7x128xf32>
    %256 = vector.shape_cast %253 : vector<7x128xf32> to vector<1x7x1x128xf32>
    tpu.vector_store %arg5[%c0_244, %c0_245, %c26_246, %c0_247], %256 {strides = array<i32>} : memref<1x7x64x128xf32, #tpu.memory_space<vmem>>, vector<1x7x1x128xf32>,
    %c0_248 = arith.constant 0 : index
    %c27 = arith.constant 27 : index
    %c0_249 = arith.constant 0 : index
    %257 = vector.load %arg7[%c0_248, %c27, %c0_249] : memref<8x64x128xbf16, #tpu.memory_space<vmem>>, vector<8x1x128xbf16>
    %258 = vector.shape_cast %257 : vector<8x1x128xbf16> to vector<8x128xbf16>
    %cst_250 = arith.constant dense<0.000000e+00> : vector<7x128xf32>
    %259 = tpu.matmul %94, %258, %cst_250 {dimension_numbers = #tpu.dot_dimension_numbers<[1], [0], [0], [1], [0, 0, 1, 1], [], []>} : vector<7x8xbf16>, vector<8x128xbf16>, vector<7x128xf32> -> vector<7x128xf32>
    %c0_251 = arith.constant 0 : index
    %c0_252 = arith.constant 0 : index
    %c27_253 = arith.constant 27 : index
    %c0_254 = arith.constant 0 : index
    %260 = vector.load %arg5[%c0_251, %c0_252, %c27_253, %c0_254] : memref<1x7x64x128xf32, #tpu.memory_space<vmem>>, vector<1x7x1x128xf32>
    %261 = vector.shape_cast %260 : vector<1x7x1x128xf32> to vector<7x128xf32>
    %262 = vector.shape_cast %259 : vector<7x128xf32> to vector<1x7x1x128xf32>
    tpu.vector_store %arg5[%c0_251, %c0_252, %c27_253, %c0_254], %262 {strides = array<i32>} : memref<1x7x64x128xf32, #tpu.memory_space<vmem>>, vector<1x7x1x128xf32>,
    %c0_255 = arith.constant 0 : index
    %c28 = arith.constant 28 : index
    %c0_256 = arith.constant 0 : index
    %263 = vector.load %arg7[%c0_255, %c28, %c0_256] : memref<8x64x128xbf16, #tpu.memory_space<vmem>>, vector<8x1x128xbf16>
    %264 = vector.shape_cast %263 : vector<8x1x128xbf16> to vector<8x128xbf16>
    %cst_257 = arith.constant dense<0.000000e+00> : vector<7x128xf32>
    %265 = tpu.matmul %94, %264, %cst_257 {dimension_numbers = #tpu.dot_dimension_numbers<[1], [0], [0], [1], [0, 0, 1, 1], [], []>} : vector<7x8xbf16>, vector<8x128xbf16>, vector<7x128xf32> -> vector<7x128xf32>
    %c0_258 = arith.constant 0 : index
    %c0_259 = arith.constant 0 : index
    %c28_260 = arith.constant 28 : index
    %c0_261 = arith.constant 0 : index
    %266 = vector.load %arg5[%c0_258, %c0_259, %c28_260, %c0_261] : memref<1x7x64x128xf32, #tpu.memory_space<vmem>>, vector<1x7x1x128xf32>
    %267 = vector.shape_cast %266 : vector<1x7x1x128xf32> to vector<7x128xf32>
    %268 = vector.shape_cast %265 : vector<7x128xf32> to vector<1x7x1x128xf32>
    tpu.vector_store %arg5[%c0_258, %c0_259, %c28_260, %c0_261], %268 {strides = array<i32>} : memref<1x7x64x128xf32, #tpu.memory_space<vmem>>, vector<1x7x1x128xf32>,
    %c0_262 = arith.constant 0 : index
    %c29 = arith.constant 29 : index
    %c0_263 = arith.constant 0 : index
    %269 = vector.load %arg7[%c0_262, %c29, %c0_263] : memref<8x64x128xbf16, #tpu.memory_space<vmem>>, vector<8x1x128xbf16>
    %270 = vector.shape_cast %269 : vector<8x1x128xbf16> to vector<8x128xbf16>
    %cst_264 = arith.constant dense<0.000000e+00> : vector<7x128xf32>
    %271 = tpu.matmul %94, %270, %cst_264 {dimension_numbers = #tpu.dot_dimension_numbers<[1], [0], [0], [1], [0, 0, 1, 1], [], []>} : vector<7x8xbf16>, vector<8x128xbf16>, vector<7x128xf32> -> vector<7x128xf32>
    %c0_265 = arith.constant 0 : index
    %c0_266 = arith.constant 0 : index
    %c29_267 = arith.constant 29 : index
    %c0_268 = arith.constant 0 : index
    %272 = vector.load %arg5[%c0_265, %c0_266, %c29_267, %c0_268] : memref<1x7x64x128xf32, #tpu.memory_space<vmem>>, vector<1x7x1x128xf32>
    %273 = vector.shape_cast %272 : vector<1x7x1x128xf32> to vector<7x128xf32>
    %274 = vector.shape_cast %271 : vector<7x128xf32> to vector<1x7x1x128xf32>
    tpu.vector_store %arg5[%c0_265, %c0_266, %c29_267, %c0_268], %274 {strides = array<i32>} : memref<1x7x64x128xf32, #tpu.memory_space<vmem>>, vector<1x7x1x128xf32>,
    %c0_269 = arith.constant 0 : index
    %c30 = arith.constant 30 : index
    %c0_270 = arith.constant 0 : index
    %275 = vector.load %arg7[%c0_269, %c30, %c0_270] : memref<8x64x128xbf16, #tpu.memory_space<vmem>>, vector<8x1x128xbf16>
    %276 = vector.shape_cast %275 : vector<8x1x128xbf16> to vector<8x128xbf16>
    %cst_271 = arith.constant dense<0.000000e+00> : vector<7x128xf32>
    %277 = tpu.matmul %94, %276, %cst_271 {dimension_numbers = #tpu.dot_dimension_numbers<[1], [0], [0], [1], [0, 0, 1, 1], [], []>} : vector<7x8xbf16>, vector<8x128xbf16>, vector<7x128xf32> -> vector<7x128xf32>
    %c0_272 = arith.constant 0 : index
    %c0_273 = arith.constant 0 : index
    %c30_274 = arith.constant 30 : index
    %c0_275 = arith.constant 0 : index
    %278 = vector.load %arg5[%c0_272, %c0_273, %c30_274, %c0_275] : memref<1x7x64x128xf32, #tpu.memory_space<vmem>>, vector<1x7x1x128xf32>
    %279 = vector.shape_cast %278 : vector<1x7x1x128xf32> to vector<7x128xf32>
    %280 = vector.shape_cast %277 : vector<7x128xf32> to vector<1x7x1x128xf32>
    tpu.vector_store %arg5[%c0_272, %c0_273, %c30_274, %c0_275], %280 {strides = array<i32>} : memref<1x7x64x128xf32, #tpu.memory_space<vmem>>, vector<1x7x1x128xf32>,
    %c0_276 = arith.constant 0 : index
    %c31 = arith.constant 31 : index
    %c0_277 = arith.constant 0 : index
    %281 = vector.load %arg7[%c0_276, %c31, %c0_277] : memref<8x64x128xbf16, #tpu.memory_space<vmem>>, vector<8x1x128xbf16>
    %282 = vector.shape_cast %281 : vector<8x1x128xbf16> to vector<8x128xbf16>
    %cst_278 = arith.constant dense<0.000000e+00> : vector<7x128xf32>
    %283 = tpu.matmul %94, %282, %cst_278 {dimension_numbers = #tpu.dot_dimension_numbers<[1], [0], [0], [1], [0, 0, 1, 1], [], []>} : vector<7x8xbf16>, vector<8x128xbf16>, vector<7x128xf32> -> vector<7x128xf32>
    %c0_279 = arith.constant 0 : index
    %c0_280 = arith.constant 0 : index
    %c31_281 = arith.constant 31 : index
    %c0_282 = arith.constant 0 : index
    %284 = vector.load %arg5[%c0_279, %c0_280, %c31_281, %c0_282] : memref<1x7x64x128xf32, #tpu.memory_space<vmem>>, vector<1x7x1x128xf32>
    %285 = vector.shape_cast %284 : vector<1x7x1x128xf32> to vector<7x128xf32>
    %286 = vector.shape_cast %283 : vector<7x128xf32> to vector<1x7x1x128xf32>
    tpu.vector_store %arg5[%c0_279, %c0_280, %c31_281, %c0_282], %286 {strides = array<i32>} : memref<1x7x64x128xf32, #tpu.memory_space<vmem>>, vector<1x7x1x128xf32>,
    %c0_283 = arith.constant 0 : index
    %c32 = arith.constant 32 : index
    %c0_284 = arith.constant 0 : index
    %287 = vector.load %arg7[%c0_283, %c32, %c0_284] : memref<8x64x128xbf16, #tpu.memory_space<vmem>>, vector<8x1x128xbf16>
    %288 = vector.shape_cast %287 : vector<8x1x128xbf16> to vector<8x128xbf16>
    %cst_285 = arith.constant dense<0.000000e+00> : vector<7x128xf32>
    %289 = tpu.matmul %94, %288, %cst_285 {dimension_numbers = #tpu.dot_dimension_numbers<[1], [0], [0], [1], [0, 0, 1, 1], [], []>} : vector<7x8xbf16>, vector<8x128xbf16>, vector<7x128xf32> -> vector<7x128xf32>
    %c0_286 = arith.constant 0 : index
    %c0_287 = arith.constant 0 : index
    %c32_288 = arith.constant 32 : index
    %c0_289 = arith.constant 0 : index
    %290 = vector.load %arg5[%c0_286, %c0_287, %c32_288, %c0_289] : memref<1x7x64x128xf32, #tpu.memory_space<vmem>>, vector<1x7x1x128xf32>
    %291 = vector.shape_cast %290 : vector<1x7x1x128xf32> to vector<7x128xf32>
    %292 = vector.shape_cast %289 : vector<7x128xf32> to vector<1x7x1x128xf32>
    tpu.vector_store %arg5[%c0_286, %c0_287, %c32_288, %c0_289], %292 {strides = array<i32>} : memref<1x7x64x128xf32, #tpu.memory_space<vmem>>, vector<1x7x1x128xf32>,
    %c0_290 = arith.constant 0 : index
    %c33 = arith.constant 33 : index
    %c0_291 = arith.constant 0 : index
    %293 = vector.load %arg7[%c0_290, %c33, %c0_291] : memref<8x64x128xbf16, #tpu.memory_space<vmem>>, vector<8x1x128xbf16>
    %294 = vector.shape_cast %293 : vector<8x1x128xbf16> to vector<8x128xbf16>
    %cst_292 = arith.constant dense<0.000000e+00> : vector<7x128xf32>
    %295 = tpu.matmul %94, %294, %cst_292 {dimension_numbers = #tpu.dot_dimension_numbers<[1], [0], [0], [1], [0, 0, 1, 1], [], []>} : vector<7x8xbf16>, vector<8x128xbf16>, vector<7x128xf32> -> vector<7x128xf32>
    %c0_293 = arith.constant 0 : index
    %c0_294 = arith.constant 0 : index
    %c33_295 = arith.constant 33 : index
    %c0_296 = arith.constant 0 : index
    %296 = vector.load %arg5[%c0_293, %c0_294, %c33_295, %c0_296] : memref<1x7x64x128xf32, #tpu.memory_space<vmem>>, vector<1x7x1x128xf32>
    %297 = vector.shape_cast %296 : vector<1x7x1x128xf32> to vector<7x128xf32>
    %298 = vector.shape_cast %295 : vector<7x128xf32> to vector<1x7x1x128xf32>
    tpu.vector_store %arg5[%c0_293, %c0_294, %c33_295, %c0_296], %298 {strides = array<i32>} : memref<1x7x64x128xf32, #tpu.memory_space<vmem>>, vector<1x7x1x128xf32>,
    %c0_297 = arith.constant 0 : index
    %c34 = arith.constant 34 : index
    %c0_298 = arith.constant 0 : index
    %299 = vector.load %arg7[%c0_297, %c34, %c0_298] : memref<8x64x128xbf16, #tpu.memory_space<vmem>>, vector<8x1x128xbf16>
    %300 = vector.shape_cast %299 : vector<8x1x128xbf16> to vector<8x128xbf16>
    %cst_299 = arith.constant dense<0.000000e+00> : vector<7x128xf32>
    %301 = tpu.matmul %94, %300, %cst_299 {dimension_numbers = #tpu.dot_dimension_numbers<[1], [0], [0], [1], [0, 0, 1, 1], [], []>} : vector<7x8xbf16>, vector<8x128xbf16>, vector<7x128xf32> -> vector<7x128xf32>
    %c0_300 = arith.constant 0 : index
    %c0_301 = arith.constant 0 : index
    %c34_302 = arith.constant 34 : index
    %c0_303 = arith.constant 0 : index
    %302 = vector.load %arg5[%c0_300, %c0_301, %c34_302, %c0_303] : memref<1x7x64x128xf32, #tpu.memory_space<vmem>>, vector<1x7x1x128xf32>
    %303 = vector.shape_cast %302 : vector<1x7x1x128xf32> to vector<7x128xf32>
    %304 = vector.shape_cast %301 : vector<7x128xf32> to vector<1x7x1x128xf32>
    tpu.vector_store %arg5[%c0_300, %c0_301, %c34_302, %c0_303], %304 {strides = array<i32>} : memref<1x7x64x128xf32, #tpu.memory_space<vmem>>, vector<1x7x1x128xf32>,
    %c0_304 = arith.constant 0 : index
    %c35 = arith.constant 35 : index
    %c0_305 = arith.constant 0 : index
    %305 = vector.load %arg7[%c0_304, %c35, %c0_305] : memref<8x64x128xbf16, #tpu.memory_space<vmem>>, vector<8x1x128xbf16>
    %306 = vector.shape_cast %305 : vector<8x1x128xbf16> to vector<8x128xbf16>
    %cst_306 = arith.constant dense<0.000000e+00> : vector<7x128xf32>
    %307 = tpu.matmul %94, %306, %cst_306 {dimension_numbers = #tpu.dot_dimension_numbers<[1], [0], [0], [1], [0, 0, 1, 1], [], []>} : vector<7x8xbf16>, vector<8x128xbf16>, vector<7x128xf32> -> vector<7x128xf32>
    %c0_307 = arith.constant 0 : index
    %c0_308 = arith.constant 0 : index
    %c35_309 = arith.constant 35 : index
    %c0_310 = arith.constant 0 : index
    %308 = vector.load %arg5[%c0_307, %c0_308, %c35_309, %c0_310] : memref<1x7x64x128xf32, #tpu.memory_space<vmem>>, vector<1x7x1x128xf32>
    %309 = vector.shape_cast %308 : vector<1x7x1x128xf32> to vector<7x128xf32>
    %310 = vector.shape_cast %307 : vector<7x128xf32> to vector<1x7x1x128xf32>
    tpu.vector_store %arg5[%c0_307, %c0_308, %c35_309, %c0_310], %310 {strides = array<i32>} : memref<1x7x64x128xf32, #tpu.memory_space<vmem>>, vector<1x7x1x128xf32>,
    %c0_311 = arith.constant 0 : index
    %c36 = arith.constant 36 : index
    %c0_312 = arith.constant 0 : index
    %311 = vector.load %arg7[%c0_311, %c36, %c0_312] : memref<8x64x128xbf16, #tpu.memory_space<vmem>>, vector<8x1x128xbf16>
    %312 = vector.shape_cast %311 : vector<8x1x128xbf16> to vector<8x128xbf16>
    %cst_313 = arith.constant dense<0.000000e+00> : vector<7x128xf32>
    %313 = tpu.matmul %94, %312, %cst_313 {dimension_numbers = #tpu.dot_dimension_numbers<[1], [0], [0], [1], [0, 0, 1, 1], [], []>} : vector<7x8xbf16>, vector<8x128xbf16>, vector<7x128xf32> -> vector<7x128xf32>
    %c0_314 = arith.constant 0 : index
    %c0_315 = arith.constant 0 : index
    %c36_316 = arith.constant 36 : index
    %c0_317 = arith.constant 0 : index
    %314 = vector.load %arg5[%c0_314, %c0_315, %c36_316, %c0_317] : memref<1x7x64x128xf32, #tpu.memory_space<vmem>>, vector<1x7x1x128xf32>
    %315 = vector.shape_cast %314 : vector<1x7x1x128xf32> to vector<7x128xf32>
    %316 = vector.shape_cast %313 : vector<7x128xf32> to vector<1x7x1x128xf32>
    tpu.vector_store %arg5[%c0_314, %c0_315, %c36_316, %c0_317], %316 {strides = array<i32>} : memref<1x7x64x128xf32, #tpu.memory_space<vmem>>, vector<1x7x1x128xf32>,
    %c0_318 = arith.constant 0 : index
    %c37 = arith.constant 37 : index
    %c0_319 = arith.constant 0 : index
    %317 = vector.load %arg7[%c0_318, %c37, %c0_319] : memref<8x64x128xbf16, #tpu.memory_space<vmem>>, vector<8x1x128xbf16>
    %318 = vector.shape_cast %317 : vector<8x1x128xbf16> to vector<8x128xbf16>
    %cst_320 = arith.constant dense<0.000000e+00> : vector<7x128xf32>
    %319 = tpu.matmul %94, %318, %cst_320 {dimension_numbers = #tpu.dot_dimension_numbers<[1], [0], [0], [1], [0, 0, 1, 1], [], []>} : vector<7x8xbf16>, vector<8x128xbf16>, vector<7x128xf32> -> vector<7x128xf32>
    %c0_321 = arith.constant 0 : index
    %c0_322 = arith.constant 0 : index
    %c37_323 = arith.constant 37 : index
    %c0_324 = arith.constant 0 : index
    %320 = vector.load %arg5[%c0_321, %c0_322, %c37_323, %c0_324] : memref<1x7x64x128xf32, #tpu.memory_space<vmem>>, vector<1x7x1x128xf32>
    %321 = vector.shape_cast %320 : vector<1x7x1x128xf32> to vector<7x128xf32>
    %322 = vector.shape_cast %319 : vector<7x128xf32> to vector<1x7x1x128xf32>
    tpu.vector_store %arg5[%c0_321, %c0_322, %c37_323, %c0_324], %322 {strides = array<i32>} : memref<1x7x64x128xf32, #tpu.memory_space<vmem>>, vector<1x7x1x128xf32>,
    %c0_325 = arith.constant 0 : index
    %c38 = arith.constant 38 : index
    %c0_326 = arith.constant 0 : index
    %323 = vector.load %arg7[%c0_325, %c38, %c0_326] : memref<8x64x128xbf16, #tpu.memory_space<vmem>>, vector<8x1x128xbf16>
    %324 = vector.shape_cast %323 : vector<8x1x128xbf16> to vector<8x128xbf16>
    %cst_327 = arith.constant dense<0.000000e+00> : vector<7x128xf32>
    %325 = tpu.matmul %94, %324, %cst_327 {dimension_numbers = #tpu.dot_dimension_numbers<[1], [0], [0], [1], [0, 0, 1, 1], [], []>} : vector<7x8xbf16>, vector<8x128xbf16>, vector<7x128xf32> -> vector<7x128xf32>
    %c0_328 = arith.constant 0 : index
    %c0_329 = arith.constant 0 : index
    %c38_330 = arith.constant 38 : index
    %c0_331 = arith.constant 0 : index
    %326 = vector.load %arg5[%c0_328, %c0_329, %c38_330, %c0_331] : memref<1x7x64x128xf32, #tpu.memory_space<vmem>>, vector<1x7x1x128xf32>
    %327 = vector.shape_cast %326 : vector<1x7x1x128xf32> to vector<7x128xf32>
    %328 = vector.shape_cast %325 : vector<7x128xf32> to vector<1x7x1x128xf32>
    tpu.vector_store %arg5[%c0_328, %c0_329, %c38_330, %c0_331], %328 {strides = array<i32>} : memref<1x7x64x128xf32, #tpu.memory_space<vmem>>, vector<1x7x1x128xf32>,
    %c0_332 = arith.constant 0 : index
    %c39 = arith.constant 39 : index
    %c0_333 = arith.constant 0 : index
    %329 = vector.load %arg7[%c0_332, %c39, %c0_333] : memref<8x64x128xbf16, #tpu.memory_space<vmem>>, vector<8x1x128xbf16>
    %330 = vector.shape_cast %329 : vector<8x1x128xbf16> to vector<8x128xbf16>
    %cst_334 = arith.constant dense<0.000000e+00> : vector<7x128xf32>
    %331 = tpu.matmul %94, %330, %cst_334 {dimension_numbers = #tpu.dot_dimension_numbers<[1], [0], [0], [1], [0, 0, 1, 1], [], []>} : vector<7x8xbf16>, vector<8x128xbf16>, vector<7x128xf32> -> vector<7x128xf32>
    %c0_335 = arith.constant 0 : index
    %c0_336 = arith.constant 0 : index
    %c39_337 = arith.constant 39 : index
    %c0_338 = arith.constant 0 : index
    %332 = vector.load %arg5[%c0_335, %c0_336, %c39_337, %c0_338] : memref<1x7x64x128xf32, #tpu.memory_space<vmem>>, vector<1x7x1x128xf32>
    %333 = vector.shape_cast %332 : vector<1x7x1x128xf32> to vector<7x128xf32>
    %334 = vector.shape_cast %331 : vector<7x128xf32> to vector<1x7x1x128xf32>
    tpu.vector_store %arg5[%c0_335, %c0_336, %c39_337, %c0_338], %334 {strides = array<i32>} : memref<1x7x64x128xf32, #tpu.memory_space<vmem>>, vector<1x7x1x128xf32>,
    %c0_339 = arith.constant 0 : index
    %c40 = arith.constant 40 : index
    %c0_340 = arith.constant 0 : index
    %335 = vector.load %arg7[%c0_339, %c40, %c0_340] : memref<8x64x128xbf16, #tpu.memory_space<vmem>>, vector<8x1x128xbf16>
    %336 = vector.shape_cast %335 : vector<8x1x128xbf16> to vector<8x128xbf16>
    %cst_341 = arith.constant dense<0.000000e+00> : vector<7x128xf32>
    %337 = tpu.matmul %94, %336, %cst_341 {dimension_numbers = #tpu.dot_dimension_numbers<[1], [0], [0], [1], [0, 0, 1, 1], [], []>} : vector<7x8xbf16>, vector<8x128xbf16>, vector<7x128xf32> -> vector<7x128xf32>
    %c0_342 = arith.constant 0 : index
    %c0_343 = arith.constant 0 : index
    %c40_344 = arith.constant 40 : index
    %c0_345 = arith.constant 0 : index
    %338 = vector.load %arg5[%c0_342, %c0_343, %c40_344, %c0_345] : memref<1x7x64x128xf32, #tpu.memory_space<vmem>>, vector<1x7x1x128xf32>
    %339 = vector.shape_cast %338 : vector<1x7x1x128xf32> to vector<7x128xf32>
    %340 = vector.shape_cast %337 : vector<7x128xf32> to vector<1x7x1x128xf32>
    tpu.vector_store %arg5[%c0_342, %c0_343, %c40_344, %c0_345], %340 {strides = array<i32>} : memref<1x7x64x128xf32, #tpu.memory_space<vmem>>, vector<1x7x1x128xf32>,
    %c0_346 = arith.constant 0 : index
    %c41 = arith.constant 41 : index
    %c0_347 = arith.constant 0 : index
    %341 = vector.load %arg7[%c0_346, %c41, %c0_347] : memref<8x64x128xbf16, #tpu.memory_space<vmem>>, vector<8x1x128xbf16>
    %342 = vector.shape_cast %341 : vector<8x1x128xbf16> to vector<8x128xbf16>
    %cst_348 = arith.constant dense<0.000000e+00> : vector<7x128xf32>
    %343 = tpu.matmul %94, %342, %cst_348 {dimension_numbers = #tpu.dot_dimension_numbers<[1], [0], [0], [1], [0, 0, 1, 1], [], []>} : vector<7x8xbf16>, vector<8x128xbf16>, vector<7x128xf32> -> vector<7x128xf32>
    %c0_349 = arith.constant 0 : index
    %c0_350 = arith.constant 0 : index
    %c41_351 = arith.constant 41 : index
    %c0_352 = arith.constant 0 : index
    %344 = vector.load %arg5[%c0_349, %c0_350, %c41_351, %c0_352] : memref<1x7x64x128xf32, #tpu.memory_space<vmem>>, vector<1x7x1x128xf32>
    %345 = vector.shape_cast %344 : vector<1x7x1x128xf32> to vector<7x128xf32>
    %346 = vector.shape_cast %343 : vector<7x128xf32> to vector<1x7x1x128xf32>
    tpu.vector_store %arg5[%c0_349, %c0_350, %c41_351, %c0_352], %346 {strides = array<i32>} : memref<1x7x64x128xf32, #tpu.memory_space<vmem>>, vector<1x7x1x128xf32>,
    %c0_353 = arith.constant 0 : index
    %c42 = arith.constant 42 : index
    %c0_354 = arith.constant 0 : index
    %347 = vector.load %arg7[%c0_353, %c42, %c0_354] : memref<8x64x128xbf16, #tpu.memory_space<vmem>>, vector<8x1x128xbf16>
    %348 = vector.shape_cast %347 : vector<8x1x128xbf16> to vector<8x128xbf16>
    %cst_355 = arith.constant dense<0.000000e+00> : vector<7x128xf32>
    %349 = tpu.matmul %94, %348, %cst_355 {dimension_numbers = #tpu.dot_dimension_numbers<[1], [0], [0], [1], [0, 0, 1, 1], [], []>} : vector<7x8xbf16>, vector<8x128xbf16>, vector<7x128xf32> -> vector<7x128xf32>
    %c0_356 = arith.constant 0 : index
    %c0_357 = arith.constant 0 : index
    %c42_358 = arith.constant 42 : index
    %c0_359 = arith.constant 0 : index
    %350 = vector.load %arg5[%c0_356, %c0_357, %c42_358, %c0_359] : memref<1x7x64x128xf32, #tpu.memory_space<vmem>>, vector<1x7x1x128xf32>
    %351 = vector.shape_cast %350 : vector<1x7x1x128xf32> to vector<7x128xf32>
    %352 = vector.shape_cast %349 : vector<7x128xf32> to vector<1x7x1x128xf32>
    tpu.vector_store %arg5[%c0_356, %c0_357, %c42_358, %c0_359], %352 {strides = array<i32>} : memref<1x7x64x128xf32, #tpu.memory_space<vmem>>, vector<1x7x1x128xf32>,
    %c0_360 = arith.constant 0 : index
    %c43 = arith.constant 43 : index
    %c0_361 = arith.constant 0 : index
    %353 = vector.load %arg7[%c0_360, %c43, %c0_361] : memref<8x64x128xbf16, #tpu.memory_space<vmem>>, vector<8x1x128xbf16>
    %354 = vector.shape_cast %353 : vector<8x1x128xbf16> to vector<8x128xbf16>
    %cst_362 = arith.constant dense<0.000000e+00> : vector<7x128xf32>
    %355 = tpu.matmul %94, %354, %cst_362 {dimension_numbers = #tpu.dot_dimension_numbers<[1], [0], [0], [1], [0, 0, 1, 1], [], []>} : vector<7x8xbf16>, vector<8x128xbf16>, vector<7x128xf32> -> vector<7x128xf32>
    %c0_363 = arith.constant 0 : index
    %c0_364 = arith.constant 0 : index
    %c43_365 = arith.constant 43 : index
    %c0_366 = arith.constant 0 : index
    %356 = vector.load %arg5[%c0_363, %c0_364, %c43_365, %c0_366] : memref<1x7x64x128xf32, #tpu.memory_space<vmem>>, vector<1x7x1x128xf32>
    %357 = vector.shape_cast %356 : vector<1x7x1x128xf32> to vector<7x128xf32>
    %358 = vector.shape_cast %355 : vector<7x128xf32> to vector<1x7x1x128xf32>
    tpu.vector_store %arg5[%c0_363, %c0_364, %c43_365, %c0_366], %358 {strides = array<i32>} : memref<1x7x64x128xf32, #tpu.memory_space<vmem>>, vector<1x7x1x128xf32>,
    %c0_367 = arith.constant 0 : index
    %c44 = arith.constant 44 : index
    %c0_368 = arith.constant 0 : index
    %359 = vector.load %arg7[%c0_367, %c44, %c0_368] : memref<8x64x128xbf16, #tpu.memory_space<vmem>>, vector<8x1x128xbf16>
    %360 = vector.shape_cast %359 : vector<8x1x128xbf16> to vector<8x128xbf16>
    %cst_369 = arith.constant dense<0.000000e+00> : vector<7x128xf32>
    %361 = tpu.matmul %94, %360, %cst_369 {dimension_numbers = #tpu.dot_dimension_numbers<[1], [0], [0], [1], [0, 0, 1, 1], [], []>} : vector<7x8xbf16>, vector<8x128xbf16>, vector<7x128xf32> -> vector<7x128xf32>
    %c0_370 = arith.constant 0 : index
    %c0_371 = arith.constant 0 : index
    %c44_372 = arith.constant 44 : index
    %c0_373 = arith.constant 0 : index
    %362 = vector.load %arg5[%c0_370, %c0_371, %c44_372, %c0_373] : memref<1x7x64x128xf32, #tpu.memory_space<vmem>>, vector<1x7x1x128xf32>
    %363 = vector.shape_cast %362 : vector<1x7x1x128xf32> to vector<7x128xf32>
    %364 = vector.shape_cast %361 : vector<7x128xf32> to vector<1x7x1x128xf32>
    tpu.vector_store %arg5[%c0_370, %c0_371, %c44_372, %c0_373], %364 {strides = array<i32>} : memref<1x7x64x128xf32, #tpu.memory_space<vmem>>, vector<1x7x1x128xf32>,
    %c0_374 = arith.constant 0 : index
    %c45 = arith.constant 45 : index
    %c0_375 = arith.constant 0 : index
    %365 = vector.load %arg7[%c0_374, %c45, %c0_375] : memref<8x64x128xbf16, #tpu.memory_space<vmem>>, vector<8x1x128xbf16>
    %366 = vector.shape_cast %365 : vector<8x1x128xbf16> to vector<8x128xbf16>
    %cst_376 = arith.constant dense<0.000000e+00> : vector<7x128xf32>
    %367 = tpu.matmul %94, %366, %cst_376 {dimension_numbers = #tpu.dot_dimension_numbers<[1], [0], [0], [1], [0, 0, 1, 1], [], []>} : vector<7x8xbf16>, vector<8x128xbf16>, vector<7x128xf32> -> vector<7x128xf32>
    %c0_377 = arith.constant 0 : index
    %c0_378 = arith.constant 0 : index
    %c45_379 = arith.constant 45 : index
    %c0_380 = arith.constant 0 : index
    %368 = vector.load %arg5[%c0_377, %c0_378, %c45_379, %c0_380] : memref<1x7x64x128xf32, #tpu.memory_space<vmem>>, vector<1x7x1x128xf32>
    %369 = vector.shape_cast %368 : vector<1x7x1x128xf32> to vector<7x128xf32>
    %370 = vector.shape_cast %367 : vector<7x128xf32> to vector<1x7x1x128xf32>
    tpu.vector_store %arg5[%c0_377, %c0_378, %c45_379, %c0_380], %370 {strides = array<i32>} : memref<1x7x64x128xf32, #tpu.memory_space<vmem>>, vector<1x7x1x128xf32>,
    %c0_381 = arith.constant 0 : index
    %c46 = arith.constant 46 : index
    %c0_382 = arith.constant 0 : index
    %371 = vector.load %arg7[%c0_381, %c46, %c0_382] : memref<8x64x128xbf16, #tpu.memory_space<vmem>>, vector<8x1x128xbf16>
    %372 = vector.shape_cast %371 : vector<8x1x128xbf16> to vector<8x128xbf16>
    %cst_383 = arith.constant dense<0.000000e+00> : vector<7x128xf32>
    %373 = tpu.matmul %94, %372, %cst_383 {dimension_numbers = #tpu.dot_dimension_numbers<[1], [0], [0], [1], [0, 0, 1, 1], [], []>} : vector<7x8xbf16>, vector<8x128xbf16>, vector<7x128xf32> -> vector<7x128xf32>
    %c0_384 = arith.constant 0 : index
    %c0_385 = arith.constant 0 : index
    %c46_386 = arith.constant 46 : index
    %c0_387 = arith.constant 0 : index
    %374 = vector.load %arg5[%c0_384, %c0_385, %c46_386, %c0_387] : memref<1x7x64x128xf32, #tpu.memory_space<vmem>>, vector<1x7x1x128xf32>
    %375 = vector.shape_cast %374 : vector<1x7x1x128xf32> to vector<7x128xf32>
    %376 = vector.shape_cast %373 : vector<7x128xf32> to vector<1x7x1x128xf32>
    tpu.vector_store %arg5[%c0_384, %c0_385, %c46_386, %c0_387], %376 {strides = array<i32>} : memref<1x7x64x128xf32, #tpu.memory_space<vmem>>, vector<1x7x1x128xf32>,
    %c0_388 = arith.constant 0 : index
    %c47 = arith.constant 47 : index
    %c0_389 = arith.constant 0 : index
    %377 = vector.load %arg7[%c0_388, %c47, %c0_389] : memref<8x64x128xbf16, #tpu.memory_space<vmem>>, vector<8x1x128xbf16>
    %378 = vector.shape_cast %377 : vector<8x1x128xbf16> to vector<8x128xbf16>
    %cst_390 = arith.constant dense<0.000000e+00> : vector<7x128xf32>
    %379 = tpu.matmul %94, %378, %cst_390 {dimension_numbers = #tpu.dot_dimension_numbers<[1], [0], [0], [1], [0, 0, 1, 1], [], []>} : vector<7x8xbf16>, vector<8x128xbf16>, vector<7x128xf32> -> vector<7x128xf32>
    %c0_391 = arith.constant 0 : index
    %c0_392 = arith.constant 0 : index
    %c47_393 = arith.constant 47 : index
    %c0_394 = arith.constant 0 : index
    %380 = vector.load %arg5[%c0_391, %c0_392, %c47_393, %c0_394] : memref<1x7x64x128xf32, #tpu.memory_space<vmem>>, vector<1x7x1x128xf32>
    %381 = vector.shape_cast %380 : vector<1x7x1x128xf32> to vector<7x128xf32>
    %382 = vector.shape_cast %379 : vector<7x128xf32> to vector<1x7x1x128xf32>
    tpu.vector_store %arg5[%c0_391, %c0_392, %c47_393, %c0_394], %382 {strides = array<i32>} : memref<1x7x64x128xf32, #tpu.memory_space<vmem>>, vector<1x7x1x128xf32>,
    %c0_395 = arith.constant 0 : index
    %c48 = arith.constant 48 : index
    %c0_396 = arith.constant 0 : index
    %383 = vector.load %arg7[%c0_395, %c48, %c0_396] : memref<8x64x128xbf16, #tpu.memory_space<vmem>>, vector<8x1x128xbf16>
    %384 = vector.shape_cast %383 : vector<8x1x128xbf16> to vector<8x128xbf16>
    %cst_397 = arith.constant dense<0.000000e+00> : vector<7x128xf32>
    %385 = tpu.matmul %94, %384, %cst_397 {dimension_numbers = #tpu.dot_dimension_numbers<[1], [0], [0], [1], [0, 0, 1, 1], [], []>} : vector<7x8xbf16>, vector<8x128xbf16>, vector<7x128xf32> -> vector<7x128xf32>
    %c0_398 = arith.constant 0 : index
    %c0_399 = arith.constant 0 : index
    %c48_400 = arith.constant 48 : index
    %c0_401 = arith.constant 0 : index
    %386 = vector.load %arg5[%c0_398, %c0_399, %c48_400, %c0_401] : memref<1x7x64x128xf32, #tpu.memory_space<vmem>>, vector<1x7x1x128xf32>
    %387 = vector.shape_cast %386 : vector<1x7x1x128xf32> to vector<7x128xf32>
    %388 = vector.shape_cast %385 : vector<7x128xf32> to vector<1x7x1x128xf32>
    tpu.vector_store %arg5[%c0_398, %c0_399, %c48_400, %c0_401], %388 {strides = array<i32>} : memref<1x7x64x128xf32, #tpu.memory_space<vmem>>, vector<1x7x1x128xf32>,
    %c0_402 = arith.constant 0 : index
    %c49 = arith.constant 49 : index
    %c0_403 = arith.constant 0 : index
    %389 = vector.load %arg7[%c0_402, %c49, %c0_403] : memref<8x64x128xbf16, #tpu.memory_space<vmem>>, vector<8x1x128xbf16>
    %390 = vector.shape_cast %389 : vector<8x1x128xbf16> to vector<8x128xbf16>
    %cst_404 = arith.constant dense<0.000000e+00> : vector<7x128xf32>
    %391 = tpu.matmul %94, %390, %cst_404 {dimension_numbers = #tpu.dot_dimension_numbers<[1], [0], [0], [1], [0, 0, 1, 1], [], []>} : vector<7x8xbf16>, vector<8x128xbf16>, vector<7x128xf32> -> vector<7x128xf32>
    %c0_405 = arith.constant 0 : index
    %c0_406 = arith.constant 0 : index
    %c49_407 = arith.constant 49 : index
    %c0_408 = arith.constant 0 : index
    %392 = vector.load %arg5[%c0_405, %c0_406, %c49_407, %c0_408] : memref<1x7x64x128xf32, #tpu.memory_space<vmem>>, vector<1x7x1x128xf32>
    %393 = vector.shape_cast %392 : vector<1x7x1x128xf32> to vector<7x128xf32>
    %394 = vector.shape_cast %391 : vector<7x128xf32> to vector<1x7x1x128xf32>
    tpu.vector_store %arg5[%c0_405, %c0_406, %c49_407, %c0_408], %394 {strides = array<i32>} : memref<1x7x64x128xf32, #tpu.memory_space<vmem>>, vector<1x7x1x128xf32>,
    %c0_409 = arith.constant 0 : index
    %c50 = arith.constant 50 : index
    %c0_410 = arith.constant 0 : index
    %395 = vector.load %arg7[%c0_409, %c50, %c0_410] : memref<8x64x128xbf16, #tpu.memory_space<vmem>>, vector<8x1x128xbf16>
    %396 = vector.shape_cast %395 : vector<8x1x128xbf16> to vector<8x128xbf16>
    %cst_411 = arith.constant dense<0.000000e+00> : vector<7x128xf32>
    %397 = tpu.matmul %94, %396, %cst_411 {dimension_numbers = #tpu.dot_dimension_numbers<[1], [0], [0], [1], [0, 0, 1, 1], [], []>} : vector<7x8xbf16>, vector<8x128xbf16>, vector<7x128xf32> -> vector<7x128xf32>
    %c0_412 = arith.constant 0 : index
    %c0_413 = arith.constant 0 : index
    %c50_414 = arith.constant 50 : index
    %c0_415 = arith.constant 0 : index
    %398 = vector.load %arg5[%c0_412, %c0_413, %c50_414, %c0_415] : memref<1x7x64x128xf32, #tpu.memory_space<vmem>>, vector<1x7x1x128xf32>
    %399 = vector.shape_cast %398 : vector<1x7x1x128xf32> to vector<7x128xf32>
    %400 = vector.shape_cast %397 : vector<7x128xf32> to vector<1x7x1x128xf32>
    tpu.vector_store %arg5[%c0_412, %c0_413, %c50_414, %c0_415], %400 {strides = array<i32>} : memref<1x7x64x128xf32, #tpu.memory_space<vmem>>, vector<1x7x1x128xf32>,
    %c0_416 = arith.constant 0 : index
    %c51 = arith.constant 51 : index
    %c0_417 = arith.constant 0 : index
    %401 = vector.load %arg7[%c0_416, %c51, %c0_417] : memref<8x64x128xbf16, #tpu.memory_space<vmem>>, vector<8x1x128xbf16>
    %402 = vector.shape_cast %401 : vector<8x1x128xbf16> to vector<8x128xbf16>
    %cst_418 = arith.constant dense<0.000000e+00> : vector<7x128xf32>
    %403 = tpu.matmul %94, %402, %cst_418 {dimension_numbers = #tpu.dot_dimension_numbers<[1], [0], [0], [1], [0, 0, 1, 1], [], []>} : vector<7x8xbf16>, vector<8x128xbf16>, vector<7x128xf32> -> vector<7x128xf32>
    %c0_419 = arith.constant 0 : index
    %c0_420 = arith.constant 0 : index
    %c51_421 = arith.constant 51 : index
    %c0_422 = arith.constant 0 : index
    %404 = vector.load %arg5[%c0_419, %c0_420, %c51_421, %c0_422] : memref<1x7x64x128xf32, #tpu.memory_space<vmem>>, vector<1x7x1x128xf32>
    %405 = vector.shape_cast %404 : vector<1x7x1x128xf32> to vector<7x128xf32>
    %406 = vector.shape_cast %403 : vector<7x128xf32> to vector<1x7x1x128xf32>
    tpu.vector_store %arg5[%c0_419, %c0_420, %c51_421, %c0_422], %406 {strides = array<i32>} : memref<1x7x64x128xf32, #tpu.memory_space<vmem>>, vector<1x7x1x128xf32>,
    %c0_423 = arith.constant 0 : index
    %c52 = arith.constant 52 : index
    %c0_424 = arith.constant 0 : index
    %407 = vector.load %arg7[%c0_423, %c52, %c0_424] : memref<8x64x128xbf16, #tpu.memory_space<vmem>>, vector<8x1x128xbf16>
    %408 = vector.shape_cast %407 : vector<8x1x128xbf16> to vector<8x128xbf16>
    %cst_425 = arith.constant dense<0.000000e+00> : vector<7x128xf32>
    %409 = tpu.matmul %94, %408, %cst_425 {dimension_numbers = #tpu.dot_dimension_numbers<[1], [0], [0], [1], [0, 0, 1, 1], [], []>} : vector<7x8xbf16>, vector<8x128xbf16>, vector<7x128xf32> -> vector<7x128xf32>
    %c0_426 = arith.constant 0 : index
    %c0_427 = arith.constant 0 : index
    %c52_428 = arith.constant 52 : index
    %c0_429 = arith.constant 0 : index
    %410 = vector.load %arg5[%c0_426, %c0_427, %c52_428, %c0_429] : memref<1x7x64x128xf32, #tpu.memory_space<vmem>>, vector<1x7x1x128xf32>
    %411 = vector.shape_cast %410 : vector<1x7x1x128xf32> to vector<7x128xf32>
    %412 = vector.shape_cast %409 : vector<7x128xf32> to vector<1x7x1x128xf32>
    tpu.vector_store %arg5[%c0_426, %c0_427, %c52_428, %c0_429], %412 {strides = array<i32>} : memref<1x7x64x128xf32, #tpu.memory_space<vmem>>, vector<1x7x1x128xf32>,
    %c0_430 = arith.constant 0 : index
    %c53 = arith.constant 53 : index
    %c0_431 = arith.constant 0 : index
    %413 = vector.load %arg7[%c0_430, %c53, %c0_431] : memref<8x64x128xbf16, #tpu.memory_space<vmem>>, vector<8x1x128xbf16>
    %414 = vector.shape_cast %413 : vector<8x1x128xbf16> to vector<8x128xbf16>
    %cst_432 = arith.constant dense<0.000000e+00> : vector<7x128xf32>
    %415 = tpu.matmul %94, %414, %cst_432 {dimension_numbers = #tpu.dot_dimension_numbers<[1], [0], [0], [1], [0, 0, 1, 1], [], []>} : vector<7x8xbf16>, vector<8x128xbf16>, vector<7x128xf32> -> vector<7x128xf32>
    %c0_433 = arith.constant 0 : index
    %c0_434 = arith.constant 0 : index
    %c53_435 = arith.constant 53 : index
    %c0_436 = arith.constant 0 : index
    %416 = vector.load %arg5[%c0_433, %c0_434, %c53_435, %c0_436] : memref<1x7x64x128xf32, #tpu.memory_space<vmem>>, vector<1x7x1x128xf32>
    %417 = vector.shape_cast %416 : vector<1x7x1x128xf32> to vector<7x128xf32>
    %418 = vector.shape_cast %415 : vector<7x128xf32> to vector<1x7x1x128xf32>
    tpu.vector_store %arg5[%c0_433, %c0_434, %c53_435, %c0_436], %418 {strides = array<i32>} : memref<1x7x64x128xf32, #tpu.memory_space<vmem>>, vector<1x7x1x128xf32>,
    %c0_437 = arith.constant 0 : index
    %c54 = arith.constant 54 : index
    %c0_438 = arith.constant 0 : index
    %419 = vector.load %arg7[%c0_437, %c54, %c0_438] : memref<8x64x128xbf16, #tpu.memory_space<vmem>>, vector<8x1x128xbf16>
    %420 = vector.shape_cast %419 : vector<8x1x128xbf16> to vector<8x128xbf16>
    %cst_439 = arith.constant dense<0.000000e+00> : vector<7x128xf32>
    %421 = tpu.matmul %94, %420, %cst_439 {dimension_numbers = #tpu.dot_dimension_numbers<[1], [0], [0], [1], [0, 0, 1, 1], [], []>} : vector<7x8xbf16>, vector<8x128xbf16>, vector<7x128xf32> -> vector<7x128xf32>
    %c0_440 = arith.constant 0 : index
    %c0_441 = arith.constant 0 : index
    %c54_442 = arith.constant 54 : index
    %c0_443 = arith.constant 0 : index
    %422 = vector.load %arg5[%c0_440, %c0_441, %c54_442, %c0_443] : memref<1x7x64x128xf32, #tpu.memory_space<vmem>>, vector<1x7x1x128xf32>
    %423 = vector.shape_cast %422 : vector<1x7x1x128xf32> to vector<7x128xf32>
    %424 = vector.shape_cast %421 : vector<7x128xf32> to vector<1x7x1x128xf32>
    tpu.vector_store %arg5[%c0_440, %c0_441, %c54_442, %c0_443], %424 {strides = array<i32>} : memref<1x7x64x128xf32, #tpu.memory_space<vmem>>, vector<1x7x1x128xf32>,
    %c0_444 = arith.constant 0 : index
    %c55 = arith.constant 55 : index
    %c0_445 = arith.constant 0 : index
    %425 = vector.load %arg7[%c0_444, %c55, %c0_445] : memref<8x64x128xbf16, #tpu.memory_space<vmem>>, vector<8x1x128xbf16>
    %426 = vector.shape_cast %425 : vector<8x1x128xbf16> to vector<8x128xbf16>
    %cst_446 = arith.constant dense<0.000000e+00> : vector<7x128xf32>
    %427 = tpu.matmul %94, %426, %cst_446 {dimension_numbers = #tpu.dot_dimension_numbers<[1], [0], [0], [1], [0, 0, 1, 1], [], []>} : vector<7x8xbf16>, vector<8x128xbf16>, vector<7x128xf32> -> vector<7x128xf32>
    %c0_447 = arith.constant 0 : index
    %c0_448 = arith.constant 0 : index
    %c55_449 = arith.constant 55 : index
    %c0_450 = arith.constant 0 : index
    %428 = vector.load %arg5[%c0_447, %c0_448, %c55_449, %c0_450] : memref<1x7x64x128xf32, #tpu.memory_space<vmem>>, vector<1x7x1x128xf32>
    %429 = vector.shape_cast %428 : vector<1x7x1x128xf32> to vector<7x128xf32>
    %430 = vector.shape_cast %427 : vector<7x128xf32> to vector<1x7x1x128xf32>
    tpu.vector_store %arg5[%c0_447, %c0_448, %c55_449, %c0_450], %430 {strides = array<i32>} : memref<1x7x64x128xf32, #tpu.memory_space<vmem>>, vector<1x7x1x128xf32>,
    %c0_451 = arith.constant 0 : index
    %c56 = arith.constant 56 : index
    %c0_452 = arith.constant 0 : index
    %431 = vector.load %arg7[%c0_451, %c56, %c0_452] : memref<8x64x128xbf16, #tpu.memory_space<vmem>>, vector<8x1x128xbf16>
    %432 = vector.shape_cast %431 : vector<8x1x128xbf16> to vector<8x128xbf16>
    %cst_453 = arith.constant dense<0.000000e+00> : vector<7x128xf32>
    %433 = tpu.matmul %94, %432, %cst_453 {dimension_numbers = #tpu.dot_dimension_numbers<[1], [0], [0], [1], [0, 0, 1, 1], [], []>} : vector<7x8xbf16>, vector<8x128xbf16>, vector<7x128xf32> -> vector<7x128xf32>
    %c0_454 = arith.constant 0 : index
    %c0_455 = arith.constant 0 : index
    %c56_456 = arith.constant 56 : index
    %c0_457 = arith.constant 0 : index
    %434 = vector.load %arg5[%c0_454, %c0_455, %c56_456, %c0_457] : memref<1x7x64x128xf32, #tpu.memory_space<vmem>>, vector<1x7x1x128xf32>
    %435 = vector.shape_cast %434 : vector<1x7x1x128xf32> to vector<7x128xf32>
    %436 = vector.shape_cast %433 : vector<7x128xf32> to vector<1x7x1x128xf32>
    tpu.vector_store %arg5[%c0_454, %c0_455, %c56_456, %c0_457], %436 {strides = array<i32>} : memref<1x7x64x128xf32, #tpu.memory_space<vmem>>, vector<1x7x1x128xf32>,
    %c0_458 = arith.constant 0 : index
    %c57 = arith.constant 57 : index
    %c0_459 = arith.constant 0 : index
    %437 = vector.load %arg7[%c0_458, %c57, %c0_459] : memref<8x64x128xbf16, #tpu.memory_space<vmem>>, vector<8x1x128xbf16>
    %438 = vector.shape_cast %437 : vector<8x1x128xbf16> to vector<8x128xbf16>
    %cst_460 = arith.constant dense<0.000000e+00> : vector<7x128xf32>
    %439 = tpu.matmul %94, %438, %cst_460 {dimension_numbers = #tpu.dot_dimension_numbers<[1], [0], [0], [1], [0, 0, 1, 1], [], []>} : vector<7x8xbf16>, vector<8x128xbf16>, vector<7x128xf32> -> vector<7x128xf32>
    %c0_461 = arith.constant 0 : index
    %c0_462 = arith.constant 0 : index
    %c57_463 = arith.constant 57 : index
    %c0_464 = arith.constant 0 : index
    %440 = vector.load %arg5[%c0_461, %c0_462, %c57_463, %c0_464] : memref<1x7x64x128xf32, #tpu.memory_space<vmem>>, vector<1x7x1x128xf32>
    %441 = vector.shape_cast %440 : vector<1x7x1x128xf32> to vector<7x128xf32>
    %442 = vector.shape_cast %439 : vector<7x128xf32> to vector<1x7x1x128xf32>
    tpu.vector_store %arg5[%c0_461, %c0_462, %c57_463, %c0_464], %442 {strides = array<i32>} : memref<1x7x64x128xf32, #tpu.memory_space<vmem>>, vector<1x7x1x128xf32>,
    %c0_465 = arith.constant 0 : index
    %c58 = arith.constant 58 : index
    %c0_466 = arith.constant 0 : index
    %443 = vector.load %arg7[%c0_465, %c58, %c0_466] : memref<8x64x128xbf16, #tpu.memory_space<vmem>>, vector<8x1x128xbf16>
    %444 = vector.shape_cast %443 : vector<8x1x128xbf16> to vector<8x128xbf16>
    %cst_467 = arith.constant dense<0.000000e+00> : vector<7x128xf32>
    %445 = tpu.matmul %94, %444, %cst_467 {dimension_numbers = #tpu.dot_dimension_numbers<[1], [0], [0], [1], [0, 0, 1, 1], [], []>} : vector<7x8xbf16>, vector<8x128xbf16>, vector<7x128xf32> -> vector<7x128xf32>
    %c0_468 = arith.constant 0 : index
    %c0_469 = arith.constant 0 : index
    %c58_470 = arith.constant 58 : index
    %c0_471 = arith.constant 0 : index
    %446 = vector.load %arg5[%c0_468, %c0_469, %c58_470, %c0_471] : memref<1x7x64x128xf32, #tpu.memory_space<vmem>>, vector<1x7x1x128xf32>
    %447 = vector.shape_cast %446 : vector<1x7x1x128xf32> to vector<7x128xf32>
    %448 = vector.shape_cast %445 : vector<7x128xf32> to vector<1x7x1x128xf32>
    tpu.vector_store %arg5[%c0_468, %c0_469, %c58_470, %c0_471], %448 {strides = array<i32>} : memref<1x7x64x128xf32, #tpu.memory_space<vmem>>, vector<1x7x1x128xf32>,
    %c0_472 = arith.constant 0 : index
    %c59 = arith.constant 59 : index
    %c0_473 = arith.constant 0 : index
    %449 = vector.load %arg7[%c0_472, %c59, %c0_473] : memref<8x64x128xbf16, #tpu.memory_space<vmem>>, vector<8x1x128xbf16>
    %450 = vector.shape_cast %449 : vector<8x1x128xbf16> to vector<8x128xbf16>
    %cst_474 = arith.constant dense<0.000000e+00> : vector<7x128xf32>
    %451 = tpu.matmul %94, %450, %cst_474 {dimension_numbers = #tpu.dot_dimension_numbers<[1], [0], [0], [1], [0, 0, 1, 1], [], []>} : vector<7x8xbf16>, vector<8x128xbf16>, vector<7x128xf32> -> vector<7x128xf32>
    %c0_475 = arith.constant 0 : index
    %c0_476 = arith.constant 0 : index
    %c59_477 = arith.constant 59 : index
    %c0_478 = arith.constant 0 : index
    %452 = vector.load %arg5[%c0_475, %c0_476, %c59_477, %c0_478] : memref<1x7x64x128xf32, #tpu.memory_space<vmem>>, vector<1x7x1x128xf32>
    %453 = vector.shape_cast %452 : vector<1x7x1x128xf32> to vector<7x128xf32>
    %454 = vector.shape_cast %451 : vector<7x128xf32> to vector<1x7x1x128xf32>
    tpu.vector_store %arg5[%c0_475, %c0_476, %c59_477, %c0_478], %454 {strides = array<i32>} : memref<1x7x64x128xf32, #tpu.memory_space<vmem>>, vector<1x7x1x128xf32>,
    %c0_479 = arith.constant 0 : index
    %c60 = arith.constant 60 : index
    %c0_480 = arith.constant 0 : index
    %455 = vector.load %arg7[%c0_479, %c60, %c0_480] : memref<8x64x128xbf16, #tpu.memory_space<vmem>>, vector<8x1x128xbf16>
    %456 = vector.shape_cast %455 : vector<8x1x128xbf16> to vector<8x128xbf16>
    %cst_481 = arith.constant dense<0.000000e+00> : vector<7x128xf32>
    %457 = tpu.matmul %94, %456, %cst_481 {dimension_numbers = #tpu.dot_dimension_numbers<[1], [0], [0], [1], [0, 0, 1, 1], [], []>} : vector<7x8xbf16>, vector<8x128xbf16>, vector<7x128xf32> -> vector<7x128xf32>
    %c0_482 = arith.constant 0 : index
    %c0_483 = arith.constant 0 : index
    %c60_484 = arith.constant 60 : index
    %c0_485 = arith.constant 0 : index
    %458 = vector.load %arg5[%c0_482, %c0_483, %c60_484, %c0_485] : memref<1x7x64x128xf32, #tpu.memory_space<vmem>>, vector<1x7x1x128xf32>
    %459 = vector.shape_cast %458 : vector<1x7x1x128xf32> to vector<7x128xf32>
    %460 = vector.shape_cast %457 : vector<7x128xf32> to vector<1x7x1x128xf32>
    tpu.vector_store %arg5[%c0_482, %c0_483, %c60_484, %c0_485], %460 {strides = array<i32>} : memref<1x7x64x128xf32, #tpu.memory_space<vmem>>, vector<1x7x1x128xf32>,
    %c0_486 = arith.constant 0 : index
    %c61 = arith.constant 61 : index
    %c0_487 = arith.constant 0 : index
    %461 = vector.load %arg7[%c0_486, %c61, %c0_487] : memref<8x64x128xbf16, #tpu.memory_space<vmem>>, vector<8x1x128xbf16>
    %462 = vector.shape_cast %461 : vector<8x1x128xbf16> to vector<8x128xbf16>
    %cst_488 = arith.constant dense<0.000000e+00> : vector<7x128xf32>
    %463 = tpu.matmul %94, %462, %cst_488 {dimension_numbers = #tpu.dot_dimension_numbers<[1], [0], [0], [1], [0, 0, 1, 1], [], []>} : vector<7x8xbf16>, vector<8x128xbf16>, vector<7x128xf32> -> vector<7x128xf32>
    %c0_489 = arith.constant 0 : index
    %c0_490 = arith.constant 0 : index
    %c61_491 = arith.constant 61 : index
    %c0_492 = arith.constant 0 : index
    %464 = vector.load %arg5[%c0_489, %c0_490, %c61_491, %c0_492] : memref<1x7x64x128xf32, #tpu.memory_space<vmem>>, vector<1x7x1x128xf32>
    %465 = vector.shape_cast %464 : vector<1x7x1x128xf32> to vector<7x128xf32>
    %466 = vector.shape_cast %463 : vector<7x128xf32> to vector<1x7x1x128xf32>
    tpu.vector_store %arg5[%c0_489, %c0_490, %c61_491, %c0_492], %466 {strides = array<i32>} : memref<1x7x64x128xf32, #tpu.memory_space<vmem>>, vector<1x7x1x128xf32>,
    %c0_493 = arith.constant 0 : index
    %c62 = arith.constant 62 : index
    %c0_494 = arith.constant 0 : index
    %467 = vector.load %arg7[%c0_493, %c62, %c0_494] : memref<8x64x128xbf16, #tpu.memory_space<vmem>>, vector<8x1x128xbf16>
    %468 = vector.shape_cast %467 : vector<8x1x128xbf16> to vector<8x128xbf16>
    %cst_495 = arith.constant dense<0.000000e+00> : vector<7x128xf32>
    %469 = tpu.matmul %94, %468, %cst_495 {dimension_numbers = #tpu.dot_dimension_numbers<[1], [0], [0], [1], [0, 0, 1, 1], [], []>} : vector<7x8xbf16>, vector<8x128xbf16>, vector<7x128xf32> -> vector<7x128xf32>
    %c0_496 = arith.constant 0 : index
    %c0_497 = arith.constant 0 : index
    %c62_498 = arith.constant 62 : index
    %c0_499 = arith.constant 0 : index
    %470 = vector.load %arg5[%c0_496, %c0_497, %c62_498, %c0_499] : memref<1x7x64x128xf32, #tpu.memory_space<vmem>>, vector<1x7x1x128xf32>
    %471 = vector.shape_cast %470 : vector<1x7x1x128xf32> to vector<7x128xf32>
    %472 = vector.shape_cast %469 : vector<7x128xf32> to vector<1x7x1x128xf32>
    tpu.vector_store %arg5[%c0_496, %c0_497, %c62_498, %c0_499], %472 {strides = array<i32>} : memref<1x7x64x128xf32, #tpu.memory_space<vmem>>, vector<1x7x1x128xf32>,
    %c0_500 = arith.constant 0 : index
    %c63 = arith.constant 63 : index
    %c0_501 = arith.constant 0 : index
    %473 = vector.load %arg7[%c0_500, %c63, %c0_501] : memref<8x64x128xbf16, #tpu.memory_space<vmem>>, vector<8x1x128xbf16>
    %474 = vector.shape_cast %473 : vector<8x1x128xbf16> to vector<8x128xbf16>
    %cst_502 = arith.constant dense<0.000000e+00> : vector<7x128xf32>
    %475 = tpu.matmul %94, %474, %cst_502 {dimension_numbers = #tpu.dot_dimension_numbers<[1], [0], [0], [1], [0, 0, 1, 1], [], []>} : vector<7x8xbf16>, vector<8x128xbf16>, vector<7x128xf32> -> vector<7x128xf32>
    %c0_503 = arith.constant 0 : index
    %c0_504 = arith.constant 0 : index
    %c63_505 = arith.constant 63 : index
    %c0_506 = arith.constant 0 : index
    %476 = vector.load %arg5[%c0_503, %c0_504, %c63_505, %c0_506] : memref<1x7x64x128xf32, #tpu.memory_space<vmem>>, vector<1x7x1x128xf32>
    %477 = vector.shape_cast %476 : vector<1x7x1x128xf32> to vector<7x128xf32>
    %478 = vector.shape_cast %475 : vector<7x128xf32> to vector<1x7x1x128xf32>
    tpu.vector_store %arg5[%c0_503, %c0_504, %c63_505, %c0_506], %478 {strides = array<i32>} : memref<1x7x64x128xf32, #tpu.memory_space<vmem>>, vector<1x7x1x128xf32>,
    return
  }
  func.func @transform_0(%arg0: i32, %arg1: i32) -> (i32, i32, i32) {
    %c0_i32 = arith.constant 0 : i32
    %c0_i32_0 = arith.constant 0 : i32
    %c0_i32_1 = arith.constant 0 : i32
    return %arg0, %c0_i32, %c0_i32_0 : i32, i32, i32
  }
  func.func @transform_1(%arg0: i32, %arg1: i32) -> (i32, i32, i32) {
    %c0_i32 = arith.constant 0 : i32
    %c0_i32_0 = arith.constant 0 : i32
    %c0_i32_1 = arith.constant 0 : i32
    return %arg0, %c0_i32, %c0_i32_0 : i32, i32, i32
  }
  func.func @transform_2(%arg0: i32, %arg1: i32) -> (i32, i32) {
    %c0_i32 = arith.constant 0 : i32
    %c0_i32_0 = arith.constant 0 : i32
    return %arg1, %c0_i32 : i32, i32
  }
  func.func @transform_3(%arg0: i32, %arg1: i32) -> (i32, i32, i32, i32) {
    %c0_i32 = arith.constant 0 : i32
    %c0_i32_0 = arith.constant 0 : i32
    %c0_i32_1 = arith.constant 0 : i32
    return %arg0, %c0_i32, %arg1, %c0_i32_0 : i32, i32, i32, i32
  }
}

</mosaic_0001>

<llo_original>
// kernel: maskformer_forward.1
$region0: #{maskformer_forward.1}
  #allocation0 [shape = 'u32[]', space=smem, size = 0x4, offset = 0x4, fixed_abs, tag = 'smem constant byte address 0x4 - core index']
  #allocation1 [shape = 'u32[144,128]{1,0:T(1,128)}', space=vmem, size = 0x12000, scoped, tag = 'internal scratch']
  #allocation2 [shape = 'f32[64,1024]{1,0:T(8,128)}', space=vmem, size = 0x40000, scoped, tag = 'scratch operand']
  #allocation3 [shape = 'bf16[8,64,128]{2,1,0:T(16,128)(2,1)}', space=vmem, size = 0x20000, scoped, tag = 'scratch operand']
  #allocation6 [shape = 's32[]', space=sflag, size = 0x4, offset = 0, fixed_abs, tag = 'sflag constant byte address 0x0 - dummy sync flag']
  %s0 = inlined_call_operand.vmem [shape: bf16[2,7,8], index: 0, kind: input, shape index: {}]
  %s1 = inlined_call_operand.vmem [shape: bf16[2,32,1024], index: 1, kind: input, shape index: {}]
  %s2 = inlined_call_operand.vmem [shape: bf16[128,32], index: 2, kind: input, shape index: {}]
  %s3 = inlined_call_operand.hbm [shape: f32[2,7,128,128], index: 3, kind: output, shape index: {}]
  %s4 = sld [smem:[#allocation0]]
  $region45: #{maskformer_forward.1} parent=0
    _
  %s6 = ssub.s32 1, %s4
  %s7 = scalar_select 0, %s6, %s4
  $region1: #{maskformer_forward.1} parent=0
    #allocation4 [shape = 'u8[458752]{0}', space=vmem, size = 0x70000, scoped, tag = 'output window, operand 0']
    #allocation5 [shape = 's32[2]{0}', space=sflag, size = 0x8, scoped, tag = 'scoped memory for maskformer_forward.1']
    %8 = vsyncpa [#allocation5], 0
    %s9 = scalar_lea.sflag [#allocation5], 1
    %10 = vsyncpa %s9, 0
    loop: start=0, step=1, limit=6
    $region2: #{maskformer_forward.1} parent=1 // loop_pre_header
      _
    $region3: #{maskformer_forward.1} parent=1 // loop_header
      %s12 = sphi 0, %s16
      %p13 = scmp.ge.s32.totalorder %s12, 6
      %s19 = sphi 0, %s31
      %s20 = sphi 0, %s27
      %s21 = sphi 0, %s19
      %s22 = sphi 0, %s20
      %s23 = sphi 0, %s21
      %s24 = sphi 0, %s22
      %s34 = sphi 0, %s36
      %s37 = sphi 0, %s34
      %s38 = sphi 0, %s37
      %s54 = sphi 0, %s38
      %s60 = sphi 0, %s62
      %s63 = sphi 0, %s60
      %s64 = sphi 0, %s63
      %s80 = sphi 0, %s64
      %s86 = sphi 0, %s88
      %s89 = sphi 0, %s86
      %s90 = sphi 0, %s89
      %s106 = sphi 0, %s90
      %s114 = sphi 0, %s116
      %s117 = sphi 0, %s114
      %s118 = sphi 0, %s117
      %s134 = sphi 0, %s118
    $region4: #{maskformer_forward.1} parent=1 // loop_header_branch
      %15 = sbr.rel (%p13) target = $region8
    $region5: #{maskformer_forward.1} parent=1 // loop_body
      %s17 = ssub.s32 %s12, 1
      %s18 = ssub.s32 %s12, 2
      %s25 = sadd.s32 1, %s20
      %p26 = scmp.ge.s32.totalorder %s25, 2
      %s27 = scalar_select %p26, 0, %s25
      %s28 = sadd.s32 1, %s19
      %s29 = scalar_select %p26, %s28, %s19
      %p30 = scmp.ge.s32.totalorder %s29, 2
      %s31 = scalar_select %p30, 0, %s29
      %s32 = ssub.s32 %s19, %s31
      %p33 = scmp.eq.s32.totalorder %s32, 0
      %s35 = sadd.s32 %s34, 1
      %s36 = scalar_select %p33, %s34, %s35
      %p39 = pneg %p33
      %p40 = scmp.eq.s32.totalorder %s12, 3
      %p41 = por %p39, %p40
      %p42 = scmp.ne.s32.totalorder %s34, %s37
      %p43 = scmp.eq.s32.totalorder %s12, 0
      %p44 = por %p42, %p43
      %p45 = scmp.ne.s32.totalorder %s34, %s37
      %p46 = scmp.eq.s32.totalorder %s17, 3
      %p47 = por %p45, %p46
      %p48 = scmp.ne.s32.totalorder %s37, %s38
      %p49 = scmp.eq.s32.totalorder %s17, 0
      %p50 = por %p48, %p49
      %p51 = scmp.ne.s32.totalorder %s37, %s38
      %p52 = scmp.eq.s32.totalorder %s18, 3
      %p53 = por %p51, %p52
      %p55 = scmp.ne.s32.totalorder %s38, %s54
      %p56 = scmp.eq.s32.totalorder %s18, 0
      %p57 = por %p55, %p56
      %s58 = ssub.s32 %s19, %s31
      %p59 = scmp.eq.s32.totalorder %s58, 0
      %s61 = sadd.s32 %s60, 1
      %s62 = scalar_select %p59, %s60, %s61
      %p65 = pneg %p59
      %p66 = scmp.eq.s32.totalorder %s12, 3
      %p67 = por %p65, %p66
      %p68 = scmp.ne.s32.totalorder %s60, %s63
      %p69 = scmp.eq.s32.totalorder %s12, 0
      %p70 = por %p68, %p69
      %p71 = scmp.ne.s32.totalorder %s60, %s63
      %p72 = scmp.eq.s32.totalorder %s17, 3
      %p73 = por %p71, %p72
      %p74 = scmp.ne.s32.totalorder %s63, %s64
      %p75 = scmp.eq.s32.totalorder %s17, 0
      %p76 = por %p74, %p75
      %p77 = scmp.ne.s32.totalorder %s63, %s64
      %p78 = scmp.eq.s32.totalorder %s18, 3
      %p79 = por %p77, %p78
      %p81 = scmp.ne.s32.totalorder %s64, %s80
      %p82 = scmp.eq.s32.totalorder %s18, 0
      %p83 = por %p81, %p82
      %s84 = ssub.s32 %s20, %s27
      %p85 = scmp.eq.s32.totalorder %s84, 0
      %s87 = sadd.s32 %s86, 1
      %s88 = scalar_select %p85, %s86, %s87
      %p91 = pneg %p85
      %p92 = scmp.eq.s32.totalorder %s12, 3
      %p93 = por %p91, %p92
      %p94 = scmp.ne.s32.totalorder %s86, %s89
      %p95 = scmp.eq.s32.totalorder %s12, 0
      %p96 = por %p94, %p95
      %p97 = scmp.ne.s32.totalorder %s86, %s89
      %p98 = scmp.eq.s32.totalorder %s17, 3
      %p99 = por %p97, %p98
      %p100 = scmp.ne.s32.totalorder %s89, %s90
      %p101 = scmp.eq.s32.totalorder %s17, 0
      %p102 = por %p100, %p101
      %p103 = scmp.ne.s32.totalorder %s89, %s90
      %p104 = scmp.eq.s32.totalorder %s18, 3
      %p105 = por %p103, %p104
      %p107 = scmp.ne.s32.totalorder %s90, %s106
      %p108 = scmp.eq.s32.totalorder %s18, 0
      %p109 = por %p107, %p108
      %s110 = ssub.s32 %s19, %s31
      %s111 = ssub.s32 %s20, %s27
      %s112 = sor.u32 %s110, %s111
      %p113 = scmp.eq.s32.totalorder %s112, 0
      %s115 = sadd.s32 %s114, 1
      %s116 = scalar_select %p113, %s114, %s115
      %p119 = pneg %p113
      %p120 = scmp.eq.s32.totalorder %s12, 3
      %p121 = por %p119, %p120
      %p122 = scmp.ne.s32.totalorder %s114, %s117
      %p123 = scmp.eq.s32.totalorder %s12, 0
      %p124 = por %p122, %p123
      %p125 = scmp.ne.s32.totalorder %s114, %s117
      %p126 = scmp.eq.s32.totalorder %s17, 3
      %p127 = por %p125, %p126
      %p128 = scmp.ne.s32.totalorder %s117, %s118
      %p129 = scmp.eq.s32.totalorder %s17, 0
      %p130 = por %p128, %p129
      %p131 = scmp.ne.s32.totalorder %s117, %s118
      %p132 = scmp.eq.s32.totalorder %s18, 3
      %p133 = por %p131, %p132
      %p135 = scmp.ne.s32.totalorder %s118, %s134
      %p136 = scmp.eq.s32.totalorder %s18, 0
      %p137 = por %p135, %p136
      %p138 = scmp.le.s32.totalorder 1, %s12
      %p139 = scmp.lt.s32.totalorder %s12, 5
      %p140 = pnand %p138, %p139
      %p141 = pneg %p140
      // Predicated region
      $region9: #{maskformer_forward.1} parent=5 // pred_check
        _
      $region10: #{maskformer_forward.1} parent=5 // pred_check_branch
        %143 = sbr.rel (%p140) target = $region12
      $region11: #{maskformer_forward.1} parent=5 // pred_region
        %s144 = ssub.s32 %s12, 1
      $region12: #{maskformer_forward.1} parent=5 // pred_fallthru
        _
      %p145 = scmp.lt.s32.totalorder %s12, 4
      // Predicated region
      $region13: #{maskformer_forward.1} parent=5 // pred_check
        %p146 = pneg %p145
      $region14: #{maskformer_forward.1} parent=5 // pred_check_branch
        %148 = sbr.rel (%p146) target = $region16
      $region15: #{maskformer_forward.1} parent=5 // pred_region
        // Predicated region
        $region17: #{maskformer_forward.1} parent=15 // pred_check
          %p149 = pneg %p44
        $region18: #{maskformer_forward.1} parent=15 // pred_check_branch
          %151 = sbr.rel (%p149) target = $region20
        $region19: #{maskformer_forward.1} parent=15 // pred_region
          %p152 = scmp.lt.s32.totalorder %s19, 1
          %s153 = scalar_select %p152, %s19, 1
          %s154 = smul.addr %s153, 4
          %s155 = scalar_lea.vmem %s0, %s154
        $region20: #{maskformer_forward.1} parent=15 // pred_fallthru
          _
        // Predicated region
        $region21: #{maskformer_forward.1} parent=15 // pred_check
          %p156 = pneg %p70
        $region22: #{maskformer_forward.1} parent=15 // pred_check_branch
          %158 = sbr.rel (%p156) target = $region24
        $region23: #{maskformer_forward.1} parent=15 // pred_region
          %p159 = scmp.lt.s32.totalorder %s19, 1
          %s160 = scalar_select %p159, %s19, 1
          %s161 = smul.addr %s160, 32
          %s162 = smul.addr %s161, 4
          %s163 = scalar_lea.vmem %s1, %s162
        $region24: #{maskformer_forward.1} parent=15 // pred_fallthru
          _
        // Predicated region
        $region25: #{maskformer_forward.1} parent=15 // pred_check
          %p164 = pneg %p96
        $region26: #{maskformer_forward.1} parent=15 // pred_check_branch
          %166 = sbr.rel (%p164) target = $region28
        $region27: #{maskformer_forward.1} parent=15 // pred_region
          %s167 = smul.u32 8, %s20
          %p168 = scmp.lt.s32.totalorder %s167, 15
          %s169 = scalar_select %p168, %s167, 15
          %s170 = smul.addr %s169, 4
          %s171 = scalar_lea.vmem %s2, %s170
          %s172 = smul.u32 8, %s20
        $region28: #{maskformer_forward.1} parent=15 // pred_fallthru
          _
      $region16: #{maskformer_forward.1} parent=5 // pred_fallthru
        _
      %p173 = scmp.le.s32.totalorder 1, %s12
      %p174 = scmp.lt.s32.totalorder %s12, 5
      %p175 = pnand %p173, %p174
      %p176 = pneg %p175
      // Predicated region
      $region29: #{maskformer_forward.1} parent=5 // pred_check
        _
      $region30: #{maskformer_forward.1} parent=5 // pred_check_branch
        %178 = sbr.rel (%p175) target = $region32
      $region31: #{maskformer_forward.1} parent=5 // pred_region
        %s179 = ssub.s32 %s12, 1
        %p180 = scmp.lt.s32.totalorder %s21, 1
        %s181 = scalar_select %p180, %s21, 1
        %s182 = smul.addr %s181, 4
        %s183 = scalar_lea.vmem %s0, %s182
        %p184 = pneg %p50
        %p185 = pneg %p47
        %p186 = scmp.lt.s32.totalorder %s21, 1
        %s187 = scalar_select %p186, %s21, 1
        %s188 = smul.addr %s187, 32
        %s189 = smul.addr %s188, 4
        %s190 = scalar_lea.vmem %s1, %s189
        %p191 = pneg %p76
        %p192 = pneg %p73
        %s193 = smul.u32 8, %s22
        %p194 = scmp.lt.s32.totalorder %s193, 15
        %s195 = scalar_select %p194, %s193, 15
        %s196 = smul.addr %s195, 4
        %s197 = scalar_lea.vmem %s2, %s196
        %p198 = pneg %p102
        %p199 = pneg %p99
        %p200 = pneg %p130
        %p201 = pneg %p127
        %s202 = sand.u32 %s117, 1
        %s203 = scalar_lea.sflag [#allocation5], %s202
        %s204 = sand.u32 %s117, 1
        %s205 = smul.addr %s204, 448
        %s206 = scalar_lea.vmem [#allocation4], %s205
        %p207 = scmp.lt.s32.totalorder %s21, 1
        %s208 = scalar_select %p207, %s21, 1
        %s209 = smul.addr %s208, 4
        %s210 = scalar_lea.vmem %s0, %s209
        %p211 = scmp.lt.s32.totalorder %s21, 1
        %s212 = scalar_select %p211, %s21, 1
        %s213 = smul.addr %s212, 32
        %s214 = smul.addr %s213, 4
        %s215 = scalar_lea.vmem %s1, %s214
        %s216 = smul.u32 8, %s22
        %p217 = scmp.lt.s32.totalorder %s216, 15
        %s218 = scalar_select %p217, %s216, 15
        %s219 = smul.addr %s218, 4
        %s220 = scalar_lea.vmem %s2, %s219
        %s221 = smul.u32 8, %s22
        %s222 = smul.u32 8, %s22
        %v224 = vld [vmem:[%s220] sm:$0xf]
        %v225 = vld [vmem:[%s220 + $0x4] sm:$0xf]
        %v226 = vld [vmem:[%s220 + $0x8] sm:$0xf]
        %v227 = vld [vmem:[%s220 + $0xc] sm:$0xf]
        %v228 = vld [vmem:[%s220 + $0x10] sm:$0xf]
        %v229 = vld [vmem:[%s220 + $0x14] sm:$0xf]
        %v230 = vld [vmem:[%s220 + $0x18] sm:$0xf]
        %v231 = vld [vmem:[%s220 + $0x1c] sm:$0xf]
        %v232 = vld [vmem:[%s215] sm:$0xff]
        %v233 = vld [vmem:[%s215 + $0x8] sm:$0xff]
        %v234 = vld [vmem:[%s215 + $0x10] sm:$0xff]
        %v235 = vld [vmem:[%s215 + $0x18] sm:$0xff]
        %v236 = vld [vmem:[%s215 + $0x20] sm:$0xff]
        %v237 = vld [vmem:[%s215 + $0x28] sm:$0xff]
        %v238 = vld [vmem:[%s215 + $0x30] sm:$0xff]
        %v239 = vld [vmem:[%s215 + $0x38] sm:$0xff]
        %v240 = vld [vmem:[%s215 + $0x40] sm:$0xff]
        %v241 = vld [vmem:[%s215 + $0x48] sm:$0xff]
        %v242 = vld [vmem:[%s215 + $0x50] sm:$0xff]
        %v243 = vld [vmem:[%s215 + $0x58] sm:$0xff]
        %v244 = vld [vmem:[%s215 + $0x60] sm:$0xff]
        %v245 = vld [vmem:[%s215 + $0x68] sm:$0xff]
        %v246 = vld [vmem:[%s215 + $0x70] sm:$0xff]
        %v247 = vld [vmem:[%s215 + $0x78] sm:$0xff]
        %v256 = vunpack.c.l.b16 %v224
        %v257 = vunpack.c.l.b16 %v225
        %v258 = vunpack.c.l.b16 %v226
        %v259 = vunpack.c.l.b16 %v227
        %v260 = vunpack.c.l.b16 %v228
        %v261 = vunpack.c.l.b16 %v229
        %v262 = vunpack.c.l.b16 %v230
        %v263 = vunpack.c.l.b16 %v231
        %v264 = vpack.c.b16 %v257, %v256
        %v265 = vpack.c.b16 %v259, %v258
        %v266 = vpack.c.b16 %v261, %v260
        %v267 = vpack.c.b16 %v263, %v262
        %v284 = vunpack.c.l.b16 %v232
        %v285 = vunpack.c.h.b16 %v232
        %v286 = vunpack.c.l.b16 %v233
        %v287 = vunpack.c.h.b16 %v233
        %v288 = vunpack.c.l.b16 %v234
        %v289 = vunpack.c.h.b16 %v234
        %v290 = vunpack.c.l.b16 %v235
        %v291 = vunpack.c.h.b16 %v235
        %v292 = vunpack.c.l.b16 %v236
        %v293 = vunpack.c.h.b16 %v236
        %v294 = vunpack.c.l.b16 %v237
        %v295 = vunpack.c.h.b16 %v237
        %v296 = vunpack.c.l.b16 %v238
        %v297 = vunpack.c.h.b16 %v238
        %v298 = vunpack.c.l.b16 %v239
        %v299 = vunpack.c.h.b16 %v239
        %v300 = vunpack.c.l.b16 %v240
        %v301 = vunpack.c.h.b16 %v240
        %v302 = vunpack.c.l.b16 %v241
        %v303 = vunpack.c.h.b16 %v241
        %v304 = vunpack.c.l.b16 %v242
        %v305 = vunpack.c.h.b16 %v242
        %v306 = vunpack.c.l.b16 %v243
        %v307 = vunpack.c.h.b16 %v243
        %v308 = vunpack.c.l.b16 %v244
        %v309 = vunpack.c.h.b16 %v244
        %v310 = vunpack.c.l.b16 %v245
        %v311 = vunpack.c.h.b16 %v245
        %v312 = vunpack.c.l.b16 %v246
        %v313 = vunpack.c.h.b16 %v246
        %v314 = vunpack.c.l.b16 %v247
        %v315 = vunpack.c.h.b16 %v247
        %v316 = vpack.c.b16 %v292, %v284
        %v317 = vpack.c.b16 %v293, %v285
        %v318 = vpack.c.b16 %v294, %v286
        %v319 = vpack.c.b16 %v295, %v287
        %v320 = vpack.c.b16 %v296, %v288
        %v321 = vpack.c.b16 %v297, %v289
        %v322 = vpack.c.b16 %v298, %v290
        %v323 = vpack.c.b16 %v299, %v291
        %v324 = vpack.c.b16 %v308, %v300
        %v325 = vpack.c.b16 %v309, %v301
        %v326 = vpack.c.b16 %v310, %v302
        %v327 = vpack.c.b16 %v311, %v303
        %v328 = vpack.c.b16 %v312, %v304
        %v329 = vpack.c.b16 %v313, %v305
        %v330 = vpack.c.b16 %v314, %v306
        %v331 = vpack.c.b16 %v315, %v307
        %vm348 = vcmask 261120
        %v350 = vsel %vm348, %v264, 0
        %v353 = vsel %vm348, %v265, 0
        %v356 = vsel %vm348, %v266, 0
        %v359 = vsel %vm348, %v267, 0
        %361 = vmatprep.subr.bf16.mxu0 %v317
        %362 = vmatpush1.bf16.msra.mxu0 %v316
        %363 = vmatprep.subr.bf16.mxu0 %v325
        %364 = vmatpush1.bf16.msra.mxu0 %v324
        %365 = vmatprep.subr.bf16.mxu0 0
        %366 = vmatpush1.bf16.msra.mxu0 0
        %367 = vmatprep.subr.bf16.mxu0 0
        %368 = vmatpush1.bf16.msra.mxu0 0
        %369 = vmatprep.subr.bf16.mxu0 0
        %370 = vmatpush1.bf16.msra.mxu0 0
        %371 = vmatprep.subr.bf16.mxu0 0
        %372 = vmatpush1.bf16.msra.mxu0 0
        %373 = vmatprep.subr.bf16.mxu0 0
        %374 = vmatpush1.bf16.msra.mxu0 0
        %375 = vmatprep.subr.bf16.mxu0 0
        %376 = vmatpush1.bf16.msra.mxu0 0
        %377 = vmatprep.subr.bf16.mxu0 0
        %378 = vmatpush1.bf16.msra.mxu0 0
        %379 = vmatprep.subr.bf16.mxu0 0
        %380 = vmatpush1.bf16.msra.mxu0 0
        %381 = vmatprep.subr.bf16.mxu0 0
        %382 = vmatpush1.bf16.msra.mxu0 0
        %383 = vmatprep.subr.bf16.mxu0 0
        %384 = vmatpush1.bf16.msra.mxu0 0
        %385 = vmatprep.subr.bf16.mxu0 0
        %386 = vmatpush1.bf16.msra.mxu0 0
        %387 = vmatprep.subr.bf16.mxu0 0
        %388 = vmatpush1.bf16.msra.mxu0 0
        %389 = vmatprep.subr.bf16.mxu0 0
        %390 = vmatpush1.bf16.msra.mxu0 0
        %391 = vmatprep.subr.bf16.mxu0 0
        %392 = vmatpush1.bf16.msra.mxu0 0
        %393 = vmatprep.mubr.bf16.mxu0 0
        %394 = vmatmul.mubr.bf16.gmra.mrb[0].mxu0 %v350
        %v395 = vpop.f32.mrb[0].mxu0
        %v396 = vadd.f32 0.0, %v395
        %v397 = vpop.f32.mrb[0].mxu0
        %v398 = vadd.f32 0.0, %v397
        %v399 = vpop.f32.mrb[0].mxu0
        %v400 = vadd.f32 0.0, %v399
        %v401 = vpop.f32.mrb[0].mxu0
        %v402 = vadd.f32 0.0, %v401
        %403 = vmatprep.mubr.bf16.mxu0 0
        %404 = vmatmul.mubr.bf16.gmra.mrb[0].mxu0 %v353
        %v405 = vpop.f32.mrb[0].mxu0
        %v406 = vadd.f32 0.0, %v405
        %v407 = vpop.f32.mrb[0].mxu0
        %v408 = vadd.f32 0.0, %v407
        %v409 = vpop.f32.mrb[0].mxu0
        %v410 = vadd.f32 0.0, %v409
        %v411 = vpop.f32.mrb[0].mxu0
        %v412 = vadd.f32 0.0, %v411
        %413 = vmatprep.mubr.bf16.mxu0 0
        %414 = vmatmul.mubr.bf16.gmra.mrb[0].mxu0 %v356
        %v415 = vpop.f32.mrb[0].mxu0
        %v416 = vadd.f32 0.0, %v415
        %v417 = vpop.f32.mrb[0].mxu0
        %v418 = vadd.f32 0.0, %v417
        %v419 = vpop.f32.mrb[0].mxu0
        %v420 = vadd.f32 0.0, %v419
        %v421 = vpop.f32.mrb[0].mxu0
        %v422 = vadd.f32 0.0, %v421
        %423 = vmatprep.mubr.bf16.mxu0 0
        %424 = vmatmul.mubr.bf16.gmra.mrb[0].mxu0 %v359
        %v425 = vpop.f32.mrb[0].mxu0
        %v426 = vadd.f32 0.0, %v425
        %v427 = vpop.f32.mrb[0].mxu0
        %v428 = vadd.f32 0.0, %v427
        %v429 = vpop.f32.mrb[0].mxu0
        %v430 = vadd.f32 0.0, %v429
        %v431 = vpop.f32.mrb[0].mxu0
        %v432 = vadd.f32 0.0, %v431
        %433 = vdwg.mxu0
        %434 = vmatprep.subr.bf16.mxu0 %v319
        %435 = vmatpush1.bf16.msra.mxu0 %v318
        %436 = vmatprep.subr.bf16.mxu0 %v327
        %437 = vmatpush1.bf16.msra.mxu0 %v326
        %438 = vmatprep.subr.bf16.mxu0 0
        %439 = vmatpush1.bf16.msra.mxu0 0
        %440 = vmatprep.subr.bf16.mxu0 0
        %441 = vmatpush1.bf16.msra.mxu0 0
        %442 = vmatprep.subr.bf16.mxu0 0
        %443 = vmatpush1.bf16.msra.mxu0 0
        %444 = vmatprep.subr.bf16.mxu0 0
        %445 = vmatpush1.bf16.msra.mxu0 0
        %446 = vmatprep.subr.bf16.mxu0 0
        %447 = vmatpush1.bf16.msra.mxu0 0
        %448 = vmatprep.subr.bf16.mxu0 0
        %449 = vmatpush1.bf16.msra.mxu0 0
        %450 = vmatprep.subr.bf16.mxu0 0
        %451 = vmatpush1.bf16.msra.mxu0 0
        %452 = vmatprep.subr.bf16.mxu0 0
        %453 = vmatpush1.bf16.msra.mxu0 0
        %454 = vmatprep.subr.bf16.mxu0 0
        %455 = vmatpush1.bf16.msra.mxu0 0
        %456 = vmatprep.subr.bf16.mxu0 0
        %457 = vmatpush1.bf16.msra.mxu0 0
        %458 = vmatprep.subr.bf16.mxu0 0
        %459 = vmatpush1.bf16.msra.mxu0 0
        %460 = vmatprep.subr.bf16.mxu0 0
        %461 = vmatpush1.bf16.msra.mxu0 0
        %462 = vmatprep.subr.bf16.mxu0 0
        %463 = vmatpush1.bf16.msra.mxu0 0
        %464 = vmatprep.subr.bf16.mxu0 0
        %465 = vmatpush1.bf16.msra.mxu0 0
        %466 = vmatprep.mubr.bf16.mxu0 0
        %467 = vmatmul.mubr.bf16.gmra.mrb[0].mxu0 %v350
        %v468 = vpop.f32.mrb[0].mxu0
        %v469 = vadd.f32 0.0, %v468
        %v470 = vpop.f32.mrb[0].mxu0
        %v471 = vadd.f32 0.0, %v470
        %v472 = vpop.f32.mrb[0].mxu0
        %v473 = vadd.f32 0.0, %v472
        %v474 = vpop.f32.mrb[0].mxu0
        %v475 = vadd.f32 0.0, %v474
        %476 = vmatprep.mubr.bf16.mxu0 0
        %477 = vmatmul.mubr.bf16.gmra.mrb[0].mxu0 %v353
        %v478 = vpop.f32.mrb[0].mxu0
        %v479 = vadd.f32 0.0, %v478
        %v480 = vpop.f32.mrb[0].mxu0
        %v481 = vadd.f32 0.0, %v480
        %v482 = vpop.f32.mrb[0].mxu0
        %v483 = vadd.f32 0.0, %v482
        %v484 = vpop.f32.mrb[0].mxu0
        %v485 = vadd.f32 0.0, %v484
        %486 = vmatprep.mubr.bf16.mxu0 0
        %487 = vmatmul.mubr.bf16.gmra.mrb[0].mxu0 %v356
        %v488 = vpop.f32.mrb[0].mxu0
        %v489 = vadd.f32 0.0, %v488
        %v490 = vpop.f32.mrb[0].mxu0
        %v491 = vadd.f32 0.0, %v490
        %v492 = vpop.f32.mrb[0].mxu0
        %v493 = vadd.f32 0.0, %v492
        %v494 = vpop.f32.mrb[0].mxu0
        %v495 = vadd.f32 0.0, %v494
        %496 = vmatprep.mubr.bf16.mxu0 0
        %497 = vmatmul.mubr.bf16.gmra.mrb[0].mxu0 %v359
        %v498 = vpop.f32.mrb[0].mxu0
        %v499 = vadd.f32 0.0, %v498
        %v500 = vpop.f32.mrb[0].mxu0
        %v501 = vadd.f32 0.0, %v500
        %v502 = vpop.f32.mrb[0].mxu0
        %v503 = vadd.f32 0.0, %v502
        %v504 = vpop.f32.mrb[0].mxu0
        %v505 = vadd.f32 0.0, %v504
        %506 = vdwg.mxu0
        %507 = vmatprep.subr.bf16.mxu0 %v321
        %508 = vmatpush1.bf16.msra.mxu0 %v320
        %509 = vmatprep.subr.bf16.mxu0 %v329
        %510 = vmatpush1.bf16.msra.mxu0 %v328
        %511 = vmatprep.subr.bf16.mxu0 0
        %512 = vmatpush1.bf16.msra.mxu0 0
        %513 = vmatprep.subr.bf16.mxu0 0
        %514 = vmatpush1.bf16.msra.mxu0 0
        %515 = vmatprep.subr.bf16.mxu0 0
        %516 = vmatpush1.bf16.msra.mxu0 0
        %517 = vmatprep.subr.bf16.mxu0 0
        %518 = vmatpush1.bf16.msra.mxu0 0
        %519 = vmatprep.subr.bf16.mxu0 0
        %520 = vmatpush1.bf16.msra.mxu0 0
        %521 = vmatprep.subr.bf16.mxu0 0
        %522 = vmatpush1.bf16.msra.mxu0 0
        %523 = vmatprep.subr.bf16.mxu0 0
        %524 = vmatpush1.bf16.msra.mxu0 0
        %525 = vmatprep.subr.bf16.mxu0 0
        %526 = vmatpush1.bf16.msra.mxu0 0
        %527 = vmatprep.subr.bf16.mxu0 0
        %528 = vmatpush1.bf16.msra.mxu0 0
        %529 = vmatprep.subr.bf16.mxu0 0
        %530 = vmatpush1.bf16.msra.mxu0 0
        %531 = vmatprep.subr.bf16.mxu0 0
        %532 = vmatpush1.bf16.msra.mxu0 0
        %533 = vmatprep.subr.bf16.mxu0 0
        %534 = vmatpush1.bf16.msra.mxu0 0
        %535 = vmatprep.subr.bf16.mxu0 0
        %536 = vmatpush1.bf16.msra.mxu0 0
        %537 = vmatprep.subr.bf16.mxu0 0
        %538 = vmatpush1.bf16.msra.mxu0 0
        %539 = vmatprep.mubr.bf16.mxu0 0
        %540 = vmatmul.mubr.bf16.gmra.mrb[0].mxu0 %v350
        %v541 = vpop.f32.mrb[0].mxu0
        %v542 = vadd.f32 0.0, %v541
        %v543 = vpop.f32.mrb[0].mxu0
        %v544 = vadd.f32 0.0, %v543
        %v545 = vpop.f32.mrb[0].mxu0
        %v546 = vadd.f32 0.0, %v545
        %v547 = vpop.f32.mrb[0].mxu0
        %v548 = vadd.f32 0.0, %v547
        %549 = vmatprep.mubr.bf16.mxu0 0
        %550 = vmatmul.mubr.bf16.gmra.mrb[0].mxu0 %v353
        %v551 = vpop.f32.mrb[0].mxu0
        %v552 = vadd.f32 0.0, %v551
        %v553 = vpop.f32.mrb[0].mxu0
        %v554 = vadd.f32 0.0, %v553
        %v555 = vpop.f32.mrb[0].mxu0
        %v556 = vadd.f32 0.0, %v555
        %v557 = vpop.f32.mrb[0].mxu0
        %v558 = vadd.f32 0.0, %v557
        %559 = vmatprep.mubr.bf16.mxu0 0
        %560 = vmatmul.mubr.bf16.gmra.mrb[0].mxu0 %v356
        %v561 = vpop.f32.mrb[0].mxu0
        %v562 = vadd.f32 0.0, %v561
        %v563 = vpop.f32.mrb[0].mxu0
        %v564 = vadd.f32 0.0, %v563
        %v565 = vpop.f32.mrb[0].mxu0
        %v566 = vadd.f32 0.0, %v565
        %v567 = vpop.f32.mrb[0].mxu0
        %v568 = vadd.f32 0.0, %v567
        %569 = vmatprep.mubr.bf16.mxu0 0
        %570 = vmatmul.mubr.bf16.gmra.mrb[0].mxu0 %v359
        %v571 = vpop.f32.mrb[0].mxu0
        %v572 = vadd.f32 0.0, %v571
        %v573 = vpop.f32.mrb[0].mxu0
        %v574 = vadd.f32 0.0, %v573
        %v575 = vpop.f32.mrb[0].mxu0
        %v576 = vadd.f32 0.0, %v575
        %v577 = vpop.f32.mrb[0].mxu0
        %v578 = vadd.f32 0.0, %v577
        %579 = vdwg.mxu0
        %580 = vmatprep.subr.bf16.mxu0 %v323
        %581 = vmatpush1.bf16.msra.mxu0 %v322
        %582 = vmatprep.subr.bf16.mxu0 %v331
        %583 = vmatpush1.bf16.msra.mxu0 %v330
        %584 = vmatprep.subr.bf16.mxu0 0
        %585 = vmatpush1.bf16.msra.mxu0 0
        %586 = vmatprep.subr.bf16.mxu0 0
        %587 = vmatpush1.bf16.msra.mxu0 0
        %588 = vmatprep.subr.bf16.mxu0 0
        %589 = vmatpush1.bf16.msra.mxu0 0
        %590 = vmatprep.subr.bf16.mxu0 0
        %591 = vmatpush1.bf16.msra.mxu0 0
        %592 = vmatprep.subr.bf16.mxu0 0
        %593 = vmatpush1.bf16.msra.mxu0 0
        %594 = vmatprep.subr.bf16.mxu0 0
        %595 = vmatpush1.bf16.msra.mxu0 0
        %596 = vmatprep.subr.bf16.mxu0 0
        %597 = vmatpush1.bf16.msra.mxu0 0
        %598 = vmatprep.subr.bf16.mxu0 0
        %599 = vmatpush1.bf16.msra.mxu0 0
        %600 = vmatprep.subr.bf16.mxu0 0
        %601 = vmatpush1.bf16.msra.mxu0 0
        %602 = vmatprep.subr.bf16.mxu0 0
        %603 = vmatpush1.bf16.msra.mxu0 0
        %604 = vmatprep.subr.bf16.mxu0 0
        %605 = vmatpush1.bf16.msra.mxu0 0
        %606 = vmatprep.subr.bf16.mxu0 0
        %607 = vmatpush1.bf16.msra.mxu0 0
        %608 = vmatprep.subr.bf16.mxu0 0
        %609 = vmatpush1.bf16.msra.mxu0 0
        %610 = vmatprep.subr.bf16.mxu0 0
        %611 = vmatpush1.bf16.msra.mxu0 0
        %612 = vmatprep.mubr.bf16.mxu0 0
        %613 = vmatmul.mubr.bf16.gmra.mrb[0].mxu0 %v350
        %v614 = vpop.f32.mrb[0].mxu0
        %v615 = vadd.f32 0.0, %v614
        %v616 = vpop.f32.mrb[0].mxu0
        %v617 = vadd.f32 0.0, %v616
        %v618 = vpop.f32.mrb[0].mxu0
        %v619 = vadd.f32 0.0, %v618
        %v620 = vpop.f32.mrb[0].mxu0
        %v621 = vadd.f32 0.0, %v620
        %622 = vmatprep.mubr.bf16.mxu0 0
        %623 = vmatmul.mubr.bf16.gmra.mrb[0].mxu0 %v353
        %v624 = vpop.f32.mrb[0].mxu0
        %v625 = vadd.f32 0.0, %v624
        %v626 = vpop.f32.mrb[0].mxu0
        %v627 = vadd.f32 0.0, %v626
        %v628 = vpop.f32.mrb[0].mxu0
        %v629 = vadd.f32 0.0, %v628
        %v630 = vpop.f32.mrb[0].mxu0
        %v631 = vadd.f32 0.0, %v630
        %632 = vmatprep.mubr.bf16.mxu0 0
        %633 = vmatmul.mubr.bf16.gmra.mrb[0].mxu0 %v356
        %v634 = vpop.f32.mrb[0].mxu0
        %v635 = vadd.f32 0.0, %v634
        %v636 = vpop.f32.mrb[0].mxu0
        %v637 = vadd.f32 0.0, %v636
        %v638 = vpop.f32.mrb[0].mxu0
        %v639 = vadd.f32 0.0, %v638
        %v640 = vpop.f32.mrb[0].mxu0
        %v641 = vadd.f32 0.0, %v640
        %642 = vmatprep.mubr.bf16.mxu0 0
        %643 = vmatmul.mubr.bf16.gmra.mrb[0].mxu0 %v359
        %v644 = vpop.f32.mrb[0].mxu0
        %v645 = vadd.f32 0.0, %v644
        %v646 = vpop.f32.mrb[0].mxu0
        %v647 = vadd.f32 0.0, %v646
        %v648 = vpop.f32.mrb[0].mxu0
        %v649 = vadd.f32 0.0, %v648
        %v650 = vpop.f32.mrb[0].mxu0
        %v651 = vadd.f32 0.0, %v650
        %652 = vdwg.mxu0
        %653 = vst [vmem:[#allocation2] sm:$0xff] %v396
        %654 = vst [vmem:[#allocation2 + $0x8] sm:$0xff] %v398
        %655 = vst [vmem:[#allocation2 + $0x10] sm:$0xff] %v469
        %656 = vst [vmem:[#allocation2 + $0x18] sm:$0xff] %v471
        %657 = vst [vmem:[#allocation2 + $0x20] sm:$0xff] %v542
        %658 = vst [vmem:[#allocation2 + $0x28] sm:$0xff] %v544
        %659 = vst [vmem:[#allocation2 + $0x30] sm:$0xff] %v615
        %660 = vst [vmem:[#allocation2 + $0x38] sm:$0xff] %v617
        %661 = vst [vmem:[#allocation2 + $0x40] sm:$0xff] %v400
        %662 = vst [vmem:[#allocation2 + $0x48] sm:$0xff] %v402
        %663 = vst [vmem:[#allocation2 + $0x50] sm:$0xff] %v473
        %664 = vst [vmem:[#allocation2 + $0x58] sm:$0xff] %v475
        %665 = vst [vmem:[#allocation2 + $0x60] sm:$0xff] %v546
        %666 = vst [vmem:[#allocation2 + $0x68] sm:$0xff] %v548
        %667 = vst [vmem:[#allocation2 + $0x70] sm:$0xff] %v619
        %668 = vst [vmem:[#allocation2 + $0x78] sm:$0xff] %v621
        %669 = vst [vmem:[#allocation2 + $0x80] sm:$0xff] %v406
        %670 = vst [vmem:[#allocation2 + $0x88] sm:$0xff] %v408
        %671 = vst [vmem:[#allocation2 + $0x90] sm:$0xff] %v479
        %672 = vst [vmem:[#allocation2 + $0x98] sm:$0xff] %v481
        %673 = vst [vmem:[#allocation2 + $0xa0] sm:$0xff] %v552
        %674 = vst [vmem:[#allocation2 + $0xa8] sm:$0xff] %v554
        %675 = vst [vmem:[#allocation2 + $0xb0] sm:$0xff] %v625
        %676 = vst [vmem:[#allocation2 + $0xb8] sm:$0xff] %v627
        %677 = vst [vmem:[#allocation2 + $0xc0] sm:$0xff] %v410
        %678 = vst [vmem:[#allocation2 + $0xc8] sm:$0xff] %v412
        %679 = vst [vmem:[#allocation2 + $0xd0] sm:$0xff] %v483
        %680 = vst [vmem:[#allocation2 + $0xd8] sm:$0xff] %v485
        %681 = vst [vmem:[#allocation2 + $0xe0] sm:$0xff] %v556
        %682 = vst [vmem:[#allocation2 + $0xe8] sm:$0xff] %v558
        %683 = vst [vmem:[#allocation2 + $0xf0] sm:$0xff] %v629
        %684 = vst [vmem:[#allocation2 + $0xf8] sm:$0xff] %v631
        %685 = vst [vmem:[#allocation2 + $0x100] sm:$0xff] %v416
        %686 = vst [vmem:[#allocation2 + $0x108] sm:$0xff] %v418
        %687 = vst [vmem:[#allocation2 + $0x110] sm:$0xff] %v489
        %688 = vst [vmem:[#allocation2 + $0x118] sm:$0xff] %v491
        %689 = vst [vmem:[#allocation2 + $0x120] sm:$0xff] %v562
        %690 = vst [vmem:[#allocation2 + $0x128] sm:$0xff] %v564
        %691 = vst [vmem:[#allocation2 + $0x130] sm:$0xff] %v635
        %692 = vst [vmem:[#allocation2 + $0x138] sm:$0xff] %v637
        %693 = vst [vmem:[#allocation2 + $0x140] sm:$0xff] %v420
        %694 = vst [vmem:[#allocation2 + $0x148] sm:$0xff] %v422
        %695 = vst [vmem:[#allocation2 + $0x150] sm:$0xff] %v493
        %696 = vst [vmem:[#allocation2 + $0x158] sm:$0xff] %v495
        %697 = vst [vmem:[#allocation2 + $0x160] sm:$0xff] %v566
        %698 = vst [vmem:[#allocation2 + $0x168] sm:$0xff] %v568
        %699 = vst [vmem:[#allocation2 + $0x170] sm:$0xff] %v639
        %700 = vst [vmem:[#allocation2 + $0x178] sm:$0xff] %v641
        %701 = vst [vmem:[#allocation2 + $0x180] sm:$0xff] %v426
        %702 = vst [vmem:[#allocation2 + $0x188] sm:$0xff] %v428
        %703 = vst [vmem:[#allocation2 + $0x190] sm:$0xff] %v499
        %704 = vst [vmem:[#allocation2 + $0x198] sm:$0xff] %v501
        %705 = vst [vmem:[#allocation2 + $0x1a0] sm:$0xff] %v572
        %706 = vst [vmem:[#allocation2 + $0x1a8] sm:$0xff] %v574
        %707 = vst [vmem:[#allocation2 + $0x1b0] sm:$0xff] %v645
        %708 = vst [vmem:[#allocation2 + $0x1b8] sm:$0xff] %v647
        %709 = vst [vmem:[#allocation2 + $0x1c0] sm:$0xff] %v430
        %710 = vst [vmem:[#allocation2 + $0x1c8] sm:$0xff] %v432
        %711 = vst [vmem:[#allocation2 + $0x1d0] sm:$0xff] %v503
        %712 = vst [vmem:[#allocation2 + $0x1d8] sm:$0xff] %v505
        %713 = vst [vmem:[#allocation2 + $0x1e0] sm:$0xff] %v576
        %714 = vst [vmem:[#allocation2 + $0x1e8] sm:$0xff] %v578
        %715 = vst [vmem:[#allocation2 + $0x1f0] sm:$0xff] %v649
        %716 = vst [vmem:[#allocation2 + $0x1f8] sm:$0xff] %v651
        %v717 = vld [vmem:[#allocation2] sm:$0xff]
        %v718 = vld [vmem:[#allocation2 + $0x40] sm:$0xff]
        %v719 = vld [vmem:[#allocation2 + $0x80] sm:$0xff]
        %v720 = vld [vmem:[#allocation2 + $0xc0] sm:$0xff]
        %v721 = vld [vmem:[#allocation2 + $0x100] sm:$0xff]
        %v722 = vld [vmem:[#allocation2 + $0x140] sm:$0xff]
        %v723 = vld [vmem:[#allocation2 + $0x180] sm:$0xff]
        %v724 = vld [vmem:[#allocation2 + $0x1c0] sm:$0xff]
        %v725 = vsub.f32 0.0, %v717
        %v726 = vsub.f32 0.0, %v718
        %v727 = vsub.f32 0.0, %v719
        %v728 = vsub.f32 0.0, %v720
        %v729 = vsub.f32 0.0, %v721
        %v730 = vsub.f32 0.0, %v722
        %v731 = vsub.f32 0.0, %v723
        %v732 = vsub.f32 0.0, %v724
        %v733 = vmul.f32 %v725, 1.442695
        %v734 = vpow.pop %v733
        %v735 = vmul.f32 %v726, 1.442695
        %v736 = vpow.pop %v735
        %v737 = vmul.f32 %v727, 1.442695
        %v738 = vpow.pop %v737
        %v739 = vmul.f32 %v728, 1.442695
        %v740 = vpow.pop %v739
        %v741 = vmul.f32 %v729, 1.442695
        %v742 = vpow.pop %v741
        %v743 = vmul.f32 %v730, 1.442695
        %v744 = vpow.pop %v743
        %v745 = vmul.f32 %v731, 1.442695
        %v746 = vpow.pop %v745
        %v747 = vmul.f32 %v732, 1.442695
        %v748 = vpow.pop %v747
        %v749 = vadd.f32 %v734, 1.0
        %v750 = vadd.f32 %v736, 1.0
        %v751 = vadd.f32 %v738, 1.0
        %v752 = vadd.f32 %v740, 1.0
        %v753 = vadd.f32 %v742, 1.0
        %v754 = vadd.f32 %v744, 1.0
        %v755 = vadd.f32 %v746, 1.0
        %v756 = vadd.f32 %v748, 1.0
        %v757 = vrcp.pop %v749
        %v758 = vrcp.pop %v750
        %v759 = vrcp.pop %v751
        %v760 = vrcp.pop %v752
        %v761 = vrcp.pop %v753
        %v762 = vrcp.pop %v754
        %v763 = vrcp.pop %v755
        %v764 = vrcp.pop %v756
        %v765 = vpack.c.bf16 %v758, %v757
        %v766 = vpack.c.bf16 %v760, %v759
        %v767 = vpack.c.bf16 %v762, %v761
        %v768 = vpack.c.bf16 %v764, %v763
        %769 = vst [vmem:[#allocation3] sm:$0xff] %v765
        %770 = vst [vmem:[#allocation3 + $0x8] sm:$0xff] %v766
        %771 = vst [vmem:[#allocation3 + $0x10] sm:$0xff] %v767
        %772 = vst [vmem:[#allocation3 + $0x18] sm:$0xff] %v768
        %v773 = vld [vmem:[#allocation2 + $0x8] sm:$0xff]
        %v774 = vld [vmem:[#allocation2 + $0x48] sm:$0xff]
        %v775 = vld [vmem:[#allocation2 + $0x88] sm:$0xff]
        %v776 = vld [vmem:[#allocation2 + $0xc8] sm:$0xff]
        %v777 = vld [vmem:[#allocation2 + $0x108] sm:$0xff]
        %v778 = vld [vmem:[#allocation2 + $0x148] sm:$0xff]
        %v779 = vld [vmem:[#allocation2 + $0x188] sm:$0xff]
        %v780 = vld [vmem:[#allocation2 + $0x1c8] sm:$0xff]
        %v781 = vsub.f32 0.0, %v773
        %v782 = vsub.f32 0.0, %v774
        %v783 = vsub.f32 0.0, %v775
        %v784 = vsub.f32 0.0, %v776
        %v785 = vsub.f32 0.0, %v777
        %v786 = vsub.f32 0.0, %v778
        %v787 = vsub.f32 0.0, %v779
        %v788 = vsub.f32 0.0, %v780
        %v789 = vmul.f32 %v781, 1.442695
        %v790 = vpow.pop %v789
        %v791 = vmul.f32 %v782, 1.442695
        %v792 = vpow.pop %v791
        %v793 = vmul.f32 %v783, 1.442695
        %v794 = vpow.pop %v793
        %v795 = vmul.f32 %v784, 1.442695
        %v796 = vpow.pop %v795
        %v797 = vmul.f32 %v785, 1.442695
        %v798 = vpow.pop %v797
        %v799 = vmul.f32 %v786, 1.442695
        %v800 = vpow.pop %v799
        %v801 = vmul.f32 %v787, 1.442695
        %v802 = vpow.pop %v801
        %v803 = vmul.f32 %v788, 1.442695
        %v804 = vpow.pop %v803
        %v805 = vadd.f32 %v790, 1.0
        %v806 = vadd.f32 %v792, 1.0
        %v807 = vadd.f32 %v794, 1.0
        %v808 = vadd.f32 %v796, 1.0
        %v809 = vadd.f32 %v798, 1.0
        %v810 = vadd.f32 %v800, 1.0
        %v811 = vadd.f32 %v802, 1.0
        %v812 = vadd.f32 %v804, 1.0
        %v813 = vrcp.pop %v805
        %v814 = vrcp.pop %v806
        %v815 = vrcp.pop %v807
        %v816 = vrcp.pop %v808
        %v817 = vrcp.pop %v809
        %v818 = vrcp.pop %v810
        %v819 = vrcp.pop %v811
        %v820 = vrcp.pop %v812
        %v821 = vpack.c.bf16 %v814, %v813
        %v822 = vpack.c.bf16 %v816, %v815
        %v823 = vpack.c.bf16 %v818, %v817
        %v824 = vpack.c.bf16 %v820, %v819
        %s825 = scalar_lea.vmem [#allocation3], 32
        %826 = vst [vmem:[%s825] sm:$0xff] %v821
        %827 = vst [vmem:[%s825 + $0x8] sm:$0xff] %v822
        %828 = vst [vmem:[%s825 + $0x10] sm:$0xff] %v823
        %829 = vst [vmem:[%s825 + $0x18] sm:$0xff] %v824
        %v830 = vld [vmem:[#allocation2 + $0x10] sm:$0xff]
        %v831 = vld [vmem:[#allocation2 + $0x50] sm:$0xff]
        %v832 = vld [vmem:[#allocation2 + $0x90] sm:$0xff]
        %v833 = vld [vmem:[#allocation2 + $0xd0] sm:$0xff]
        %v834 = vld [vmem:[#allocation2 + $0x110] sm:$0xff]
        %v835 = vld [vmem:[#allocation2 + $0x150] sm:$0xff]
        %v836 = vld [vmem:[#allocation2 + $0x190] sm:$0xff]
        %v837 = vld [vmem:[#allocation2 + $0x1d0] sm:$0xff]
        %v838 = vsub.f32 0.0, %v830
        %v839 = vsub.f32 0.0, %v831
        %v840 = vsub.f32 0.0, %v832
        %v841 = vsub.f32 0.0, %v833
        %v842 = vsub.f32 0.0, %v834
        %v843 = vsub.f32 0.0, %v835
        %v844 = vsub.f32 0.0, %v836
        %v845 = vsub.f32 0.0, %v837
        %v846 = vmul.f32 %v838, 1.442695
        %v847 = vpow.pop %v846
        %v848 = vmul.f32 %v839, 1.442695
        %v849 = vpow.pop %v848
        %v850 = vmul.f32 %v840, 1.442695
        %v851 = vpow.pop %v850
        %v852 = vmul.f32 %v841, 1.442695
        %v853 = vpow.pop %v852
        %v854 = vmul.f32 %v842, 1.442695
        %v855 = vpow.pop %v854
        %v856 = vmul.f32 %v843, 1.442695
        %v857 = vpow.pop %v856
        %v858 = vmul.f32 %v844, 1.442695
        %v859 = vpow.pop %v858
        %v860 = vmul.f32 %v845, 1.442695
        %v861 = vpow.pop %v860
        %v862 = vadd.f32 %v847, 1.0
        %v863 = vadd.f32 %v849, 1.0
        %v864 = vadd.f32 %v851, 1.0
        %v865 = vadd.f32 %v853, 1.0
        %v866 = vadd.f32 %v855, 1.0
        %v867 = vadd.f32 %v857, 1.0
        %v868 = vadd.f32 %v859, 1.0
        %v869 = vadd.f32 %v861, 1.0
        %v870 = vrcp.pop %v862
        %v871 = vrcp.pop %v863
        %v872 = vrcp.pop %v864
        %v873 = vrcp.pop %v865
        %v874 = vrcp.pop %v866
        %v875 = vrcp.pop %v867
        %v876 = vrcp.pop %v868
        %v877 = vrcp.pop %v869
        %v878 = vpack.c.bf16 %v871, %v870
        %v879 = vpack.c.bf16 %v873, %v872
        %v880 = vpack.c.bf16 %v875, %v874
        %v881 = vpack.c.bf16 %v877, %v876
        %s882 = scalar_lea.vmem [#allocation3], 64
        %883 = vst [vmem:[%s882] sm:$0xff] %v878
        %884 = vst [vmem:[%s882 + $0x8] sm:$0xff] %v879
        %885 = vst [vmem:[%s882 + $0x10] sm:$0xff] %v880
        %886 = vst [vmem:[%s882 + $0x18] sm:$0xff] %v881
        %v887 = vld [vmem:[#allocation2 + $0x18] sm:$0xff]
        %v888 = vld [vmem:[#allocation2 + $0x58] sm:$0xff]
        %v889 = vld [vmem:[#allocation2 + $0x98] sm:$0xff]
        %v890 = vld [vmem:[#allocation2 + $0xd8] sm:$0xff]
        %v891 = vld [vmem:[#allocation2 + $0x118] sm:$0xff]
        %v892 = vld [vmem:[#allocation2 + $0x158] sm:$0xff]
        %v893 = vld [vmem:[#allocation2 + $0x198] sm:$0xff]
        %v894 = vld [vmem:[#allocation2 + $0x1d8] sm:$0xff]
        %v895 = vsub.f32 0.0, %v887
        %v896 = vsub.f32 0.0, %v888
        %v897 = vsub.f32 0.0, %v889
        %v898 = vsub.f32 0.0, %v890
        %v899 = vsub.f32 0.0, %v891
        %v900 = vsub.f32 0.0, %v892
        %v901 = vsub.f32 0.0, %v893
        %v902 = vsub.f32 0.0, %v894
        %v903 = vmul.f32 %v895, 1.442695
        %v904 = vpow.pop %v903
        %v905 = vmul.f32 %v896, 1.442695
        %v906 = vpow.pop %v905
        %v907 = vmul.f32 %v897, 1.442695
        %v908 = vpow.pop %v907
        %v909 = vmul.f32 %v898, 1.442695
        %v910 = vpow.pop %v909
        %v911 = vmul.f32 %v899, 1.442695
        %v912 = vpow.pop %v911
        %v913 = vmul.f32 %v900, 1.442695
        %v914 = vpow.pop %v913
        %v915 = vmul.f32 %v901, 1.442695
        %v916 = vpow.pop %v915
        %v917 = vmul.f32 %v902, 1.442695
        %v918 = vpow.pop %v917
        %v919 = vadd.f32 %v904, 1.0
        %v920 = vadd.f32 %v906, 1.0
        %v921 = vadd.f32 %v908, 1.0
        %v922 = vadd.f32 %v910, 1.0
        %v923 = vadd.f32 %v912, 1.0
        %v924 = vadd.f32 %v914, 1.0
        %v925 = vadd.f32 %v916, 1.0
        %v926 = vadd.f32 %v918, 1.0
        %v927 = vrcp.pop %v919
        %v928 = vrcp.pop %v920
        %v929 = vrcp.pop %v921
        %v930 = vrcp.pop %v922
        %v931 = vrcp.pop %v923
        %v932 = vrcp.pop %v924
        %v933 = vrcp.pop %v925
        %v934 = vrcp.pop %v926
        %v935 = vpack.c.bf16 %v928, %v927
        %v936 = vpack.c.bf16 %v930, %v929
        %v937 = vpack.c.bf16 %v932, %v931
        %v938 = vpack.c.bf16 %v934, %v933
        %s939 = scalar_lea.vmem [#allocation3], 96
        %940 = vst [vmem:[%s939] sm:$0xff] %v935
        %941 = vst [vmem:[%s939 + $0x8] sm:$0xff] %v936
        %942 = vst [vmem:[%s939 + $0x10] sm:$0xff] %v937
        %943 = vst [vmem:[%s939 + $0x18] sm:$0xff] %v938
        %v944 = vld [vmem:[#allocation2 + $0x20] sm:$0xff]
        %v945 = vld [vmem:[#allocation2 + $0x60] sm:$0xff]
        %v946 = vld [vmem:[#allocation2 + $0xa0] sm:$0xff]
        %v947 = vld [vmem:[#allocation2 + $0xe0] sm:$0xff]
        %v948 = vld [vmem:[#allocation2 + $0x120] sm:$0xff]
        %v949 = vld [vmem:[#allocation2 + $0x160] sm:$0xff]
        %v950 = vld [vmem:[#allocation2 + $0x1a0] sm:$0xff]
        %v951 = vld [vmem:[#allocation2 + $0x1e0] sm:$0xff]
        %v952 = vsub.f32 0.0, %v944
        %v953 = vsub.f32 0.0, %v945
        %v954 = vsub.f32 0.0, %v946
        %v955 = vsub.f32 0.0, %v947
        %v956 = vsub.f32 0.0, %v948
        %v957 = vsub.f32 0.0, %v949
        %v958 = vsub.f32 0.0, %v950
        %v959 = vsub.f32 0.0, %v951
        %v960 = vmul.f32 %v952, 1.442695
        %v961 = vpow.pop %v960
        %v962 = vmul.f32 %v953, 1.442695
        %v963 = vpow.pop %v962
        %v964 = vmul.f32 %v954, 1.442695
        %v965 = vpow.pop %v964
        %v966 = vmul.f32 %v955, 1.442695
        %v967 = vpow.pop %v966
        %v968 = vmul.f32 %v956, 1.442695
        %v969 = vpow.pop %v968
        %v970 = vmul.f32 %v957, 1.442695
        %v971 = vpow.pop %v970
        %v972 = vmul.f32 %v958, 1.442695
        %v973 = vpow.pop %v972
        %v974 = vmul.f32 %v959, 1.442695
        %v975 = vpow.pop %v974
        %v976 = vadd.f32 %v961, 1.0
        %v977 = vadd.f32 %v963, 1.0
        %v978 = vadd.f32 %v965, 1.0
        %v979 = vadd.f32 %v967, 1.0
        %v980 = vadd.f32 %v969, 1.0
        %v981 = vadd.f32 %v971, 1.0
        %v982 = vadd.f32 %v973, 1.0
        %v983 = vadd.f32 %v975, 1.0
        %v984 = vrcp.pop %v976
        %v985 = vrcp.pop %v977
        %v986 = vrcp.pop %v978
        %v987 = vrcp.pop %v979
        %v988 = vrcp.pop %v980
        %v989 = vrcp.pop %v981
        %v990 = vrcp.pop %v982
        %v991 = vrcp.pop %v983
        %v992 = vpack.c.bf16 %v985, %v984
        %v993 = vpack.c.bf16 %v987, %v986
        %v994 = vpack.c.bf16 %v989, %v988
        %v995 = vpack.c.bf16 %v991, %v990
        %s996 = scalar_lea.vmem [#allocation3], 128
        %997 = vst [vmem:[%s996] sm:$0xff] %v992
        %998 = vst [vmem:[%s996 + $0x8] sm:$0xff] %v993
        %999 = vst [vmem:[%s996 + $0x10] sm:$0xff] %v994
        %1000 = vst [vmem:[%s996 + $0x18] sm:$0xff] %v995
        %v1001 = vld [vmem:[#allocation2 + $0x28] sm:$0xff]
        %v1002 = vld [vmem:[#allocation2 + $0x68] sm:$0xff]
        %v1003 = vld [vmem:[#allocation2 + $0xa8] sm:$0xff]
        %v1004 = vld [vmem:[#allocation2 + $0xe8] sm:$0xff]
        %v1005 = vld [vmem:[#allocation2 + $0x128] sm:$0xff]
        %v1006 = vld [vmem:[#allocation2 + $0x168] sm:$0xff]
        %v1007 = vld [vmem:[#allocation2 + $0x1a8] sm:$0xff]
        %v1008 = vld [vmem:[#allocation2 + $0x1e8] sm:$0xff]
        %v1009 = vsub.f32 0.0, %v1001
        %v1010 = vsub.f32 0.0, %v1002
        %v1011 = vsub.f32 0.0, %v1003
        %v1012 = vsub.f32 0.0, %v1004
        %v1013 = vsub.f32 0.0, %v1005
        %v1014 = vsub.f32 0.0, %v1006
        %v1015 = vsub.f32 0.0, %v1007
        %v1016 = vsub.f32 0.0, %v1008
        %v1017 = vmul.f32 %v1009, 1.442695
        %v1018 = vpow.pop %v1017
        %v1019 = vmul.f32 %v1010, 1.442695
        %v1020 = vpow.pop %v1019
        %v1021 = vmul.f32 %v1011, 1.442695
        %v1022 = vpow.pop %v1021
        %v1023 = vmul.f32 %v1012, 1.442695
        %v1024 = vpow.pop %v1023
        %v1025 = vmul.f32 %v1013, 1.442695
        %v1026 = vpow.pop %v1025
        %v1027 = vmul.f32 %v1014, 1.442695
        %v1028 = vpow.pop %v1027
        %v1029 = vmul.f32 %v1015, 1.442695
        %v1030 = vpow.pop %v1029
        %v1031 = vmul.f32 %v1016, 1.442695
        %v1032 = vpow.pop %v1031
        %v1033 = vadd.f32 %v1018, 1.0
        %v1034 = vadd.f32 %v1020, 1.0
        %v1035 = vadd.f32 %v1022, 1.0
        %v1036 = vadd.f32 %v1024, 1.0
        %v1037 = vadd.f32 %v1026, 1.0
        %v1038 = vadd.f32 %v1028, 1.0
        %v1039 = vadd.f32 %v1030, 1.0
        %v1040 = vadd.f32 %v1032, 1.0
        %v1041 = vrcp.pop %v1033
        %v1042 = vrcp.pop %v1034
        %v1043 = vrcp.pop %v1035
        %v1044 = vrcp.pop %v1036
        %v1045 = vrcp.pop %v1037
        %v1046 = vrcp.pop %v1038
        %v1047 = vrcp.pop %v1039
        %v1048 = vrcp.pop %v1040
        %v1049 = vpack.c.bf16 %v1042, %v1041
        %v1050 = vpack.c.bf16 %v1044, %v1043
        %v1051 = vpack.c.bf16 %v1046, %v1045
        %v1052 = vpack.c.bf16 %v1048, %v1047
        %s1053 = scalar_lea.vmem [#allocation3], 160
        %1054 = vst [vmem:[%s1053] sm:$0xff] %v1049
        %1055 = vst [vmem:[%s1053 + $0x8] sm:$0xff] %v1050
        %1056 = vst [vmem:[%s1053 + $0x10] sm:$0xff] %v1051
        %1057 = vst [vmem:[%s1053 + $0x18] sm:$0xff] %v1052
        %v1058 = vld [vmem:[#allocation2 + $0x30] sm:$0xff]
        %v1059 = vld [vmem:[#allocation2 + $0x70] sm:$0xff]
        %v1060 = vld [vmem:[#allocation2 + $0xb0] sm:$0xff]
        %v1061 = vld [vmem:[#allocation2 + $0xf0] sm:$0xff]
        %v1062 = vld [vmem:[#allocation2 + $0x130] sm:$0xff]
        %v1063 = vld [vmem:[#allocation2 + $0x170] sm:$0xff]
        %v1064 = vld [vmem:[#allocation2 + $0x1b0] sm:$0xff]
        %v1065 = vld [vmem:[#allocation2 + $0x1f0] sm:$0xff]
        %v1066 = vsub.f32 0.0, %v1058
        %v1067 = vsub.f32 0.0, %v1059
        %v1068 = vsub.f32 0.0, %v1060
        %v1069 = vsub.f32 0.0, %v1061
        %v1070 = vsub.f32 0.0, %v1062
        %v1071 = vsub.f32 0.0, %v1063
        %v1072 = vsub.f32 0.0, %v1064
        %v1073 = vsub.f32 0.0, %v1065
        %v1074 = vmul.f32 %v1066, 1.442695
        %v1075 = vpow.pop %v1074
        %v1076 = vmul.f32 %v1067, 1.442695
        %v1077 = vpow.pop %v1076
        %v1078 = vmul.f32 %v1068, 1.442695
        %v1079 = vpow.pop %v1078
        %v1080 = vmul.f32 %v1069, 1.442695
        %v1081 = vpow.pop %v1080
        %v1082 = vmul.f32 %v1070, 1.442695
        %v1083 = vpow.pop %v1082
        %v1084 = vmul.f32 %v1071, 1.442695
        %v1085 = vpow.pop %v1084
        %v1086 = vmul.f32 %v1072, 1.442695
        %v1087 = vpow.pop %v1086
        %v1088 = vmul.f32 %v1073, 1.442695
        %v1089 = vpow.pop %v1088
        %v1090 = vadd.f32 %v1075, 1.0
        %v1091 = vadd.f32 %v1077, 1.0
        %v1092 = vadd.f32 %v1079, 1.0
        %v1093 = vadd.f32 %v1081, 1.0
        %v1094 = vadd.f32 %v1083, 1.0
        %v1095 = vadd.f32 %v1085, 1.0
        %v1096 = vadd.f32 %v1087, 1.0
        %v1097 = vadd.f32 %v1089, 1.0
        %v1098 = vrcp.pop %v1090
        %v1099 = vrcp.pop %v1091
        %v1100 = vrcp.pop %v1092
        %v1101 = vrcp.pop %v1093
        %v1102 = vrcp.pop %v1094
        %v1103 = vrcp.pop %v1095
        %v1104 = vrcp.pop %v1096
        %v1105 = vrcp.pop %v1097
        %v1106 = vpack.c.bf16 %v1099, %v1098
        %v1107 = vpack.c.bf16 %v1101, %v1100
        %v1108 = vpack.c.bf16 %v1103, %v1102
        %v1109 = vpack.c.bf16 %v1105, %v1104
        %s1110 = scalar_lea.vmem [#allocation3], 192
        %1111 = vst [vmem:[%s1110] sm:$0xff] %v1106
        %1112 = vst [vmem:[%s1110 + $0x8] sm:$0xff] %v1107
        %1113 = vst [vmem:[%s1110 + $0x10] sm:$0xff] %v1108
        %1114 = vst [vmem:[%s1110 + $0x18] sm:$0xff] %v1109
        %v1115 = vld [vmem:[#allocation2 + $0x38] sm:$0xff]
        %v1116 = vld [vmem:[#allocation2 + $0x78] sm:$0xff]
        %v1117 = vld [vmem:[#allocation2 + $0xb8] sm:$0xff]
        %v1118 = vld [vmem:[#allocation2 + $0xf8] sm:$0xff]
        %v1119 = vld [vmem:[#allocation2 + $0x138] sm:$0xff]
        %v1120 = vld [vmem:[#allocation2 + $0x178] sm:$0xff]
        %v1121 = vld [vmem:[#allocation2 + $0x1b8] sm:$0xff]
        %v1122 = vld [vmem:[#allocation2 + $0x1f8] sm:$0xff]
        %v1123 = vsub.f32 0.0, %v1115
        %v1124 = vsub.f32 0.0, %v1116
        %v1125 = vsub.f32 0.0, %v1117
        %v1126 = vsub.f32 0.0, %v1118
        %v1127 = vsub.f32 0.0, %v1119
        %v1128 = vsub.f32 0.0, %v1120
        %v1129 = vsub.f32 0.0, %v1121
        %v1130 = vsub.f32 0.0, %v1122
        %v1131 = vmul.f32 %v1123, 1.442695
        %v1132 = vpow.pop %v1131
        %v1133 = vmul.f32 %v1124, 1.442695
        %v1134 = vpow.pop %v1133
        %v1135 = vmul.f32 %v1125, 1.442695
        %v1136 = vpow.pop %v1135
        %v1137 = vmul.f32 %v1126, 1.442695
        %v1138 = vpow.pop %v1137
        %v1139 = vmul.f32 %v1127, 1.442695
        %v1140 = vpow.pop %v1139
        %v1141 = vmul.f32 %v1128, 1.442695
        %v1142 = vpow.pop %v1141
        %v1143 = vmul.f32 %v1129, 1.442695
        %v1144 = vpow.pop %v1143
        %v1145 = vmul.f32 %v1130, 1.442695
        %v1146 = vpow.pop %v1145
        %v1147 = vadd.f32 %v1132, 1.0
        %v1148 = vadd.f32 %v1134, 1.0
        %v1149 = vadd.f32 %v1136, 1.0
        %v1150 = vadd.f32 %v1138, 1.0
        %v1151 = vadd.f32 %v1140, 1.0
        %v1152 = vadd.f32 %v1142, 1.0
        %v1153 = vadd.f32 %v1144, 1.0
        %v1154 = vadd.f32 %v1146, 1.0
        %v1155 = vrcp.pop %v1147
        %v1156 = vrcp.pop %v1148
        %v1157 = vrcp.pop %v1149
        %v1158 = vrcp.pop %v1150
        %v1159 = vrcp.pop %v1151
        %v1160 = vrcp.pop %v1152
        %v1161 = vrcp.pop %v1153
        %v1162 = vrcp.pop %v1154
        %v1163 = vpack.c.bf16 %v1156, %v1155
        %v1164 = vpack.c.bf16 %v1158, %v1157
        %v1165 = vpack.c.bf16 %v1160, %v1159
        %v1166 = vpack.c.bf16 %v1162, %v1161
        %s1167 = scalar_lea.vmem [#allocation3], 224
        %1168 = vst [vmem:[%s1167] sm:$0xff] %v1163
        %1169 = vst [vmem:[%s1167 + $0x8] sm:$0xff] %v1164
        %1170 = vst [vmem:[%s1167 + $0x10] sm:$0xff] %v1165
        %1171 = vst [vmem:[%s1167 + $0x18] sm:$0xff] %v1166
        %v1172 = vld [vmem:[%s210] sm:$0xf]
        %v1173 = vld [vmem:[#allocation3] sm:$0x1]
        %v1174 = vld [vmem:[#allocation3 + $0x20] sm:$0x1]
        %v1175 = vld [vmem:[#allocation3 + $0x40] sm:$0x1]
        %v1176 = vld [vmem:[#allocation3 + $0x60] sm:$0x1]
        %v1177 = vld [vmem:[#allocation3 + $0x80] sm:$0x1]
        %v1178 = vld [vmem:[#allocation3 + $0xa0] sm:$0x1]
        %v1179 = vld [vmem:[#allocation3 + $0xc0] sm:$0x1]
        %v1180 = vld [vmem:[#allocation3 + $0xe0] sm:$0x1]
        %v1189 = vunpack.c.l.b16 %v1173
        %v1190 = vunpack.c.l.b16 %v1174
        %v1191 = vunpack.c.l.b16 %v1175
        %v1192 = vunpack.c.l.b16 %v1176
        %v1193 = vunpack.c.l.b16 %v1177
        %v1194 = vunpack.c.l.b16 %v1178
        %v1195 = vunpack.c.l.b16 %v1179
        %v1196 = vunpack.c.l.b16 %v1180
        %v1197 = vrot.slane %v1190, 7
        %vm1198 = vcmask 1041409
        %v1199 = vsel %vm1198, %v1197, %v1189
        %v1200 = vrot.slane %v1191, 6
        %vm1201 = vcmask 1042434
        %v1202 = vsel %vm1201, %v1200, %v1199
        %v1203 = vrot.slane %v1192, 5
        %vm1204 = vcmask 1043459
        %v1205 = vsel %vm1204, %v1203, %v1202
        %v1206 = vrot.slane %v1193, 4
        %vm1207 = vcmask 1044484
        %v1208 = vsel %vm1207, %v1206, %v1205
        %v1209 = vrot.slane %v1194, 3
        %vm1210 = vcmask 1045509
        %v1211 = vsel %vm1210, %v1209, %v1208
        %v1212 = vrot.slane %v1195, 2
        %vm1213 = vcmask 1046534
        %v1214 = vsel %vm1213, %v1212, %v1211
        %v1215 = vrot.slane %v1196, 1
        %vm1216 = vcmask 1047559
        %v1217 = vsel %vm1216, %v1215, %v1214
        %v1218 = vpack.c.b16 %v1217, %v1217
        %vm1219 = vcmask 64512
        %v1221 = vsel %vm1219, %v1172, 0
        %vm1223 = vcmask 1043456
        %v1225 = vsel %vm1223, %v1218, 0
        %1227 = vmatprep.subr.bf16.mxu0 0
        %1228 = vmatpush1.bf16.msra.mxu0 %v1225
        %1229 = vmatprep.subr.bf16.mxu0 0
        %1230 = vmatpush1.bf16.msra.mxu0 0
        %1231 = vmatprep.subr.bf16.mxu0 0
        %1232 = vmatpush1.bf16.msra.mxu0 0
        %1233 = vmatprep.subr.bf16.mxu0 0
        %1234 = vmatpush1.bf16.msra.mxu0 0
        %1235 = vmatprep.subr.bf16.mxu0 0
        %1236 = vmatpush1.bf16.msra.mxu0 0
        %1237 = vmatprep.subr.bf16.mxu0 0
        %1238 = vmatpush1.bf16.msra.mxu0 0
        %1239 = vmatprep.subr.bf16.mxu0 0
        %1240 = vmatpush1.bf16.msra.mxu0 0
        %1241 = vmatprep.subr.bf16.mxu0 0
        %1242 = vmatpush1.bf16.msra.mxu0 0
        %1243 = vmatprep.subr.bf16.mxu0 0
        %1244 = vmatpush1.bf16.msra.mxu0 0
        %1245 = vmatprep.subr.bf16.mxu0 0
        %1246 = vmatpush1.bf16.msra.mxu0 0
        %1247 = vmatprep.subr.bf16.mxu0 0
        %1248 = vmatpush1.bf16.msra.mxu0 0
        %1249 = vmatprep.subr.bf16.mxu0 0
        %1250 = vmatpush1.bf16.msra.mxu0 0
        %1251 = vmatprep.subr.bf16.mxu0 0
        %1252 = vmatpush1.bf16.msra.mxu0 0
        %1253 = vmatprep.subr.bf16.mxu0 0
        %1254 = vmatpush1.bf16.msra.mxu0 0
        %1255 = vmatprep.subr.bf16.mxu0 0
        %1256 = vmatpush1.bf16.msra.mxu0 0
        %1257 = vmatprep.subr.bf16.mxu0 0
        %1258 = vmatpush1.bf16.msra.mxu0 0
        %1259 = vmatprep.mubr.bf16.mxu0 0
        %1260 = vmatmul.mubr.bf16.gmra.mrb[0].mxu0 %v1221
        %v1261 = vpop.f32.mrb[0].mxu0
        %v1262 = vadd.f32 0.0, %v1261
        %v1263 = vpop.f32.mrb[0].mxu0
        %v1264 = vpop.f32.mrb[0].mxu0
        %v1265 = vpop.f32.mrb[0].mxu0
        %1266 = vdwg.mxu0
        %v1268 = vcombine.high %v1262, %v1262
        %v1270 = vunpack.c.l.s4 1966171168
        %v1271 = vunpack.c.0.s8 %v1270
        %v1272 = vlaneseq
        %v1273 = vshrl.u32 %v1272, 7
        %v1274 = vsub.s32 %v1271, %v1273
        %v1275 = vrot.slane %v1262, %v1274
        %v1277 = vunpack.c.l.s4 1966171168
        %v1278 = vunpack.c.0.s8 %v1277
        %v1279 = vlaneseq
        %v1280 = vshrl.u32 %v1279, 7
        %v1281 = vsub.s32 %v1278, %v1280
        %v1282 = vrot.slane %v1268, %v1281
        %v1283 = vcombine.high %v1275, %v1275
        %v1284 = vcombine.high %v1282, %v1282
        %v1286 = vunpack.c.l.s4 1966171168
        %v1287 = vunpack.c.0.s8 %v1286
        %v1288 = vlaneseq
        %v1289 = vshrl.u32 %v1288, 7
        %v1290 = vsub.s32 %v1287, %v1289
        %v1291 = vrot.slane %v1275, %v1290
        %v1293 = vunpack.c.l.s4 1966171168
        %v1294 = vunpack.c.0.s8 %v1293
        %v1295 = vlaneseq
        %v1296 = vshrl.u32 %v1295, 7
        %v1297 = vsub.s32 %v1294, %v1296
        %v1298 = vrot.slane %v1282, %v1297
        %v1300 = vunpack.c.l.s4 1966171168
        %v1301 = vunpack.c.0.s8 %v1300
        %v1302 = vlaneseq
        %v1303 = vshrl.u32 %v1302, 7
        %v1304 = vsub.s32 %v1301, %v1303
        %v1305 = vrot.slane %v1283, %v1304
        %v1307 = vunpack.c.l.s4 1966171168
        %v1308 = vunpack.c.0.s8 %v1307
        %v1309 = vlaneseq
        %v1310 = vshrl.u32 %v1309, 7
        %v1311 = vsub.s32 %v1308, %v1310
        %v1312 = vrot.slane %v1284, %v1311
        %v1313 = vcombine.high %v1291, %v1291
        %v1314 = vcombine.high %v1298, %v1298
        %v1315 = vcombine.high %v1305, %v1305
        %1323 = vst [vmem:[%s206] sm:$0x1] %v1291
        %1324 = vst [vmem:[%s206 + $0x40] sm:$0x1] %v1305
        %1325 = vst [vmem:[%s206 + $0x80] sm:$0x1] %v1313
        %1326 = vst [vmem:[%s206 + $0xc0] sm:$0x1] %v1315
        %1327 = vst [vmem:[%s206 + $0x100] sm:$0x1] %v1298
        %1328 = vst [vmem:[%s206 + $0x140] sm:$0x1] %v1312
        %1329 = vst [vmem:[%s206 + $0x180] sm:$0x1] %v1314
        %v1330 = vld [vmem:[#allocation3] sm:$0x1]
        %v1331 = vld [vmem:[#allocation3 + $0x20] sm:$0x1]
        %v1332 = vld [vmem:[#allocation3 + $0x40] sm:$0x1]
        %v1333 = vld [vmem:[#allocation3 + $0x60] sm:$0x1]
        %v1334 = vld [vmem:[#allocation3 + $0x80] sm:$0x1]
        %v1335 = vld [vmem:[#allocation3 + $0xa0] sm:$0x1]
        %v1336 = vld [vmem:[#allocation3 + $0xc0] sm:$0x1]
        %v1337 = vld [vmem:[#allocation3 + $0xe0] sm:$0x1]
        %v1346 = vunpack.c.l.b16 %v1330
        %v1347 = vunpack.c.l.b16 %v1331
        %v1348 = vunpack.c.l.b16 %v1332
        %v1349 = vunpack.c.l.b16 %v1333
        %v1350 = vunpack.c.l.b16 %v1334
        %v1351 = vunpack.c.l.b16 %v1335
        %v1352 = vunpack.c.l.b16 %v1336
        %v1353 = vunpack.c.l.b16 %v1337
        %v1354 = vrot.slane %v1346, 1
        %v1355 = vsel %vm1198, %v1347, %v1354
        %v1356 = vrot.slane %v1348, 7
        %v1357 = vsel %vm1201, %v1356, %v1355
        %v1358 = vrot.slane %v1349, 6
        %v1359 = vsel %vm1204, %v1358, %v1357
        %v1360 = vrot.slane %v1350, 5
        %v1361 = vsel %vm1207, %v1360, %v1359
        %v1362 = vrot.slane %v1351, 4
        %v1363 = vsel %vm1210, %v1362, %v1361
        %v1364 = vrot.slane %v1352, 3
        %v1365 = vsel %vm1213, %v1364, %v1363
        %v1366 = vrot.slane %v1353, 2
        %v1367 = vsel %vm1216, %v1366, %v1365
        %v1368 = vpack.c.b16 %v1367, %v1367
        %v1370 = vsel %vm1223, %v1368, 0
        %1372 = vmatprep.subr.bf16.mxu0 0
        %1373 = vmatpush1.bf16.msra.mxu0 %v1370
        %1374 = vmatprep.subr.bf16.mxu0 0
        %1375 = vmatpush1.bf16.msra.mxu0 0
        %1376 = vmatprep.subr.bf16.mxu0 0
        %1377 = vmatpush1.bf16.msra.mxu0 0
        %1378 = vmatprep.subr.bf16.mxu0 0
        %1379 = vmatpush1.bf16.msra.mxu0 0
        %1380 = vmatprep.subr.bf16.mxu0 0
        %1381 = vmatpush1.bf16.msra.mxu0 0
        %1382 = vmatprep.subr.bf16.mxu0 0
        %1383 = vmatpush1.bf16.msra.mxu0 0
        %1384 = vmatprep.subr.bf16.mxu0 0
        %1385 = vmatpush1.bf16.msra.mxu0 0
        %1386 = vmatprep.subr.bf16.mxu0 0
        %1387 = vmatpush1.bf16.msra.mxu0 0
        %1388 = vmatprep.subr.bf16.mxu0 0
        %1389 = vmatpush1.bf16.msra.mxu0 0
        %1390 = vmatprep.subr.bf16.mxu0 0
        %1391 = vmatpush1.bf16.msra.mxu0 0
        %1392 = vmatprep.subr.bf16.mxu0 0
        %1393 = vmatpush1.bf16.msra.mxu0 0
        %1394 = vmatprep.subr.bf16.mxu0 0
        %1395 = vmatpush1.bf16.msra.mxu0 0
        %1396 = vmatprep.subr.bf16.mxu0 0
        %1397 = vmatpush1.bf16.msra.mxu0 0
        %1398 = vmatprep.subr.bf16.mxu0 0
        %1399 = vmatpush1.bf16.msra.mxu0 0
        %1400 = vmatprep.subr.bf16.mxu0 0
        %1401 = vmatpush1.bf16.msra.mxu0 0
        %1402 = vmatprep.subr.bf16.mxu0 0
        %1403 = vmatpush1.bf16.msra.mxu0 0
        %1404 = vmatprep.mubr.bf16.mxu0 0
        %1405 = vmatmul.mubr.bf16.gmra.mrb[0].mxu0 %v1221
        %v1406 = vpop.f32.mrb[0].mxu0
        %v1407 = vadd.f32 0.0, %v1406
        %v1408 = vpop.f32.mrb[0].mxu0
        %v1409 = vpop.f32.mrb[0].mxu0
        %v1410 = vpop.f32.mrb[0].mxu0
        %1411 = vdwg.mxu0
        %v1413 = vcombine.high %v1407, %v1407
        %v1415 = vunpack.c.l.s4 1966171168
        %v1416 = vunpack.c.0.s8 %v1415
        %v1417 = vlaneseq
        %v1418 = vshrl.u32 %v1417, 7
        %v1419 = vsub.s32 %v1416, %v1418
        %v1420 = vrot.slane %v1407, %v1419
        %v1422 = vunpack.c.l.s4 1966171168
        %v1423 = vunpack.c.0.s8 %v1422
        %v1424 = vlaneseq
        %v1425 = vshrl.u32 %v1424, 7
        %v1426 = vsub.s32 %v1423, %v1425
        %v1427 = vrot.slane %v1413, %v1426
        %v1428 = vcombine.high %v1420, %v1420
        %v1429 = vcombine.high %v1427, %v1427
        %v1431 = vunpack.c.l.s4 1966171168
        %v1432 = vunpack.c.0.s8 %v1431
        %v1433 = vlaneseq
        %v1434 = vshrl.u32 %v1433, 7
        %v1435 = vsub.s32 %v1432, %v1434
        %v1436 = vrot.slane %v1420, %v1435
        %v1438 = vunpack.c.l.s4 1966171168
        %v1439 = vunpack.c.0.s8 %v1438
        %v1440 = vlaneseq
        %v1441 = vshrl.u32 %v1440, 7
        %v1442 = vsub.s32 %v1439, %v1441
        %v1443 = vrot.slane %v1427, %v1442
        %v1445 = vunpack.c.l.s4 1966171168
        %v1446 = vunpack.c.0.s8 %v1445
        %v1447 = vlaneseq
        %v1448 = vshrl.u32 %v1447, 7
        %v1449 = vsub.s32 %v1446, %v1448
        %v1450 = vrot.slane %v1428, %v1449
        %v1452 = vunpack.c.l.s4 1966171168
        %v1453 = vunpack.c.0.s8 %v1452
        %v1454 = vlaneseq
        %v1455 = vshrl.u32 %v1454, 7
        %v1456 = vsub.s32 %v1453, %v1455
        %v1457 = vrot.slane %v1429, %v1456
        %v1458 = vcombine.high %v1436, %v1436
        %v1459 = vcombine.high %v1443, %v1443
        %v1460 = vcombine.high %v1450, %v1450
        %1468 = vst [vmem:[%s206 + $0x1] sm:$0x1] %v1436
        %1469 = vst [vmem:[%s206 + $0x41] sm:$0x1] %v1450
        %1470 = vst [vmem:[%s206 + $0x81] sm:$0x1] %v1458
        %1471 = vst [vmem:[%s206 + $0xc1] sm:$0x1] %v1460
        %1472 = vst [vmem:[%s206 + $0x101] sm:$0x1] %v1443
        %1473 = vst [vmem:[%s206 + $0x141] sm:$0x1] %v1457
        %1474 = vst [vmem:[%s206 + $0x181] sm:$0x1] %v1459
        %v1475 = vld [vmem:[#allocation3] sm:$0x2]
        %v1476 = vld [vmem:[#allocation3 + $0x20] sm:$0x2]
        %v1477 = vld [vmem:[#allocation3 + $0x40] sm:$0x2]
        %v1478 = vld [vmem:[#allocation3 + $0x60] sm:$0x2]
        %v1479 = vld [vmem:[#allocation3 + $0x80] sm:$0x2]
        %v1480 = vld [vmem:[#allocation3 + $0xa0] sm:$0x2]
        %v1481 = vld [vmem:[#allocation3 + $0xc0] sm:$0x2]
        %v1482 = vld [vmem:[#allocation3 + $0xe0] sm:$0x2]
        %v1491 = vunpack.c.l.b16 %v1475
        %v1492 = vunpack.c.l.b16 %v1476
        %v1493 = vunpack.c.l.b16 %v1477
        %v1494 = vunpack.c.l.b16 %v1478
        %v1495 = vunpack.c.l.b16 %v1479
        %v1496 = vunpack.c.l.b16 %v1480
        %v1497 = vunpack.c.l.b16 %v1481
        %v1498 = vunpack.c.l.b16 %v1482
        %v1499 = vrot.slane %v1491, 2
        %v1500 = vrot.slane %v1492, 1
        %v1501 = vsel %vm1198, %v1500, %v1499
        %v1502 = vsel %vm1201, %v1493, %v1501
        %v1503 = vrot.slane %v1494, 7
        %v1504 = vsel %vm1204, %v1503, %v1502
        %v1505 = vrot.slane %v1495, 6
        %v1506 = vsel %vm1207, %v1505, %v1504
        %v1507 = vrot.slane %v1496, 5
        %v1508 = vsel %vm1210, %v1507, %v1506
        %v1509 = vrot.slane %v1497, 4
        %v1510 = vsel %vm1213, %v1509, %v1508
        %v1511 = vrot.slane %v1498, 3
        %v1512 = vsel %vm1216, %v1511, %v1510
        %v1513 = vpack.c.b16 %v1512, %v1512
        %v1515 = vsel %vm1223, %v1513, 0
        %1517 = vmatprep.subr.bf16.mxu0 0
        %1518 = vmatpush1.bf16.msra.mxu0 %v1515
        %1519 = vmatprep.subr.bf16.mxu0 0
        %1520 = vmatpush1.bf16.msra.mxu0 0
        %1521 = vmatprep.subr.bf16.mxu0 0
        %1522 = vmatpush1.bf16.msra.mxu0 0
        %1523 = vmatprep.subr.bf16.mxu0 0
        %1524 = vmatpush1.bf16.msra.mxu0 0
        %1525 = vmatprep.subr.bf16.mxu0 0
        %1526 = vmatpush1.bf16.msra.mxu0 0
        %1527 = vmatprep.subr.bf16.mxu0 0
        %1528 = vmatpush1.bf16.msra.mxu0 0
        %1529 = vmatprep.subr.bf16.mxu0 0
        %1530 = vmatpush1.bf16.msra.mxu0 0
        %1531 = vmatprep.subr.bf16.mxu0 0
        %1532 = vmatpush1.bf16.msra.mxu0 0
        %1533 = vmatprep.subr.bf16.mxu0 0
        %1534 = vmatpush1.bf16.msra.mxu0 0
        %1535 = vmatprep.subr.bf16.mxu0 0
        %1536 = vmatpush1.bf16.msra.mxu0 0
        %1537 = vmatprep.subr.bf16.mxu0 0
        %1538 = vmatpush1.bf16.msra.mxu0 0
        %1539 = vmatprep.subr.bf16.mxu0 0
        %1540 = vmatpush1.bf16.msra.mxu0 0
        %1541 = vmatprep.subr.bf16.mxu0 0
        %1542 = vmatpush1.bf16.msra.mxu0 0
        %1543 = vmatprep.subr.bf16.mxu0 0
        %1544 = vmatpush1.bf16.msra.mxu0 0
        %1545 = vmatprep.subr.bf16.mxu0 0
        %1546 = vmatpush1.bf16.msra.mxu0 0
        %1547 = vmatprep.subr.bf16.mxu0 0
        %1548 = vmatpush1.bf16.msra.mxu0 0
        %1549 = vmatprep.mubr.bf16.mxu0 0
        %1550 = vmatmul.mubr.bf16.gmra.mrb[0].mxu0 %v1221
        %v1551 = vpop.f32.mrb[0].mxu0
        %v1552 = vadd.f32 0.0, %v1551
        %v1553 = vpop.f32.mrb[0].mxu0
        %v1554 = vpop.f32.mrb[0].mxu0
        %v1555 = vpop.f32.mrb[0].mxu0
        %1556 = vdwg.mxu0
        %v1558 = vcombine.high %v1552, %v1552
        %v1560 = vunpack.c.l.s4 1966171168
        %v1561 = vunpack.c.0.s8 %v1560
        %v1562 = vlaneseq
        %v1563 = vshrl.u32 %v1562, 7
        %v1564 = vsub.s32 %v1561, %v1563
        %v1565 = vrot.slane %v1552, %v1564
        %v1567 = vunpack.c.l.s4 1966171168
        %v1568 = vunpack.c.0.s8 %v1567
        %v1569 = vlaneseq
        %v1570 = vshrl.u32 %v1569, 7
        %v1571 = vsub.s32 %v1568, %v1570
        %v1572 = vrot.slane %v1558, %v1571
        %v1573 = vcombine.high %v1565, %v1565
        %v1574 = vcombine.high %v1572, %v1572
        %v1576 = vunpack.c.l.s4 1966171168
        %v1577 = vunpack.c.0.s8 %v1576
        %v1578 = vlaneseq
        %v1579 = vshrl.u32 %v1578, 7
        %v1580 = vsub.s32 %v1577, %v1579
        %v1581 = vrot.slane %v1565, %v1580
        %v1583 = vunpack.c.l.s4 1966171168
        %v1584 = vunpack.c.0.s8 %v1583
        %v1585 = vlaneseq
        %v1586 = vshrl.u32 %v1585, 7
        %v1587 = vsub.s32 %v1584, %v1586
        %v1588 = vrot.slane %v1572, %v1587
        %v1590 = vunpack.c.l.s4 1966171168
        %v1591 = vunpack.c.0.s8 %v1590
        %v1592 = vlaneseq
        %v1593 = vshrl.u32 %v1592, 7
        %v1594 = vsub.s32 %v1591, %v1593
        %v1595 = vrot.slane %v1573, %v1594
        %v1597 = vunpack.c.l.s4 1966171168
        %v1598 = vunpack.c.0.s8 %v1597
        %v1599 = vlaneseq
        %v1600 = vshrl.u32 %v1599, 7
        %v1601 = vsub.s32 %v1598, %v1600
        %v1602 = vrot.slane %v1574, %v1601
        %v1603 = vcombine.high %v1581, %v1581
        %v1604 = vcombine.high %v1588, %v1588
        %v1605 = vcombine.high %v1595, %v1595
        %1613 = vst [vmem:[%s206 + $0x2] sm:$0x1] %v1581
        %1614 = vst [vmem:[%s206 + $0x42] sm:$0x1] %v1595
        %1615 = vst [vmem:[%s206 + $0x82] sm:$0x1] %v1603
        %1616 = vst [vmem:[%s206 + $0xc2] sm:$0x1] %v1605
        %1617 = vst [vmem:[%s206 + $0x102] sm:$0x1] %v1588
        %1618 = vst [vmem:[%s206 + $0x142] sm:$0x1] %v1602
        %1619 = vst [vmem:[%s206 + $0x182] sm:$0x1] %v1604
        %v1620 = vld [vmem:[#allocation3] sm:$0x2]
        %v1621 = vld [vmem:[#allocation3 + $0x20] sm:$0x2]
        %v1622 = vld [vmem:[#allocation3 + $0x40] sm:$0x2]
        %v1623 = vld [vmem:[#allocation3 + $0x60] sm:$0x2]
        %v1624 = vld [vmem:[#allocation3 + $0x80] sm:$0x2]
        %v1625 = vld [vmem:[#allocation3 + $0xa0] sm:$0x2]
        %v1626 = vld [vmem:[#allocation3 + $0xc0] sm:$0x2]
        %v1627 = vld [vmem:[#allocation3 + $0xe0] sm:$0x2]
        %v1636 = vunpack.c.l.b16 %v1620
        %v1637 = vunpack.c.l.b16 %v1621
        %v1638 = vunpack.c.l.b16 %v1622
        %v1639 = vunpack.c.l.b16 %v1623
        %v1640 = vunpack.c.l.b16 %v1624
        %v1641 = vunpack.c.l.b16 %v1625
        %v1642 = vunpack.c.l.b16 %v1626
        %v1643 = vunpack.c.l.b16 %v1627
        %v1644 = vrot.slane %v1636, 3
        %v1645 = vrot.slane %v1637, 2
        %v1646 = vsel %vm1198, %v1645, %v1644
        %v1647 = vrot.slane %v1638, 1
        %v1648 = vsel %vm1201, %v1647, %v1646
        %v1649 = vsel %vm1204, %v1639, %v1648
        %v1650 = vrot.slane %v1640, 7
        %v1651 = vsel %vm1207, %v1650, %v1649
        %v1652 = vrot.slane %v1641, 6
        %v1653 = vsel %vm1210, %v1652, %v1651
        %v1654 = vrot.slane %v1642, 5
        %v1655 = vsel %vm1213, %v1654, %v1653
        %v1656 = vrot.slane %v1643, 4
        %v1657 = vsel %vm1216, %v1656, %v1655
        %v1658 = vpack.c.b16 %v1657, %v1657
        %v1660 = vsel %vm1223, %v1658, 0
        %1662 = vmatprep.subr.bf16.mxu0 0
        %1663 = vmatpush1.bf16.msra.mxu0 %v1660
        %1664 = vmatprep.subr.bf16.mxu0 0
        %1665 = vmatpush1.bf16.msra.mxu0 0
        %1666 = vmatprep.subr.bf16.mxu0 0
        %1667 = vmatpush1.bf16.msra.mxu0 0
        %1668 = vmatprep.subr.bf16.mxu0 0
        %1669 = vmatpush1.bf16.msra.mxu0 0
        %1670 = vmatprep.subr.bf16.mxu0 0
        %1671 = vmatpush1.bf16.msra.mxu0 0
        %1672 = vmatprep.subr.bf16.mxu0 0
        %1673 = vmatpush1.bf16.msra.mxu0 0
        %1674 = vmatprep.subr.bf16.mxu0 0
        %1675 = vmatpush1.bf16.msra.mxu0 0
        %1676 = vmatprep.subr.bf16.mxu0 0
        %1677 = vmatpush1.bf16.msra.mxu0 0
        %1678 = vmatprep.subr.bf16.mxu0 0
        %1679 = vmatpush1.bf16.msra.mxu0 0
        %1680 = vmatprep.subr.bf16.mxu0 0
        %1681 = vmatpush1.bf16.msra.mxu0 0
        %1682 = vmatprep.subr.bf16.mxu0 0
        %1683 = vmatpush1.bf16.msra.mxu0 0
        %1684 = vmatprep.subr.bf16.mxu0 0
        %1685 = vmatpush1.bf16.msra.mxu0 0
        %1686 = vmatprep.subr.bf16.mxu0 0
        %1687 = vmatpush1.bf16.msra.mxu0 0
        %1688 = vmatprep.subr.bf16.mxu0 0
        %1689 = vmatpush1.bf16.msra.mxu0 0
        %1690 = vmatprep.subr.bf16.mxu0 0
        %1691 = vmatpush1.bf16.msra.mxu0 0
        %1692 = vmatprep.subr.bf16.mxu0 0
        %1693 = vmatpush1.bf16.msra.mxu0 0
        %1694 = vmatprep.mubr.bf16.mxu0 0
        %1695 = vmatmul.mubr.bf16.gmra.mrb[0].mxu0 %v1221
        %v1696 = vpop.f32.mrb[0].mxu0
        %v1697 = vadd.f32 0.0, %v1696
        %v1698 = vpop.f32.mrb[0].mxu0
        %v1699 = vpop.f32.mrb[0].mxu0
        %v1700 = vpop.f32.mrb[0].mxu0
        %1701 = vdwg.mxu0
        %v1703 = vcombine.high %v1697, %v1697
        %v1705 = vunpack.c.l.s4 1966171168
        %v1706 = vunpack.c.0.s8 %v1705
        %v1707 = vlaneseq
        %v1708 = vshrl.u32 %v1707, 7
        %v1709 = vsub.s32 %v1706, %v1708
        %v1710 = vrot.slane %v1697, %v1709
        %v1712 = vunpack.c.l.s4 1966171168
        %v1713 = vunpack.c.0.s8 %v1712
        %v1714 = vlaneseq
        %v1715 = vshrl.u32 %v1714, 7
        %v1716 = vsub.s32 %v1713, %v1715
        %v1717 = vrot.slane %v1703, %v1716
        %v1718 = vcombine.high %v1710, %v1710
        %v1719 = vcombine.high %v1717, %v1717
        %v1721 = vunpack.c.l.s4 1966171168
        %v1722 = vunpack.c.0.s8 %v1721
        %v1723 = vlaneseq
        %v1724 = vshrl.u32 %v1723, 7
        %v1725 = vsub.s32 %v1722, %v1724
        %v1726 = vrot.slane %v1710, %v1725
        %v1728 = vunpack.c.l.s4 1966171168
        %v1729 = vunpack.c.0.s8 %v1728
        %v1730 = vlaneseq
        %v1731 = vshrl.u32 %v1730, 7
        %v1732 = vsub.s32 %v1729, %v1731
        %v1733 = vrot.slane %v1717, %v1732
        %v1735 = vunpack.c.l.s4 1966171168
        %v1736 = vunpack.c.0.s8 %v1735
        %v1737 = vlaneseq
        %v1738 = vshrl.u32 %v1737, 7
        %v1739 = vsub.s32 %v1736, %v1738
        %v1740 = vrot.slane %v1718, %v1739
        %v1742 = vunpack.c.l.s4 1966171168
        %v1743 = vunpack.c.0.s8 %v1742
        %v1744 = vlaneseq
        %v1745 = vshrl.u32 %v1744, 7
        %v1746 = vsub.s32 %v1743, %v1745
        %v1747 = vrot.slane %v1719, %v1746
        %v1748 = vcombine.high %v1726, %v1726
        %v1749 = vcombine.high %v1733, %v1733
        %v1750 = vcombine.high %v1740, %v1740
        %1758 = vst [vmem:[%s206 + $0x3] sm:$0x1] %v1726
        %1759 = vst [vmem:[%s206 + $0x43] sm:$0x1] %v1740
        %1760 = vst [vmem:[%s206 + $0x83] sm:$0x1] %v1748
        %1761 = vst [vmem:[%s206 + $0xc3] sm:$0x1] %v1750
        %1762 = vst [vmem:[%s206 + $0x103] sm:$0x1] %v1733
        %1763 = vst [vmem:[%s206 + $0x143] sm:$0x1] %v1747
        %1764 = vst [vmem:[%s206 + $0x183] sm:$0x1] %v1749
        %v1765 = vld [vmem:[#allocation3] sm:$0x4]
        %v1766 = vld [vmem:[#allocation3 + $0x20] sm:$0x4]
        %v1767 = vld [vmem:[#allocation3 + $0x40] sm:$0x4]
        %v1768 = vld [vmem:[#allocation3 + $0x60] sm:$0x4]
        %v1769 = vld [vmem:[#allocation3 + $0x80] sm:$0x4]
        %v1770 = vld [vmem:[#allocation3 + $0xa0] sm:$0x4]
        %v1771 = vld [vmem:[#allocation3 + $0xc0] sm:$0x4]
        %v1772 = vld [vmem:[#allocation3 + $0xe0] sm:$0x4]
        %v1781 = vunpack.c.l.b16 %v1765
        %v1782 = vunpack.c.l.b16 %v1766
        %v1783 = vunpack.c.l.b16 %v1767
        %v1784 = vunpack.c.l.b16 %v1768
        %v1785 = vunpack.c.l.b16 %v1769
        %v1786 = vunpack.c.l.b16 %v1770
        %v1787 = vunpack.c.l.b16 %v1771
        %v1788 = vunpack.c.l.b16 %v1772
        %v1789 = vrot.slane %v1781, 4
        %v1790 = vrot.slane %v1782, 3
        %v1791 = vsel %vm1198, %v1790, %v1789
        %v1792 = vrot.slane %v1783, 2
        %v1793 = vsel %vm1201, %v1792, %v1791
        %v1794 = vrot.slane %v1784, 1
        %v1795 = vsel %vm1204, %v1794, %v1793
        %v1796 = vsel %vm1207, %v1785, %v1795
        %v1797 = vrot.slane %v1786, 7
        %v1798 = vsel %vm1210, %v1797, %v1796
        %v1799 = vrot.slane %v1787, 6
        %v1800 = vsel %vm1213, %v1799, %v1798
        %v1801 = vrot.slane %v1788, 5
        %v1802 = vsel %vm1216, %v1801, %v1800
        %v1803 = vpack.c.b16 %v1802, %v1802
        %v1805 = vsel %vm1223, %v1803, 0
        %1807 = vmatprep.subr.bf16.mxu0 0
        %1808 = vmatpush1.bf16.msra.mxu0 %v1805
        %1809 = vmatprep.subr.bf16.mxu0 0
        %1810 = vmatpush1.bf16.msra.mxu0 0
        %1811 = vmatprep.subr.bf16.mxu0 0
        %1812 = vmatpush1.bf16.msra.mxu0 0
        %1813 = vmatprep.subr.bf16.mxu0 0
        %1814 = vmatpush1.bf16.msra.mxu0 0
        %1815 = vmatprep.subr.bf16.mxu0 0
        %1816 = vmatpush1.bf16.msra.mxu0 0
        %1817 = vmatprep.subr.bf16.mxu0 0
        %1818 = vmatpush1.bf16.msra.mxu0 0
        %1819 = vmatprep.subr.bf16.mxu0 0
        %1820 = vmatpush1.bf16.msra.mxu0 0
        %1821 = vmatprep.subr.bf16.mxu0 0
        %1822 = vmatpush1.bf16.msra.mxu0 0
        %1823 = vmatprep.subr.bf16.mxu0 0
        %1824 = vmatpush1.bf16.msra.mxu0 0
        %1825 = vmatprep.subr.bf16.mxu0 0
        %1826 = vmatpush1.bf16.msra.mxu0 0
        %1827 = vmatprep.subr.bf16.mxu0 0
        %1828 = vmatpush1.bf16.msra.mxu0 0
        %1829 = vmatprep.subr.bf16.mxu0 0
        %1830 = vmatpush1.bf16.msra.mxu0 0
        %1831 = vmatprep.subr.bf16.mxu0 0
        %1832 = vmatpush1.bf16.msra.mxu0 0
        %1833 = vmatprep.subr.bf16.mxu0 0
        %1834 = vmatpush1.bf16.msra.mxu0 0
        %1835 = vmatprep.subr.bf16.mxu0 0
        %1836 = vmatpush1.bf16.msra.mxu0 0
        %1837 = vmatprep.subr.bf16.mxu0 0
        %1838 = vmatpush1.bf16.msra.mxu0 0
        %1839 = vmatprep.mubr.bf16.mxu0 0
        %1840 = vmatmul.mubr.bf16.gmra.mrb[0].mxu0 %v1221
        %v1841 = vpop.f32.mrb[0].mxu0
        %v1842 = vadd.f32 0.0, %v1841
        %v1843 = vpop.f32.mrb[0].mxu0
        %v1844 = vpop.f32.mrb[0].mxu0
        %v1845 = vpop.f32.mrb[0].mxu0
        %1846 = vdwg.mxu0
        %v1848 = vcombine.high %v1842, %v1842
        %v1850 = vunpack.c.l.s4 1966171168
        %v1851 = vunpack.c.0.s8 %v1850
        %v1852 = vlaneseq
        %v1853 = vshrl.u32 %v1852, 7
        %v1854 = vsub.s32 %v1851, %v1853
        %v1855 = vrot.slane %v1842, %v1854
        %v1857 = vunpack.c.l.s4 1966171168
        %v1858 = vunpack.c.0.s8 %v1857
        %v1859 = vlaneseq
        %v1860 = vshrl.u32 %v1859, 7
        %v1861 = vsub.s32 %v1858, %v1860
        %v1862 = vrot.slane %v1848, %v1861
        %v1863 = vcombine.high %v1855, %v1855
        %v1864 = vcombine.high %v1862, %v1862
        %v1866 = vunpack.c.l.s4 1966171168
        %v1867 = vunpack.c.0.s8 %v1866
        %v1868 = vlaneseq
        %v1869 = vshrl.u32 %v1868, 7
        %v1870 = vsub.s32 %v1867, %v1869
        %v1871 = vrot.slane %v1855, %v1870
        %v1873 = vunpack.c.l.s4 1966171168
        %v1874 = vunpack.c.0.s8 %v1873
        %v1875 = vlaneseq
        %v1876 = vshrl.u32 %v1875, 7
        %v1877 = vsub.s32 %v1874, %v1876
        %v1878 = vrot.slane %v1862, %v1877
        %v1880 = vunpack.c.l.s4 1966171168
        %v1881 = vunpack.c.0.s8 %v1880
        %v1882 = vlaneseq
        %v1883 = vshrl.u32 %v1882, 7
        %v1884 = vsub.s32 %v1881, %v1883
        %v1885 = vrot.slane %v1863, %v1884
        %v1887 = vunpack.c.l.s4 1966171168
        %v1888 = vunpack.c.0.s8 %v1887
        %v1889 = vlaneseq
        %v1890 = vshrl.u32 %v1889, 7
        %v1891 = vsub.s32 %v1888, %v1890
        %v1892 = vrot.slane %v1864, %v1891
        %v1893 = vcombine.high %v1871, %v1871
        %v1894 = vcombine.high %v1878, %v1878
        %v1895 = vcombine.high %v1885, %v1885
        %1903 = vst [vmem:[%s206 + $0x4] sm:$0x1] %v1871
        %1904 = vst [vmem:[%s206 + $0x44] sm:$0x1] %v1885
        %1905 = vst [vmem:[%s206 + $0x84] sm:$0x1] %v1893
        %1906 = vst [vmem:[%s206 + $0xc4] sm:$0x1] %v1895
        %1907 = vst [vmem:[%s206 + $0x104] sm:$0x1] %v1878
        %1908 = vst [vmem:[%s206 + $0x144] sm:$0x1] %v1892
        %1909 = vst [vmem:[%s206 + $0x184] sm:$0x1] %v1894
        %v1910 = vld [vmem:[#allocation3] sm:$0x4]
        %v1911 = vld [vmem:[#allocation3 + $0x20] sm:$0x4]
        %v1912 = vld [vmem:[#allocation3 + $0x40] sm:$0x4]
        %v1913 = vld [vmem:[#allocation3 + $0x60] sm:$0x4]
        %v1914 = vld [vmem:[#allocation3 + $0x80] sm:$0x4]
        %v1915 = vld [vmem:[#allocation3 + $0xa0] sm:$0x4]
        %v1916 = vld [vmem:[#allocation3 + $0xc0] sm:$0x4]
        %v1917 = vld [vmem:[#allocation3 + $0xe0] sm:$0x4]
        %v1926 = vunpack.c.l.b16 %v1910
        %v1927 = vunpack.c.l.b16 %v1911
        %v1928 = vunpack.c.l.b16 %v1912
        %v1929 = vunpack.c.l.b16 %v1913
        %v1930 = vunpack.c.l.b16 %v1914
        %v1931 = vunpack.c.l.b16 %v1915
        %v1932 = vunpack.c.l.b16 %v1916
        %v1933 = vunpack.c.l.b16 %v1917
        %v1934 = vrot.slane %v1926, 5
        %v1935 = vrot.slane %v1927, 4
        %v1936 = vsel %vm1198, %v1935, %v1934
        %v1937 = vrot.slane %v1928, 3
        %v1938 = vsel %vm1201, %v1937, %v1936
        %v1939 = vrot.slane %v1929, 2
        %v1940 = vsel %vm1204, %v1939, %v1938
        %v1941 = vrot.slane %v1930, 1
        %v1942 = vsel %vm1207, %v1941, %v1940
        %v1943 = vsel %vm1210, %v1931, %v1942
        %v1944 = vrot.slane %v1932, 7
        %v1945 = vsel %vm1213, %v1944, %v1943
        %v1946 = vrot.slane %v1933, 6
        %v1947 = vsel %vm1216, %v1946, %v1945
        %v1948 = vpack.c.b16 %v1947, %v1947
        %v1950 = vsel %vm1223, %v1948, 0
        %1952 = vmatprep.subr.bf16.mxu0 0
        %1953 = vmatpush1.bf16.msra.mxu0 %v1950
        %1954 = vmatprep.subr.bf16.mxu0 0
        %1955 = vmatpush1.bf16.msra.mxu0 0
        %1956 = vmatprep.subr.bf16.mxu0 0
        %1957 = vmatpush1.bf16.msra.mxu0 0
        %1958 = vmatprep.subr.bf16.mxu0 0
        %1959 = vmatpush1.bf16.msra.mxu0 0
        %1960 = vmatprep.subr.bf16.mxu0 0
        %1961 = vmatpush1.bf16.msra.mxu0 0
        %1962 = vmatprep.subr.bf16.mxu0 0
        %1963 = vmatpush1.bf16.msra.mxu0 0
        %1964 = vmatprep.subr.bf16.mxu0 0
        %1965 = vmatpush1.bf16.msra.mxu0 0
        %1966 = vmatprep.subr.bf16.mxu0 0
        %1967 = vmatpush1.bf16.msra.mxu0 0
        %1968 = vmatprep.subr.bf16.mxu0 0
        %1969 = vmatpush1.bf16.msra.mxu0 0
        %1970 = vmatprep.subr.bf16.mxu0 0
        %1971 = vmatpush1.bf16.msra.mxu0 0
        %1972 = vmatprep.subr.bf16.mxu0 0
        %1973 = vmatpush1.bf16.msra.mxu0 0
        %1974 = vmatprep.subr.bf16.mxu0 0
        %1975 = vmatpush1.bf16.msra.mxu0 0
        %1976 = vmatprep.subr.bf16.mxu0 0
        %1977 = vmatpush1.bf16.msra.mxu0 0
        %1978 = vmatprep.subr.bf16.mxu0 0
        %1979 = vmatpush1.bf16.msra.mxu0 0
        %1980 = vmatprep.subr.bf16.mxu0 0
        %1981 = vmatpush1.bf16.msra.mxu0 0
        %1982 = vmatprep.subr.bf16.mxu0 0
        %1983 = vmatpush1.bf16.msra.mxu0 0
        %1984 = vmatprep.mubr.bf16.mxu0 0
        %1985 = vmatmul.mubr.bf16.gmra.mrb[0].mxu0 %v1221
        %v1986 = vpop.f32.mrb[0].mxu0
        %v1987 = vadd.f32 0.0, %v1986
        %v1988 = vpop.f32.mrb[0].mxu0
        %v1989 = vpop.f32.mrb[0].mxu0
        %v1990 = vpop.f32.mrb[0].mxu0
        %1991 = vdwg.mxu0
        %v1993 = vcombine.high %v1987, %v1987
        %v1995 = vunpack.c.l.s4 1966171168
        %v1996 = vunpack.c.0.s8 %v1995
        %v1997 = vlaneseq
        %v1998 = vshrl.u32 %v1997, 7
        %v1999 = vsub.s32 %v1996, %v1998
        %v2000 = vrot.slane %v1987, %v1999
        %v2002 = vunpack.c.l.s4 1966171168
        %v2003 = vunpack.c.0.s8 %v2002
        %v2004 = vlaneseq
        %v2005 = vshrl.u32 %v2004, 7
        %v2006 = vsub.s32 %v2003, %v2005
        %v2007 = vrot.slane %v1993, %v2006
        %v2008 = vcombine.high %v2000, %v2000
        %v2009 = vcombine.high %v2007, %v2007
        %v2011 = vunpack.c.l.s4 1966171168
        %v2012 = vunpack.c.0.s8 %v2011
        %v2013 = vlaneseq
        %v2014 = vshrl.u32 %v2013, 7
        %v2015 = vsub.s32 %v2012, %v2014
        %v2016 = vrot.slane %v2000, %v2015
        %v2018 = vunpack.c.l.s4 1966171168
        %v2019 = vunpack.c.0.s8 %v2018
        %v2020 = vlaneseq
        %v2021 = vshrl.u32 %v2020, 7
        %v2022 = vsub.s32 %v2019, %v2021
        %v2023 = vrot.slane %v2007, %v2022
        %v2025 = vunpack.c.l.s4 1966171168
        %v2026 = vunpack.c.0.s8 %v2025
        %v2027 = vlaneseq
        %v2028 = vshrl.u32 %v2027, 7
        %v2029 = vsub.s32 %v2026, %v2028
        %v2030 = vrot.slane %v2008, %v2029
        %v2032 = vunpack.c.l.s4 1966171168
        %v2033 = vunpack.c.0.s8 %v2032
        %v2034 = vlaneseq
        %v2035 = vshrl.u32 %v2034, 7
        %v2036 = vsub.s32 %v2033, %v2035
        %v2037 = vrot.slane %v2009, %v2036
        %v2038 = vcombine.high %v2016, %v2016
        %v2039 = vcombine.high %v2023, %v2023
        %v2040 = vcombine.high %v2030, %v2030
        %2048 = vst [vmem:[%s206 + $0x5] sm:$0x1] %v2016
        %2049 = vst [vmem:[%s206 + $0x45] sm:$0x1] %v2030
        %2050 = vst [vmem:[%s206 + $0x85] sm:$0x1] %v2038
        %2051 = vst [vmem:[%s206 + $0xc5] sm:$0x1] %v2040
        %2052 = vst [vmem:[%s206 + $0x105] sm:$0x1] %v2023
        %2053 = vst [vmem:[%s206 + $0x145] sm:$0x1] %v2037
        %2054 = vst [vmem:[%s206 + $0x185] sm:$0x1] %v2039
        %v2055 = vld [vmem:[#allocation3] sm:$0x8]
        %v2056 = vld [vmem:[#allocation3 + $0x20] sm:$0x8]
        %v2057 = vld [vmem:[#allocation3 + $0x40] sm:$0x8]
        %v2058 = vld [vmem:[#allocation3 + $0x60] sm:$0x8]
        %v2059 = vld [vmem:[#allocation3 + $0x80] sm:$0x8]
        %v2060 = vld [vmem:[#allocation3 + $0xa0] sm:$0x8]
        %v2061 = vld [vmem:[#allocation3 + $0xc0] sm:$0x8]
        %v2062 = vld [vmem:[#allocation3 + $0xe0] sm:$0x8]
        %v2071 = vunpack.c.l.b16 %v2055
        %v2072 = vunpack.c.l.b16 %v2056
        %v2073 = vunpack.c.l.b16 %v2057
        %v2074 = vunpack.c.l.b16 %v2058
        %v2075 = vunpack.c.l.b16 %v2059
        %v2076 = vunpack.c.l.b16 %v2060
        %v2077 = vunpack.c.l.b16 %v2061
        %v2078 = vunpack.c.l.b16 %v2062
        %v2079 = vrot.slane %v2071, 6
        %v2080 = vrot.slane %v2072, 5
        %v2081 = vsel %vm1198, %v2080, %v2079
        %v2082 = vrot.slane %v2073, 4
        %v2083 = vsel %vm1201, %v2082, %v2081
        %v2084 = vrot.slane %v2074, 3
        %v2085 = vsel %vm1204, %v2084, %v2083
        %v2086 = vrot.slane %v2075, 2
        %v2087 = vsel %vm1207, %v2086, %v2085
        %v2088 = vrot.slane %v2076, 1
        %v2089 = vsel %vm1210, %v2088, %v2087
        %v2090 = vsel %vm1213, %v2077, %v2089
        %v2091 = vrot.slane %v2078, 7
        %v2092 = vsel %vm1216, %v2091, %v2090
        %v2093 = vpack.c.b16 %v2092, %v2092
        %v2095 = vsel %vm1223, %v2093, 0
        %2097 = vmatprep.subr.bf16.mxu0 0
        %2098 = vmatpush1.bf16.msra.mxu0 %v2095
        %2099 = vmatprep.subr.bf16.mxu0 0
        %2100 = vmatpush1.bf16.msra.mxu0 0
        %2101 = vmatprep.subr.bf16.mxu0 0
        %2102 = vmatpush1.bf16.msra.mxu0 0
        %2103 = vmatprep.subr.bf16.mxu0 0
        %2104 = vmatpush1.bf16.msra.mxu0 0
        %2105 = vmatprep.subr.bf16.mxu0 0
        %2106 = vmatpush1.bf16.msra.mxu0 0
        %2107 = vmatprep.subr.bf16.mxu0 0
        %2108 = vmatpush1.bf16.msra.mxu0 0
        %2109 = vmatprep.subr.bf16.mxu0 0
        %2110 = vmatpush1.bf16.msra.mxu0 0
        %2111 = vmatprep.subr.bf16.mxu0 0
        %2112 = vmatpush1.bf16.msra.mxu0 0
        %2113 = vmatprep.subr.bf16.mxu0 0
        %2114 = vmatpush1.bf16.msra.mxu0 0
        %2115 = vmatprep.subr.bf16.mxu0 0
        %2116 = vmatpush1.bf16.msra.mxu0 0
        %2117 = vmatprep.subr.bf16.mxu0 0
        %2118 = vmatpush1.bf16.msra.mxu0 0
        %2119 = vmatprep.subr.bf16.mxu0 0
        %2120 = vmatpush1.bf16.msra.mxu0 0
        %2121 = vmatprep.subr.bf16.mxu0 0
        %2122 = vmatpush1.bf16.msra.mxu0 0
        %2123 = vmatprep.subr.bf16.mxu0 0
        %2124 = vmatpush1.bf16.msra.mxu0 0
        %2125 = vmatprep.subr.bf16.mxu0 0
        %2126 = vmatpush1.bf16.msra.mxu0 0
        %2127 = vmatprep.subr.bf16.mxu0 0
        %2128 = vmatpush1.bf16.msra.mxu0 0
        %2129 = vmatprep.mubr.bf16.mxu0 0
        %2130 = vmatmul.mubr.bf16.gmra.mrb[0].mxu0 %v1221
        %v2131 = vpop.f32.mrb[0].mxu0
        %v2132 = vadd.f32 0.0, %v2131
        %v2133 = vpop.f32.mrb[0].mxu0
        %v2134 = vpop.f32.mrb[0].mxu0
        %v2135 = vpop.f32.mrb[0].mxu0
        %2136 = vdwg.mxu0
        %v2138 = vcombine.high %v2132, %v2132
        %v2140 = vunpack.c.l.s4 1966171168
        %v2141 = vunpack.c.0.s8 %v2140
        %v2142 = vlaneseq
        %v2143 = vshrl.u32 %v2142, 7
        %v2144 = vsub.s32 %v2141, %v2143
        %v2145 = vrot.slane %v2132, %v2144
        %v2147 = vunpack.c.l.s4 1966171168
        %v2148 = vunpack.c.0.s8 %v2147
        %v2149 = vlaneseq
        %v2150 = vshrl.u32 %v2149, 7
        %v2151 = vsub.s32 %v2148, %v2150
        %v2152 = vrot.slane %v2138, %v2151
        %v2153 = vcombine.high %v2145, %v2145
        %v2154 = vcombine.high %v2152, %v2152
        %v2156 = vunpack.c.l.s4 1966171168
        %v2157 = vunpack.c.0.s8 %v2156
        %v2158 = vlaneseq
        %v2159 = vshrl.u32 %v2158, 7
        %v2160 = vsub.s32 %v2157, %v2159
        %v2161 = vrot.slane %v2145, %v2160
        %v2163 = vunpack.c.l.s4 1966171168
        %v2164 = vunpack.c.0.s8 %v2163
        %v2165 = vlaneseq
        %v2166 = vshrl.u32 %v2165, 7
        %v2167 = vsub.s32 %v2164, %v2166
        %v2168 = vrot.slane %v2152, %v2167
        %v2170 = vunpack.c.l.s4 1966171168
        %v2171 = vunpack.c.0.s8 %v2170
        %v2172 = vlaneseq
        %v2173 = vshrl.u32 %v2172, 7
        %v2174 = vsub.s32 %v2171, %v2173
        %v2175 = vrot.slane %v2153, %v2174
        %v2177 = vunpack.c.l.s4 1966171168
        %v2178 = vunpack.c.0.s8 %v2177
        %v2179 = vlaneseq
        %v2180 = vshrl.u32 %v2179, 7
        %v2181 = vsub.s32 %v2178, %v2180
        %v2182 = vrot.slane %v2154, %v2181
        %v2183 = vcombine.high %v2161, %v2161
        %v2184 = vcombine.high %v2168, %v2168
        %v2185 = vcombine.high %v2175, %v2175
        %2193 = vst [vmem:[%s206 + $0x6] sm:$0x1] %v2161
        %2194 = vst [vmem:[%s206 + $0x46] sm:$0x1] %v2175
        %2195 = vst [vmem:[%s206 + $0x86] sm:$0x1] %v2183
        %2196 = vst [vmem:[%s206 + $0xc6] sm:$0x1] %v2185
        %2197 = vst [vmem:[%s206 + $0x106] sm:$0x1] %v2168
        %2198 = vst [vmem:[%s206 + $0x146] sm:$0x1] %v2182
        %2199 = vst [vmem:[%s206 + $0x186] sm:$0x1] %v2184
        %v2200 = vld [vmem:[#allocation3] sm:$0x8]
        %v2201 = vld [vmem:[#allocation3 + $0x20] sm:$0x8]
        %v2202 = vld [vmem:[#allocation3 + $0x40] sm:$0x8]
        %v2203 = vld [vmem:[#allocation3 + $0x60] sm:$0x8]
        %v2204 = vld [vmem:[#allocation3 + $0x80] sm:$0x8]
        %v2205 = vld [vmem:[#allocation3 + $0xa0] sm:$0x8]
        %v2206 = vld [vmem:[#allocation3 + $0xc0] sm:$0x8]
        %v2207 = vld [vmem:[#allocation3 + $0xe0] sm:$0x8]
        %v2216 = vunpack.c.l.b16 %v2200
        %v2217 = vunpack.c.l.b16 %v2201
        %v2218 = vunpack.c.l.b16 %v2202
        %v2219 = vunpack.c.l.b16 %v2203
        %v2220 = vunpack.c.l.b16 %v2204
        %v2221 = vunpack.c.l.b16 %v2205
        %v2222 = vunpack.c.l.b16 %v2206
        %v2223 = vunpack.c.l.b16 %v2207
        %v2224 = vrot.slane %v2216, 7
        %v2225 = vrot.slane %v2217, 6
        %v2226 = vsel %vm1198, %v2225, %v2224
        %v2227 = vrot.slane %v2218, 5
        %v2228 = vsel %vm1201, %v2227, %v2226
        %v2229 = vrot.slane %v2219, 4
        %v2230 = vsel %vm1204, %v2229, %v2228
        %v2231 = vrot.slane %v2220, 3
        %v2232 = vsel %vm1207, %v2231, %v2230
        %v2233 = vrot.slane %v2221, 2
        %v2234 = vsel %vm1210, %v2233, %v2232
        %v2235 = vrot.slane %v2222, 1
        %v2236 = vsel %vm1213, %v2235, %v2234
        %v2237 = vsel %vm1216, %v2223, %v2236
        %v2238 = vpack.c.b16 %v2237, %v2237
        %v2240 = vsel %vm1223, %v2238, 0
        %2242 = vmatprep.subr.bf16.mxu0 0
        %2243 = vmatpush1.bf16.msra.mxu0 %v2240
        %2244 = vmatprep.subr.bf16.mxu0 0
        %2245 = vmatpush1.bf16.msra.mxu0 0
        %2246 = vmatprep.subr.bf16.mxu0 0
        %2247 = vmatpush1.bf16.msra.mxu0 0
        %2248 = vmatprep.subr.bf16.mxu0 0
        %2249 = vmatpush1.bf16.msra.mxu0 0
        %2250 = vmatprep.subr.bf16.mxu0 0
        %2251 = vmatpush1.bf16.msra.mxu0 0
        %2252 = vmatprep.subr.bf16.mxu0 0
        %2253 = vmatpush1.bf16.msra.mxu0 0
        %2254 = vmatprep.subr.bf16.mxu0 0
        %2255 = vmatpush1.bf16.msra.mxu0 0
        %2256 = vmatprep.subr.bf16.mxu0 0
        %2257 = vmatpush1.bf16.msra.mxu0 0
        %2258 = vmatprep.subr.bf16.mxu0 0
        %2259 = vmatpush1.bf16.msra.mxu0 0
        %2260 = vmatprep.subr.bf16.mxu0 0
        %2261 = vmatpush1.bf16.msra.mxu0 0
        %2262 = vmatprep.subr.bf16.mxu0 0
        %2263 = vmatpush1.bf16.msra.mxu0 0
        %2264 = vmatprep.subr.bf16.mxu0 0
        %2265 = vmatpush1.bf16.msra.mxu0 0
        %2266 = vmatprep.subr.bf16.mxu0 0
        %2267 = vmatpush1.bf16.msra.mxu0 0
        %2268 = vmatprep.subr.bf16.mxu0 0
        %2269 = vmatpush1.bf16.msra.mxu0 0
        %2270 = vmatprep.subr.bf16.mxu0 0
        %2271 = vmatpush1.bf16.msra.mxu0 0
        %2272 = vmatprep.subr.bf16.mxu0 0
        %2273 = vmatpush1.bf16.msra.mxu0 0
        %2274 = vmatprep.mubr.bf16.mxu0 0
        %2275 = vmatmul.mubr.bf16.gmra.mrb[0].mxu0 %v1221
        %v2276 = vpop.f32.mrb[0].mxu0
        %v2277 = vadd.f32 0.0, %v2276
        %v2278 = vpop.f32.mrb[0].mxu0
        %v2279 = vpop.f32.mrb[0].mxu0
        %v2280 = vpop.f32.mrb[0].mxu0
        %2281 = vdwg.mxu0
        %v2283 = vcombine.high %v2277, %v2277
        %v2285 = vunpack.c.l.s4 1966171168
        %v2286 = vunpack.c.0.s8 %v2285
        %v2287 = vlaneseq
        %v2288 = vshrl.u32 %v2287, 7
        %v2289 = vsub.s32 %v2286, %v2288
        %v2290 = vrot.slane %v2277, %v2289
        %v2292 = vunpack.c.l.s4 1966171168
        %v2293 = vunpack.c.0.s8 %v2292
        %v2294 = vlaneseq
        %v2295 = vshrl.u32 %v2294, 7
        %v2296 = vsub.s32 %v2293, %v2295
        %v2297 = vrot.slane %v2283, %v2296
        %v2298 = vcombine.high %v2290, %v2290
        %v2299 = vcombine.high %v2297, %v2297
        %v2301 = vunpack.c.l.s4 1966171168
        %v2302 = vunpack.c.0.s8 %v2301
        %v2303 = vlaneseq
        %v2304 = vshrl.u32 %v2303, 7
        %v2305 = vsub.s32 %v2302, %v2304
        %v2306 = vrot.slane %v2290, %v2305
        %v2308 = vunpack.c.l.s4 1966171168
        %v2309 = vunpack.c.0.s8 %v2308
        %v2310 = vlaneseq
        %v2311 = vshrl.u32 %v2310, 7
        %v2312 = vsub.s32 %v2309, %v2311
        %v2313 = vrot.slane %v2297, %v2312
        %v2315 = vunpack.c.l.s4 1966171168
        %v2316 = vunpack.c.0.s8 %v2315
        %v2317 = vlaneseq
        %v2318 = vshrl.u32 %v2317, 7
        %v2319 = vsub.s32 %v2316, %v2318
        %v2320 = vrot.slane %v2298, %v2319
        %v2322 = vunpack.c.l.s4 1966171168
        %v2323 = vunpack.c.0.s8 %v2322
        %v2324 = vlaneseq
        %v2325 = vshrl.u32 %v2324, 7
        %v2326 = vsub.s32 %v2323, %v2325
        %v2327 = vrot.slane %v2299, %v2326
        %v2328 = vcombine.high %v2306, %v2306
        %v2329 = vcombine.high %v2313, %v2313
        %v2330 = vcombine.high %v2320, %v2320
        %2338 = vst [vmem:[%s206 + $0x7] sm:$0x1] %v2306
        %2339 = vst [vmem:[%s206 + $0x47] sm:$0x1] %v2320
        %2340 = vst [vmem:[%s206 + $0x87] sm:$0x1] %v2328
        %2341 = vst [vmem:[%s206 + $0xc7] sm:$0x1] %v2330
        %2342 = vst [vmem:[%s206 + $0x107] sm:$0x1] %v2313
        %2343 = vst [vmem:[%s206 + $0x147] sm:$0x1] %v2327
        %2344 = vst [vmem:[%s206 + $0x187] sm:$0x1] %v2329
        %v2345 = vld [vmem:[#allocation3] sm:$0x10]
        %v2346 = vld [vmem:[#allocation3 + $0x20] sm:$0x10]
        %v2347 = vld [vmem:[#allocation3 + $0x40] sm:$0x10]
        %v2348 = vld [vmem:[#allocation3 + $0x60] sm:$0x10]
        %v2349 = vld [vmem:[#allocation3 + $0x80] sm:$0x10]
        %v2350 = vld [vmem:[#allocation3 + $0xa0] sm:$0x10]
        %v2351 = vld [vmem:[#allocation3 + $0xc0] sm:$0x10]
        %v2352 = vld [vmem:[#allocation3 + $0xe0] sm:$0x10]
        %v2361 = vunpack.c.h.b16 %v2345
        %v2362 = vunpack.c.h.b16 %v2346
        %v2363 = vunpack.c.h.b16 %v2347
        %v2364 = vunpack.c.h.b16 %v2348
        %v2365 = vunpack.c.h.b16 %v2349
        %v2366 = vunpack.c.h.b16 %v2350
        %v2367 = vunpack.c.h.b16 %v2351
        %v2368 = vunpack.c.h.b16 %v2352
        %v2369 = vrot.slane %v2362, 7
        %v2370 = vsel %vm1198, %v2369, %v2361
        %v2371 = vrot.slane %v2363, 6
        %v2372 = vsel %vm1201, %v2371, %v2370
        %v2373 = vrot.slane %v2364, 5
        %v2374 = vsel %vm1204, %v2373, %v2372
        %v2375 = vrot.slane %v2365, 4
        %v2376 = vsel %vm1207, %v2375, %v2374
        %v2377 = vrot.slane %v2366, 3
        %v2378 = vsel %vm1210, %v2377, %v2376
        %v2379 = vrot.slane %v2367, 2
        %v2380 = vsel %vm1213, %v2379, %v2378
        %v2381 = vrot.slane %v2368, 1
        %v2382 = vsel %vm1216, %v2381, %v2380
        %v2383 = vpack.c.b16 %v2382, %v2382
        %v2385 = vsel %vm1223, %v2383, 0
        %2387 = vmatprep.subr.bf16.mxu0 0
        %2388 = vmatpush1.bf16.msra.mxu0 %v2385
        %2389 = vmatprep.subr.bf16.mxu0 0
        %2390 = vmatpush1.bf16.msra.mxu0 0
        %2391 = vmatprep.subr.bf16.mxu0 0
        %2392 = vmatpush1.bf16.msra.mxu0 0
        %2393 = vmatprep.subr.bf16.mxu0 0
        %2394 = vmatpush1.bf16.msra.mxu0 0
        %2395 = vmatprep.subr.bf16.mxu0 0
        %2396 = vmatpush1.bf16.msra.mxu0 0
        %2397 = vmatprep.subr.bf16.mxu0 0
        %2398 = vmatpush1.bf16.msra.mxu0 0
        %2399 = vmatprep.subr.bf16.mxu0 0
        %2400 = vmatpush1.bf16.msra.mxu0 0
        %2401 = vmatprep.subr.bf16.mxu0 0
        %2402 = vmatpush1.bf16.msra.mxu0 0
        %2403 = vmatprep.subr.bf16.mxu0 0
        %2404 = vmatpush1.bf16.msra.mxu0 0
        %2405 = vmatprep.subr.bf16.mxu0 0
        %2406 = vmatpush1.bf16.msra.mxu0 0
        %2407 = vmatprep.subr.bf16.mxu0 0
        %2408 = vmatpush1.bf16.msra.mxu0 0
        %2409 = vmatprep.subr.bf16.mxu0 0
        %2410 = vmatpush1.bf16.msra.mxu0 0
        %2411 = vmatprep.subr.bf16.mxu0 0
        %2412 = vmatpush1.bf16.msra.mxu0 0
        %2413 = vmatprep.subr.bf16.mxu0 0
        %2414 = vmatpush1.bf16.msra.mxu0 0
        %2415 = vmatprep.subr.bf16.mxu0 0
        %2416 = vmatpush1.bf16.msra.mxu0 0
        %2417 = vmatprep.subr.bf16.mxu0 0
        %2418 = vmatpush1.bf16.msra.mxu0 0
        %2419 = vmatprep.mubr.bf16.mxu0 0
        %2420 = vmatmul.mubr.bf16.gmra.mrb[0].mxu0 %v1221
        %v2421 = vpop.f32.mrb[0].mxu0
        %v2422 = vadd.f32 0.0, %v2421
        %v2423 = vpop.f32.mrb[0].mxu0
        %v2424 = vpop.f32.mrb[0].mxu0
        %v2425 = vpop.f32.mrb[0].mxu0
        %2426 = vdwg.mxu0
        %v2428 = vcombine.high %v2422, %v2422
        %v2430 = vunpack.c.l.s4 1966171168
        %v2431 = vunpack.c.0.s8 %v2430
        %v2432 = vlaneseq
        %v2433 = vshrl.u32 %v2432, 7
        %v2434 = vsub.s32 %v2431, %v2433
        %v2435 = vrot.slane %v2422, %v2434
        %v2437 = vunpack.c.l.s4 1966171168
        %v2438 = vunpack.c.0.s8 %v2437
        %v2439 = vlaneseq
        %v2440 = vshrl.u32 %v2439, 7
        %v2441 = vsub.s32 %v2438, %v2440
        %v2442 = vrot.slane %v2428, %v2441
        %v2443 = vcombine.high %v2435, %v2435
        %v2444 = vcombine.high %v2442, %v2442
        %v2446 = vunpack.c.l.s4 1966171168
        %v2447 = vunpack.c.0.s8 %v2446
        %v2448 = vlaneseq
        %v2449 = vshrl.u32 %v2448, 7
        %v2450 = vsub.s32 %v2447, %v2449
        %v2451 = vrot.slane %v2435, %v2450
        %v2453 = vunpack.c.l.s4 1966171168
        %v2454 = vunpack.c.0.s8 %v2453
        %v2455 = vlaneseq
        %v2456 = vshrl.u32 %v2455, 7
        %v2457 = vsub.s32 %v2454, %v2456
        %v2458 = vrot.slane %v2442, %v2457
        %v2460 = vunpack.c.l.s4 1966171168
        %v2461 = vunpack.c.0.s8 %v2460
        %v2462 = vlaneseq
        %v2463 = vshrl.u32 %v2462, 7
        %v2464 = vsub.s32 %v2461, %v2463
        %v2465 = vrot.slane %v2443, %v2464
        %v2467 = vunpack.c.l.s4 1966171168
        %v2468 = vunpack.c.0.s8 %v2467
        %v2469 = vlaneseq
        %v2470 = vshrl.u32 %v2469, 7
        %v2471 = vsub.s32 %v2468, %v2470
        %v2472 = vrot.slane %v2444, %v2471
        %v2473 = vcombine.high %v2451, %v2451
        %v2474 = vcombine.high %v2458, %v2458
        %v2475 = vcombine.high %v2465, %v2465
        %2483 = vst [vmem:[%s206 + $0x8] sm:$0x1] %v2451
        %2484 = vst [vmem:[%s206 + $0x48] sm:$0x1] %v2465
        %2485 = vst [vmem:[%s206 + $0x88] sm:$0x1] %v2473
        %2486 = vst [vmem:[%s206 + $0xc8] sm:$0x1] %v2475
        %2487 = vst [vmem:[%s206 + $0x108] sm:$0x1] %v2458
        %2488 = vst [vmem:[%s206 + $0x148] sm:$0x1] %v2472
        %2489 = vst [vmem:[%s206 + $0x188] sm:$0x1] %v2474
        %v2490 = vld [vmem:[#allocation3] sm:$0x10]
        %v2491 = vld [vmem:[#allocation3 + $0x20] sm:$0x10]
        %v2492 = vld [vmem:[#allocation3 + $0x40] sm:$0x10]
        %v2493 = vld [vmem:[#allocation3 + $0x60] sm:$0x10]
        %v2494 = vld [vmem:[#allocation3 + $0x80] sm:$0x10]
        %v2495 = vld [vmem:[#allocation3 + $0xa0] sm:$0x10]
        %v2496 = vld [vmem:[#allocation3 + $0xc0] sm:$0x10]
        %v2497 = vld [vmem:[#allocation3 + $0xe0] sm:$0x10]
        %v2506 = vunpack.c.h.b16 %v2490
        %v2507 = vunpack.c.h.b16 %v2491
        %v2508 = vunpack.c.h.b16 %v2492
        %v2509 = vunpack.c.h.b16 %v2493
        %v2510 = vunpack.c.h.b16 %v2494
        %v2511 = vunpack.c.h.b16 %v2495
        %v2512 = vunpack.c.h.b16 %v2496
        %v2513 = vunpack.c.h.b16 %v2497
        %v2514 = vrot.slane %v2506, 1
        %v2515 = vsel %vm1198, %v2507, %v2514
        %v2516 = vrot.slane %v2508, 7
        %v2517 = vsel %vm1201, %v2516, %v2515
        %v2518 = vrot.slane %v2509, 6
        %v2519 = vsel %vm1204, %v2518, %v2517
        %v2520 = vrot.slane %v2510, 5
        %v2521 = vsel %vm1207, %v2520, %v2519
        %v2522 = vrot.slane %v2511, 4
        %v2523 = vsel %vm1210, %v2522, %v2521
        %v2524 = vrot.slane %v2512, 3
        %v2525 = vsel %vm1213, %v2524, %v2523
        %v2526 = vrot.slane %v2513, 2
        %v2527 = vsel %vm1216, %v2526, %v2525
        %v2528 = vpack.c.b16 %v2527, %v2527
        %v2530 = vsel %vm1223, %v2528, 0
        %2532 = vmatprep.subr.bf16.mxu0 0
        %2533 = vmatpush1.bf16.msra.mxu0 %v2530
        %2534 = vmatprep.subr.bf16.mxu0 0
        %2535 = vmatpush1.bf16.msra.mxu0 0
        %2536 = vmatprep.subr.bf16.mxu0 0
        %2537 = vmatpush1.bf16.msra.mxu0 0
        %2538 = vmatprep.subr.bf16.mxu0 0
        %2539 = vmatpush1.bf16.msra.mxu0 0
        %2540 = vmatprep.subr.bf16.mxu0 0
        %2541 = vmatpush1.bf16.msra.mxu0 0
        %2542 = vmatprep.subr.bf16.mxu0 0
        %2543 = vmatpush1.bf16.msra.mxu0 0
        %2544 = vmatprep.subr.bf16.mxu0 0
        %2545 = vmatpush1.bf16.msra.mxu0 0
        %2546 = vmatprep.subr.bf16.mxu0 0
        %2547 = vmatpush1.bf16.msra.mxu0 0
        %2548 = vmatprep.subr.bf16.mxu0 0
        %2549 = vmatpush1.bf16.msra.mxu0 0
        %2550 = vmatprep.subr.bf16.mxu0 0
        %2551 = vmatpush1.bf16.msra.mxu0 0
        %2552 = vmatprep.subr.bf16.mxu0 0
        %2553 = vmatpush1.bf16.msra.mxu0 0
        %2554 = vmatprep.subr.bf16.mxu0 0
        %2555 = vmatpush1.bf16.msra.mxu0 0
        %2556 = vmatprep.subr.bf16.mxu0 0
        %2557 = vmatpush1.bf16.msra.mxu0 0
        %2558 = vmatprep.subr.bf16.mxu0 0
        %2559 = vmatpush1.bf16.msra.mxu0 0
        %2560 = vmatprep.subr.bf16.mxu0 0
        %2561 = vmatpush1.bf16.msra.mxu0 0
        %2562 = vmatprep.subr.bf16.mxu0 0
        %2563 = vmatpush1.bf16.msra.mxu0 0
        %2564 = vmatprep.mubr.bf16.mxu0 0
        %2565 = vmatmul.mubr.bf16.gmra.mrb[0].mxu0 %v1221
        %v2566 = vpop.f32.mrb[0].mxu0
        %v2567 = vadd.f32 0.0, %v2566
        %v2568 = vpop.f32.mrb[0].mxu0
        %v2569 = vpop.f32.mrb[0].mxu0
        %v2570 = vpop.f32.mrb[0].mxu0
        %2571 = vdwg.mxu0
        %v2573 = vcombine.high %v2567, %v2567
        %v2575 = vunpack.c.l.s4 1966171168
        %v2576 = vunpack.c.0.s8 %v2575
        %v2577 = vlaneseq
        %v2578 = vshrl.u32 %v2577, 7
        %v2579 = vsub.s32 %v2576, %v2578
        %v2580 = vrot.slane %v2567, %v2579
        %v2582 = vunpack.c.l.s4 1966171168
        %v2583 = vunpack.c.0.s8 %v2582
        %v2584 = vlaneseq
        %v2585 = vshrl.u32 %v2584, 7
        %v2586 = vsub.s32 %v2583, %v2585
        %v2587 = vrot.slane %v2573, %v2586
        %v2588 = vcombine.high %v2580, %v2580
        %v2589 = vcombine.high %v2587, %v2587
        %v2591 = vunpack.c.l.s4 1966171168
        %v2592 = vunpack.c.0.s8 %v2591
        %v2593 = vlaneseq
        %v2594 = vshrl.u32 %v2593, 7
        %v2595 = vsub.s32 %v2592, %v2594
        %v2596 = vrot.slane %v2580, %v2595
        %v2598 = vunpack.c.l.s4 1966171168
        %v2599 = vunpack.c.0.s8 %v2598
        %v2600 = vlaneseq
        %v2601 = vshrl.u32 %v2600, 7
        %v2602 = vsub.s32 %v2599, %v2601
        %v2603 = vrot.slane %v2587, %v2602
        %v2605 = vunpack.c.l.s4 1966171168
        %v2606 = vunpack.c.0.s8 %v2605
        %v2607 = vlaneseq
        %v2608 = vshrl.u32 %v2607, 7
        %v2609 = vsub.s32 %v2606, %v2608
        %v2610 = vrot.slane %v2588, %v2609
        %v2612 = vunpack.c.l.s4 1966171168
        %v2613 = vunpack.c.0.s8 %v2612
        %v2614 = vlaneseq
        %v2615 = vshrl.u32 %v2614, 7
        %v2616 = vsub.s32 %v2613, %v2615
        %v2617 = vrot.slane %v2589, %v2616
        %v2618 = vcombine.high %v2596, %v2596
        %v2619 = vcombine.high %v2603, %v2603
        %v2620 = vcombine.high %v2610, %v2610
        %2628 = vst [vmem:[%s206 + $0x9] sm:$0x1] %v2596
        %2629 = vst [vmem:[%s206 + $0x49] sm:$0x1] %v2610
        %2630 = vst [vmem:[%s206 + $0x89] sm:$0x1] %v2618
        %2631 = vst [vmem:[%s206 + $0xc9] sm:$0x1] %v2620
        %2632 = vst [vmem:[%s206 + $0x109] sm:$0x1] %v2603
        %2633 = vst [vmem:[%s206 + $0x149] sm:$0x1] %v2617
        %2634 = vst [vmem:[%s206 + $0x189] sm:$0x1] %v2619
        %v2635 = vld [vmem:[#allocation3] sm:$0x20]
        %v2636 = vld [vmem:[#allocation3 + $0x20] sm:$0x20]
        %v2637 = vld [vmem:[#allocation3 + $0x40] sm:$0x20]
        %v2638 = vld [vmem:[#allocation3 + $0x60] sm:$0x20]
        %v2639 = vld [vmem:[#allocation3 + $0x80] sm:$0x20]
        %v2640 = vld [vmem:[#allocation3 + $0xa0] sm:$0x20]
        %v2641 = vld [vmem:[#allocation3 + $0xc0] sm:$0x20]
        %v2642 = vld [vmem:[#allocation3 + $0xe0] sm:$0x20]
        %v2651 = vunpack.c.h.b16 %v2635
        %v2652 = vunpack.c.h.b16 %v2636
        %v2653 = vunpack.c.h.b16 %v2637
        %v2654 = vunpack.c.h.b16 %v2638
        %v2655 = vunpack.c.h.b16 %v2639
        %v2656 = vunpack.c.h.b16 %v2640
        %v2657 = vunpack.c.h.b16 %v2641
        %v2658 = vunpack.c.h.b16 %v2642
        %v2659 = vrot.slane %v2651, 2
        %v2660 = vrot.slane %v2652, 1
        %v2661 = vsel %vm1198, %v2660, %v2659
        %v2662 = vsel %vm1201, %v2653, %v2661
        %v2663 = vrot.slane %v2654, 7
        %v2664 = vsel %vm1204, %v2663, %v2662
        %v2665 = vrot.slane %v2655, 6
        %v2666 = vsel %vm1207, %v2665, %v2664
        %v2667 = vrot.slane %v2656, 5
        %v2668 = vsel %vm1210, %v2667, %v2666
        %v2669 = vrot.slane %v2657, 4
        %v2670 = vsel %vm1213, %v2669, %v2668
        %v2671 = vrot.slane %v2658, 3
        %v2672 = vsel %vm1216, %v2671, %v2670
        %v2673 = vpack.c.b16 %v2672, %v2672
        %v2675 = vsel %vm1223, %v2673, 0
        %2677 = vmatprep.subr.bf16.mxu0 0
        %2678 = vmatpush1.bf16.msra.mxu0 %v2675
        %2679 = vmatprep.subr.bf16.mxu0 0
        %2680 = vmatpush1.bf16.msra.mxu0 0
        %2681 = vmatprep.subr.bf16.mxu0 0
        %2682 = vmatpush1.bf16.msra.mxu0 0
        %2683 = vmatprep.subr.bf16.mxu0 0
        %2684 = vmatpush1.bf16.msra.mxu0 0
        %2685 = vmatprep.subr.bf16.mxu0 0
        %2686 = vmatpush1.bf16.msra.mxu0 0
        %2687 = vmatprep.subr.bf16.mxu0 0
        %2688 = vmatpush1.bf16.msra.mxu0 0
        %2689 = vmatprep.subr.bf16.mxu0 0
        %2690 = vmatpush1.bf16.msra.mxu0 0
        %2691 = vmatprep.subr.bf16.mxu0 0
        %2692 = vmatpush1.bf16.msra.mxu0 0
        %2693 = vmatprep.subr.bf16.mxu0 0
        %2694 = vmatpush1.bf16.msra.mxu0 0
        %2695 = vmatprep.subr.bf16.mxu0 0
        %2696 = vmatpush1.bf16.msra.mxu0 0
        %2697 = vmatprep.subr.bf16.mxu0 0
        %2698 = vmatpush1.bf16.msra.mxu0 0
        %2699 = vmatprep.subr.bf16.mxu0 0
        %2700 = vmatpush1.bf16.msra.mxu0 0
        %2701 = vmatprep.subr.bf16.mxu0 0
        %2702 = vmatpush1.bf16.msra.mxu0 0
        %2703 = vmatprep.subr.bf16.mxu0 0
        %2704 = vmatpush1.bf16.msra.mxu0 0
        %2705 = vmatprep.subr.bf16.mxu0 0
        %2706 = vmatpush1.bf16.msra.mxu0 0
        %2707 = vmatprep.subr.bf16.mxu0 0
        %2708 = vmatpush1.bf16.msra.mxu0 0
        %2709 = vmatprep.mubr.bf16.mxu0 0
        %2710 = vmatmul.mubr.bf16.gmra.mrb[0].mxu0 %v1221
        %v2711 = vpop.f32.mrb[0].mxu0
        %v2712 = vadd.f32 0.0, %v2711
        %v2713 = vpop.f32.mrb[0].mxu0
        %v2714 = vpop.f32.mrb[0].mxu0
        %v2715 = vpop.f32.mrb[0].mxu0
        %2716 = vdwg.mxu0
        %v2718 = vcombine.high %v2712, %v2712
        %v2720 = vunpack.c.l.s4 1966171168
        %v2721 = vunpack.c.0.s8 %v2720
        %v2722 = vlaneseq
        %v2723 = vshrl.u32 %v2722, 7
        %v2724 = vsub.s32 %v2721, %v2723
        %v2725 = vrot.slane %v2712, %v2724
        %v2727 = vunpack.c.l.s4 1966171168
        %v2728 = vunpack.c.0.s8 %v2727
        %v2729 = vlaneseq
        %v2730 = vshrl.u32 %v2729, 7
        %v2731 = vsub.s32 %v2728, %v2730
        %v2732 = vrot.slane %v2718, %v2731
        %v2733 = vcombine.high %v2725, %v2725
        %v2734 = vcombine.high %v2732, %v2732
        %v2736 = vunpack.c.l.s4 1966171168
        %v2737 = vunpack.c.0.s8 %v2736
        %v2738 = vlaneseq
        %v2739 = vshrl.u32 %v2738, 7
        %v2740 = vsub.s32 %v2737, %v2739
        %v2741 = vrot.slane %v2725, %v2740
        %v2743 = vunpack.c.l.s4 1966171168
        %v2744 = vunpack.c.0.s8 %v2743
        %v2745 = vlaneseq
        %v2746 = vshrl.u32 %v2745, 7
        %v2747 = vsub.s32 %v2744, %v2746
        %v2748 = vrot.slane %v2732, %v2747
        %v2750 = vunpack.c.l.s4 1966171168
        %v2751 = vunpack.c.0.s8 %v2750
        %v2752 = vlaneseq
        %v2753 = vshrl.u32 %v2752, 7
        %v2754 = vsub.s32 %v2751, %v2753
        %v2755 = vrot.slane %v2733, %v2754
        %v2757 = vunpack.c.l.s4 1966171168
        %v2758 = vunpack.c.0.s8 %v2757
        %v2759 = vlaneseq
        %v2760 = vshrl.u32 %v2759, 7
        %v2761 = vsub.s32 %v2758, %v2760
        %v2762 = vrot.slane %v2734, %v2761
        %v2763 = vcombine.high %v2741, %v2741
        %v2764 = vcombine.high %v2748, %v2748
        %v2765 = vcombine.high %v2755, %v2755
        %2773 = vst [vmem:[%s206 + $0xa] sm:$0x1] %v2741
        %2774 = vst [vmem:[%s206 + $0x4a] sm:$0x1] %v2755
        %2775 = vst [vmem:[%s206 + $0x8a] sm:$0x1] %v2763
        %2776 = vst [vmem:[%s206 + $0xca] sm:$0x1] %v2765
        %2777 = vst [vmem:[%s206 + $0x10a] sm:$0x1] %v2748
        %2778 = vst [vmem:[%s206 + $0x14a] sm:$0x1] %v2762
        %2779 = vst [vmem:[%s206 + $0x18a] sm:$0x1] %v2764
        %v2780 = vld [vmem:[#allocation3] sm:$0x20]
        %v2781 = vld [vmem:[#allocation3 + $0x20] sm:$0x20]
        %v2782 = vld [vmem:[#allocation3 + $0x40] sm:$0x20]
        %v2783 = vld [vmem:[#allocation3 + $0x60] sm:$0x20]
        %v2784 = vld [vmem:[#allocation3 + $0x80] sm:$0x20]
        %v2785 = vld [vmem:[#allocation3 + $0xa0] sm:$0x20]
        %v2786 = vld [vmem:[#allocation3 + $0xc0] sm:$0x20]
        %v2787 = vld [vmem:[#allocation3 + $0xe0] sm:$0x20]
        %v2796 = vunpack.c.h.b16 %v2780
        %v2797 = vunpack.c.h.b16 %v2781
        %v2798 = vunpack.c.h.b16 %v2782
        %v2799 = vunpack.c.h.b16 %v2783
        %v2800 = vunpack.c.h.b16 %v2784
        %v2801 = vunpack.c.h.b16 %v2785
        %v2802 = vunpack.c.h.b16 %v2786
        %v2803 = vunpack.c.h.b16 %v2787
        %v2804 = vrot.slane %v2796, 3
        %v2805 = vrot.slane %v2797, 2
        %v2806 = vsel %vm1198, %v2805, %v2804
        %v2807 = vrot.slane %v2798, 1
        %v2808 = vsel %vm1201, %v2807, %v2806
        %v2809 = vsel %vm1204, %v2799, %v2808
        %v2810 = vrot.slane %v2800, 7
        %v2811 = vsel %vm1207, %v2810, %v2809
        %v2812 = vrot.slane %v2801, 6
        %v2813 = vsel %vm1210, %v2812, %v2811
        %v2814 = vrot.slane %v2802, 5
        %v2815 = vsel %vm1213, %v2814, %v2813
        %v2816 = vrot.slane %v2803, 4
        %v2817 = vsel %vm1216, %v2816, %v2815
        %v2818 = vpack.c.b16 %v2817, %v2817
        %v2820 = vsel %vm1223, %v2818, 0
        %2822 = vmatprep.subr.bf16.mxu0 0
        %2823 = vmatpush1.bf16.msra.mxu0 %v2820
        %2824 = vmatprep.subr.bf16.mxu0 0
        %2825 = vmatpush1.bf16.msra.mxu0 0
        %2826 = vmatprep.subr.bf16.mxu0 0
        %2827 = vmatpush1.bf16.msra.mxu0 0
        %2828 = vmatprep.subr.bf16.mxu0 0
        %2829 = vmatpush1.bf16.msra.mxu0 0
        %2830 = vmatprep.subr.bf16.mxu0 0
        %2831 = vmatpush1.bf16.msra.mxu0 0
        %2832 = vmatprep.subr.bf16.mxu0 0
        %2833 = vmatpush1.bf16.msra.mxu0 0
        %2834 = vmatprep.subr.bf16.mxu0 0
        %2835 = vmatpush1.bf16.msra.mxu0 0
        %2836 = vmatprep.subr.bf16.mxu0 0
        %2837 = vmatpush1.bf16.msra.mxu0 0
        %2838 = vmatprep.subr.bf16.mxu0 0
        %2839 = vmatpush1.bf16.msra.mxu0 0
        %2840 = vmatprep.subr.bf16.mxu0 0
        %2841 = vmatpush1.bf16.msra.mxu0 0
        %2842 = vmatprep.subr.bf16.mxu0 0
        %2843 = vmatpush1.bf16.msra.mxu0 0
        %2844 = vmatprep.subr.bf16.mxu0 0
        %2845 = vmatpush1.bf16.msra.mxu0 0
        %2846 = vmatprep.subr.bf16.mxu0 0
        %2847 = vmatpush1.bf16.msra.mxu0 0
        %2848 = vmatprep.subr.bf16.mxu0 0
        %2849 = vmatpush1.bf16.msra.mxu0 0
        %2850 = vmatprep.subr.bf16.mxu0 0
        %2851 = vmatpush1.bf16.msra.mxu0 0
        %2852 = vmatprep.subr.bf16.mxu0 0
        %2853 = vmatpush1.bf16.msra.mxu0 0
        %2854 = vmatprep.mubr.bf16.mxu0 0
        %2855 = vmatmul.mubr.bf16.gmra.mrb[0].mxu0 %v1221
        %v2856 = vpop.f32.mrb[0].mxu0
        %v2857 = vadd.f32 0.0, %v2856
        %v2858 = vpop.f32.mrb[0].mxu0
        %v2859 = vpop.f32.mrb[0].mxu0
        %v2860 = vpop.f32.mrb[0].mxu0
        %2861 = vdwg.mxu0
        %v2863 = vcombine.high %v2857, %v2857
        %v2865 = vunpack.c.l.s4 1966171168
        %v2866 = vunpack.c.0.s8 %v2865
        %v2867 = vlaneseq
        %v2868 = vshrl.u32 %v2867, 7
        %v2869 = vsub.s32 %v2866, %v2868
        %v2870 = vrot.slane %v2857, %v2869
        %v2872 = vunpack.c.l.s4 1966171168
        %v2873 = vunpack.c.0.s8 %v2872
        %v2874 = vlaneseq
        %v2875 = vshrl.u32 %v2874, 7
        %v2876 = vsub.s32 %v2873, %v2875
        %v2877 = vrot.slane %v2863, %v2876
        %v2878 = vcombine.high %v2870, %v2870
        %v2879 = vcombine.high %v2877, %v2877
        %v2881 = vunpack.c.l.s4 1966171168
        %v2882 = vunpack.c.0.s8 %v2881
        %v2883 = vlaneseq
        %v2884 = vshrl.u32 %v2883, 7
        %v2885 = vsub.s32 %v2882, %v2884
        %v2886 = vrot.slane %v2870, %v2885
        %v2888 = vunpack.c.l.s4 1966171168
        %v2889 = vunpack.c.0.s8 %v2888
        %v2890 = vlaneseq
        %v2891 = vshrl.u32 %v2890, 7
        %v2892 = vsub.s32 %v2889, %v2891
        %v2893 = vrot.slane %v2877, %v2892
        %v2895 = vunpack.c.l.s4 1966171168
        %v2896 = vunpack.c.0.s8 %v2895
        %v2897 = vlaneseq
        %v2898 = vshrl.u32 %v2897, 7
        %v2899 = vsub.s32 %v2896, %v2898
        %v2900 = vrot.slane %v2878, %v2899
        %v2902 = vunpack.c.l.s4 1966171168
        %v2903 = vunpack.c.0.s8 %v2902
        %v2904 = vlaneseq
        %v2905 = vshrl.u32 %v2904, 7
        %v2906 = vsub.s32 %v2903, %v2905
        %v2907 = vrot.slane %v2879, %v2906
        %v2908 = vcombine.high %v2886, %v2886
        %v2909 = vcombine.high %v2893, %v2893
        %v2910 = vcombine.high %v2900, %v2900
        %2918 = vst [vmem:[%s206 + $0xb] sm:$0x1] %v2886
        %2919 = vst [vmem:[%s206 + $0x4b] sm:$0x1] %v2900
        %2920 = vst [vmem:[%s206 + $0x8b] sm:$0x1] %v2908
        %2921 = vst [vmem:[%s206 + $0xcb] sm:$0x1] %v2910
        %2922 = vst [vmem:[%s206 + $0x10b] sm:$0x1] %v2893
        %2923 = vst [vmem:[%s206 + $0x14b] sm:$0x1] %v2907
        %2924 = vst [vmem:[%s206 + $0x18b] sm:$0x1] %v2909
        %v2925 = vld [vmem:[#allocation3] sm:$0x40]
        %v2926 = vld [vmem:[#allocation3 + $0x20] sm:$0x40]
        %v2927 = vld [vmem:[#allocation3 + $0x40] sm:$0x40]
        %v2928 = vld [vmem:[#allocation3 + $0x60] sm:$0x40]
        %v2929 = vld [vmem:[#allocation3 + $0x80] sm:$0x40]
        %v2930 = vld [vmem:[#allocation3 + $0xa0] sm:$0x40]
        %v2931 = vld [vmem:[#allocation3 + $0xc0] sm:$0x40]
        %v2932 = vld [vmem:[#allocation3 + $0xe0] sm:$0x40]
        %v2941 = vunpack.c.h.b16 %v2925
        %v2942 = vunpack.c.h.b16 %v2926
        %v2943 = vunpack.c.h.b16 %v2927
        %v2944 = vunpack.c.h.b16 %v2928
        %v2945 = vunpack.c.h.b16 %v2929
        %v2946 = vunpack.c.h.b16 %v2930
        %v2947 = vunpack.c.h.b16 %v2931
        %v2948 = vunpack.c.h.b16 %v2932
        %v2949 = vrot.slane %v2941, 4
        %v2950 = vrot.slane %v2942, 3
        %v2951 = vsel %vm1198, %v2950, %v2949
        %v2952 = vrot.slane %v2943, 2
        %v2953 = vsel %vm1201, %v2952, %v2951
        %v2954 = vrot.slane %v2944, 1
        %v2955 = vsel %vm1204, %v2954, %v2953
        %v2956 = vsel %vm1207, %v2945, %v2955
        %v2957 = vrot.slane %v2946, 7
        %v2958 = vsel %vm1210, %v2957, %v2956
        %v2959 = vrot.slane %v2947, 6
        %v2960 = vsel %vm1213, %v2959, %v2958
        %v2961 = vrot.slane %v2948, 5
        %v2962 = vsel %vm1216, %v2961, %v2960
        %v2963 = vpack.c.b16 %v2962, %v2962
        %v2965 = vsel %vm1223, %v2963, 0
        %2967 = vmatprep.subr.bf16.mxu0 0
        %2968 = vmatpush1.bf16.msra.mxu0 %v2965
        %2969 = vmatprep.subr.bf16.mxu0 0
        %2970 = vmatpush1.bf16.msra.mxu0 0
        %2971 = vmatprep.subr.bf16.mxu0 0
        %2972 = vmatpush1.bf16.msra.mxu0 0
        %2973 = vmatprep.subr.bf16.mxu0 0
        %2974 = vmatpush1.bf16.msra.mxu0 0
        %2975 = vmatprep.subr.bf16.mxu0 0
        %2976 = vmatpush1.bf16.msra.mxu0 0
        %2977 = vmatprep.subr.bf16.mxu0 0
        %2978 = vmatpush1.bf16.msra.mxu0 0
        %2979 = vmatprep.subr.bf16.mxu0 0
        %2980 = vmatpush1.bf16.msra.mxu0 0
        %2981 = vmatprep.subr.bf16.mxu0 0
        %2982 = vmatpush1.bf16.msra.mxu0 0
        %2983 = vmatprep.subr.bf16.mxu0 0
        %2984 = vmatpush1.bf16.msra.mxu0 0
        %2985 = vmatprep.subr.bf16.mxu0 0
        %2986 = vmatpush1.bf16.msra.mxu0 0
        %2987 = vmatprep.subr.bf16.mxu0 0
        %2988 = vmatpush1.bf16.msra.mxu0 0
        %2989 = vmatprep.subr.bf16.mxu0 0
        %2990 = vmatpush1.bf16.msra.mxu0 0
        %2991 = vmatprep.subr.bf16.mxu0 0
        %2992 = vmatpush1.bf16.msra.mxu0 0
        %2993 = vmatprep.subr.bf16.mxu0 0
        %2994 = vmatpush1.bf16.msra.mxu0 0
        %2995 = vmatprep.subr.bf16.mxu0 0
        %2996 = vmatpush1.bf16.msra.mxu0 0
        %2997 = vmatprep.subr.bf16.mxu0 0
        %2998 = vmatpush1.bf16.msra.mxu0 0
        %2999 = vmatprep.mubr.bf16.mxu0 0
        %3000 = vmatmul.mubr.bf16.gmra.mrb[0].mxu0 %v1221
        %v3001 = vpop.f32.mrb[0].mxu0
        %v3002 = vadd.f32 0.0, %v3001
        %v3003 = vpop.f32.mrb[0].mxu0
        %v3004 = vpop.f32.mrb[0].mxu0
        %v3005 = vpop.f32.mrb[0].mxu0
        %3006 = vdwg.mxu0
        %v3008 = vcombine.high %v3002, %v3002
        %v3010 = vunpack.c.l.s4 1966171168
        %v3011 = vunpack.c.0.s8 %v3010
        %v3012 = vlaneseq
        %v3013 = vshrl.u32 %v3012, 7
        %v3014 = vsub.s32 %v3011, %v3013
        %v3015 = vrot.slane %v3002, %v3014
        %v3017 = vunpack.c.l.s4 1966171168
        %v3018 = vunpack.c.0.s8 %v3017
        %v3019 = vlaneseq
        %v3020 = vshrl.u32 %v3019, 7
        %v3021 = vsub.s32 %v3018, %v3020
        %v3022 = vrot.slane %v3008, %v3021
        %v3023 = vcombine.high %v3015, %v3015
        %v3024 = vcombine.high %v3022, %v3022
        %v3026 = vunpack.c.l.s4 1966171168
        %v3027 = vunpack.c.0.s8 %v3026
        %v3028 = vlaneseq
        %v3029 = vshrl.u32 %v3028, 7
        %v3030 = vsub.s32 %v3027, %v3029
        %v3031 = vrot.slane %v3015, %v3030
        %v3033 = vunpack.c.l.s4 1966171168
        %v3034 = vunpack.c.0.s8 %v3033
        %v3035 = vlaneseq
        %v3036 = vshrl.u32 %v3035, 7
        %v3037 = vsub.s32 %v3034, %v3036
        %v3038 = vrot.slane %v3022, %v3037
        %v3040 = vunpack.c.l.s4 1966171168
        %v3041 = vunpack.c.0.s8 %v3040
        %v3042 = vlaneseq
        %v3043 = vshrl.u32 %v3042, 7
        %v3044 = vsub.s32 %v3041, %v3043
        %v3045 = vrot.slane %v3023, %v3044
        %v3047 = vunpack.c.l.s4 1966171168
        %v3048 = vunpack.c.0.s8 %v3047
        %v3049 = vlaneseq
        %v3050 = vshrl.u32 %v3049, 7
        %v3051 = vsub.s32 %v3048, %v3050
        %v3052 = vrot.slane %v3024, %v3051
        %v3053 = vcombine.high %v3031, %v3031
        %v3054 = vcombine.high %v3038, %v3038
        %v3055 = vcombine.high %v3045, %v3045
        %3063 = vst [vmem:[%s206 + $0xc] sm:$0x1] %v3031
        %3064 = vst [vmem:[%s206 + $0x4c] sm:$0x1] %v3045
        %3065 = vst [vmem:[%s206 + $0x8c] sm:$0x1] %v3053
        %3066 = vst [vmem:[%s206 + $0xcc] sm:$0x1] %v3055
        %3067 = vst [vmem:[%s206 + $0x10c] sm:$0x1] %v3038
        %3068 = vst [vmem:[%s206 + $0x14c] sm:$0x1] %v3052
        %3069 = vst [vmem:[%s206 + $0x18c] sm:$0x1] %v3054
        %v3070 = vld [vmem:[#allocation3] sm:$0x40]
        %v3071 = vld [vmem:[#allocation3 + $0x20] sm:$0x40]
        %v3072 = vld [vmem:[#allocation3 + $0x40] sm:$0x40]
        %v3073 = vld [vmem:[#allocation3 + $0x60] sm:$0x40]
        %v3074 = vld [vmem:[#allocation3 + $0x80] sm:$0x40]
        %v3075 = vld [vmem:[#allocation3 + $0xa0] sm:$0x40]
        %v3076 = vld [vmem:[#allocation3 + $0xc0] sm:$0x40]
        %v3077 = vld [vmem:[#allocation3 + $0xe0] sm:$0x40]
        %v3086 = vunpack.c.h.b16 %v3070
        %v3087 = vunpack.c.h.b16 %v3071
        %v3088 = vunpack.c.h.b16 %v3072
        %v3089 = vunpack.c.h.b16 %v3073
        %v3090 = vunpack.c.h.b16 %v3074
        %v3091 = vunpack.c.h.b16 %v3075
        %v3092 = vunpack.c.h.b16 %v3076
        %v3093 = vunpack.c.h.b16 %v3077
        %v3094 = vrot.slane %v3086, 5
        %v3095 = vrot.slane %v3087, 4
        %v3096 = vsel %vm1198, %v3095, %v3094
        %v3097 = vrot.slane %v3088, 3
        %v3098 = vsel %vm1201, %v3097, %v3096
        %v3099 = vrot.slane %v3089, 2
        %v3100 = vsel %vm1204, %v3099, %v3098
        %v3101 = vrot.slane %v3090, 1
        %v3102 = vsel %vm1207, %v3101, %v3100
        %v3103 = vsel %vm1210, %v3091, %v3102
        %v3104 = vrot.slane %v3092, 7
        %v3105 = vsel %vm1213, %v3104, %v3103
        %v3106 = vrot.slane %v3093, 6
        %v3107 = vsel %vm1216, %v3106, %v3105
        %v3108 = vpack.c.b16 %v3107, %v3107
        %v3110 = vsel %vm1223, %v3108, 0
        %3112 = vmatprep.subr.bf16.mxu0 0
        %3113 = vmatpush1.bf16.msra.mxu0 %v3110
        %3114 = vmatprep.subr.bf16.mxu0 0
        %3115 = vmatpush1.bf16.msra.mxu0 0
        %3116 = vmatprep.subr.bf16.mxu0 0
        %3117 = vmatpush1.bf16.msra.mxu0 0
        %3118 = vmatprep.subr.bf16.mxu0 0
        %3119 = vmatpush1.bf16.msra.mxu0 0
        %3120 = vmatprep.subr.bf16.mxu0 0
        %3121 = vmatpush1.bf16.msra.mxu0 0
        %3122 = vmatprep.subr.bf16.mxu0 0
        %3123 = vmatpush1.bf16.msra.mxu0 0
        %3124 = vmatprep.subr.bf16.mxu0 0
        %3125 = vmatpush1.bf16.msra.mxu0 0
        %3126 = vmatprep.subr.bf16.mxu0 0
        %3127 = vmatpush1.bf16.msra.mxu0 0
        %3128 = vmatprep.subr.bf16.mxu0 0
        %3129 = vmatpush1.bf16.msra.mxu0 0
        %3130 = vmatprep.subr.bf16.mxu0 0
        %3131 = vmatpush1.bf16.msra.mxu0 0
        %3132 = vmatprep.subr.bf16.mxu0 0
        %3133 = vmatpush1.bf16.msra.mxu0 0
        %3134 = vmatprep.subr.bf16.mxu0 0
        %3135 = vmatpush1.bf16.msra.mxu0 0
        %3136 = vmatprep.subr.bf16.mxu0 0
        %3137 = vmatpush1.bf16.msra.mxu0 0
        %3138 = vmatprep.subr.bf16.mxu0 0
        %3139 = vmatpush1.bf16.msra.mxu0 0
        %3140 = vmatprep.subr.bf16.mxu0 0
        %3141 = vmatpush1.bf16.msra.mxu0 0
        %3142 = vmatprep.subr.bf16.mxu0 0
        %3143 = vmatpush1.bf16.msra.mxu0 0
        %3144 = vmatprep.mubr.bf16.mxu0 0
        %3145 = vmatmul.mubr.bf16.gmra.mrb[0].mxu0 %v1221
        %v3146 = vpop.f32.mrb[0].mxu0
        %v3147 = vadd.f32 0.0, %v3146
        %v3148 = vpop.f32.mrb[0].mxu0
        %v3149 = vpop.f32.mrb[0].mxu0
        %v3150 = vpop.f32.mrb[0].mxu0
        %3151 = vdwg.mxu0
        %v3153 = vcombine.high %v3147, %v3147
        %v3155 = vunpack.c.l.s4 1966171168
        %v3156 = vunpack.c.0.s8 %v3155
        %v3157 = vlaneseq
        %v3158 = vshrl.u32 %v3157, 7
        %v3159 = vsub.s32 %v3156, %v3158
        %v3160 = vrot.slane %v3147, %v3159
        %v3162 = vunpack.c.l.s4 1966171168
        %v3163 = vunpack.c.0.s8 %v3162
        %v3164 = vlaneseq
        %v3165 = vshrl.u32 %v3164, 7
        %v3166 = vsub.s32 %v3163, %v3165
        %v3167 = vrot.slane %v3153, %v3166
        %v3168 = vcombine.high %v3160, %v3160
        %v3169 = vcombine.high %v3167, %v3167
        %v3171 = vunpack.c.l.s4 1966171168
        %v3172 = vunpack.c.0.s8 %v3171
        %v3173 = vlaneseq
        %v3174 = vshrl.u32 %v3173, 7
        %v3175 = vsub.s32 %v3172, %v3174
        %v3176 = vrot.slane %v3160, %v3175
        %v3178 = vunpack.c.l.s4 1966171168
        %v3179 = vunpack.c.0.s8 %v3178
        %v3180 = vlaneseq
        %v3181 = vshrl.u32 %v3180, 7
        %v3182 = vsub.s32 %v3179, %v3181
        %v3183 = vrot.slane %v3167, %v3182
        %v3185 = vunpack.c.l.s4 1966171168
        %v3186 = vunpack.c.0.s8 %v3185
        %v3187 = vlaneseq
        %v3188 = vshrl.u32 %v3187, 7
        %v3189 = vsub.s32 %v3186, %v3188
        %v3190 = vrot.slane %v3168, %v3189
        %v3192 = vunpack.c.l.s4 1966171168
        %v3193 = vunpack.c.0.s8 %v3192
        %v3194 = vlaneseq
        %v3195 = vshrl.u32 %v3194, 7
        %v3196 = vsub.s32 %v3193, %v3195
        %v3197 = vrot.slane %v3169, %v3196
        %v3198 = vcombine.high %v3176, %v3176
        %v3199 = vcombine.high %v3183, %v3183
        %v3200 = vcombine.high %v3190, %v3190
        %3208 = vst [vmem:[%s206 + $0xd] sm:$0x1] %v3176
        %3209 = vst [vmem:[%s206 + $0x4d] sm:$0x1] %v3190
        %3210 = vst [vmem:[%s206 + $0x8d] sm:$0x1] %v3198
        %3211 = vst [vmem:[%s206 + $0xcd] sm:$0x1] %v3200
        %3212 = vst [vmem:[%s206 + $0x10d] sm:$0x1] %v3183
        %3213 = vst [vmem:[%s206 + $0x14d] sm:$0x1] %v3197
        %3214 = vst [vmem:[%s206 + $0x18d] sm:$0x1] %v3199
        %v3215 = vld [vmem:[#allocation3] sm:$0x80]
        %v3216 = vld [vmem:[#allocation3 + $0x20] sm:$0x80]
        %v3217 = vld [vmem:[#allocation3 + $0x40] sm:$0x80]
        %v3218 = vld [vmem:[#allocation3 + $0x60] sm:$0x80]
        %v3219 = vld [vmem:[#allocation3 + $0x80] sm:$0x80]
        %v3220 = vld [vmem:[#allocation3 + $0xa0] sm:$0x80]
        %v3221 = vld [vmem:[#allocation3 + $0xc0] sm:$0x80]
        %v3222 = vld [vmem:[#allocation3 + $0xe0] sm:$0x80]
        %v3231 = vunpack.c.h.b16 %v3215
        %v3232 = vunpack.c.h.b16 %v3216
        %v3233 = vunpack.c.h.b16 %v3217
        %v3234 = vunpack.c.h.b16 %v3218
        %v3235 = vunpack.c.h.b16 %v3219
        %v3236 = vunpack.c.h.b16 %v3220
        %v3237 = vunpack.c.h.b16 %v3221
        %v3238 = vunpack.c.h.b16 %v3222
        %v3239 = vrot.slane %v3231, 6
        %v3240 = vrot.slane %v3232, 5
        %v3241 = vsel %vm1198, %v3240, %v3239
        %v3242 = vrot.slane %v3233, 4
        %v3243 = vsel %vm1201, %v3242, %v3241
        %v3244 = vrot.slane %v3234, 3
        %v3245 = vsel %vm1204, %v3244, %v3243
        %v3246 = vrot.slane %v3235, 2
        %v3247 = vsel %vm1207, %v3246, %v3245
        %v3248 = vrot.slane %v3236, 1
        %v3249 = vsel %vm1210, %v3248, %v3247
        %v3250 = vsel %vm1213, %v3237, %v3249
        %v3251 = vrot.slane %v3238, 7
        %v3252 = vsel %vm1216, %v3251, %v3250
        %v3253 = vpack.c.b16 %v3252, %v3252
        %v3255 = vsel %vm1223, %v3253, 0
        %3257 = vmatprep.subr.bf16.mxu0 0
        %3258 = vmatpush1.bf16.msra.mxu0 %v3255
        %3259 = vmatprep.subr.bf16.mxu0 0
        %3260 = vmatpush1.bf16.msra.mxu0 0
        %3261 = vmatprep.subr.bf16.mxu0 0
        %3262 = vmatpush1.bf16.msra.mxu0 0
        %3263 = vmatprep.subr.bf16.mxu0 0
        %3264 = vmatpush1.bf16.msra.mxu0 0
        %3265 = vmatprep.subr.bf16.mxu0 0
        %3266 = vmatpush1.bf16.msra.mxu0 0
        %3267 = vmatprep.subr.bf16.mxu0 0
        %3268 = vmatpush1.bf16.msra.mxu0 0
        %3269 = vmatprep.subr.bf16.mxu0 0
        %3270 = vmatpush1.bf16.msra.mxu0 0
        %3271 = vmatprep.subr.bf16.mxu0 0
        %3272 = vmatpush1.bf16.msra.mxu0 0
        %3273 = vmatprep.subr.bf16.mxu0 0
        %3274 = vmatpush1.bf16.msra.mxu0 0
        %3275 = vmatprep.subr.bf16.mxu0 0
        %3276 = vmatpush1.bf16.msra.mxu0 0
        %3277 = vmatprep.subr.bf16.mxu0 0
        %3278 = vmatpush1.bf16.msra.mxu0 0
        %3279 = vmatprep.subr.bf16.mxu0 0
        %3280 = vmatpush1.bf16.msra.mxu0 0
        %3281 = vmatprep.subr.bf16.mxu0 0
        %3282 = vmatpush1.bf16.msra.mxu0 0
        %3283 = vmatprep.subr.bf16.mxu0 0
        %3284 = vmatpush1.bf16.msra.mxu0 0
        %3285 = vmatprep.subr.bf16.mxu0 0
        %3286 = vmatpush1.bf16.msra.mxu0 0
        %3287 = vmatprep.subr.bf16.mxu0 0
        %3288 = vmatpush1.bf16.msra.mxu0 0
        %3289 = vmatprep.mubr.bf16.mxu0 0
        %3290 = vmatmul.mubr.bf16.gmra.mrb[0].mxu0 %v1221
        %v3291 = vpop.f32.mrb[0].mxu0
        %v3292 = vadd.f32 0.0, %v3291
        %v3293 = vpop.f32.mrb[0].mxu0
        %v3294 = vpop.f32.mrb[0].mxu0
        %v3295 = vpop.f32.mrb[0].mxu0
        %3296 = vdwg.mxu0
        %v3298 = vcombine.high %v3292, %v3292
        %v3300 = vunpack.c.l.s4 1966171168
        %v3301 = vunpack.c.0.s8 %v3300
        %v3302 = vlaneseq
        %v3303 = vshrl.u32 %v3302, 7
        %v3304 = vsub.s32 %v3301, %v3303
        %v3305 = vrot.slane %v3292, %v3304
        %v3307 = vunpack.c.l.s4 1966171168
        %v3308 = vunpack.c.0.s8 %v3307
        %v3309 = vlaneseq
        %v3310 = vshrl.u32 %v3309, 7
        %v3311 = vsub.s32 %v3308, %v3310
        %v3312 = vrot.slane %v3298, %v3311
        %v3313 = vcombine.high %v3305, %v3305
        %v3314 = vcombine.high %v3312, %v3312
        %v3316 = vunpack.c.l.s4 1966171168
        %v3317 = vunpack.c.0.s8 %v3316
        %v3318 = vlaneseq
        %v3319 = vshrl.u32 %v3318, 7
        %v3320 = vsub.s32 %v3317, %v3319
        %v3321 = vrot.slane %v3305, %v3320
        %v3323 = vunpack.c.l.s4 1966171168
        %v3324 = vunpack.c.0.s8 %v3323
        %v3325 = vlaneseq
        %v3326 = vshrl.u32 %v3325, 7
        %v3327 = vsub.s32 %v3324, %v3326
        %v3328 = vrot.slane %v3312, %v3327
        %v3330 = vunpack.c.l.s4 1966171168
        %v3331 = vunpack.c.0.s8 %v3330
        %v3332 = vlaneseq
        %v3333 = vshrl.u32 %v3332, 7
        %v3334 = vsub.s32 %v3331, %v3333
        %v3335 = vrot.slane %v3313, %v3334
        %v3337 = vunpack.c.l.s4 1966171168
        %v3338 = vunpack.c.0.s8 %v3337
        %v3339 = vlaneseq
        %v3340 = vshrl.u32 %v3339, 7
        %v3341 = vsub.s32 %v3338, %v3340
        %v3342 = vrot.slane %v3314, %v3341
        %v3343 = vcombine.high %v3321, %v3321
        %v3344 = vcombine.high %v3328, %v3328
        %v3345 = vcombine.high %v3335, %v3335
        %3353 = vst [vmem:[%s206 + $0xe] sm:$0x1] %v3321
        %3354 = vst [vmem:[%s206 + $0x4e] sm:$0x1] %v3335
        %3355 = vst [vmem:[%s206 + $0x8e] sm:$0x1] %v3343
        %3356 = vst [vmem:[%s206 + $0xce] sm:$0x1] %v3345
        %3357 = vst [vmem:[%s206 + $0x10e] sm:$0x1] %v3328
        %3358 = vst [vmem:[%s206 + $0x14e] sm:$0x1] %v3342
        %3359 = vst [vmem:[%s206 + $0x18e] sm:$0x1] %v3344
        %v3360 = vld [vmem:[#allocation3] sm:$0x80]
        %v3361 = vld [vmem:[#allocation3 + $0x20] sm:$0x80]
        %v3362 = vld [vmem:[#allocation3 + $0x40] sm:$0x80]
        %v3363 = vld [vmem:[#allocation3 + $0x60] sm:$0x80]
        %v3364 = vld [vmem:[#allocation3 + $0x80] sm:$0x80]
        %v3365 = vld [vmem:[#allocation3 + $0xa0] sm:$0x80]
        %v3366 = vld [vmem:[#allocation3 + $0xc0] sm:$0x80]
        %v3367 = vld [vmem:[#allocation3 + $0xe0] sm:$0x80]
        %v3376 = vunpack.c.h.b16 %v3360
        %v3377 = vunpack.c.h.b16 %v3361
        %v3378 = vunpack.c.h.b16 %v3362
        %v3379 = vunpack.c.h.b16 %v3363
        %v3380 = vunpack.c.h.b16 %v3364
        %v3381 = vunpack.c.h.b16 %v3365
        %v3382 = vunpack.c.h.b16 %v3366
        %v3383 = vunpack.c.h.b16 %v3367
        %v3384 = vrot.slane %v3376, 7
        %v3385 = vrot.slane %v3377, 6
        %v3386 = vsel %vm1198, %v3385, %v3384
        %v3387 = vrot.slane %v3378, 5
        %v3388 = vsel %vm1201, %v3387, %v3386
        %v3389 = vrot.slane %v3379, 4
        %v3390 = vsel %vm1204, %v3389, %v3388
        %v3391 = vrot.slane %v3380, 3
        %v3392 = vsel %vm1207, %v3391, %v3390
        %v3393 = vrot.slane %v3381, 2
        %v3394 = vsel %vm1210, %v3393, %v3392
        %v3395 = vrot.slane %v3382, 1
        %v3396 = vsel %vm1213, %v3395, %v3394
        %v3397 = vsel %vm1216, %v3383, %v3396
        %v3398 = vpack.c.b16 %v3397, %v3397
        %v3400 = vsel %vm1223, %v3398, 0
        %3402 = vmatprep.subr.bf16.mxu0 0
        %3403 = vmatpush1.bf16.msra.mxu0 %v3400
        %3404 = vmatprep.subr.bf16.mxu0 0
        %3405 = vmatpush1.bf16.msra.mxu0 0
        %3406 = vmatprep.subr.bf16.mxu0 0
        %3407 = vmatpush1.bf16.msra.mxu0 0
        %3408 = vmatprep.subr.bf16.mxu0 0
        %3409 = vmatpush1.bf16.msra.mxu0 0
        %3410 = vmatprep.subr.bf16.mxu0 0
        %3411 = vmatpush1.bf16.msra.mxu0 0
        %3412 = vmatprep.subr.bf16.mxu0 0
        %3413 = vmatpush1.bf16.msra.mxu0 0
        %3414 = vmatprep.subr.bf16.mxu0 0
        %3415 = vmatpush1.bf16.msra.mxu0 0
        %3416 = vmatprep.subr.bf16.mxu0 0
        %3417 = vmatpush1.bf16.msra.mxu0 0
        %3418 = vmatprep.subr.bf16.mxu0 0
        %3419 = vmatpush1.bf16.msra.mxu0 0
        %3420 = vmatprep.subr.bf16.mxu0 0
        %3421 = vmatpush1.bf16.msra.mxu0 0
        %3422 = vmatprep.subr.bf16.mxu0 0
        %3423 = vmatpush1.bf16.msra.mxu0 0
        %3424 = vmatprep.subr.bf16.mxu0 0
        %3425 = vmatpush1.bf16.msra.mxu0 0
        %3426 = vmatprep.subr.bf16.mxu0 0
        %3427 = vmatpush1.bf16.msra.mxu0 0
        %3428 = vmatprep.subr.bf16.mxu0 0
        %3429 = vmatpush1.bf16.msra.mxu0 0
        %3430 = vmatprep.subr.bf16.mxu0 0
        %3431 = vmatpush1.bf16.msra.mxu0 0
        %3432 = vmatprep.subr.bf16.mxu0 0
        %3433 = vmatpush1.bf16.msra.mxu0 0
        %3434 = vmatprep.mubr.bf16.mxu0 0
        %3435 = vmatmul.mubr.bf16.gmra.mrb[0].mxu0 %v1221
        %v3436 = vpop.f32.mrb[0].mxu0
        %v3437 = vadd.f32 0.0, %v3436
        %v3438 = vpop.f32.mrb[0].mxu0
        %v3439 = vpop.f32.mrb[0].mxu0
        %v3440 = vpop.f32.mrb[0].mxu0
        %3441 = vdwg.mxu0
        %v3443 = vcombine.high %v3437, %v3437
        %v3445 = vunpack.c.l.s4 1966171168
        %v3446 = vunpack.c.0.s8 %v3445
        %v3447 = vlaneseq
        %v3448 = vshrl.u32 %v3447, 7
        %v3449 = vsub.s32 %v3446, %v3448
        %v3450 = vrot.slane %v3437, %v3449
        %v3452 = vunpack.c.l.s4 1966171168
        %v3453 = vunpack.c.0.s8 %v3452
        %v3454 = vlaneseq
        %v3455 = vshrl.u32 %v3454, 7
        %v3456 = vsub.s32 %v3453, %v3455
        %v3457 = vrot.slane %v3443, %v3456
        %v3458 = vcombine.high %v3450, %v3450
        %v3459 = vcombine.high %v3457, %v3457
        %v3461 = vunpack.c.l.s4 1966171168
        %v3462 = vunpack.c.0.s8 %v3461
        %v3463 = vlaneseq
        %v3464 = vshrl.u32 %v3463, 7
        %v3465 = vsub.s32 %v3462, %v3464
        %v3466 = vrot.slane %v3450, %v3465
        %v3468 = vunpack.c.l.s4 1966171168
        %v3469 = vunpack.c.0.s8 %v3468
        %v3470 = vlaneseq
        %v3471 = vshrl.u32 %v3470, 7
        %v3472 = vsub.s32 %v3469, %v3471
        %v3473 = vrot.slane %v3457, %v3472
        %v3475 = vunpack.c.l.s4 1966171168
        %v3476 = vunpack.c.0.s8 %v3475
        %v3477 = vlaneseq
        %v3478 = vshrl.u32 %v3477, 7
        %v3479 = vsub.s32 %v3476, %v3478
        %v3480 = vrot.slane %v3458, %v3479
        %v3482 = vunpack.c.l.s4 1966171168
        %v3483 = vunpack.c.0.s8 %v3482
        %v3484 = vlaneseq
        %v3485 = vshrl.u32 %v3484, 7
        %v3486 = vsub.s32 %v3483, %v3485
        %v3487 = vrot.slane %v3459, %v3486
        %v3488 = vcombine.high %v3466, %v3466
        %v3489 = vcombine.high %v3473, %v3473
        %v3490 = vcombine.high %v3480, %v3480
        %3498 = vst [vmem:[%s206 + $0xf] sm:$0x1] %v3466
        %3499 = vst [vmem:[%s206 + $0x4f] sm:$0x1] %v3480
        %3500 = vst [vmem:[%s206 + $0x8f] sm:$0x1] %v3488
        %3501 = vst [vmem:[%s206 + $0xcf] sm:$0x1] %v3490
        %3502 = vst [vmem:[%s206 + $0x10f] sm:$0x1] %v3473
        %3503 = vst [vmem:[%s206 + $0x14f] sm:$0x1] %v3487
        %3504 = vst [vmem:[%s206 + $0x18f] sm:$0x1] %v3489
        %v3505 = vld [vmem:[#allocation3 + $0x8] sm:$0x1]
        %v3506 = vld [vmem:[#allocation3 + $0x28] sm:$0x1]
        %v3507 = vld [vmem:[#allocation3 + $0x48] sm:$0x1]
        %v3508 = vld [vmem:[#allocation3 + $0x68] sm:$0x1]
        %v3509 = vld [vmem:[#allocation3 + $0x88] sm:$0x1]
        %v3510 = vld [vmem:[#allocation3 + $0xa8] sm:$0x1]
        %v3511 = vld [vmem:[#allocation3 + $0xc8] sm:$0x1]
        %v3512 = vld [vmem:[#allocation3 + $0xe8] sm:$0x1]
        %v3521 = vunpack.c.l.b16 %v3505
        %v3522 = vunpack.c.l.b16 %v3506
        %v3523 = vunpack.c.l.b16 %v3507
        %v3524 = vunpack.c.l.b16 %v3508
        %v3525 = vunpack.c.l.b16 %v3509
        %v3526 = vunpack.c.l.b16 %v3510
        %v3527 = vunpack.c.l.b16 %v3511
        %v3528 = vunpack.c.l.b16 %v3512
        %v3529 = vrot.slane %v3522, 7
        %v3530 = vsel %vm1198, %v3529, %v3521
        %v3531 = vrot.slane %v3523, 6
        %v3532 = vsel %vm1201, %v3531, %v3530
        %v3533 = vrot.slane %v3524, 5
        %v3534 = vsel %vm1204, %v3533, %v3532
        %v3535 = vrot.slane %v3525, 4
        %v3536 = vsel %vm1207, %v3535, %v3534
        %v3537 = vrot.slane %v3526, 3
        %v3538 = vsel %vm1210, %v3537, %v3536
        %v3539 = vrot.slane %v3527, 2
        %v3540 = vsel %vm1213, %v3539, %v3538
        %v3541 = vrot.slane %v3528, 1
        %v3542 = vsel %vm1216, %v3541, %v3540
        %v3543 = vpack.c.b16 %v3542, %v3542
        %v3545 = vsel %vm1223, %v3543, 0
        %3547 = vmatprep.subr.bf16.mxu0 0
        %3548 = vmatpush1.bf16.msra.mxu0 %v3545
        %3549 = vmatprep.subr.bf16.mxu0 0
        %3550 = vmatpush1.bf16.msra.mxu0 0
        %3551 = vmatprep.subr.bf16.mxu0 0
        %3552 = vmatpush1.bf16.msra.mxu0 0
        %3553 = vmatprep.subr.bf16.mxu0 0
        %3554 = vmatpush1.bf16.msra.mxu0 0
        %3555 = vmatprep.subr.bf16.mxu0 0
        %3556 = vmatpush1.bf16.msra.mxu0 0
        %3557 = vmatprep.subr.bf16.mxu0 0
        %3558 = vmatpush1.bf16.msra.mxu0 0
        %3559 = vmatprep.subr.bf16.mxu0 0
        %3560 = vmatpush1.bf16.msra.mxu0 0
        %3561 = vmatprep.subr.bf16.mxu0 0
        %3562 = vmatpush1.bf16.msra.mxu0 0
        %3563 = vmatprep.subr.bf16.mxu0 0
        %3564 = vmatpush1.bf16.msra.mxu0 0
        %3565 = vmatprep.subr.bf16.mxu0 0
        %3566 = vmatpush1.bf16.msra.mxu0 0
        %3567 = vmatprep.subr.bf16.mxu0 0
        %3568 = vmatpush1.bf16.msra.mxu0 0
        %3569 = vmatprep.subr.bf16.mxu0 0
        %3570 = vmatpush1.bf16.msra.mxu0 0
        %3571 = vmatprep.subr.bf16.mxu0 0
        %3572 = vmatpush1.bf16.msra.mxu0 0
        %3573 = vmatprep.subr.bf16.mxu0 0
        %3574 = vmatpush1.bf16.msra.mxu0 0
        %3575 = vmatprep.subr.bf16.mxu0 0
        %3576 = vmatpush1.bf16.msra.mxu0 0
        %3577 = vmatprep.subr.bf16.mxu0 0
        %3578 = vmatpush1.bf16.msra.mxu0 0
        %3579 = vmatprep.mubr.bf16.mxu0 0
        %3580 = vmatmul.mubr.bf16.gmra.mrb[0].mxu0 %v1221
        %v3581 = vpop.f32.mrb[0].mxu0
        %v3582 = vadd.f32 0.0, %v3581
        %v3583 = vpop.f32.mrb[0].mxu0
        %v3584 = vpop.f32.mrb[0].mxu0
        %v3585 = vpop.f32.mrb[0].mxu0
        %3586 = vdwg.mxu0
        %v3588 = vcombine.high %v3582, %v3582
        %v3590 = vunpack.c.l.s4 1966171168
        %v3591 = vunpack.c.0.s8 %v3590
        %v3592 = vlaneseq
        %v3593 = vshrl.u32 %v3592, 7
        %v3594 = vsub.s32 %v3591, %v3593
        %v3595 = vrot.slane %v3582, %v3594
        %v3597 = vunpack.c.l.s4 1966171168
        %v3598 = vunpack.c.0.s8 %v3597
        %v3599 = vlaneseq
        %v3600 = vshrl.u32 %v3599, 7
        %v3601 = vsub.s32 %v3598, %v3600
        %v3602 = vrot.slane %v3588, %v3601
        %v3603 = vcombine.high %v3595, %v3595
        %v3604 = vcombine.high %v3602, %v3602
        %v3606 = vunpack.c.l.s4 1966171168
        %v3607 = vunpack.c.0.s8 %v3606
        %v3608 = vlaneseq
        %v3609 = vshrl.u32 %v3608, 7
        %v3610 = vsub.s32 %v3607, %v3609
        %v3611 = vrot.slane %v3595, %v3610
        %v3613 = vunpack.c.l.s4 1966171168
        %v3614 = vunpack.c.0.s8 %v3613
        %v3615 = vlaneseq
        %v3616 = vshrl.u32 %v3615, 7
        %v3617 = vsub.s32 %v3614, %v3616
        %v3618 = vrot.slane %v3602, %v3617
        %v3620 = vunpack.c.l.s4 1966171168
        %v3621 = vunpack.c.0.s8 %v3620
        %v3622 = vlaneseq
        %v3623 = vshrl.u32 %v3622, 7
        %v3624 = vsub.s32 %v3621, %v3623
        %v3625 = vrot.slane %v3603, %v3624
        %v3627 = vunpack.c.l.s4 1966171168
        %v3628 = vunpack.c.0.s8 %v3627
        %v3629 = vlaneseq
        %v3630 = vshrl.u32 %v3629, 7
        %v3631 = vsub.s32 %v3628, %v3630
        %v3632 = vrot.slane %v3604, %v3631
        %v3633 = vcombine.high %v3611, %v3611
        %v3634 = vcombine.high %v3618, %v3618
        %v3635 = vcombine.high %v3625, %v3625
        %3643 = vst [vmem:[%s206 + $0x10] sm:$0x1] %v3611
        %3644 = vst [vmem:[%s206 + $0x50] sm:$0x1] %v3625
        %3645 = vst [vmem:[%s206 + $0x90] sm:$0x1] %v3633
        %3646 = vst [vmem:[%s206 + $0xd0] sm:$0x1] %v3635
        %3647 = vst [vmem:[%s206 + $0x110] sm:$0x1] %v3618
        %3648 = vst [vmem:[%s206 + $0x150] sm:$0x1] %v3632
        %3649 = vst [vmem:[%s206 + $0x190] sm:$0x1] %v3634
        %v3650 = vld [vmem:[#allocation3 + $0x8] sm:$0x1]
        %v3651 = vld [vmem:[#allocation3 + $0x28] sm:$0x1]
        %v3652 = vld [vmem:[#allocation3 + $0x48] sm:$0x1]
        %v3653 = vld [vmem:[#allocation3 + $0x68] sm:$0x1]
        %v3654 = vld [vmem:[#allocation3 + $0x88] sm:$0x1]
        %v3655 = vld [vmem:[#allocation3 + $0xa8] sm:$0x1]
        %v3656 = vld [vmem:[#allocation3 + $0xc8] sm:$0x1]
        %v3657 = vld [vmem:[#allocation3 + $0xe8] sm:$0x1]
        %v3666 = vunpack.c.l.b16 %v3650
        %v3667 = vunpack.c.l.b16 %v3651
        %v3668 = vunpack.c.l.b16 %v3652
        %v3669 = vunpack.c.l.b16 %v3653
        %v3670 = vunpack.c.l.b16 %v3654
        %v3671 = vunpack.c.l.b16 %v3655
        %v3672 = vunpack.c.l.b16 %v3656
        %v3673 = vunpack.c.l.b16 %v3657
        %v3674 = vrot.slane %v3666, 1
        %v3675 = vsel %vm1198, %v3667, %v3674
        %v3676 = vrot.slane %v3668, 7
        %v3677 = vsel %vm1201, %v3676, %v3675
        %v3678 = vrot.slane %v3669, 6
        %v3679 = vsel %vm1204, %v3678, %v3677
        %v3680 = vrot.slane %v3670, 5
        %v3681 = vsel %vm1207, %v3680, %v3679
        %v3682 = vrot.slane %v3671, 4
        %v3683 = vsel %vm1210, %v3682, %v3681
        %v3684 = vrot.slane %v3672, 3
        %v3685 = vsel %vm1213, %v3684, %v3683
        %v3686 = vrot.slane %v3673, 2
        %v3687 = vsel %vm1216, %v3686, %v3685
        %v3688 = vpack.c.b16 %v3687, %v3687
        %v3690 = vsel %vm1223, %v3688, 0
        %3692 = vmatprep.subr.bf16.mxu0 0
        %3693 = vmatpush1.bf16.msra.mxu0 %v3690
        %3694 = vmatprep.subr.bf16.mxu0 0
        %3695 = vmatpush1.bf16.msra.mxu0 0
        %3696 = vmatprep.subr.bf16.mxu0 0
        %3697 = vmatpush1.bf16.msra.mxu0 0
        %3698 = vmatprep.subr.bf16.mxu0 0
        %3699 = vmatpush1.bf16.msra.mxu0 0
        %3700 = vmatprep.subr.bf16.mxu0 0
        %3701 = vmatpush1.bf16.msra.mxu0 0
        %3702 = vmatprep.subr.bf16.mxu0 0
        %3703 = vmatpush1.bf16.msra.mxu0 0
        %3704 = vmatprep.subr.bf16.mxu0 0
        %3705 = vmatpush1.bf16.msra.mxu0 0
        %3706 = vmatprep.subr.bf16.mxu0 0
        %3707 = vmatpush1.bf16.msra.mxu0 0
        %3708 = vmatprep.subr.bf16.mxu0 0
        %3709 = vmatpush1.bf16.msra.mxu0 0
        %3710 = vmatprep.subr.bf16.mxu0 0
        %3711 = vmatpush1.bf16.msra.mxu0 0
        %3712 = vmatprep.subr.bf16.mxu0 0
        %3713 = vmatpush1.bf16.msra.mxu0 0
        %3714 = vmatprep.subr.bf16.mxu0 0
        %3715 = vmatpush1.bf16.msra.mxu0 0
        %3716 = vmatprep.subr.bf16.mxu0 0
        %3717 = vmatpush1.bf16.msra.mxu0 0
        %3718 = vmatprep.subr.bf16.mxu0 0
        %3719 = vmatpush1.bf16.msra.mxu0 0
        %3720 = vmatprep.subr.bf16.mxu0 0
        %3721 = vmatpush1.bf16.msra.mxu0 0
        %3722 = vmatprep.subr.bf16.mxu0 0
        %3723 = vmatpush1.bf16.msra.mxu0 0
        %3724 = vmatprep.mubr.bf16.mxu0 0
        %3725 = vmatmul.mubr.bf16.gmra.mrb[0].mxu0 %v1221
        %v3726 = vpop.f32.mrb[0].mxu0
        %v3727 = vadd.f32 0.0, %v3726
        %v3728 = vpop.f32.mrb[0].mxu0
        %v3729 = vpop.f32.mrb[0].mxu0
        %v3730 = vpop.f32.mrb[0].mxu0
        %3731 = vdwg.mxu0
        %v3733 = vcombine.high %v3727, %v3727
        %v3735 = vunpack.c.l.s4 1966171168
        %v3736 = vunpack.c.0.s8 %v3735
        %v3737 = vlaneseq
        %v3738 = vshrl.u32 %v3737, 7
        %v3739 = vsub.s32 %v3736, %v3738
        %v3740 = vrot.slane %v3727, %v3739
        %v3742 = vunpack.c.l.s4 1966171168
        %v3743 = vunpack.c.0.s8 %v3742
        %v3744 = vlaneseq
        %v3745 = vshrl.u32 %v3744, 7
        %v3746 = vsub.s32 %v3743, %v3745
        %v3747 = vrot.slane %v3733, %v3746
        %v3748 = vcombine.high %v3740, %v3740
        %v3749 = vcombine.high %v3747, %v3747
        %v3751 = vunpack.c.l.s4 1966171168
        %v3752 = vunpack.c.0.s8 %v3751
        %v3753 = vlaneseq
        %v3754 = vshrl.u32 %v3753, 7
        %v3755 = vsub.s32 %v3752, %v3754
        %v3756 = vrot.slane %v3740, %v3755
        %v3758 = vunpack.c.l.s4 1966171168
        %v3759 = vunpack.c.0.s8 %v3758
        %v3760 = vlaneseq
        %v3761 = vshrl.u32 %v3760, 7
        %v3762 = vsub.s32 %v3759, %v3761
        %v3763 = vrot.slane %v3747, %v3762
        %v3765 = vunpack.c.l.s4 1966171168
        %v3766 = vunpack.c.0.s8 %v3765
        %v3767 = vlaneseq
        %v3768 = vshrl.u32 %v3767, 7
        %v3769 = vsub.s32 %v3766, %v3768
        %v3770 = vrot.slane %v3748, %v3769
        %v3772 = vunpack.c.l.s4 1966171168
        %v3773 = vunpack.c.0.s8 %v3772
        %v3774 = vlaneseq
        %v3775 = vshrl.u32 %v3774, 7
        %v3776 = vsub.s32 %v3773, %v3775
        %v3777 = vrot.slane %v3749, %v3776
        %v3778 = vcombine.high %v3756, %v3756
        %v3779 = vcombine.high %v3763, %v3763
        %v3780 = vcombine.high %v3770, %v3770
        %3788 = vst [vmem:[%s206 + $0x11] sm:$0x1] %v3756
        %3789 = vst [vmem:[%s206 + $0x51] sm:$0x1] %v3770
        %3790 = vst [vmem:[%s206 + $0x91] sm:$0x1] %v3778
        %3791 = vst [vmem:[%s206 + $0xd1] sm:$0x1] %v3780
        %3792 = vst [vmem:[%s206 + $0x111] sm:$0x1] %v3763
        %3793 = vst [vmem:[%s206 + $0x151] sm:$0x1] %v3777
        %3794 = vst [vmem:[%s206 + $0x191] sm:$0x1] %v3779
        %v3795 = vld [vmem:[#allocation3 + $0x8] sm:$0x2]
        %v3796 = vld [vmem:[#allocation3 + $0x28] sm:$0x2]
        %v3797 = vld [vmem:[#allocation3 + $0x48] sm:$0x2]
        %v3798 = vld [vmem:[#allocation3 + $0x68] sm:$0x2]
        %v3799 = vld [vmem:[#allocation3 + $0x88] sm:$0x2]
        %v3800 = vld [vmem:[#allocation3 + $0xa8] sm:$0x2]
        %v3801 = vld [vmem:[#allocation3 + $0xc8] sm:$0x2]
        %v3802 = vld [vmem:[#allocation3 + $0xe8] sm:$0x2]
        %v3811 = vunpack.c.l.b16 %v3795
        %v3812 = vunpack.c.l.b16 %v3796
        %v3813 = vunpack.c.l.b16 %v3797
        %v3814 = vunpack.c.l.b16 %v3798
        %v3815 = vunpack.c.l.b16 %v3799
        %v3816 = vunpack.c.l.b16 %v3800
        %v3817 = vunpack.c.l.b16 %v3801
        %v3818 = vunpack.c.l.b16 %v3802
        %v3819 = vrot.slane %v3811, 2
        %v3820 = vrot.slane %v3812, 1
        %v3821 = vsel %vm1198, %v3820, %v3819
        %v3822 = vsel %vm1201, %v3813, %v3821
        %v3823 = vrot.slane %v3814, 7
        %v3824 = vsel %vm1204, %v3823, %v3822
        %v3825 = vrot.slane %v3815, 6
        %v3826 = vsel %vm1207, %v3825, %v3824
        %v3827 = vrot.slane %v3816, 5
        %v3828 = vsel %vm1210, %v3827, %v3826
        %v3829 = vrot.slane %v3817, 4
        %v3830 = vsel %vm1213, %v3829, %v3828
        %v3831 = vrot.slane %v3818, 3
        %v3832 = vsel %vm1216, %v3831, %v3830
        %v3833 = vpack.c.b16 %v3832, %v3832
        %v3835 = vsel %vm1223, %v3833, 0
        %3837 = vmatprep.subr.bf16.mxu0 0
        %3838 = vmatpush1.bf16.msra.mxu0 %v3835
        %3839 = vmatprep.subr.bf16.mxu0 0
        %3840 = vmatpush1.bf16.msra.mxu0 0
        %3841 = vmatprep.subr.bf16.mxu0 0
        %3842 = vmatpush1.bf16.msra.mxu0 0
        %3843 = vmatprep.subr.bf16.mxu0 0
        %3844 = vmatpush1.bf16.msra.mxu0 0
        %3845 = vmatprep.subr.bf16.mxu0 0
        %3846 = vmatpush1.bf16.msra.mxu0 0
        %3847 = vmatprep.subr.bf16.mxu0 0
        %3848 = vmatpush1.bf16.msra.mxu0 0
        %3849 = vmatprep.subr.bf16.mxu0 0
        %3850 = vmatpush1.bf16.msra.mxu0 0
        %3851 = vmatprep.subr.bf16.mxu0 0
        %3852 = vmatpush1.bf16.msra.mxu0 0
        %3853 = vmatprep.subr.bf16.mxu0 0
        %3854 = vmatpush1.bf16.msra.mxu0 0
        %3855 = vmatprep.subr.bf16.mxu0 0
        %3856 = vmatpush1.bf16.msra.mxu0 0
        %3857 = vmatprep.subr.bf16.mxu0 0
        %3858 = vmatpush1.bf16.msra.mxu0 0
        %3859 = vmatprep.subr.bf16.mxu0 0
        %3860 = vmatpush1.bf16.msra.mxu0 0
        %3861 = vmatprep.subr.bf16.mxu0 0
        %3862 = vmatpush1.bf16.msra.mxu0 0
        %3863 = vmatprep.subr.bf16.mxu0 0
        %3864 = vmatpush1.bf16.msra.mxu0 0
        %3865 = vmatprep.subr.bf16.mxu0 0
        %3866 = vmatpush1.bf16.msra.mxu0 0
        %3867 = vmatprep.subr.bf16.mxu0 0
        %3868 = vmatpush1.bf16.msra.mxu0 0
        %3869 = vmatprep.mubr.bf16.mxu0 0
        %3870 = vmatmul.mubr.bf16.gmra.mrb[0].mxu0 %v1221
        %v3871 = vpop.f32.mrb[0].mxu0
        %v3872 = vadd.f32 0.0, %v3871
        %v3873 = vpop.f32.mrb[0].mxu0
        %v3874 = vpop.f32.mrb[0].mxu0
        %v3875 = vpop.f32.mrb[0].mxu0
        %3876 = vdwg.mxu0
        %v3878 = vcombine.high %v3872, %v3872
        %v3880 = vunpack.c.l.s4 1966171168
        %v3881 = vunpack.c.0.s8 %v3880
        %v3882 = vlaneseq
        %v3883 = vshrl.u32 %v3882, 7
        %v3884 = vsub.s32 %v3881, %v3883
        %v3885 = vrot.slane %v3872, %v3884
        %v3887 = vunpack.c.l.s4 1966171168
        %v3888 = vunpack.c.0.s8 %v3887
        %v3889 = vlaneseq
        %v3890 = vshrl.u32 %v3889, 7
        %v3891 = vsub.s32 %v3888, %v3890
        %v3892 = vrot.slane %v3878, %v3891
        %v3893 = vcombine.high %v3885, %v3885
        %v3894 = vcombine.high %v3892, %v3892
        %v3896 = vunpack.c.l.s4 1966171168
        %v3897 = vunpack.c.0.s8 %v3896
        %v3898 = vlaneseq
        %v3899 = vshrl.u32 %v3898, 7
        %v3900 = vsub.s32 %v3897, %v3899
        %v3901 = vrot.slane %v3885, %v3900
        %v3903 = vunpack.c.l.s4 1966171168
        %v3904 = vunpack.c.0.s8 %v3903
        %v3905 = vlaneseq
        %v3906 = vshrl.u32 %v3905, 7
        %v3907 = vsub.s32 %v3904, %v3906
        %v3908 = vrot.slane %v3892, %v3907
        %v3910 = vunpack.c.l.s4 1966171168
        %v3911 = vunpack.c.0.s8 %v3910
        %v3912 = vlaneseq
        %v3913 = vshrl.u32 %v3912, 7
        %v3914 = vsub.s32 %v3911, %v3913
        %v3915 = vrot.slane %v3893, %v3914
        %v3917 = vunpack.c.l.s4 1966171168
        %v3918 = vunpack.c.0.s8 %v3917
        %v3919 = vlaneseq
        %v3920 = vshrl.u32 %v3919, 7
        %v3921 = vsub.s32 %v3918, %v3920
        %v3922 = vrot.slane %v3894, %v3921
        %v3923 = vcombine.high %v3901, %v3901
        %v3924 = vcombine.high %v3908, %v3908
        %v3925 = vcombine.high %v3915, %v3915
        %3933 = vst [vmem:[%s206 + $0x12] sm:$0x1] %v3901
        %3934 = vst [vmem:[%s206 + $0x52] sm:$0x1] %v3915
        %3935 = vst [vmem:[%s206 + $0x92] sm:$0x1] %v3923
        %3936 = vst [vmem:[%s206 + $0xd2] sm:$0x1] %v3925
        %3937 = vst [vmem:[%s206 + $0x112] sm:$0x1] %v3908
        %3938 = vst [vmem:[%s206 + $0x152] sm:$0x1] %v3922
        %3939 = vst [vmem:[%s206 + $0x192] sm:$0x1] %v3924
        %v3940 = vld [vmem:[#allocation3 + $0x8] sm:$0x2]
        %v3941 = vld [vmem:[#allocation3 + $0x28] sm:$0x2]
        %v3942 = vld [vmem:[#allocation3 + $0x48] sm:$0x2]
        %v3943 = vld [vmem:[#allocation3 + $0x68] sm:$0x2]
        %v3944 = vld [vmem:[#allocation3 + $0x88] sm:$0x2]
        %v3945 = vld [vmem:[#allocation3 + $0xa8] sm:$0x2]
        %v3946 = vld [vmem:[#allocation3 + $0xc8] sm:$0x2]
        %v3947 = vld [vmem:[#allocation3 + $0xe8] sm:$0x2]
        %v3956 = vunpack.c.l.b16 %v3940
        %v3957 = vunpack.c.l.b16 %v3941
        %v3958 = vunpack.c.l.b16 %v3942
        %v3959 = vunpack.c.l.b16 %v3943
        %v3960 = vunpack.c.l.b16 %v3944
        %v3961 = vunpack.c.l.b16 %v3945
        %v3962 = vunpack.c.l.b16 %v3946
        %v3963 = vunpack.c.l.b16 %v3947
        %v3964 = vrot.slane %v3956, 3
        %v3965 = vrot.slane %v3957, 2
        %v3966 = vsel %vm1198, %v3965, %v3964
        %v3967 = vrot.slane %v3958, 1
        %v3968 = vsel %vm1201, %v3967, %v3966
        %v3969 = vsel %vm1204, %v3959, %v3968
        %v3970 = vrot.slane %v3960, 7
        %v3971 = vsel %vm1207, %v3970, %v3969
        %v3972 = vrot.slane %v3961, 6
        %v3973 = vsel %vm1210, %v3972, %v3971
        %v3974 = vrot.slane %v3962, 5
        %v3975 = vsel %vm1213, %v3974, %v3973
        %v3976 = vrot.slane %v3963, 4
        %v3977 = vsel %vm1216, %v3976, %v3975
        %v3978 = vpack.c.b16 %v3977, %v3977
        %v3980 = vsel %vm1223, %v3978, 0
        %3982 = vmatprep.subr.bf16.mxu0 0
        %3983 = vmatpush1.bf16.msra.mxu0 %v3980
        %3984 = vmatprep.subr.bf16.mxu0 0
        %3985 = vmatpush1.bf16.msra.mxu0 0
        %3986 = vmatprep.subr.bf16.mxu0 0
        %3987 = vmatpush1.bf16.msra.mxu0 0
        %3988 = vmatprep.subr.bf16.mxu0 0
        %3989 = vmatpush1.bf16.msra.mxu0 0
        %3990 = vmatprep.subr.bf16.mxu0 0
        %3991 = vmatpush1.bf16.msra.mxu0 0
        %3992 = vmatprep.subr.bf16.mxu0 0
        %3993 = vmatpush1.bf16.msra.mxu0 0
        %3994 = vmatprep.subr.bf16.mxu0 0
        %3995 = vmatpush1.bf16.msra.mxu0 0
        %3996 = vmatprep.subr.bf16.mxu0 0
        %3997 = vmatpush1.bf16.msra.mxu0 0
        %3998 = vmatprep.subr.bf16.mxu0 0
        %3999 = vmatpush1.bf16.msra.mxu0 0
        %4000 = vmatprep.subr.bf16.mxu0 0
        %4001 = vmatpush1.bf16.msra.mxu0 0
        %4002 = vmatprep.subr.bf16.mxu0 0
        %4003 = vmatpush1.bf16.msra.mxu0 0
        %4004 = vmatprep.subr.bf16.mxu0 0
        %4005 = vmatpush1.bf16.msra.mxu0 0
        %4006 = vmatprep.subr.bf16.mxu0 0
        %4007 = vmatpush1.bf16.msra.mxu0 0
        %4008 = vmatprep.subr.bf16.mxu0 0
        %4009 = vmatpush1.bf16.msra.mxu0 0
        %4010 = vmatprep.subr.bf16.mxu0 0
        %4011 = vmatpush1.bf16.msra.mxu0 0
        %4012 = vmatprep.subr.bf16.mxu0 0
        %4013 = vmatpush1.bf16.msra.mxu0 0
        %4014 = vmatprep.mubr.bf16.mxu0 0
        %4015 = vmatmul.mubr.bf16.gmra.mrb[0].mxu0 %v1221
        %v4016 = vpop.f32.mrb[0].mxu0
        %v4017 = vadd.f32 0.0, %v4016
        %v4018 = vpop.f32.mrb[0].mxu0
        %v4019 = vpop.f32.mrb[0].mxu0
        %v4020 = vpop.f32.mrb[0].mxu0
        %4021 = vdwg.mxu0
        %v4023 = vcombine.high %v4017, %v4017
        %v4025 = vunpack.c.l.s4 1966171168
        %v4026 = vunpack.c.0.s8 %v4025
        %v4027 = vlaneseq
        %v4028 = vshrl.u32 %v4027, 7
        %v4029 = vsub.s32 %v4026, %v4028
        %v4030 = vrot.slane %v4017, %v4029
        %v4032 = vunpack.c.l.s4 1966171168
        %v4033 = vunpack.c.0.s8 %v4032
        %v4034 = vlaneseq
        %v4035 = vshrl.u32 %v4034, 7
        %v4036 = vsub.s32 %v4033, %v4035
        %v4037 = vrot.slane %v4023, %v4036
        %v4038 = vcombine.high %v4030, %v4030
        %v4039 = vcombine.high %v4037, %v4037
        %v4041 = vunpack.c.l.s4 1966171168
        %v4042 = vunpack.c.0.s8 %v4041
        %v4043 = vlaneseq
        %v4044 = vshrl.u32 %v4043, 7
        %v4045 = vsub.s32 %v4042, %v4044
        %v4046 = vrot.slane %v4030, %v4045
        %v4048 = vunpack.c.l.s4 1966171168
        %v4049 = vunpack.c.0.s8 %v4048
        %v4050 = vlaneseq
        %v4051 = vshrl.u32 %v4050, 7
        %v4052 = vsub.s32 %v4049, %v4051
        %v4053 = vrot.slane %v4037, %v4052
        %v4055 = vunpack.c.l.s4 1966171168
        %v4056 = vunpack.c.0.s8 %v4055
        %v4057 = vlaneseq
        %v4058 = vshrl.u32 %v4057, 7
        %v4059 = vsub.s32 %v4056, %v4058
        %v4060 = vrot.slane %v4038, %v4059
        %v4062 = vunpack.c.l.s4 1966171168
        %v4063 = vunpack.c.0.s8 %v4062
        %v4064 = vlaneseq
        %v4065 = vshrl.u32 %v4064, 7
        %v4066 = vsub.s32 %v4063, %v4065
        %v4067 = vrot.slane %v4039, %v4066
        %v4068 = vcombine.high %v4046, %v4046
        %v4069 = vcombine.high %v4053, %v4053
        %v4070 = vcombine.high %v4060, %v4060
        %4078 = vst [vmem:[%s206 + $0x13] sm:$0x1] %v4046
        %4079 = vst [vmem:[%s206 + $0x53] sm:$0x1] %v4060
        %4080 = vst [vmem:[%s206 + $0x93] sm:$0x1] %v4068
        %4081 = vst [vmem:[%s206 + $0xd3] sm:$0x1] %v4070
        %4082 = vst [vmem:[%s206 + $0x113] sm:$0x1] %v4053
        %4083 = vst [vmem:[%s206 + $0x153] sm:$0x1] %v4067
        %4084 = vst [vmem:[%s206 + $0x193] sm:$0x1] %v4069
        %v4085 = vld [vmem:[#allocation3 + $0x8] sm:$0x4]
        %v4086 = vld [vmem:[#allocation3 + $0x28] sm:$0x4]
        %v4087 = vld [vmem:[#allocation3 + $0x48] sm:$0x4]
        %v4088 = vld [vmem:[#allocation3 + $0x68] sm:$0x4]
        %v4089 = vld [vmem:[#allocation3 + $0x88] sm:$0x4]
        %v4090 = vld [vmem:[#allocation3 + $0xa8] sm:$0x4]
        %v4091 = vld [vmem:[#allocation3 + $0xc8] sm:$0x4]
        %v4092 = vld [vmem:[#allocation3 + $0xe8] sm:$0x4]
        %v4101 = vunpack.c.l.b16 %v4085
        %v4102 = vunpack.c.l.b16 %v4086
        %v4103 = vunpack.c.l.b16 %v4087
        %v4104 = vunpack.c.l.b16 %v4088
        %v4105 = vunpack.c.l.b16 %v4089
        %v4106 = vunpack.c.l.b16 %v4090
        %v4107 = vunpack.c.l.b16 %v4091
        %v4108 = vunpack.c.l.b16 %v4092
        %v4109 = vrot.slane %v4101, 4
        %v4110 = vrot.slane %v4102, 3
        %v4111 = vsel %vm1198, %v4110, %v4109
        %v4112 = vrot.slane %v4103, 2
        %v4113 = vsel %vm1201, %v4112, %v4111
        %v4114 = vrot.slane %v4104, 1
        %v4115 = vsel %vm1204, %v4114, %v4113
        %v4116 = vsel %vm1207, %v4105, %v4115
        %v4117 = vrot.slane %v4106, 7
        %v4118 = vsel %vm1210, %v4117, %v4116
        %v4119 = vrot.slane %v4107, 6
        %v4120 = vsel %vm1213, %v4119, %v4118
        %v4121 = vrot.slane %v4108, 5
        %v4122 = vsel %vm1216, %v4121, %v4120
        %v4123 = vpack.c.b16 %v4122, %v4122
        %v4125 = vsel %vm1223, %v4123, 0
        %4127 = vmatprep.subr.bf16.mxu0 0
        %4128 = vmatpush1.bf16.msra.mxu0 %v4125
        %4129 = vmatprep.subr.bf16.mxu0 0
        %4130 = vmatpush1.bf16.msra.mxu0 0
        %4131 = vmatprep.subr.bf16.mxu0 0
        %4132 = vmatpush1.bf16.msra.mxu0 0
        %4133 = vmatprep.subr.bf16.mxu0 0
        %4134 = vmatpush1.bf16.msra.mxu0 0
        %4135 = vmatprep.subr.bf16.mxu0 0
        %4136 = vmatpush1.bf16.msra.mxu0 0
        %4137 = vmatprep.subr.bf16.mxu0 0
        %4138 = vmatpush1.bf16.msra.mxu0 0
        %4139 = vmatprep.subr.bf16.mxu0 0
        %4140 = vmatpush1.bf16.msra.mxu0 0
        %4141 = vmatprep.subr.bf16.mxu0 0
        %4142 = vmatpush1.bf16.msra.mxu0 0
        %4143 = vmatprep.subr.bf16.mxu0 0
        %4144 = vmatpush1.bf16.msra.mxu0 0
        %4145 = vmatprep.subr.bf16.mxu0 0
        %4146 = vmatpush1.bf16.msra.mxu0 0
        %4147 = vmatprep.subr.bf16.mxu0 0
        %4148 = vmatpush1.bf16.msra.mxu0 0
        %4149 = vmatprep.subr.bf16.mxu0 0
        %4150 = vmatpush1.bf16.msra.mxu0 0
        %4151 = vmatprep.subr.bf16.mxu0 0
        %4152 = vmatpush1.bf16.msra.mxu0 0
        %4153 = vmatprep.subr.bf16.mxu0 0
        %4154 = vmatpush1.bf16.msra.mxu0 0
        %4155 = vmatprep.subr.bf16.mxu0 0
        %4156 = vmatpush1.bf16.msra.mxu0 0
        %4157 = vmatprep.subr.bf16.mxu0 0
        %4158 = vmatpush1.bf16.msra.mxu0 0
        %4159 = vmatprep.mubr.bf16.mxu0 0
        %4160 = vmatmul.mubr.bf16.gmra.mrb[0].mxu0 %v1221
        %v4161 = vpop.f32.mrb[0].mxu0
        %v4162 = vadd.f32 0.0, %v4161
        %v4163 = vpop.f32.mrb[0].mxu0
        %v4164 = vpop.f32.mrb[0].mxu0
        %v4165 = vpop.f32.mrb[0].mxu0
        %4166 = vdwg.mxu0
        %v4168 = vcombine.high %v4162, %v4162
        %v4170 = vunpack.c.l.s4 1966171168
        %v4171 = vunpack.c.0.s8 %v4170
        %v4172 = vlaneseq
        %v4173 = vshrl.u32 %v4172, 7
        %v4174 = vsub.s32 %v4171, %v4173
        %v4175 = vrot.slane %v4162, %v4174
        %v4177 = vunpack.c.l.s4 1966171168
        %v4178 = vunpack.c.0.s8 %v4177
        %v4179 = vlaneseq
        %v4180 = vshrl.u32 %v4179, 7
        %v4181 = vsub.s32 %v4178, %v4180
        %v4182 = vrot.slane %v4168, %v4181
        %v4183 = vcombine.high %v4175, %v4175
        %v4184 = vcombine.high %v4182, %v4182
        %v4186 = vunpack.c.l.s4 1966171168
        %v4187 = vunpack.c.0.s8 %v4186
        %v4188 = vlaneseq
        %v4189 = vshrl.u32 %v4188, 7
        %v4190 = vsub.s32 %v4187, %v4189
        %v4191 = vrot.slane %v4175, %v4190
        %v4193 = vunpack.c.l.s4 1966171168
        %v4194 = vunpack.c.0.s8 %v4193
        %v4195 = vlaneseq
        %v4196 = vshrl.u32 %v4195, 7
        %v4197 = vsub.s32 %v4194, %v4196
        %v4198 = vrot.slane %v4182, %v4197
        %v4200 = vunpack.c.l.s4 1966171168
        %v4201 = vunpack.c.0.s8 %v4200
        %v4202 = vlaneseq
        %v4203 = vshrl.u32 %v4202, 7
        %v4204 = vsub.s32 %v4201, %v4203
        %v4205 = vrot.slane %v4183, %v4204
        %v4207 = vunpack.c.l.s4 1966171168
        %v4208 = vunpack.c.0.s8 %v4207
        %v4209 = vlaneseq
        %v4210 = vshrl.u32 %v4209, 7
        %v4211 = vsub.s32 %v4208, %v4210
        %v4212 = vrot.slane %v4184, %v4211
        %v4213 = vcombine.high %v4191, %v4191
        %v4214 = vcombine.high %v4198, %v4198
        %v4215 = vcombine.high %v4205, %v4205
        %4223 = vst [vmem:[%s206 + $0x14] sm:$0x1] %v4191
        %4224 = vst [vmem:[%s206 + $0x54] sm:$0x1] %v4205
        %4225 = vst [vmem:[%s206 + $0x94] sm:$0x1] %v4213
        %4226 = vst [vmem:[%s206 + $0xd4] sm:$0x1] %v4215
        %4227 = vst [vmem:[%s206 + $0x114] sm:$0x1] %v4198
        %4228 = vst [vmem:[%s206 + $0x154] sm:$0x1] %v4212
        %4229 = vst [vmem:[%s206 + $0x194] sm:$0x1] %v4214
        %v4230 = vld [vmem:[#allocation3 + $0x8] sm:$0x4]
        %v4231 = vld [vmem:[#allocation3 + $0x28] sm:$0x4]
        %v4232 = vld [vmem:[#allocation3 + $0x48] sm:$0x4]
        %v4233 = vld [vmem:[#allocation3 + $0x68] sm:$0x4]
        %v4234 = vld [vmem:[#allocation3 + $0x88] sm:$0x4]
        %v4235 = vld [vmem:[#allocation3 + $0xa8] sm:$0x4]
        %v4236 = vld [vmem:[#allocation3 + $0xc8] sm:$0x4]
        %v4237 = vld [vmem:[#allocation3 + $0xe8] sm:$0x4]
        %v4246 = vunpack.c.l.b16 %v4230
        %v4247 = vunpack.c.l.b16 %v4231
        %v4248 = vunpack.c.l.b16 %v4232
        %v4249 = vunpack.c.l.b16 %v4233
        %v4250 = vunpack.c.l.b16 %v4234
        %v4251 = vunpack.c.l.b16 %v4235
        %v4252 = vunpack.c.l.b16 %v4236
        %v4253 = vunpack.c.l.b16 %v4237
        %v4254 = vrot.slane %v4246, 5
        %v4255 = vrot.slane %v4247, 4
        %v4256 = vsel %vm1198, %v4255, %v4254
        %v4257 = vrot.slane %v4248, 3
        %v4258 = vsel %vm1201, %v4257, %v4256
        %v4259 = vrot.slane %v4249, 2
        %v4260 = vsel %vm1204, %v4259, %v4258
        %v4261 = vrot.slane %v4250, 1
        %v4262 = vsel %vm1207, %v4261, %v4260
        %v4263 = vsel %vm1210, %v4251, %v4262
        %v4264 = vrot.slane %v4252, 7
        %v4265 = vsel %vm1213, %v4264, %v4263
        %v4266 = vrot.slane %v4253, 6
        %v4267 = vsel %vm1216, %v4266, %v4265
        %v4268 = vpack.c.b16 %v4267, %v4267
        %v4270 = vsel %vm1223, %v4268, 0
        %4272 = vmatprep.subr.bf16.mxu0 0
        %4273 = vmatpush1.bf16.msra.mxu0 %v4270
        %4274 = vmatprep.subr.bf16.mxu0 0
        %4275 = vmatpush1.bf16.msra.mxu0 0
        %4276 = vmatprep.subr.bf16.mxu0 0
        %4277 = vmatpush1.bf16.msra.mxu0 0
        %4278 = vmatprep.subr.bf16.mxu0 0
        %4279 = vmatpush1.bf16.msra.mxu0 0
        %4280 = vmatprep.subr.bf16.mxu0 0
        %4281 = vmatpush1.bf16.msra.mxu0 0
        %4282 = vmatprep.subr.bf16.mxu0 0
        %4283 = vmatpush1.bf16.msra.mxu0 0
        %4284 = vmatprep.subr.bf16.mxu0 0
        %4285 = vmatpush1.bf16.msra.mxu0 0
        %4286 = vmatprep.subr.bf16.mxu0 0
        %4287 = vmatpush1.bf16.msra.mxu0 0
        %4288 = vmatprep.subr.bf16.mxu0 0
        %4289 = vmatpush1.bf16.msra.mxu0 0
        %4290 = vmatprep.subr.bf16.mxu0 0
        %4291 = vmatpush1.bf16.msra.mxu0 0
        %4292 = vmatprep.subr.bf16.mxu0 0
        %4293 = vmatpush1.bf16.msra.mxu0 0
        %4294 = vmatprep.subr.bf16.mxu0 0
        %4295 = vmatpush1.bf16.msra.mxu0 0
        %4296 = vmatprep.subr.bf16.mxu0 0
        %4297 = vmatpush1.bf16.msra.mxu0 0
        %4298 = vmatprep.subr.bf16.mxu0 0
        %4299 = vmatpush1.bf16.msra.mxu0 0
        %4300 = vmatprep.subr.bf16.mxu0 0
        %4301 = vmatpush1.bf16.msra.mxu0 0
        %4302 = vmatprep.subr.bf16.mxu0 0
        %4303 = vmatpush1.bf16.msra.mxu0 0
        %4304 = vmatprep.mubr.bf16.mxu0 0
        %4305 = vmatmul.mubr.bf16.gmra.mrb[0].mxu0 %v1221
        %v4306 = vpop.f32.mrb[0].mxu0
        %v4307 = vadd.f32 0.0, %v4306
        %v4308 = vpop.f32.mrb[0].mxu0
        %v4309 = vpop.f32.mrb[0].mxu0
        %v4310 = vpop.f32.mrb[0].mxu0
        %4311 = vdwg.mxu0
        %v4313 = vcombine.high %v4307, %v4307
        %v4315 = vunpack.c.l.s4 1966171168
        %v4316 = vunpack.c.0.s8 %v4315
        %v4317 = vlaneseq
        %v4318 = vshrl.u32 %v4317, 7
        %v4319 = vsub.s32 %v4316, %v4318
        %v4320 = vrot.slane %v4307, %v4319
        %v4322 = vunpack.c.l.s4 1966171168
        %v4323 = vunpack.c.0.s8 %v4322
        %v4324 = vlaneseq
        %v4325 = vshrl.u32 %v4324, 7
        %v4326 = vsub.s32 %v4323, %v4325
        %v4327 = vrot.slane %v4313, %v4326
        %v4328 = vcombine.high %v4320, %v4320
        %v4329 = vcombine.high %v4327, %v4327
        %v4331 = vunpack.c.l.s4 1966171168
        %v4332 = vunpack.c.0.s8 %v4331
        %v4333 = vlaneseq
        %v4334 = vshrl.u32 %v4333, 7
        %v4335 = vsub.s32 %v4332, %v4334
        %v4336 = vrot.slane %v4320, %v4335
        %v4338 = vunpack.c.l.s4 1966171168
        %v4339 = vunpack.c.0.s8 %v4338
        %v4340 = vlaneseq
        %v4341 = vshrl.u32 %v4340, 7
        %v4342 = vsub.s32 %v4339, %v4341
        %v4343 = vrot.slane %v4327, %v4342
        %v4345 = vunpack.c.l.s4 1966171168
        %v4346 = vunpack.c.0.s8 %v4345
        %v4347 = vlaneseq
        %v4348 = vshrl.u32 %v4347, 7
        %v4349 = vsub.s32 %v4346, %v4348
        %v4350 = vrot.slane %v4328, %v4349
        %v4352 = vunpack.c.l.s4 1966171168
        %v4353 = vunpack.c.0.s8 %v4352
        %v4354 = vlaneseq
        %v4355 = vshrl.u32 %v4354, 7
        %v4356 = vsub.s32 %v4353, %v4355
        %v4357 = vrot.slane %v4329, %v4356
        %v4358 = vcombine.high %v4336, %v4336
        %v4359 = vcombine.high %v4343, %v4343
        %v4360 = vcombine.high %v4350, %v4350
        %4368 = vst [vmem:[%s206 + $0x15] sm:$0x1] %v4336
        %4369 = vst [vmem:[%s206 + $0x55] sm:$0x1] %v4350
        %4370 = vst [vmem:[%s206 + $0x95] sm:$0x1] %v4358
        %4371 = vst [vmem:[%s206 + $0xd5] sm:$0x1] %v4360
        %4372 = vst [vmem:[%s206 + $0x115] sm:$0x1] %v4343
        %4373 = vst [vmem:[%s206 + $0x155] sm:$0x1] %v4357
        %4374 = vst [vmem:[%s206 + $0x195] sm:$0x1] %v4359
        %v4375 = vld [vmem:[#allocation3 + $0x8] sm:$0x8]
        %v4376 = vld [vmem:[#allocation3 + $0x28] sm:$0x8]
        %v4377 = vld [vmem:[#allocation3 + $0x48] sm:$0x8]
        %v4378 = vld [vmem:[#allocation3 + $0x68] sm:$0x8]
        %v4379 = vld [vmem:[#allocation3 + $0x88] sm:$0x8]
        %v4380 = vld [vmem:[#allocation3 + $0xa8] sm:$0x8]
        %v4381 = vld [vmem:[#allocation3 + $0xc8] sm:$0x8]
        %v4382 = vld [vmem:[#allocation3 + $0xe8] sm:$0x8]
        %v4391 = vunpack.c.l.b16 %v4375
        %v4392 = vunpack.c.l.b16 %v4376
        %v4393 = vunpack.c.l.b16 %v4377
        %v4394 = vunpack.c.l.b16 %v4378
        %v4395 = vunpack.c.l.b16 %v4379
        %v4396 = vunpack.c.l.b16 %v4380
        %v4397 = vunpack.c.l.b16 %v4381
        %v4398 = vunpack.c.l.b16 %v4382
        %v4399 = vrot.slane %v4391, 6
        %v4400 = vrot.slane %v4392, 5
        %v4401 = vsel %vm1198, %v4400, %v4399
        %v4402 = vrot.slane %v4393, 4
        %v4403 = vsel %vm1201, %v4402, %v4401
        %v4404 = vrot.slane %v4394, 3
        %v4405 = vsel %vm1204, %v4404, %v4403
        %v4406 = vrot.slane %v4395, 2
        %v4407 = vsel %vm1207, %v4406, %v4405
        %v4408 = vrot.slane %v4396, 1
        %v4409 = vsel %vm1210, %v4408, %v4407
        %v4410 = vsel %vm1213, %v4397, %v4409
        %v4411 = vrot.slane %v4398, 7
        %v4412 = vsel %vm1216, %v4411, %v4410
        %v4413 = vpack.c.b16 %v4412, %v4412
        %v4415 = vsel %vm1223, %v4413, 0
        %4417 = vmatprep.subr.bf16.mxu0 0
        %4418 = vmatpush1.bf16.msra.mxu0 %v4415
        %4419 = vmatprep.subr.bf16.mxu0 0
        %4420 = vmatpush1.bf16.msra.mxu0 0
        %4421 = vmatprep.subr.bf16.mxu0 0
        %4422 = vmatpush1.bf16.msra.mxu0 0
        %4423 = vmatprep.subr.bf16.mxu0 0
        %4424 = vmatpush1.bf16.msra.mxu0 0
        %4425 = vmatprep.subr.bf16.mxu0 0
        %4426 = vmatpush1.bf16.msra.mxu0 0
        %4427 = vmatprep.subr.bf16.mxu0 0
        %4428 = vmatpush1.bf16.msra.mxu0 0
        %4429 = vmatprep.subr.bf16.mxu0 0
        %4430 = vmatpush1.bf16.msra.mxu0 0
        %4431 = vmatprep.subr.bf16.mxu0 0
        %4432 = vmatpush1.bf16.msra.mxu0 0
        %4433 = vmatprep.subr.bf16.mxu0 0
        %4434 = vmatpush1.bf16.msra.mxu0 0
        %4435 = vmatprep.subr.bf16.mxu0 0
        %4436 = vmatpush1.bf16.msra.mxu0 0
        %4437 = vmatprep.subr.bf16.mxu0 0
        %4438 = vmatpush1.bf16.msra.mxu0 0
        %4439 = vmatprep.subr.bf16.mxu0 0
        %4440 = vmatpush1.bf16.msra.mxu0 0
        %4441 = vmatprep.subr.bf16.mxu0 0
        %4442 = vmatpush1.bf16.msra.mxu0 0
        %4443 = vmatprep.subr.bf16.mxu0 0
        %4444 = vmatpush1.bf16.msra.mxu0 0
        %4445 = vmatprep.subr.bf16.mxu0 0
        %4446 = vmatpush1.bf16.msra.mxu0 0
        %4447 = vmatprep.subr.bf16.mxu0 0
        %4448 = vmatpush1.bf16.msra.mxu0 0
        %4449 = vmatprep.mubr.bf16.mxu0 0
        %4450 = vmatmul.mubr.bf16.gmra.mrb[0].mxu0 %v1221
        %v4451 = vpop.f32.mrb[0].mxu0
        %v4452 = vadd.f32 0.0, %v4451
        %v4453 = vpop.f32.mrb[0].mxu0
        %v4454 = vpop.f32.mrb[0].mxu0
        %v4455 = vpop.f32.mrb[0].mxu0
        %4456 = vdwg.mxu0
        %v4458 = vcombine.high %v4452, %v4452
        %v4460 = vunpack.c.l.s4 1966171168
        %v4461 = vunpack.c.0.s8 %v4460
        %v4462 = vlaneseq
        %v4463 = vshrl.u32 %v4462, 7
        %v4464 = vsub.s32 %v4461, %v4463
        %v4465 = vrot.slane %v4452, %v4464
        %v4467 = vunpack.c.l.s4 1966171168
        %v4468 = vunpack.c.0.s8 %v4467
        %v4469 = vlaneseq
        %v4470 = vshrl.u32 %v4469, 7
        %v4471 = vsub.s32 %v4468, %v4470
        %v4472 = vrot.slane %v4458, %v4471
        %v4473 = vcombine.high %v4465, %v4465
        %v4474 = vcombine.high %v4472, %v4472
        %v4476 = vunpack.c.l.s4 1966171168
        %v4477 = vunpack.c.0.s8 %v4476
        %v4478 = vlaneseq
        %v4479 = vshrl.u32 %v4478, 7
        %v4480 = vsub.s32 %v4477, %v4479
        %v4481 = vrot.slane %v4465, %v4480
        %v4483 = vunpack.c.l.s4 1966171168
        %v4484 = vunpack.c.0.s8 %v4483
        %v4485 = vlaneseq
        %v4486 = vshrl.u32 %v4485, 7
        %v4487 = vsub.s32 %v4484, %v4486
        %v4488 = vrot.slane %v4472, %v4487
        %v4490 = vunpack.c.l.s4 1966171168
        %v4491 = vunpack.c.0.s8 %v4490
        %v4492 = vlaneseq
        %v4493 = vshrl.u32 %v4492, 7
        %v4494 = vsub.s32 %v4491, %v4493
        %v4495 = vrot.slane %v4473, %v4494
        %v4497 = vunpack.c.l.s4 1966171168
        %v4498 = vunpack.c.0.s8 %v4497
        %v4499 = vlaneseq
        %v4500 = vshrl.u32 %v4499, 7
        %v4501 = vsub.s32 %v4498, %v4500
        %v4502 = vrot.slane %v4474, %v4501
        %v4503 = vcombine.high %v4481, %v4481
        %v4504 = vcombine.high %v4488, %v4488
        %v4505 = vcombine.high %v4495, %v4495
        %4513 = vst [vmem:[%s206 + $0x16] sm:$0x1] %v4481
        %4514 = vst [vmem:[%s206 + $0x56] sm:$0x1] %v4495
        %4515 = vst [vmem:[%s206 + $0x96] sm:$0x1] %v4503
        %4516 = vst [vmem:[%s206 + $0xd6] sm:$0x1] %v4505
        %4517 = vst [vmem:[%s206 + $0x116] sm:$0x1] %v4488
        %4518 = vst [vmem:[%s206 + $0x156] sm:$0x1] %v4502
        %4519 = vst [vmem:[%s206 + $0x196] sm:$0x1] %v4504
        %v4520 = vld [vmem:[#allocation3 + $0x8] sm:$0x8]
        %v4521 = vld [vmem:[#allocation3 + $0x28] sm:$0x8]
        %v4522 = vld [vmem:[#allocation3 + $0x48] sm:$0x8]
        %v4523 = vld [vmem:[#allocation3 + $0x68] sm:$0x8]
        %v4524 = vld [vmem:[#allocation3 + $0x88] sm:$0x8]
        %v4525 = vld [vmem:[#allocation3 + $0xa8] sm:$0x8]
        %v4526 = vld [vmem:[#allocation3 + $0xc8] sm:$0x8]
        %v4527 = vld [vmem:[#allocation3 + $0xe8] sm:$0x8]
        %v4536 = vunpack.c.l.b16 %v4520
        %v4537 = vunpack.c.l.b16 %v4521
        %v4538 = vunpack.c.l.b16 %v4522
        %v4539 = vunpack.c.l.b16 %v4523
        %v4540 = vunpack.c.l.b16 %v4524
        %v4541 = vunpack.c.l.b16 %v4525
        %v4542 = vunpack.c.l.b16 %v4526
        %v4543 = vunpack.c.l.b16 %v4527
        %v4544 = vrot.slane %v4536, 7
        %v4545 = vrot.slane %v4537, 6
        %v4546 = vsel %vm1198, %v4545, %v4544
        %v4547 = vrot.slane %v4538, 5
        %v4548 = vsel %vm1201, %v4547, %v4546
        %v4549 = vrot.slane %v4539, 4
        %v4550 = vsel %vm1204, %v4549, %v4548
        %v4551 = vrot.slane %v4540, 3
        %v4552 = vsel %vm1207, %v4551, %v4550
        %v4553 = vrot.slane %v4541, 2
        %v4554 = vsel %vm1210, %v4553, %v4552
        %v4555 = vrot.slane %v4542, 1
        %v4556 = vsel %vm1213, %v4555, %v4554
        %v4557 = vsel %vm1216, %v4543, %v4556
        %v4558 = vpack.c.b16 %v4557, %v4557
        %v4560 = vsel %vm1223, %v4558, 0
        %4562 = vmatprep.subr.bf16.mxu0 0
        %4563 = vmatpush1.bf16.msra.mxu0 %v4560
        %4564 = vmatprep.subr.bf16.mxu0 0
        %4565 = vmatpush1.bf16.msra.mxu0 0
        %4566 = vmatprep.subr.bf16.mxu0 0
        %4567 = vmatpush1.bf16.msra.mxu0 0
        %4568 = vmatprep.subr.bf16.mxu0 0
        %4569 = vmatpush1.bf16.msra.mxu0 0
        %4570 = vmatprep.subr.bf16.mxu0 0
        %4571 = vmatpush1.bf16.msra.mxu0 0
        %4572 = vmatprep.subr.bf16.mxu0 0
        %4573 = vmatpush1.bf16.msra.mxu0 0
        %4574 = vmatprep.subr.bf16.mxu0 0
        %4575 = vmatpush1.bf16.msra.mxu0 0
        %4576 = vmatprep.subr.bf16.mxu0 0
        %4577 = vmatpush1.bf16.msra.mxu0 0
        %4578 = vmatprep.subr.bf16.mxu0 0
        %4579 = vmatpush1.bf16.msra.mxu0 0
        %4580 = vmatprep.subr.bf16.mxu0 0
        %4581 = vmatpush1.bf16.msra.mxu0 0
        %4582 = vmatprep.subr.bf16.mxu0 0
        %4583 = vmatpush1.bf16.msra.mxu0 0
        %4584 = vmatprep.subr.bf16.mxu0 0
        %4585 = vmatpush1.bf16.msra.mxu0 0
        %4586 = vmatprep.subr.bf16.mxu0 0
        %4587 = vmatpush1.bf16.msra.mxu0 0
        %4588 = vmatprep.subr.bf16.mxu0 0
        %4589 = vmatpush1.bf16.msra.mxu0 0
        %4590 = vmatprep.subr.bf16.mxu0 0
        %4591 = vmatpush1.bf16.msra.mxu0 0
        %4592 = vmatprep.subr.bf16.mxu0 0
        %4593 = vmatpush1.bf16.msra.mxu0 0
        %4594 = vmatprep.mubr.bf16.mxu0 0
        %4595 = vmatmul.mubr.bf16.gmra.mrb[0].mxu0 %v1221
        %v4596 = vpop.f32.mrb[0].mxu0
        %v4597 = vadd.f32 0.0, %v4596
        %v4598 = vpop.f32.mrb[0].mxu0
        %v4599 = vpop.f32.mrb[0].mxu0
        %v4600 = vpop.f32.mrb[0].mxu0
        %4601 = vdwg.mxu0
        %v4603 = vcombine.high %v4597, %v4597
        %v4605 = vunpack.c.l.s4 1966171168
        %v4606 = vunpack.c.0.s8 %v4605
        %v4607 = vlaneseq
        %v4608 = vshrl.u32 %v4607, 7
        %v4609 = vsub.s32 %v4606, %v4608
        %v4610 = vrot.slane %v4597, %v4609
        %v4612 = vunpack.c.l.s4 1966171168
        %v4613 = vunpack.c.0.s8 %v4612
        %v4614 = vlaneseq
        %v4615 = vshrl.u32 %v4614, 7
        %v4616 = vsub.s32 %v4613, %v4615
        %v4617 = vrot.slane %v4603, %v4616
        %v4618 = vcombine.high %v4610, %v4610
        %v4619 = vcombine.high %v4617, %v4617
        %v4621 = vunpack.c.l.s4 1966171168
        %v4622 = vunpack.c.0.s8 %v4621
        %v4623 = vlaneseq
        %v4624 = vshrl.u32 %v4623, 7
        %v4625 = vsub.s32 %v4622, %v4624
        %v4626 = vrot.slane %v4610, %v4625
        %v4628 = vunpack.c.l.s4 1966171168
        %v4629 = vunpack.c.0.s8 %v4628
        %v4630 = vlaneseq
        %v4631 = vshrl.u32 %v4630, 7
        %v4632 = vsub.s32 %v4629, %v4631
        %v4633 = vrot.slane %v4617, %v4632
        %v4635 = vunpack.c.l.s4 1966171168
        %v4636 = vunpack.c.0.s8 %v4635
        %v4637 = vlaneseq
        %v4638 = vshrl.u32 %v4637, 7
        %v4639 = vsub.s32 %v4636, %v4638
        %v4640 = vrot.slane %v4618, %v4639
        %v4642 = vunpack.c.l.s4 1966171168
        %v4643 = vunpack.c.0.s8 %v4642
        %v4644 = vlaneseq
        %v4645 = vshrl.u32 %v4644, 7
        %v4646 = vsub.s32 %v4643, %v4645
        %v4647 = vrot.slane %v4619, %v4646
        %v4648 = vcombine.high %v4626, %v4626
        %v4649 = vcombine.high %v4633, %v4633
        %v4650 = vcombine.high %v4640, %v4640
        %4658 = vst [vmem:[%s206 + $0x17] sm:$0x1] %v4626
        %4659 = vst [vmem:[%s206 + $0x57] sm:$0x1] %v4640
        %4660 = vst [vmem:[%s206 + $0x97] sm:$0x1] %v4648
        %4661 = vst [vmem:[%s206 + $0xd7] sm:$0x1] %v4650
        %4662 = vst [vmem:[%s206 + $0x117] sm:$0x1] %v4633
        %4663 = vst [vmem:[%s206 + $0x157] sm:$0x1] %v4647
        %4664 = vst [vmem:[%s206 + $0x197] sm:$0x1] %v4649
        %v4665 = vld [vmem:[#allocation3 + $0x8] sm:$0x10]
        %v4666 = vld [vmem:[#allocation3 + $0x28] sm:$0x10]
        %v4667 = vld [vmem:[#allocation3 + $0x48] sm:$0x10]
        %v4668 = vld [vmem:[#allocation3 + $0x68] sm:$0x10]
        %v4669 = vld [vmem:[#allocation3 + $0x88] sm:$0x10]
        %v4670 = vld [vmem:[#allocation3 + $0xa8] sm:$0x10]
        %v4671 = vld [vmem:[#allocation3 + $0xc8] sm:$0x10]
        %v4672 = vld [vmem:[#allocation3 + $0xe8] sm:$0x10]
        %v4681 = vunpack.c.h.b16 %v4665
        %v4682 = vunpack.c.h.b16 %v4666
        %v4683 = vunpack.c.h.b16 %v4667
        %v4684 = vunpack.c.h.b16 %v4668
        %v4685 = vunpack.c.h.b16 %v4669
        %v4686 = vunpack.c.h.b16 %v4670
        %v4687 = vunpack.c.h.b16 %v4671
        %v4688 = vunpack.c.h.b16 %v4672
        %v4689 = vrot.slane %v4682, 7
        %v4690 = vsel %vm1198, %v4689, %v4681
        %v4691 = vrot.slane %v4683, 6
        %v4692 = vsel %vm1201, %v4691, %v4690
        %v4693 = vrot.slane %v4684, 5
        %v4694 = vsel %vm1204, %v4693, %v4692
        %v4695 = vrot.slane %v4685, 4
        %v4696 = vsel %vm1207, %v4695, %v4694
        %v4697 = vrot.slane %v4686, 3
        %v4698 = vsel %vm1210, %v4697, %v4696
        %v4699 = vrot.slane %v4687, 2
        %v4700 = vsel %vm1213, %v4699, %v4698
        %v4701 = vrot.slane %v4688, 1
        %v4702 = vsel %vm1216, %v4701, %v4700
        %v4703 = vpack.c.b16 %v4702, %v4702
        %v4705 = vsel %vm1223, %v4703, 0
        %4707 = vmatprep.subr.bf16.mxu0 0
        %4708 = vmatpush1.bf16.msra.mxu0 %v4705
        %4709 = vmatprep.subr.bf16.mxu0 0
        %4710 = vmatpush1.bf16.msra.mxu0 0
        %4711 = vmatprep.subr.bf16.mxu0 0
        %4712 = vmatpush1.bf16.msra.mxu0 0
        %4713 = vmatprep.subr.bf16.mxu0 0
        %4714 = vmatpush1.bf16.msra.mxu0 0
        %4715 = vmatprep.subr.bf16.mxu0 0
        %4716 = vmatpush1.bf16.msra.mxu0 0
        %4717 = vmatprep.subr.bf16.mxu0 0
        %4718 = vmatpush1.bf16.msra.mxu0 0
        %4719 = vmatprep.subr.bf16.mxu0 0
        %4720 = vmatpush1.bf16.msra.mxu0 0
        %4721 = vmatprep.subr.bf16.mxu0 0
        %4722 = vmatpush1.bf16.msra.mxu0 0
        %4723 = vmatprep.subr.bf16.mxu0 0
        %4724 = vmatpush1.bf16.msra.mxu0 0
        %4725 = vmatprep.subr.bf16.mxu0 0
        %4726 = vmatpush1.bf16.msra.mxu0 0
        %4727 = vmatprep.subr.bf16.mxu0 0
        %4728 = vmatpush1.bf16.msra.mxu0 0
        %4729 = vmatprep.subr.bf16.mxu0 0
        %4730 = vmatpush1.bf16.msra.mxu0 0
        %4731 = vmatprep.subr.bf16.mxu0 0
        %4732 = vmatpush1.bf16.msra.mxu0 0
        %4733 = vmatprep.subr.bf16.mxu0 0
        %4734 = vmatpush1.bf16.msra.mxu0 0
        %4735 = vmatprep.subr.bf16.mxu0 0
        %4736 = vmatpush1.bf16.msra.mxu0 0
        %4737 = vmatprep.subr.bf16.mxu0 0
        %4738 = vmatpush1.bf16.msra.mxu0 0
        %4739 = vmatprep.mubr.bf16.mxu0 0
        %4740 = vmatmul.mubr.bf16.gmra.mrb[0].mxu0 %v1221
        %v4741 = vpop.f32.mrb[0].mxu0
        %v4742 = vadd.f32 0.0, %v4741
        %v4743 = vpop.f32.mrb[0].mxu0
        %v4744 = vpop.f32.mrb[0].mxu0
        %v4745 = vpop.f32.mrb[0].mxu0
        %4746 = vdwg.mxu0
        %v4748 = vcombine.high %v4742, %v4742
        %v4750 = vunpack.c.l.s4 1966171168
        %v4751 = vunpack.c.0.s8 %v4750
        %v4752 = vlaneseq
        %v4753 = vshrl.u32 %v4752, 7
        %v4754 = vsub.s32 %v4751, %v4753
        %v4755 = vrot.slane %v4742, %v4754
        %v4757 = vunpack.c.l.s4 1966171168
        %v4758 = vunpack.c.0.s8 %v4757
        %v4759 = vlaneseq
        %v4760 = vshrl.u32 %v4759, 7
        %v4761 = vsub.s32 %v4758, %v4760
        %v4762 = vrot.slane %v4748, %v4761
        %v4763 = vcombine.high %v4755, %v4755
        %v4764 = vcombine.high %v4762, %v4762
        %v4766 = vunpack.c.l.s4 1966171168
        %v4767 = vunpack.c.0.s8 %v4766
        %v4768 = vlaneseq
        %v4769 = vshrl.u32 %v4768, 7
        %v4770 = vsub.s32 %v4767, %v4769
        %v4771 = vrot.slane %v4755, %v4770
        %v4773 = vunpack.c.l.s4 1966171168
        %v4774 = vunpack.c.0.s8 %v4773
        %v4775 = vlaneseq
        %v4776 = vshrl.u32 %v4775, 7
        %v4777 = vsub.s32 %v4774, %v4776
        %v4778 = vrot.slane %v4762, %v4777
        %v4780 = vunpack.c.l.s4 1966171168
        %v4781 = vunpack.c.0.s8 %v4780
        %v4782 = vlaneseq
        %v4783 = vshrl.u32 %v4782, 7
        %v4784 = vsub.s32 %v4781, %v4783
        %v4785 = vrot.slane %v4763, %v4784
        %v4787 = vunpack.c.l.s4 1966171168
        %v4788 = vunpack.c.0.s8 %v4787
        %v4789 = vlaneseq
        %v4790 = vshrl.u32 %v4789, 7
        %v4791 = vsub.s32 %v4788, %v4790
        %v4792 = vrot.slane %v4764, %v4791
        %v4793 = vcombine.high %v4771, %v4771
        %v4794 = vcombine.high %v4778, %v4778
        %v4795 = vcombine.high %v4785, %v4785
        %4803 = vst [vmem:[%s206 + $0x18] sm:$0x1] %v4771
        %4804 = vst [vmem:[%s206 + $0x58] sm:$0x1] %v4785
        %4805 = vst [vmem:[%s206 + $0x98] sm:$0x1] %v4793
        %4806 = vst [vmem:[%s206 + $0xd8] sm:$0x1] %v4795
        %4807 = vst [vmem:[%s206 + $0x118] sm:$0x1] %v4778
        %4808 = vst [vmem:[%s206 + $0x158] sm:$0x1] %v4792
        %4809 = vst [vmem:[%s206 + $0x198] sm:$0x1] %v4794
        %v4810 = vld [vmem:[#allocation3 + $0x8] sm:$0x10]
        %v4811 = vld [vmem:[#allocation3 + $0x28] sm:$0x10]
        %v4812 = vld [vmem:[#allocation3 + $0x48] sm:$0x10]
        %v4813 = vld [vmem:[#allocation3 + $0x68] sm:$0x10]
        %v4814 = vld [vmem:[#allocation3 + $0x88] sm:$0x10]
        %v4815 = vld [vmem:[#allocation3 + $0xa8] sm:$0x10]
        %v4816 = vld [vmem:[#allocation3 + $0xc8] sm:$0x10]
        %v4817 = vld [vmem:[#allocation3 + $0xe8] sm:$0x10]
        %v4826 = vunpack.c.h.b16 %v4810
        %v4827 = vunpack.c.h.b16 %v4811
        %v4828 = vunpack.c.h.b16 %v4812
        %v4829 = vunpack.c.h.b16 %v4813
        %v4830 = vunpack.c.h.b16 %v4814
        %v4831 = vunpack.c.h.b16 %v4815
        %v4832 = vunpack.c.h.b16 %v4816
        %v4833 = vunpack.c.h.b16 %v4817
        %v4834 = vrot.slane %v4826, 1
        %v4835 = vsel %vm1198, %v4827, %v4834
        %v4836 = vrot.slane %v4828, 7
        %v4837 = vsel %vm1201, %v4836, %v4835
        %v4838 = vrot.slane %v4829, 6
        %v4839 = vsel %vm1204, %v4838, %v4837
        %v4840 = vrot.slane %v4830, 5
        %v4841 = vsel %vm1207, %v4840, %v4839
        %v4842 = vrot.slane %v4831, 4
        %v4843 = vsel %vm1210, %v4842, %v4841
        %v4844 = vrot.slane %v4832, 3
        %v4845 = vsel %vm1213, %v4844, %v4843
        %v4846 = vrot.slane %v4833, 2
        %v4847 = vsel %vm1216, %v4846, %v4845
        %v4848 = vpack.c.b16 %v4847, %v4847
        %v4850 = vsel %vm1223, %v4848, 0
        %4852 = vmatprep.subr.bf16.mxu0 0
        %4853 = vmatpush1.bf16.msra.mxu0 %v4850
        %4854 = vmatprep.subr.bf16.mxu0 0
        %4855 = vmatpush1.bf16.msra.mxu0 0
        %4856 = vmatprep.subr.bf16.mxu0 0
        %4857 = vmatpush1.bf16.msra.mxu0 0
        %4858 = vmatprep.subr.bf16.mxu0 0
        %4859 = vmatpush1.bf16.msra.mxu0 0
        %4860 = vmatprep.subr.bf16.mxu0 0
        %4861 = vmatpush1.bf16.msra.mxu0 0
        %4862 = vmatprep.subr.bf16.mxu0 0
        %4863 = vmatpush1.bf16.msra.mxu0 0
        %4864 = vmatprep.subr.bf16.mxu0 0
        %4865 = vmatpush1.bf16.msra.mxu0 0
        %4866 = vmatprep.subr.bf16.mxu0 0
        %4867 = vmatpush1.bf16.msra.mxu0 0
        %4868 = vmatprep.subr.bf16.mxu0 0
        %4869 = vmatpush1.bf16.msra.mxu0 0
        %4870 = vmatprep.subr.bf16.mxu0 0
        %4871 = vmatpush1.bf16.msra.mxu0 0
        %4872 = vmatprep.subr.bf16.mxu0 0
        %4873 = vmatpush1.bf16.msra.mxu0 0
        %4874 = vmatprep.subr.bf16.mxu0 0
        %4875 = vmatpush1.bf16.msra.mxu0 0
        %4876 = vmatprep.subr.bf16.mxu0 0
        %4877 = vmatpush1.bf16.msra.mxu0 0
        %4878 = vmatprep.subr.bf16.mxu0 0
        %4879 = vmatpush1.bf16.msra.mxu0 0
        %4880 = vmatprep.subr.bf16.mxu0 0
        %4881 = vmatpush1.bf16.msra.mxu0 0
        %4882 = vmatprep.subr.bf16.mxu0 0
        %4883 = vmatpush1.bf16.msra.mxu0 0
        %4884 = vmatprep.mubr.bf16.mxu0 0
        %4885 = vmatmul.mubr.bf16.gmra.mrb[0].mxu0 %v1221
        %v4886 = vpop.f32.mrb[0].mxu0
        %v4887 = vadd.f32 0.0, %v4886
        %v4888 = vpop.f32.mrb[0].mxu0
        %v4889 = vpop.f32.mrb[0].mxu0
        %v4890 = vpop.f32.mrb[0].mxu0
        %4891 = vdwg.mxu0
        %v4893 = vcombine.high %v4887, %v4887
        %v4895 = vunpack.c.l.s4 1966171168
        %v4896 = vunpack.c.0.s8 %v4895
        %v4897 = vlaneseq
        %v4898 = vshrl.u32 %v4897, 7
        %v4899 = vsub.s32 %v4896, %v4898
        %v4900 = vrot.slane %v4887, %v4899
        %v4902 = vunpack.c.l.s4 1966171168
        %v4903 = vunpack.c.0.s8 %v4902
        %v4904 = vlaneseq
        %v4905 = vshrl.u32 %v4904, 7
        %v4906 = vsub.s32 %v4903, %v4905
        %v4907 = vrot.slane %v4893, %v4906
        %v4908 = vcombine.high %v4900, %v4900
        %v4909 = vcombine.high %v4907, %v4907
        %v4911 = vunpack.c.l.s4 1966171168
        %v4912 = vunpack.c.0.s8 %v4911
        %v4913 = vlaneseq
        %v4914 = vshrl.u32 %v4913, 7
        %v4915 = vsub.s32 %v4912, %v4914
        %v4916 = vrot.slane %v4900, %v4915
        %v4918 = vunpack.c.l.s4 1966171168
        %v4919 = vunpack.c.0.s8 %v4918
        %v4920 = vlaneseq
        %v4921 = vshrl.u32 %v4920, 7
        %v4922 = vsub.s32 %v4919, %v4921
        %v4923 = vrot.slane %v4907, %v4922
        %v4925 = vunpack.c.l.s4 1966171168
        %v4926 = vunpack.c.0.s8 %v4925
        %v4927 = vlaneseq
        %v4928 = vshrl.u32 %v4927, 7
        %v4929 = vsub.s32 %v4926, %v4928
        %v4930 = vrot.slane %v4908, %v4929
        %v4932 = vunpack.c.l.s4 1966171168
        %v4933 = vunpack.c.0.s8 %v4932
        %v4934 = vlaneseq
        %v4935 = vshrl.u32 %v4934, 7
        %v4936 = vsub.s32 %v4933, %v4935
        %v4937 = vrot.slane %v4909, %v4936
        %v4938 = vcombine.high %v4916, %v4916
        %v4939 = vcombine.high %v4923, %v4923
        %v4940 = vcombine.high %v4930, %v4930
        %4948 = vst [vmem:[%s206 + $0x19] sm:$0x1] %v4916
        %4949 = vst [vmem:[%s206 + $0x59] sm:$0x1] %v4930
        %4950 = vst [vmem:[%s206 + $0x99] sm:$0x1] %v4938
        %4951 = vst [vmem:[%s206 + $0xd9] sm:$0x1] %v4940
        %4952 = vst [vmem:[%s206 + $0x119] sm:$0x1] %v4923
        %4953 = vst [vmem:[%s206 + $0x159] sm:$0x1] %v4937
        %4954 = vst [vmem:[%s206 + $0x199] sm:$0x1] %v4939
        %v4955 = vld [vmem:[#allocation3 + $0x8] sm:$0x20]
        %v4956 = vld [vmem:[#allocation3 + $0x28] sm:$0x20]
        %v4957 = vld [vmem:[#allocation3 + $0x48] sm:$0x20]
        %v4958 = vld [vmem:[#allocation3 + $0x68] sm:$0x20]
        %v4959 = vld [vmem:[#allocation3 + $0x88] sm:$0x20]
        %v4960 = vld [vmem:[#allocation3 + $0xa8] sm:$0x20]
        %v4961 = vld [vmem:[#allocation3 + $0xc8] sm:$0x20]
        %v4962 = vld [vmem:[#allocation3 + $0xe8] sm:$0x20]
        %v4971 = vunpack.c.h.b16 %v4955
        %v4972 = vunpack.c.h.b16 %v4956
        %v4973 = vunpack.c.h.b16 %v4957
        %v4974 = vunpack.c.h.b16 %v4958
        %v4975 = vunpack.c.h.b16 %v4959
        %v4976 = vunpack.c.h.b16 %v4960
        %v4977 = vunpack.c.h.b16 %v4961
        %v4978 = vunpack.c.h.b16 %v4962
        %v4979 = vrot.slane %v4971, 2
        %v4980 = vrot.slane %v4972, 1
        %v4981 = vsel %vm1198, %v4980, %v4979
        %v4982 = vsel %vm1201, %v4973, %v4981
        %v4983 = vrot.slane %v4974, 7
        %v4984 = vsel %vm1204, %v4983, %v4982
        %v4985 = vrot.slane %v4975, 6
        %v4986 = vsel %vm1207, %v4985, %v4984
        %v4987 = vrot.slane %v4976, 5
        %v4988 = vsel %vm1210, %v4987, %v4986
        %v4989 = vrot.slane %v4977, 4
        %v4990 = vsel %vm1213, %v4989, %v4988
        %v4991 = vrot.slane %v4978, 3
        %v4992 = vsel %vm1216, %v4991, %v4990
        %v4993 = vpack.c.b16 %v4992, %v4992
        %v4995 = vsel %vm1223, %v4993, 0
        %4997 = vmatprep.subr.bf16.mxu0 0
        %4998 = vmatpush1.bf16.msra.mxu0 %v4995
        %4999 = vmatprep.subr.bf16.mxu0 0
        %5000 = vmatpush1.bf16.msra.mxu0 0
        %5001 = vmatprep.subr.bf16.mxu0 0
        %5002 = vmatpush1.bf16.msra.mxu0 0
        %5003 = vmatprep.subr.bf16.mxu0 0
        %5004 = vmatpush1.bf16.msra.mxu0 0
        %5005 = vmatprep.subr.bf16.mxu0 0
        %5006 = vmatpush1.bf16.msra.mxu0 0
        %5007 = vmatprep.subr.bf16.mxu0 0
        %5008 = vmatpush1.bf16.msra.mxu0 0
        %5009 = vmatprep.subr.bf16.mxu0 0
        %5010 = vmatpush1.bf16.msra.mxu0 0
        %5011 = vmatprep.subr.bf16.mxu0 0
        %5012 = vmatpush1.bf16.msra.mxu0 0
        %5013 = vmatprep.subr.bf16.mxu0 0
        %5014 = vmatpush1.bf16.msra.mxu0 0
        %5015 = vmatprep.subr.bf16.mxu0 0
        %5016 = vmatpush1.bf16.msra.mxu0 0
        %5017 = vmatprep.subr.bf16.mxu0 0
        %5018 = vmatpush1.bf16.msra.mxu0 0
        %5019 = vmatprep.subr.bf16.mxu0 0
        %5020 = vmatpush1.bf16.msra.mxu0 0
        %5021 = vmatprep.subr.bf16.mxu0 0
        %5022 = vmatpush1.bf16.msra.mxu0 0
        %5023 = vmatprep.subr.bf16.mxu0 0
        %5024 = vmatpush1.bf16.msra.mxu0 0
        %5025 = vmatprep.subr.bf16.mxu0 0
        %5026 = vmatpush1.bf16.msra.mxu0 0
        %5027 = vmatprep.subr.bf16.mxu0 0
        %5028 = vmatpush1.bf16.msra.mxu0 0
        %5029 = vmatprep.mubr.bf16.mxu0 0
        %5030 = vmatmul.mubr.bf16.gmra.mrb[0].mxu0 %v1221
        %v5031 = vpop.f32.mrb[0].mxu0
        %v5032 = vadd.f32 0.0, %v5031
        %v5033 = vpop.f32.mrb[0].mxu0
        %v5034 = vpop.f32.mrb[0].mxu0
        %v5035 = vpop.f32.mrb[0].mxu0
        %5036 = vdwg.mxu0
        %v5038 = vcombine.high %v5032, %v5032
        %v5040 = vunpack.c.l.s4 1966171168
        %v5041 = vunpack.c.0.s8 %v5040
        %v5042 = vlaneseq
        %v5043 = vshrl.u32 %v5042, 7
        %v5044 = vsub.s32 %v5041, %v5043
        %v5045 = vrot.slane %v5032, %v5044
        %v5047 = vunpack.c.l.s4 1966171168
        %v5048 = vunpack.c.0.s8 %v5047
        %v5049 = vlaneseq
        %v5050 = vshrl.u32 %v5049, 7
        %v5051 = vsub.s32 %v5048, %v5050
        %v5052 = vrot.slane %v5038, %v5051
        %v5053 = vcombine.high %v5045, %v5045
        %v5054 = vcombine.high %v5052, %v5052
        %v5056 = vunpack.c.l.s4 1966171168
        %v5057 = vunpack.c.0.s8 %v5056
        %v5058 = vlaneseq
        %v5059 = vshrl.u32 %v5058, 7
        %v5060 = vsub.s32 %v5057, %v5059
        %v5061 = vrot.slane %v5045, %v5060
        %v5063 = vunpack.c.l.s4 1966171168
        %v5064 = vunpack.c.0.s8 %v5063
        %v5065 = vlaneseq
        %v5066 = vshrl.u32 %v5065, 7
        %v5067 = vsub.s32 %v5064, %v5066
        %v5068 = vrot.slane %v5052, %v5067
        %v5070 = vunpack.c.l.s4 1966171168
        %v5071 = vunpack.c.0.s8 %v5070
        %v5072 = vlaneseq
        %v5073 = vshrl.u32 %v5072, 7
        %v5074 = vsub.s32 %v5071, %v5073
        %v5075 = vrot.slane %v5053, %v5074
        %v5077 = vunpack.c.l.s4 1966171168
        %v5078 = vunpack.c.0.s8 %v5077
        %v5079 = vlaneseq
        %v5080 = vshrl.u32 %v5079, 7
        %v5081 = vsub.s32 %v5078, %v5080
        %v5082 = vrot.slane %v5054, %v5081
        %v5083 = vcombine.high %v5061, %v5061
        %v5084 = vcombine.high %v5068, %v5068
        %v5085 = vcombine.high %v5075, %v5075
        %5093 = vst [vmem:[%s206 + $0x1a] sm:$0x1] %v5061
        %5094 = vst [vmem:[%s206 + $0x5a] sm:$0x1] %v5075
        %5095 = vst [vmem:[%s206 + $0x9a] sm:$0x1] %v5083
        %5096 = vst [vmem:[%s206 + $0xda] sm:$0x1] %v5085
        %5097 = vst [vmem:[%s206 + $0x11a] sm:$0x1] %v5068
        %5098 = vst [vmem:[%s206 + $0x15a] sm:$0x1] %v5082
        %5099 = vst [vmem:[%s206 + $0x19a] sm:$0x1] %v5084
        %v5100 = vld [vmem:[#allocation3 + $0x8] sm:$0x20]
        %v5101 = vld [vmem:[#allocation3 + $0x28] sm:$0x20]
        %v5102 = vld [vmem:[#allocation3 + $0x48] sm:$0x20]
        %v5103 = vld [vmem:[#allocation3 + $0x68] sm:$0x20]
        %v5104 = vld [vmem:[#allocation3 + $0x88] sm:$0x20]
        %v5105 = vld [vmem:[#allocation3 + $0xa8] sm:$0x20]
        %v5106 = vld [vmem:[#allocation3 + $0xc8] sm:$0x20]
        %v5107 = vld [vmem:[#allocation3 + $0xe8] sm:$0x20]
        %v5116 = vunpack.c.h.b16 %v5100
        %v5117 = vunpack.c.h.b16 %v5101
        %v5118 = vunpack.c.h.b16 %v5102
        %v5119 = vunpack.c.h.b16 %v5103
        %v5120 = vunpack.c.h.b16 %v5104
        %v5121 = vunpack.c.h.b16 %v5105
        %v5122 = vunpack.c.h.b16 %v5106
        %v5123 = vunpack.c.h.b16 %v5107
        %v5124 = vrot.slane %v5116, 3
        %v5125 = vrot.slane %v5117, 2
        %v5126 = vsel %vm1198, %v5125, %v5124
        %v5127 = vrot.slane %v5118, 1
        %v5128 = vsel %vm1201, %v5127, %v5126
        %v5129 = vsel %vm1204, %v5119, %v5128
        %v5130 = vrot.slane %v5120, 7
        %v5131 = vsel %vm1207, %v5130, %v5129
        %v5132 = vrot.slane %v5121, 6
        %v5133 = vsel %vm1210, %v5132, %v5131
        %v5134 = vrot.slane %v5122, 5
        %v5135 = vsel %vm1213, %v5134, %v5133
        %v5136 = vrot.slane %v5123, 4
        %v5137 = vsel %vm1216, %v5136, %v5135
        %v5138 = vpack.c.b16 %v5137, %v5137
        %v5140 = vsel %vm1223, %v5138, 0
        %5142 = vmatprep.subr.bf16.mxu0 0
        %5143 = vmatpush1.bf16.msra.mxu0 %v5140
        %5144 = vmatprep.subr.bf16.mxu0 0
        %5145 = vmatpush1.bf16.msra.mxu0 0
        %5146 = vmatprep.subr.bf16.mxu0 0
        %5147 = vmatpush1.bf16.msra.mxu0 0
        %5148 = vmatprep.subr.bf16.mxu0 0
        %5149 = vmatpush1.bf16.msra.mxu0 0
        %5150 = vmatprep.subr.bf16.mxu0 0
        %5151 = vmatpush1.bf16.msra.mxu0 0
        %5152 = vmatprep.subr.bf16.mxu0 0
        %5153 = vmatpush1.bf16.msra.mxu0 0
        %5154 = vmatprep.subr.bf16.mxu0 0
        %5155 = vmatpush1.bf16.msra.mxu0 0
        %5156 = vmatprep.subr.bf16.mxu0 0
        %5157 = vmatpush1.bf16.msra.mxu0 0
        %5158 = vmatprep.subr.bf16.mxu0 0
        %5159 = vmatpush1.bf16.msra.mxu0 0
        %5160 = vmatprep.subr.bf16.mxu0 0
        %5161 = vmatpush1.bf16.msra.mxu0 0
        %5162 = vmatprep.subr.bf16.mxu0 0
        %5163 = vmatpush1.bf16.msra.mxu0 0
        %5164 = vmatprep.subr.bf16.mxu0 0
        %5165 = vmatpush1.bf16.msra.mxu0 0
        %5166 = vmatprep.subr.bf16.mxu0 0
        %5167 = vmatpush1.bf16.msra.mxu0 0
        %5168 = vmatprep.subr.bf16.mxu0 0
        %5169 = vmatpush1.bf16.msra.mxu0 0
        %5170 = vmatprep.subr.bf16.mxu0 0
        %5171 = vmatpush1.bf16.msra.mxu0 0
        %5172 = vmatprep.subr.bf16.mxu0 0
        %5173 = vmatpush1.bf16.msra.mxu0 0
        %5174 = vmatprep.mubr.bf16.mxu0 0
        %5175 = vmatmul.mubr.bf16.gmra.mrb[0].mxu0 %v1221
        %v5176 = vpop.f32.mrb[0].mxu0
        %v5177 = vadd.f32 0.0, %v5176
        %v5178 = vpop.f32.mrb[0].mxu0
        %v5179 = vpop.f32.mrb[0].mxu0
        %v5180 = vpop.f32.mrb[0].mxu0
        %5181 = vdwg.mxu0
        %v5183 = vcombine.high %v5177, %v5177
        %v5185 = vunpack.c.l.s4 1966171168
        %v5186 = vunpack.c.0.s8 %v5185
        %v5187 = vlaneseq
        %v5188 = vshrl.u32 %v5187, 7
        %v5189 = vsub.s32 %v5186, %v5188
        %v5190 = vrot.slane %v5177, %v5189
        %v5192 = vunpack.c.l.s4 1966171168
        %v5193 = vunpack.c.0.s8 %v5192
        %v5194 = vlaneseq
        %v5195 = vshrl.u32 %v5194, 7
        %v5196 = vsub.s32 %v5193, %v5195
        %v5197 = vrot.slane %v5183, %v5196
        %v5198 = vcombine.high %v5190, %v5190
        %v5199 = vcombine.high %v5197, %v5197
        %v5201 = vunpack.c.l.s4 1966171168
        %v5202 = vunpack.c.0.s8 %v5201
        %v5203 = vlaneseq
        %v5204 = vshrl.u32 %v5203, 7
        %v5205 = vsub.s32 %v5202, %v5204
        %v5206 = vrot.slane %v5190, %v5205
        %v5208 = vunpack.c.l.s4 1966171168
        %v5209 = vunpack.c.0.s8 %v5208
        %v5210 = vlaneseq
        %v5211 = vshrl.u32 %v5210, 7
        %v5212 = vsub.s32 %v5209, %v5211
        %v5213 = vrot.slane %v5197, %v5212
        %v5215 = vunpack.c.l.s4 1966171168
        %v5216 = vunpack.c.0.s8 %v5215
        %v5217 = vlaneseq
        %v5218 = vshrl.u32 %v5217, 7
        %v5219 = vsub.s32 %v5216, %v5218
        %v5220 = vrot.slane %v5198, %v5219
        %v5222 = vunpack.c.l.s4 1966171168
        %v5223 = vunpack.c.0.s8 %v5222
        %v5224 = vlaneseq
        %v5225 = vshrl.u32 %v5224, 7
        %v5226 = vsub.s32 %v5223, %v5225
        %v5227 = vrot.slane %v5199, %v5226
        %v5228 = vcombine.high %v5206, %v5206
        %v5229 = vcombine.high %v5213, %v5213
        %v5230 = vcombine.high %v5220, %v5220
        %5238 = vst [vmem:[%s206 + $0x1b] sm:$0x1] %v5206
        %5239 = vst [vmem:[%s206 + $0x5b] sm:$0x1] %v5220
        %5240 = vst [vmem:[%s206 + $0x9b] sm:$0x1] %v5228
        %5241 = vst [vmem:[%s206 + $0xdb] sm:$0x1] %v5230
        %5242 = vst [vmem:[%s206 + $0x11b] sm:$0x1] %v5213
        %5243 = vst [vmem:[%s206 + $0x15b] sm:$0x1] %v5227
        %5244 = vst [vmem:[%s206 + $0x19b] sm:$0x1] %v5229
        %v5245 = vld [vmem:[#allocation3 + $0x8] sm:$0x40]
        %v5246 = vld [vmem:[#allocation3 + $0x28] sm:$0x40]
        %v5247 = vld [vmem:[#allocation3 + $0x48] sm:$0x40]
        %v5248 = vld [vmem:[#allocation3 + $0x68] sm:$0x40]
        %v5249 = vld [vmem:[#allocation3 + $0x88] sm:$0x40]
        %v5250 = vld [vmem:[#allocation3 + $0xa8] sm:$0x40]
        %v5251 = vld [vmem:[#allocation3 + $0xc8] sm:$0x40]
        %v5252 = vld [vmem:[#allocation3 + $0xe8] sm:$0x40]
        %v5261 = vunpack.c.h.b16 %v5245
        %v5262 = vunpack.c.h.b16 %v5246
        %v5263 = vunpack.c.h.b16 %v5247
        %v5264 = vunpack.c.h.b16 %v5248
        %v5265 = vunpack.c.h.b16 %v5249
        %v5266 = vunpack.c.h.b16 %v5250
        %v5267 = vunpack.c.h.b16 %v5251
        %v5268 = vunpack.c.h.b16 %v5252
        %v5269 = vrot.slane %v5261, 4
        %v5270 = vrot.slane %v5262, 3
        %v5271 = vsel %vm1198, %v5270, %v5269
        %v5272 = vrot.slane %v5263, 2
        %v5273 = vsel %vm1201, %v5272, %v5271
        %v5274 = vrot.slane %v5264, 1
        %v5275 = vsel %vm1204, %v5274, %v5273
        %v5276 = vsel %vm1207, %v5265, %v5275
        %v5277 = vrot.slane %v5266, 7
        %v5278 = vsel %vm1210, %v5277, %v5276
        %v5279 = vrot.slane %v5267, 6
        %v5280 = vsel %vm1213, %v5279, %v5278
        %v5281 = vrot.slane %v5268, 5
        %v5282 = vsel %vm1216, %v5281, %v5280
        %v5283 = vpack.c.b16 %v5282, %v5282
        %v5285 = vsel %vm1223, %v5283, 0
        %5287 = vmatprep.subr.bf16.mxu0 0
        %5288 = vmatpush1.bf16.msra.mxu0 %v5285
        %5289 = vmatprep.subr.bf16.mxu0 0
        %5290 = vmatpush1.bf16.msra.mxu0 0
        %5291 = vmatprep.subr.bf16.mxu0 0
        %5292 = vmatpush1.bf16.msra.mxu0 0
        %5293 = vmatprep.subr.bf16.mxu0 0
        %5294 = vmatpush1.bf16.msra.mxu0 0
        %5295 = vmatprep.subr.bf16.mxu0 0
        %5296 = vmatpush1.bf16.msra.mxu0 0
        %5297 = vmatprep.subr.bf16.mxu0 0
        %5298 = vmatpush1.bf16.msra.mxu0 0
        %5299 = vmatprep.subr.bf16.mxu0 0
        %5300 = vmatpush1.bf16.msra.mxu0 0
        %5301 = vmatprep.subr.bf16.mxu0 0
        %5302 = vmatpush1.bf16.msra.mxu0 0
        %5303 = vmatprep.subr.bf16.mxu0 0
        %5304 = vmatpush1.bf16.msra.mxu0 0
        %5305 = vmatprep.subr.bf16.mxu0 0
        %5306 = vmatpush1.bf16.msra.mxu0 0
        %5307 = vmatprep.subr.bf16.mxu0 0
        %5308 = vmatpush1.bf16.msra.mxu0 0
        %5309 = vmatprep.subr.bf16.mxu0 0
        %5310 = vmatpush1.bf16.msra.mxu0 0
        %5311 = vmatprep.subr.bf16.mxu0 0
        %5312 = vmatpush1.bf16.msra.mxu0 0
        %5313 = vmatprep.subr.bf16.mxu0 0
        %5314 = vmatpush1.bf16.msra.mxu0 0
        %5315 = vmatprep.subr.bf16.mxu0 0
        %5316 = vmatpush1.bf16.msra.mxu0 0
        %5317 = vmatprep.subr.bf16.mxu0 0
        %5318 = vmatpush1.bf16.msra.mxu0 0
        %5319 = vmatprep.mubr.bf16.mxu0 0
        %5320 = vmatmul.mubr.bf16.gmra.mrb[0].mxu0 %v1221
        %v5321 = vpop.f32.mrb[0].mxu0
        %v5322 = vadd.f32 0.0, %v5321
        %v5323 = vpop.f32.mrb[0].mxu0
        %v5324 = vpop.f32.mrb[0].mxu0
        %v5325 = vpop.f32.mrb[0].mxu0
        %5326 = vdwg.mxu0
        %v5328 = vcombine.high %v5322, %v5322
        %v5330 = vunpack.c.l.s4 1966171168
        %v5331 = vunpack.c.0.s8 %v5330
        %v5332 = vlaneseq
        %v5333 = vshrl.u32 %v5332, 7
        %v5334 = vsub.s32 %v5331, %v5333
        %v5335 = vrot.slane %v5322, %v5334
        %v5337 = vunpack.c.l.s4 1966171168
        %v5338 = vunpack.c.0.s8 %v5337
        %v5339 = vlaneseq
        %v5340 = vshrl.u32 %v5339, 7
        %v5341 = vsub.s32 %v5338, %v5340
        %v5342 = vrot.slane %v5328, %v5341
        %v5343 = vcombine.high %v5335, %v5335
        %v5344 = vcombine.high %v5342, %v5342
        %v5346 = vunpack.c.l.s4 1966171168
        %v5347 = vunpack.c.0.s8 %v5346
        %v5348 = vlaneseq
        %v5349 = vshrl.u32 %v5348, 7
        %v5350 = vsub.s32 %v5347, %v5349
        %v5351 = vrot.slane %v5335, %v5350
        %v5353 = vunpack.c.l.s4 1966171168
        %v5354 = vunpack.c.0.s8 %v5353
        %v5355 = vlaneseq
        %v5356 = vshrl.u32 %v5355, 7
        %v5357 = vsub.s32 %v5354, %v5356
        %v5358 = vrot.slane %v5342, %v5357
        %v5360 = vunpack.c.l.s4 1966171168
        %v5361 = vunpack.c.0.s8 %v5360
        %v5362 = vlaneseq
        %v5363 = vshrl.u32 %v5362, 7
        %v5364 = vsub.s32 %v5361, %v5363
        %v5365 = vrot.slane %v5343, %v5364
        %v5367 = vunpack.c.l.s4 1966171168
        %v5368 = vunpack.c.0.s8 %v5367
        %v5369 = vlaneseq
        %v5370 = vshrl.u32 %v5369, 7
        %v5371 = vsub.s32 %v5368, %v5370
        %v5372 = vrot.slane %v5344, %v5371
        %v5373 = vcombine.high %v5351, %v5351
        %v5374 = vcombine.high %v5358, %v5358
        %v5375 = vcombine.high %v5365, %v5365
        %5383 = vst [vmem:[%s206 + $0x1c] sm:$0x1] %v5351
        %5384 = vst [vmem:[%s206 + $0x5c] sm:$0x1] %v5365
        %5385 = vst [vmem:[%s206 + $0x9c] sm:$0x1] %v5373
        %5386 = vst [vmem:[%s206 + $0xdc] sm:$0x1] %v5375
        %5387 = vst [vmem:[%s206 + $0x11c] sm:$0x1] %v5358
        %5388 = vst [vmem:[%s206 + $0x15c] sm:$0x1] %v5372
        %5389 = vst [vmem:[%s206 + $0x19c] sm:$0x1] %v5374
        %v5390 = vld [vmem:[#allocation3 + $0x8] sm:$0x40]
        %v5391 = vld [vmem:[#allocation3 + $0x28] sm:$0x40]
        %v5392 = vld [vmem:[#allocation3 + $0x48] sm:$0x40]
        %v5393 = vld [vmem:[#allocation3 + $0x68] sm:$0x40]
        %v5394 = vld [vmem:[#allocation3 + $0x88] sm:$0x40]
        %v5395 = vld [vmem:[#allocation3 + $0xa8] sm:$0x40]
        %v5396 = vld [vmem:[#allocation3 + $0xc8] sm:$0x40]
        %v5397 = vld [vmem:[#allocation3 + $0xe8] sm:$0x40]
        %v5406 = vunpack.c.h.b16 %v5390
        %v5407 = vunpack.c.h.b16 %v5391
        %v5408 = vunpack.c.h.b16 %v5392
        %v5409 = vunpack.c.h.b16 %v5393
        %v5410 = vunpack.c.h.b16 %v5394
        %v5411 = vunpack.c.h.b16 %v5395
        %v5412 = vunpack.c.h.b16 %v5396
        %v5413 = vunpack.c.h.b16 %v5397
        %v5414 = vrot.slane %v5406, 5
        %v5415 = vrot.slane %v5407, 4
        %v5416 = vsel %vm1198, %v5415, %v5414
        %v5417 = vrot.slane %v5408, 3
        %v5418 = vsel %vm1201, %v5417, %v5416
        %v5419 = vrot.slane %v5409, 2
        %v5420 = vsel %vm1204, %v5419, %v5418
        %v5421 = vrot.slane %v5410, 1
        %v5422 = vsel %vm1207, %v5421, %v5420
        %v5423 = vsel %vm1210, %v5411, %v5422
        %v5424 = vrot.slane %v5412, 7
        %v5425 = vsel %vm1213, %v5424, %v5423
        %v5426 = vrot.slane %v5413, 6
        %v5427 = vsel %vm1216, %v5426, %v5425
        %v5428 = vpack.c.b16 %v5427, %v5427
        %v5430 = vsel %vm1223, %v5428, 0
        %5432 = vmatprep.subr.bf16.mxu0 0
        %5433 = vmatpush1.bf16.msra.mxu0 %v5430
        %5434 = vmatprep.subr.bf16.mxu0 0
        %5435 = vmatpush1.bf16.msra.mxu0 0
        %5436 = vmatprep.subr.bf16.mxu0 0
        %5437 = vmatpush1.bf16.msra.mxu0 0
        %5438 = vmatprep.subr.bf16.mxu0 0
        %5439 = vmatpush1.bf16.msra.mxu0 0
        %5440 = vmatprep.subr.bf16.mxu0 0
        %5441 = vmatpush1.bf16.msra.mxu0 0
        %5442 = vmatprep.subr.bf16.mxu0 0
        %5443 = vmatpush1.bf16.msra.mxu0 0
        %5444 = vmatprep.subr.bf16.mxu0 0
        %5445 = vmatpush1.bf16.msra.mxu0 0
        %5446 = vmatprep.subr.bf16.mxu0 0
        %5447 = vmatpush1.bf16.msra.mxu0 0
        %5448 = vmatprep.subr.bf16.mxu0 0
        %5449 = vmatpush1.bf16.msra.mxu0 0
        %5450 = vmatprep.subr.bf16.mxu0 0
        %5451 = vmatpush1.bf16.msra.mxu0 0
        %5452 = vmatprep.subr.bf16.mxu0 0
        %5453 = vmatpush1.bf16.msra.mxu0 0
        %5454 = vmatprep.subr.bf16.mxu0 0
        %5455 = vmatpush1.bf16.msra.mxu0 0
        %5456 = vmatprep.subr.bf16.mxu0 0
        %5457 = vmatpush1.bf16.msra.mxu0 0
        %5458 = vmatprep.subr.bf16.mxu0 0
        %5459 = vmatpush1.bf16.msra.mxu0 0
        %5460 = vmatprep.subr.bf16.mxu0 0
        %5461 = vmatpush1.bf16.msra.mxu0 0
        %5462 = vmatprep.subr.bf16.mxu0 0
        %5463 = vmatpush1.bf16.msra.mxu0 0
        %5464 = vmatprep.mubr.bf16.mxu0 0
        %5465 = vmatmul.mubr.bf16.gmra.mrb[0].mxu0 %v1221
        %v5466 = vpop.f32.mrb[0].mxu0
        %v5467 = vadd.f32 0.0, %v5466
        %v5468 = vpop.f32.mrb[0].mxu0
        %v5469 = vpop.f32.mrb[0].mxu0
        %v5470 = vpop.f32.mrb[0].mxu0
        %5471 = vdwg.mxu0
        %v5473 = vcombine.high %v5467, %v5467
        %v5475 = vunpack.c.l.s4 1966171168
        %v5476 = vunpack.c.0.s8 %v5475
        %v5477 = vlaneseq
        %v5478 = vshrl.u32 %v5477, 7
        %v5479 = vsub.s32 %v5476, %v5478
        %v5480 = vrot.slane %v5467, %v5479
        %v5482 = vunpack.c.l.s4 1966171168
        %v5483 = vunpack.c.0.s8 %v5482
        %v5484 = vlaneseq
        %v5485 = vshrl.u32 %v5484, 7
        %v5486 = vsub.s32 %v5483, %v5485
        %v5487 = vrot.slane %v5473, %v5486
        %v5488 = vcombine.high %v5480, %v5480
        %v5489 = vcombine.high %v5487, %v5487
        %v5491 = vunpack.c.l.s4 1966171168
        %v5492 = vunpack.c.0.s8 %v5491
        %v5493 = vlaneseq
        %v5494 = vshrl.u32 %v5493, 7
        %v5495 = vsub.s32 %v5492, %v5494
        %v5496 = vrot.slane %v5480, %v5495
        %v5498 = vunpack.c.l.s4 1966171168
        %v5499 = vunpack.c.0.s8 %v5498
        %v5500 = vlaneseq
        %v5501 = vshrl.u32 %v5500, 7
        %v5502 = vsub.s32 %v5499, %v5501
        %v5503 = vrot.slane %v5487, %v5502
        %v5505 = vunpack.c.l.s4 1966171168
        %v5506 = vunpack.c.0.s8 %v5505
        %v5507 = vlaneseq
        %v5508 = vshrl.u32 %v5507, 7
        %v5509 = vsub.s32 %v5506, %v5508
        %v5510 = vrot.slane %v5488, %v5509
        %v5512 = vunpack.c.l.s4 1966171168
        %v5513 = vunpack.c.0.s8 %v5512
        %v5514 = vlaneseq
        %v5515 = vshrl.u32 %v5514, 7
        %v5516 = vsub.s32 %v5513, %v5515
        %v5517 = vrot.slane %v5489, %v5516
        %v5518 = vcombine.high %v5496, %v5496
        %v5519 = vcombine.high %v5503, %v5503
        %v5520 = vcombine.high %v5510, %v5510
        %5528 = vst [vmem:[%s206 + $0x1d] sm:$0x1] %v5496
        %5529 = vst [vmem:[%s206 + $0x5d] sm:$0x1] %v5510
        %5530 = vst [vmem:[%s206 + $0x9d] sm:$0x1] %v5518
        %5531 = vst [vmem:[%s206 + $0xdd] sm:$0x1] %v5520
        %5532 = vst [vmem:[%s206 + $0x11d] sm:$0x1] %v5503
        %5533 = vst [vmem:[%s206 + $0x15d] sm:$0x1] %v5517
        %5534 = vst [vmem:[%s206 + $0x19d] sm:$0x1] %v5519
        %v5535 = vld [vmem:[#allocation3 + $0x8] sm:$0x80]
        %v5536 = vld [vmem:[#allocation3 + $0x28] sm:$0x80]
        %v5537 = vld [vmem:[#allocation3 + $0x48] sm:$0x80]
        %v5538 = vld [vmem:[#allocation3 + $0x68] sm:$0x80]
        %v5539 = vld [vmem:[#allocation3 + $0x88] sm:$0x80]
        %v5540 = vld [vmem:[#allocation3 + $0xa8] sm:$0x80]
        %v5541 = vld [vmem:[#allocation3 + $0xc8] sm:$0x80]
        %v5542 = vld [vmem:[#allocation3 + $0xe8] sm:$0x80]
        %v5551 = vunpack.c.h.b16 %v5535
        %v5552 = vunpack.c.h.b16 %v5536
        %v5553 = vunpack.c.h.b16 %v5537
        %v5554 = vunpack.c.h.b16 %v5538
        %v5555 = vunpack.c.h.b16 %v5539
        %v5556 = vunpack.c.h.b16 %v5540
        %v5557 = vunpack.c.h.b16 %v5541
        %v5558 = vunpack.c.h.b16 %v5542
        %v5559 = vrot.slane %v5551, 6
        %v5560 = vrot.slane %v5552, 5
        %v5561 = vsel %vm1198, %v5560, %v5559
        %v5562 = vrot.slane %v5553, 4
        %v5563 = vsel %vm1201, %v5562, %v5561
        %v5564 = vrot.slane %v5554, 3
        %v5565 = vsel %vm1204, %v5564, %v5563
        %v5566 = vrot.slane %v5555, 2
        %v5567 = vsel %vm1207, %v5566, %v5565
        %v5568 = vrot.slane %v5556, 1
        %v5569 = vsel %vm1210, %v5568, %v5567
        %v5570 = vsel %vm1213, %v5557, %v5569
        %v5571 = vrot.slane %v5558, 7
        %v5572 = vsel %vm1216, %v5571, %v5570
        %v5573 = vpack.c.b16 %v5572, %v5572
        %v5575 = vsel %vm1223, %v5573, 0
        %5577 = vmatprep.subr.bf16.mxu0 0
        %5578 = vmatpush1.bf16.msra.mxu0 %v5575
        %5579 = vmatprep.subr.bf16.mxu0 0
        %5580 = vmatpush1.bf16.msra.mxu0 0
        %5581 = vmatprep.subr.bf16.mxu0 0
        %5582 = vmatpush1.bf16.msra.mxu0 0
        %5583 = vmatprep.subr.bf16.mxu0 0
        %5584 = vmatpush1.bf16.msra.mxu0 0
        %5585 = vmatprep.subr.bf16.mxu0 0
        %5586 = vmatpush1.bf16.msra.mxu0 0
        %5587 = vmatprep.subr.bf16.mxu0 0
        %5588 = vmatpush1.bf16.msra.mxu0 0
        %5589 = vmatprep.subr.bf16.mxu0 0
        %5590 = vmatpush1.bf16.msra.mxu0 0
        %5591 = vmatprep.subr.bf16.mxu0 0
        %5592 = vmatpush1.bf16.msra.mxu0 0
        %5593 = vmatprep.subr.bf16.mxu0 0
        %5594 = vmatpush1.bf16.msra.mxu0 0
        %5595 = vmatprep.subr.bf16.mxu0 0
        %5596 = vmatpush1.bf16.msra.mxu0 0
        %5597 = vmatprep.subr.bf16.mxu0 0
        %5598 = vmatpush1.bf16.msra.mxu0 0
        %5599 = vmatprep.subr.bf16.mxu0 0
        %5600 = vmatpush1.bf16.msra.mxu0 0
        %5601 = vmatprep.subr.bf16.mxu0 0
        %5602 = vmatpush1.bf16.msra.mxu0 0
        %5603 = vmatprep.subr.bf16.mxu0 0
        %5604 = vmatpush1.bf16.msra.mxu0 0
        %5605 = vmatprep.subr.bf16.mxu0 0
        %5606 = vmatpush1.bf16.msra.mxu0 0
        %5607 = vmatprep.subr.bf16.mxu0 0
        %5608 = vmatpush1.bf16.msra.mxu0 0
        %5609 = vmatprep.mubr.bf16.mxu0 0
        %5610 = vmatmul.mubr.bf16.gmra.mrb[0].mxu0 %v1221
        %v5611 = vpop.f32.mrb[0].mxu0
        %v5612 = vadd.f32 0.0, %v5611
        %v5613 = vpop.f32.mrb[0].mxu0
        %v5614 = vpop.f32.mrb[0].mxu0
        %v5615 = vpop.f32.mrb[0].mxu0
        %5616 = vdwg.mxu0
        %v5618 = vcombine.high %v5612, %v5612
        %v5620 = vunpack.c.l.s4 1966171168
        %v5621 = vunpack.c.0.s8 %v5620
        %v5622 = vlaneseq
        %v5623 = vshrl.u32 %v5622, 7
        %v5624 = vsub.s32 %v5621, %v5623
        %v5625 = vrot.slane %v5612, %v5624
        %v5627 = vunpack.c.l.s4 1966171168
        %v5628 = vunpack.c.0.s8 %v5627
        %v5629 = vlaneseq
        %v5630 = vshrl.u32 %v5629, 7
        %v5631 = vsub.s32 %v5628, %v5630
        %v5632 = vrot.slane %v5618, %v5631
        %v5633 = vcombine.high %v5625, %v5625
        %v5634 = vcombine.high %v5632, %v5632
        %v5636 = vunpack.c.l.s4 1966171168
        %v5637 = vunpack.c.0.s8 %v5636
        %v5638 = vlaneseq
        %v5639 = vshrl.u32 %v5638, 7
        %v5640 = vsub.s32 %v5637, %v5639
        %v5641 = vrot.slane %v5625, %v5640
        %v5643 = vunpack.c.l.s4 1966171168
        %v5644 = vunpack.c.0.s8 %v5643
        %v5645 = vlaneseq
        %v5646 = vshrl.u32 %v5645, 7
        %v5647 = vsub.s32 %v5644, %v5646
        %v5648 = vrot.slane %v5632, %v5647
        %v5650 = vunpack.c.l.s4 1966171168
        %v5651 = vunpack.c.0.s8 %v5650
        %v5652 = vlaneseq
        %v5653 = vshrl.u32 %v5652, 7
        %v5654 = vsub.s32 %v5651, %v5653
        %v5655 = vrot.slane %v5633, %v5654
        %v5657 = vunpack.c.l.s4 1966171168
        %v5658 = vunpack.c.0.s8 %v5657
        %v5659 = vlaneseq
        %v5660 = vshrl.u32 %v5659, 7
        %v5661 = vsub.s32 %v5658, %v5660
        %v5662 = vrot.slane %v5634, %v5661
        %v5663 = vcombine.high %v5641, %v5641
        %v5664 = vcombine.high %v5648, %v5648
        %v5665 = vcombine.high %v5655, %v5655
        %5673 = vst [vmem:[%s206 + $0x1e] sm:$0x1] %v5641
        %5674 = vst [vmem:[%s206 + $0x5e] sm:$0x1] %v5655
        %5675 = vst [vmem:[%s206 + $0x9e] sm:$0x1] %v5663
        %5676 = vst [vmem:[%s206 + $0xde] sm:$0x1] %v5665
        %5677 = vst [vmem:[%s206 + $0x11e] sm:$0x1] %v5648
        %5678 = vst [vmem:[%s206 + $0x15e] sm:$0x1] %v5662
        %5679 = vst [vmem:[%s206 + $0x19e] sm:$0x1] %v5664
        %v5680 = vld [vmem:[#allocation3 + $0x8] sm:$0x80]
        %v5681 = vld [vmem:[#allocation3 + $0x28] sm:$0x80]
        %v5682 = vld [vmem:[#allocation3 + $0x48] sm:$0x80]
        %v5683 = vld [vmem:[#allocation3 + $0x68] sm:$0x80]
        %v5684 = vld [vmem:[#allocation3 + $0x88] sm:$0x80]
        %v5685 = vld [vmem:[#allocation3 + $0xa8] sm:$0x80]
        %v5686 = vld [vmem:[#allocation3 + $0xc8] sm:$0x80]
        %v5687 = vld [vmem:[#allocation3 + $0xe8] sm:$0x80]
        %v5696 = vunpack.c.h.b16 %v5680
        %v5697 = vunpack.c.h.b16 %v5681
        %v5698 = vunpack.c.h.b16 %v5682
        %v5699 = vunpack.c.h.b16 %v5683
        %v5700 = vunpack.c.h.b16 %v5684
        %v5701 = vunpack.c.h.b16 %v5685
        %v5702 = vunpack.c.h.b16 %v5686
        %v5703 = vunpack.c.h.b16 %v5687
        %v5704 = vrot.slane %v5696, 7
        %v5705 = vrot.slane %v5697, 6
        %v5706 = vsel %vm1198, %v5705, %v5704
        %v5707 = vrot.slane %v5698, 5
        %v5708 = vsel %vm1201, %v5707, %v5706
        %v5709 = vrot.slane %v5699, 4
        %v5710 = vsel %vm1204, %v5709, %v5708
        %v5711 = vrot.slane %v5700, 3
        %v5712 = vsel %vm1207, %v5711, %v5710
        %v5713 = vrot.slane %v5701, 2
        %v5714 = vsel %vm1210, %v5713, %v5712
        %v5715 = vrot.slane %v5702, 1
        %v5716 = vsel %vm1213, %v5715, %v5714
        %v5717 = vsel %vm1216, %v5703, %v5716
        %v5718 = vpack.c.b16 %v5717, %v5717
        %v5720 = vsel %vm1223, %v5718, 0
        %5722 = vmatprep.subr.bf16.mxu0 0
        %5723 = vmatpush1.bf16.msra.mxu0 %v5720
        %5724 = vmatprep.subr.bf16.mxu0 0
        %5725 = vmatpush1.bf16.msra.mxu0 0
        %5726 = vmatprep.subr.bf16.mxu0 0
        %5727 = vmatpush1.bf16.msra.mxu0 0
        %5728 = vmatprep.subr.bf16.mxu0 0
        %5729 = vmatpush1.bf16.msra.mxu0 0
        %5730 = vmatprep.subr.bf16.mxu0 0
        %5731 = vmatpush1.bf16.msra.mxu0 0
        %5732 = vmatprep.subr.bf16.mxu0 0
        %5733 = vmatpush1.bf16.msra.mxu0 0
        %5734 = vmatprep.subr.bf16.mxu0 0
        %5735 = vmatpush1.bf16.msra.mxu0 0
        %5736 = vmatprep.subr.bf16.mxu0 0
        %5737 = vmatpush1.bf16.msra.mxu0 0
        %5738 = vmatprep.subr.bf16.mxu0 0
        %5739 = vmatpush1.bf16.msra.mxu0 0
        %5740 = vmatprep.subr.bf16.mxu0 0
        %5741 = vmatpush1.bf16.msra.mxu0 0
        %5742 = vmatprep.subr.bf16.mxu0 0
        %5743 = vmatpush1.bf16.msra.mxu0 0
        %5744 = vmatprep.subr.bf16.mxu0 0
        %5745 = vmatpush1.bf16.msra.mxu0 0
        %5746 = vmatprep.subr.bf16.mxu0 0
        %5747 = vmatpush1.bf16.msra.mxu0 0
        %5748 = vmatprep.subr.bf16.mxu0 0
        %5749 = vmatpush1.bf16.msra.mxu0 0
        %5750 = vmatprep.subr.bf16.mxu0 0
        %5751 = vmatpush1.bf16.msra.mxu0 0
        %5752 = vmatprep.subr.bf16.mxu0 0
        %5753 = vmatpush1.bf16.msra.mxu0 0
        %5754 = vmatprep.mubr.bf16.mxu0 0
        %5755 = vmatmul.mubr.bf16.gmra.mrb[0].mxu0 %v1221
        %v5756 = vpop.f32.mrb[0].mxu0
        %v5757 = vadd.f32 0.0, %v5756
        %v5758 = vpop.f32.mrb[0].mxu0
        %v5759 = vpop.f32.mrb[0].mxu0
        %v5760 = vpop.f32.mrb[0].mxu0
        %5761 = vdwg.mxu0
        %v5763 = vcombine.high %v5757, %v5757
        %v5765 = vunpack.c.l.s4 1966171168
        %v5766 = vunpack.c.0.s8 %v5765
        %v5767 = vlaneseq
        %v5768 = vshrl.u32 %v5767, 7
        %v5769 = vsub.s32 %v5766, %v5768
        %v5770 = vrot.slane %v5757, %v5769
        %v5772 = vunpack.c.l.s4 1966171168
        %v5773 = vunpack.c.0.s8 %v5772
        %v5774 = vlaneseq
        %v5775 = vshrl.u32 %v5774, 7
        %v5776 = vsub.s32 %v5773, %v5775
        %v5777 = vrot.slane %v5763, %v5776
        %v5778 = vcombine.high %v5770, %v5770
        %v5779 = vcombine.high %v5777, %v5777
        %v5781 = vunpack.c.l.s4 1966171168
        %v5782 = vunpack.c.0.s8 %v5781
        %v5783 = vlaneseq
        %v5784 = vshrl.u32 %v5783, 7
        %v5785 = vsub.s32 %v5782, %v5784
        %v5786 = vrot.slane %v5770, %v5785
        %v5788 = vunpack.c.l.s4 1966171168
        %v5789 = vunpack.c.0.s8 %v5788
        %v5790 = vlaneseq
        %v5791 = vshrl.u32 %v5790, 7
        %v5792 = vsub.s32 %v5789, %v5791
        %v5793 = vrot.slane %v5777, %v5792
        %v5795 = vunpack.c.l.s4 1966171168
        %v5796 = vunpack.c.0.s8 %v5795
        %v5797 = vlaneseq
        %v5798 = vshrl.u32 %v5797, 7
        %v5799 = vsub.s32 %v5796, %v5798
        %v5800 = vrot.slane %v5778, %v5799
        %v5802 = vunpack.c.l.s4 1966171168
        %v5803 = vunpack.c.0.s8 %v5802
        %v5804 = vlaneseq
        %v5805 = vshrl.u32 %v5804, 7
        %v5806 = vsub.s32 %v5803, %v5805
        %v5807 = vrot.slane %v5779, %v5806
        %v5808 = vcombine.high %v5786, %v5786
        %v5809 = vcombine.high %v5793, %v5793
        %v5810 = vcombine.high %v5800, %v5800
        %5818 = vst [vmem:[%s206 + $0x1f] sm:$0x1] %v5786
        %5819 = vst [vmem:[%s206 + $0x5f] sm:$0x1] %v5800
        %5820 = vst [vmem:[%s206 + $0x9f] sm:$0x1] %v5808
        %5821 = vst [vmem:[%s206 + $0xdf] sm:$0x1] %v5810
        %5822 = vst [vmem:[%s206 + $0x11f] sm:$0x1] %v5793
        %5823 = vst [vmem:[%s206 + $0x15f] sm:$0x1] %v5807
        %5824 = vst [vmem:[%s206 + $0x19f] sm:$0x1] %v5809
        %v5825 = vld [vmem:[#allocation3 + $0x10] sm:$0x1]
        %v5826 = vld [vmem:[#allocation3 + $0x30] sm:$0x1]
        %v5827 = vld [vmem:[#allocation3 + $0x50] sm:$0x1]
        %v5828 = vld [vmem:[#allocation3 + $0x70] sm:$0x1]
        %v5829 = vld [vmem:[#allocation3 + $0x90] sm:$0x1]
        %v5830 = vld [vmem:[#allocation3 + $0xb0] sm:$0x1]
        %v5831 = vld [vmem:[#allocation3 + $0xd0] sm:$0x1]
        %v5832 = vld [vmem:[#allocation3 + $0xf0] sm:$0x1]
        %v5841 = vunpack.c.l.b16 %v5825
        %v5842 = vunpack.c.l.b16 %v5826
        %v5843 = vunpack.c.l.b16 %v5827
        %v5844 = vunpack.c.l.b16 %v5828
        %v5845 = vunpack.c.l.b16 %v5829
        %v5846 = vunpack.c.l.b16 %v5830
        %v5847 = vunpack.c.l.b16 %v5831
        %v5848 = vunpack.c.l.b16 %v5832
        %v5849 = vrot.slane %v5842, 7
        %v5850 = vsel %vm1198, %v5849, %v5841
        %v5851 = vrot.slane %v5843, 6
        %v5852 = vsel %vm1201, %v5851, %v5850
        %v5853 = vrot.slane %v5844, 5
        %v5854 = vsel %vm1204, %v5853, %v5852
        %v5855 = vrot.slane %v5845, 4
        %v5856 = vsel %vm1207, %v5855, %v5854
        %v5857 = vrot.slane %v5846, 3
        %v5858 = vsel %vm1210, %v5857, %v5856
        %v5859 = vrot.slane %v5847, 2
        %v5860 = vsel %vm1213, %v5859, %v5858
        %v5861 = vrot.slane %v5848, 1
        %v5862 = vsel %vm1216, %v5861, %v5860
        %v5863 = vpack.c.b16 %v5862, %v5862
        %v5865 = vsel %vm1223, %v5863, 0
        %5867 = vmatprep.subr.bf16.mxu0 0
        %5868 = vmatpush1.bf16.msra.mxu0 %v5865
        %5869 = vmatprep.subr.bf16.mxu0 0
        %5870 = vmatpush1.bf16.msra.mxu0 0
        %5871 = vmatprep.subr.bf16.mxu0 0
        %5872 = vmatpush1.bf16.msra.mxu0 0
        %5873 = vmatprep.subr.bf16.mxu0 0
        %5874 = vmatpush1.bf16.msra.mxu0 0
        %5875 = vmatprep.subr.bf16.mxu0 0
        %5876 = vmatpush1.bf16.msra.mxu0 0
        %5877 = vmatprep.subr.bf16.mxu0 0
        %5878 = vmatpush1.bf16.msra.mxu0 0
        %5879 = vmatprep.subr.bf16.mxu0 0
        %5880 = vmatpush1.bf16.msra.mxu0 0
        %5881 = vmatprep.subr.bf16.mxu0 0
        %5882 = vmatpush1.bf16.msra.mxu0 0
        %5883 = vmatprep.subr.bf16.mxu0 0
        %5884 = vmatpush1.bf16.msra.mxu0 0
        %5885 = vmatprep.subr.bf16.mxu0 0
        %5886 = vmatpush1.bf16.msra.mxu0 0
        %5887 = vmatprep.subr.bf16.mxu0 0
        %5888 = vmatpush1.bf16.msra.mxu0 0
        %5889 = vmatprep.subr.bf16.mxu0 0
        %5890 = vmatpush1.bf16.msra.mxu0 0
        %5891 = vmatprep.subr.bf16.mxu0 0
        %5892 = vmatpush1.bf16.msra.mxu0 0
        %5893 = vmatprep.subr.bf16.mxu0 0
        %5894 = vmatpush1.bf16.msra.mxu0 0
        %5895 = vmatprep.subr.bf16.mxu0 0
        %5896 = vmatpush1.bf16.msra.mxu0 0
        %5897 = vmatprep.subr.bf16.mxu0 0
        %5898 = vmatpush1.bf16.msra.mxu0 0
        %5899 = vmatprep.mubr.bf16.mxu0 0
        %5900 = vmatmul.mubr.bf16.gmra.mrb[0].mxu0 %v1221
        %v5901 = vpop.f32.mrb[0].mxu0
        %v5902 = vadd.f32 0.0, %v5901
        %v5903 = vpop.f32.mrb[0].mxu0
        %v5904 = vpop.f32.mrb[0].mxu0
        %v5905 = vpop.f32.mrb[0].mxu0
        %5906 = vdwg.mxu0
        %v5908 = vcombine.high %v5902, %v5902
        %v5910 = vunpack.c.l.s4 1966171168
        %v5911 = vunpack.c.0.s8 %v5910
        %v5912 = vlaneseq
        %v5913 = vshrl.u32 %v5912, 7
        %v5914 = vsub.s32 %v5911, %v5913
        %v5915 = vrot.slane %v5902, %v5914
        %v5917 = vunpack.c.l.s4 1966171168
        %v5918 = vunpack.c.0.s8 %v5917
        %v5919 = vlaneseq
        %v5920 = vshrl.u32 %v5919, 7
        %v5921 = vsub.s32 %v5918, %v5920
        %v5922 = vrot.slane %v5908, %v5921
        %v5923 = vcombine.high %v5915, %v5915
        %v5924 = vcombine.high %v5922, %v5922
        %v5926 = vunpack.c.l.s4 1966171168
        %v5927 = vunpack.c.0.s8 %v5926
        %v5928 = vlaneseq
        %v5929 = vshrl.u32 %v5928, 7
        %v5930 = vsub.s32 %v5927, %v5929
        %v5931 = vrot.slane %v5915, %v5930
        %v5933 = vunpack.c.l.s4 1966171168
        %v5934 = vunpack.c.0.s8 %v5933
        %v5935 = vlaneseq
        %v5936 = vshrl.u32 %v5935, 7
        %v5937 = vsub.s32 %v5934, %v5936
        %v5938 = vrot.slane %v5922, %v5937
        %v5940 = vunpack.c.l.s4 1966171168
        %v5941 = vunpack.c.0.s8 %v5940
        %v5942 = vlaneseq
        %v5943 = vshrl.u32 %v5942, 7
        %v5944 = vsub.s32 %v5941, %v5943
        %v5945 = vrot.slane %v5923, %v5944
        %v5947 = vunpack.c.l.s4 1966171168
        %v5948 = vunpack.c.0.s8 %v5947
        %v5949 = vlaneseq
        %v5950 = vshrl.u32 %v5949, 7
        %v5951 = vsub.s32 %v5948, %v5950
        %v5952 = vrot.slane %v5924, %v5951
        %v5953 = vcombine.high %v5931, %v5931
        %v5954 = vcombine.high %v5938, %v5938
        %v5955 = vcombine.high %v5945, %v5945
        %5963 = vst [vmem:[%s206 + $0x20] sm:$0x1] %v5931
        %5964 = vst [vmem:[%s206 + $0x60] sm:$0x1] %v5945
        %5965 = vst [vmem:[%s206 + $0xa0] sm:$0x1] %v5953
        %5966 = vst [vmem:[%s206 + $0xe0] sm:$0x1] %v5955
        %5967 = vst [vmem:[%s206 + $0x120] sm:$0x1] %v5938
        %5968 = vst [vmem:[%s206 + $0x160] sm:$0x1] %v5952
        %5969 = vst [vmem:[%s206 + $0x1a0] sm:$0x1] %v5954
        %v5970 = vld [vmem:[#allocation3 + $0x10] sm:$0x1]
        %v5971 = vld [vmem:[#allocation3 + $0x30] sm:$0x1]
        %v5972 = vld [vmem:[#allocation3 + $0x50] sm:$0x1]
        %v5973 = vld [vmem:[#allocation3 + $0x70] sm:$0x1]
        %v5974 = vld [vmem:[#allocation3 + $0x90] sm:$0x1]
        %v5975 = vld [vmem:[#allocation3 + $0xb0] sm:$0x1]
        %v5976 = vld [vmem:[#allocation3 + $0xd0] sm:$0x1]
        %v5977 = vld [vmem:[#allocation3 + $0xf0] sm:$0x1]
        %v5986 = vunpack.c.l.b16 %v5970
        %v5987 = vunpack.c.l.b16 %v5971
        %v5988 = vunpack.c.l.b16 %v5972
        %v5989 = vunpack.c.l.b16 %v5973
        %v5990 = vunpack.c.l.b16 %v5974
        %v5991 = vunpack.c.l.b16 %v5975
        %v5992 = vunpack.c.l.b16 %v5976
        %v5993 = vunpack.c.l.b16 %v5977
        %v5994 = vrot.slane %v5986, 1
        %v5995 = vsel %vm1198, %v5987, %v5994
        %v5996 = vrot.slane %v5988, 7
        %v5997 = vsel %vm1201, %v5996, %v5995
        %v5998 = vrot.slane %v5989, 6
        %v5999 = vsel %vm1204, %v5998, %v5997
        %v6000 = vrot.slane %v5990, 5
        %v6001 = vsel %vm1207, %v6000, %v5999
        %v6002 = vrot.slane %v5991, 4
        %v6003 = vsel %vm1210, %v6002, %v6001
        %v6004 = vrot.slane %v5992, 3
        %v6005 = vsel %vm1213, %v6004, %v6003
        %v6006 = vrot.slane %v5993, 2
        %v6007 = vsel %vm1216, %v6006, %v6005
        %v6008 = vpack.c.b16 %v6007, %v6007
        %v6010 = vsel %vm1223, %v6008, 0
        %6012 = vmatprep.subr.bf16.mxu0 0
        %6013 = vmatpush1.bf16.msra.mxu0 %v6010
        %6014 = vmatprep.subr.bf16.mxu0 0
        %6015 = vmatpush1.bf16.msra.mxu0 0
        %6016 = vmatprep.subr.bf16.mxu0 0
        %6017 = vmatpush1.bf16.msra.mxu0 0
        %6018 = vmatprep.subr.bf16.mxu0 0
        %6019 = vmatpush1.bf16.msra.mxu0 0
        %6020 = vmatprep.subr.bf16.mxu0 0
        %6021 = vmatpush1.bf16.msra.mxu0 0
        %6022 = vmatprep.subr.bf16.mxu0 0
        %6023 = vmatpush1.bf16.msra.mxu0 0
        %6024 = vmatprep.subr.bf16.mxu0 0
        %6025 = vmatpush1.bf16.msra.mxu0 0
        %6026 = vmatprep.subr.bf16.mxu0 0
        %6027 = vmatpush1.bf16.msra.mxu0 0
        %6028 = vmatprep.subr.bf16.mxu0 0
        %6029 = vmatpush1.bf16.msra.mxu0 0
        %6030 = vmatprep.subr.bf16.mxu0 0
        %6031 = vmatpush1.bf16.msra.mxu0 0
        %6032 = vmatprep.subr.bf16.mxu0 0
        %6033 = vmatpush1.bf16.msra.mxu0 0
        %6034 = vmatprep.subr.bf16.mxu0 0
        %6035 = vmatpush1.bf16.msra.mxu0 0
        %6036 = vmatprep.subr.bf16.mxu0 0
        %6037 = vmatpush1.bf16.msra.mxu0 0
        %6038 = vmatprep.subr.bf16.mxu0 0
        %6039 = vmatpush1.bf16.msra.mxu0 0
        %6040 = vmatprep.subr.bf16.mxu0 0
        %6041 = vmatpush1.bf16.msra.mxu0 0
        %6042 = vmatprep.subr.bf16.mxu0 0
        %6043 = vmatpush1.bf16.msra.mxu0 0
        %6044 = vmatprep.mubr.bf16.mxu0 0
        %6045 = vmatmul.mubr.bf16.gmra.mrb[0].mxu0 %v1221
        %v6046 = vpop.f32.mrb[0].mxu0
        %v6047 = vadd.f32 0.0, %v6046
        %v6048 = vpop.f32.mrb[0].mxu0
        %v6049 = vpop.f32.mrb[0].mxu0
        %v6050 = vpop.f32.mrb[0].mxu0
        %6051 = vdwg.mxu0
        %v6053 = vcombine.high %v6047, %v6047
        %v6055 = vunpack.c.l.s4 1966171168
        %v6056 = vunpack.c.0.s8 %v6055
        %v6057 = vlaneseq
        %v6058 = vshrl.u32 %v6057, 7
        %v6059 = vsub.s32 %v6056, %v6058
        %v6060 = vrot.slane %v6047, %v6059
        %v6062 = vunpack.c.l.s4 1966171168
        %v6063 = vunpack.c.0.s8 %v6062
        %v6064 = vlaneseq
        %v6065 = vshrl.u32 %v6064, 7
        %v6066 = vsub.s32 %v6063, %v6065
        %v6067 = vrot.slane %v6053, %v6066
        %v6068 = vcombine.high %v6060, %v6060
        %v6069 = vcombine.high %v6067, %v6067
        %v6071 = vunpack.c.l.s4 1966171168
        %v6072 = vunpack.c.0.s8 %v6071
        %v6073 = vlaneseq
        %v6074 = vshrl.u32 %v6073, 7
        %v6075 = vsub.s32 %v6072, %v6074
        %v6076 = vrot.slane %v6060, %v6075
        %v6078 = vunpack.c.l.s4 1966171168
        %v6079 = vunpack.c.0.s8 %v6078
        %v6080 = vlaneseq
        %v6081 = vshrl.u32 %v6080, 7
        %v6082 = vsub.s32 %v6079, %v6081
        %v6083 = vrot.slane %v6067, %v6082
        %v6085 = vunpack.c.l.s4 1966171168
        %v6086 = vunpack.c.0.s8 %v6085
        %v6087 = vlaneseq
        %v6088 = vshrl.u32 %v6087, 7
        %v6089 = vsub.s32 %v6086, %v6088
        %v6090 = vrot.slane %v6068, %v6089
        %v6092 = vunpack.c.l.s4 1966171168
        %v6093 = vunpack.c.0.s8 %v6092
        %v6094 = vlaneseq
        %v6095 = vshrl.u32 %v6094, 7
        %v6096 = vsub.s32 %v6093, %v6095
        %v6097 = vrot.slane %v6069, %v6096
        %v6098 = vcombine.high %v6076, %v6076
        %v6099 = vcombine.high %v6083, %v6083
        %v6100 = vcombine.high %v6090, %v6090
        %6108 = vst [vmem:[%s206 + $0x21] sm:$0x1] %v6076
        %6109 = vst [vmem:[%s206 + $0x61] sm:$0x1] %v6090
        %6110 = vst [vmem:[%s206 + $0xa1] sm:$0x1] %v6098
        %6111 = vst [vmem:[%s206 + $0xe1] sm:$0x1] %v6100
        %6112 = vst [vmem:[%s206 + $0x121] sm:$0x1] %v6083
        %6113 = vst [vmem:[%s206 + $0x161] sm:$0x1] %v6097
        %6114 = vst [vmem:[%s206 + $0x1a1] sm:$0x1] %v6099
        %v6115 = vld [vmem:[#allocation3 + $0x10] sm:$0x2]
        %v6116 = vld [vmem:[#allocation3 + $0x30] sm:$0x2]
        %v6117 = vld [vmem:[#allocation3 + $0x50] sm:$0x2]
        %v6118 = vld [vmem:[#allocation3 + $0x70] sm:$0x2]
        %v6119 = vld [vmem:[#allocation3 + $0x90] sm:$0x2]
        %v6120 = vld [vmem:[#allocation3 + $0xb0] sm:$0x2]
        %v6121 = vld [vmem:[#allocation3 + $0xd0] sm:$0x2]
        %v6122 = vld [vmem:[#allocation3 + $0xf0] sm:$0x2]
        %v6131 = vunpack.c.l.b16 %v6115
        %v6132 = vunpack.c.l.b16 %v6116
        %v6133 = vunpack.c.l.b16 %v6117
        %v6134 = vunpack.c.l.b16 %v6118
        %v6135 = vunpack.c.l.b16 %v6119
        %v6136 = vunpack.c.l.b16 %v6120
        %v6137 = vunpack.c.l.b16 %v6121
        %v6138 = vunpack.c.l.b16 %v6122
        %v6139 = vrot.slane %v6131, 2
        %v6140 = vrot.slane %v6132, 1
        %v6141 = vsel %vm1198, %v6140, %v6139
        %v6142 = vsel %vm1201, %v6133, %v6141
        %v6143 = vrot.slane %v6134, 7
        %v6144 = vsel %vm1204, %v6143, %v6142
        %v6145 = vrot.slane %v6135, 6
        %v6146 = vsel %vm1207, %v6145, %v6144
        %v6147 = vrot.slane %v6136, 5
        %v6148 = vsel %vm1210, %v6147, %v6146
        %v6149 = vrot.slane %v6137, 4
        %v6150 = vsel %vm1213, %v6149, %v6148
        %v6151 = vrot.slane %v6138, 3
        %v6152 = vsel %vm1216, %v6151, %v6150
        %v6153 = vpack.c.b16 %v6152, %v6152
        %v6155 = vsel %vm1223, %v6153, 0
        %6157 = vmatprep.subr.bf16.mxu0 0
        %6158 = vmatpush1.bf16.msra.mxu0 %v6155
        %6159 = vmatprep.subr.bf16.mxu0 0
        %6160 = vmatpush1.bf16.msra.mxu0 0
        %6161 = vmatprep.subr.bf16.mxu0 0
        %6162 = vmatpush1.bf16.msra.mxu0 0
        %6163 = vmatprep.subr.bf16.mxu0 0
        %6164 = vmatpush1.bf16.msra.mxu0 0
        %6165 = vmatprep.subr.bf16.mxu0 0
        %6166 = vmatpush1.bf16.msra.mxu0 0
        %6167 = vmatprep.subr.bf16.mxu0 0
        %6168 = vmatpush1.bf16.msra.mxu0 0
        %6169 = vmatprep.subr.bf16.mxu0 0
        %6170 = vmatpush1.bf16.msra.mxu0 0
        %6171 = vmatprep.subr.bf16.mxu0 0
        %6172 = vmatpush1.bf16.msra.mxu0 0
        %6173 = vmatprep.subr.bf16.mxu0 0
        %6174 = vmatpush1.bf16.msra.mxu0 0
        %6175 = vmatprep.subr.bf16.mxu0 0
        %6176 = vmatpush1.bf16.msra.mxu0 0
        %6177 = vmatprep.subr.bf16.mxu0 0
        %6178 = vmatpush1.bf16.msra.mxu0 0
        %6179 = vmatprep.subr.bf16.mxu0 0
        %6180 = vmatpush1.bf16.msra.mxu0 0
        %6181 = vmatprep.subr.bf16.mxu0 0
        %6182 = vmatpush1.bf16.msra.mxu0 0
        %6183 = vmatprep.subr.bf16.mxu0 0
        %6184 = vmatpush1.bf16.msra.mxu0 0
        %6185 = vmatprep.subr.bf16.mxu0 0
        %6186 = vmatpush1.bf16.msra.mxu0 0
        %6187 = vmatprep.subr.bf16.mxu0 0
        %6188 = vmatpush1.bf16.msra.mxu0 0
        %6189 = vmatprep.mubr.bf16.mxu0 0
        %6190 = vmatmul.mubr.bf16.gmra.mrb[0].mxu0 %v1221
        %v6191 = vpop.f32.mrb[0].mxu0
        %v6192 = vadd.f32 0.0, %v6191
        %v6193 = vpop.f32.mrb[0].mxu0
        %v6194 = vpop.f32.mrb[0].mxu0
        %v6195 = vpop.f32.mrb[0].mxu0
        %6196 = vdwg.mxu0
        %v6198 = vcombine.high %v6192, %v6192
        %v6200 = vunpack.c.l.s4 1966171168
        %v6201 = vunpack.c.0.s8 %v6200
        %v6202 = vlaneseq
        %v6203 = vshrl.u32 %v6202, 7
        %v6204 = vsub.s32 %v6201, %v6203
        %v6205 = vrot.slane %v6192, %v6204
        %v6207 = vunpack.c.l.s4 1966171168
        %v6208 = vunpack.c.0.s8 %v6207
        %v6209 = vlaneseq
        %v6210 = vshrl.u32 %v6209, 7
        %v6211 = vsub.s32 %v6208, %v6210
        %v6212 = vrot.slane %v6198, %v6211
        %v6213 = vcombine.high %v6205, %v6205
        %v6214 = vcombine.high %v6212, %v6212
        %v6216 = vunpack.c.l.s4 1966171168
        %v6217 = vunpack.c.0.s8 %v6216
        %v6218 = vlaneseq
        %v6219 = vshrl.u32 %v6218, 7
        %v6220 = vsub.s32 %v6217, %v6219
        %v6221 = vrot.slane %v6205, %v6220
        %v6223 = vunpack.c.l.s4 1966171168
        %v6224 = vunpack.c.0.s8 %v6223
        %v6225 = vlaneseq
        %v6226 = vshrl.u32 %v6225, 7
        %v6227 = vsub.s32 %v6224, %v6226
        %v6228 = vrot.slane %v6212, %v6227
        %v6230 = vunpack.c.l.s4 1966171168
        %v6231 = vunpack.c.0.s8 %v6230
        %v6232 = vlaneseq
        %v6233 = vshrl.u32 %v6232, 7
        %v6234 = vsub.s32 %v6231, %v6233
        %v6235 = vrot.slane %v6213, %v6234
        %v6237 = vunpack.c.l.s4 1966171168
        %v6238 = vunpack.c.0.s8 %v6237
        %v6239 = vlaneseq
        %v6240 = vshrl.u32 %v6239, 7
        %v6241 = vsub.s32 %v6238, %v6240
        %v6242 = vrot.slane %v6214, %v6241
        %v6243 = vcombine.high %v6221, %v6221
        %v6244 = vcombine.high %v6228, %v6228
        %v6245 = vcombine.high %v6235, %v6235
        %6253 = vst [vmem:[%s206 + $0x22] sm:$0x1] %v6221
        %6254 = vst [vmem:[%s206 + $0x62] sm:$0x1] %v6235
        %6255 = vst [vmem:[%s206 + $0xa2] sm:$0x1] %v6243
        %6256 = vst [vmem:[%s206 + $0xe2] sm:$0x1] %v6245
        %6257 = vst [vmem:[%s206 + $0x122] sm:$0x1] %v6228
        %6258 = vst [vmem:[%s206 + $0x162] sm:$0x1] %v6242
        %6259 = vst [vmem:[%s206 + $0x1a2] sm:$0x1] %v6244
        %v6260 = vld [vmem:[#allocation3 + $0x10] sm:$0x2]
        %v6261 = vld [vmem:[#allocation3 + $0x30] sm:$0x2]
        %v6262 = vld [vmem:[#allocation3 + $0x50] sm:$0x2]
        %v6263 = vld [vmem:[#allocation3 + $0x70] sm:$0x2]
        %v6264 = vld [vmem:[#allocation3 + $0x90] sm:$0x2]
        %v6265 = vld [vmem:[#allocation3 + $0xb0] sm:$0x2]
        %v6266 = vld [vmem:[#allocation3 + $0xd0] sm:$0x2]
        %v6267 = vld [vmem:[#allocation3 + $0xf0] sm:$0x2]
        %v6276 = vunpack.c.l.b16 %v6260
        %v6277 = vunpack.c.l.b16 %v6261
        %v6278 = vunpack.c.l.b16 %v6262
        %v6279 = vunpack.c.l.b16 %v6263
        %v6280 = vunpack.c.l.b16 %v6264
        %v6281 = vunpack.c.l.b16 %v6265
        %v6282 = vunpack.c.l.b16 %v6266
        %v6283 = vunpack.c.l.b16 %v6267
        %v6284 = vrot.slane %v6276, 3
        %v6285 = vrot.slane %v6277, 2
        %v6286 = vsel %vm1198, %v6285, %v6284
        %v6287 = vrot.slane %v6278, 1
        %v6288 = vsel %vm1201, %v6287, %v6286
        %v6289 = vsel %vm1204, %v6279, %v6288
        %v6290 = vrot.slane %v6280, 7
        %v6291 = vsel %vm1207, %v6290, %v6289
        %v6292 = vrot.slane %v6281, 6
        %v6293 = vsel %vm1210, %v6292, %v6291
        %v6294 = vrot.slane %v6282, 5
        %v6295 = vsel %vm1213, %v6294, %v6293
        %v6296 = vrot.slane %v6283, 4
        %v6297 = vsel %vm1216, %v6296, %v6295
        %v6298 = vpack.c.b16 %v6297, %v6297
        %v6300 = vsel %vm1223, %v6298, 0
        %6302 = vmatprep.subr.bf16.mxu0 0
        %6303 = vmatpush1.bf16.msra.mxu0 %v6300
        %6304 = vmatprep.subr.bf16.mxu0 0
        %6305 = vmatpush1.bf16.msra.mxu0 0
        %6306 = vmatprep.subr.bf16.mxu0 0
        %6307 = vmatpush1.bf16.msra.mxu0 0
        %6308 = vmatprep.subr.bf16.mxu0 0
        %6309 = vmatpush1.bf16.msra.mxu0 0
        %6310 = vmatprep.subr.bf16.mxu0 0
        %6311 = vmatpush1.bf16.msra.mxu0 0
        %6312 = vmatprep.subr.bf16.mxu0 0
        %6313 = vmatpush1.bf16.msra.mxu0 0
        %6314 = vmatprep.subr.bf16.mxu0 0
        %6315 = vmatpush1.bf16.msra.mxu0 0
        %6316 = vmatprep.subr.bf16.mxu0 0
        %6317 = vmatpush1.bf16.msra.mxu0 0
        %6318 = vmatprep.subr.bf16.mxu0 0
        %6319 = vmatpush1.bf16.msra.mxu0 0
        %6320 = vmatprep.subr.bf16.mxu0 0
        %6321 = vmatpush1.bf16.msra.mxu0 0
        %6322 = vmatprep.subr.bf16.mxu0 0
        %6323 = vmatpush1.bf16.msra.mxu0 0
        %6324 = vmatprep.subr.bf16.mxu0 0
        %6325 = vmatpush1.bf16.msra.mxu0 0
        %6326 = vmatprep.subr.bf16.mxu0 0
        %6327 = vmatpush1.bf16.msra.mxu0 0
        %6328 = vmatprep.subr.bf16.mxu0 0
        %6329 = vmatpush1.bf16.msra.mxu0 0
        %6330 = vmatprep.subr.bf16.mxu0 0
        %6331 = vmatpush1.bf16.msra.mxu0 0
        %6332 = vmatprep.subr.bf16.mxu0 0
        %6333 = vmatpush1.bf16.msra.mxu0 0
        %6334 = vmatprep.mubr.bf16.mxu0 0
        %6335 = vmatmul.mubr.bf16.gmra.mrb[0].mxu0 %v1221
        %v6336 = vpop.f32.mrb[0].mxu0
        %v6337 = vadd.f32 0.0, %v6336
        %v6338 = vpop.f32.mrb[0].mxu0
        %v6339 = vpop.f32.mrb[0].mxu0
        %v6340 = vpop.f32.mrb[0].mxu0
        %6341 = vdwg.mxu0
        %v6343 = vcombine.high %v6337, %v6337
        %v6345 = vunpack.c.l.s4 1966171168
        %v6346 = vunpack.c.0.s8 %v6345
        %v6347 = vlaneseq
        %v6348 = vshrl.u32 %v6347, 7
        %v6349 = vsub.s32 %v6346, %v6348
        %v6350 = vrot.slane %v6337, %v6349
        %v6352 = vunpack.c.l.s4 1966171168
        %v6353 = vunpack.c.0.s8 %v6352
        %v6354 = vlaneseq
        %v6355 = vshrl.u32 %v6354, 7
        %v6356 = vsub.s32 %v6353, %v6355
        %v6357 = vrot.slane %v6343, %v6356
        %v6358 = vcombine.high %v6350, %v6350
        %v6359 = vcombine.high %v6357, %v6357
        %v6361 = vunpack.c.l.s4 1966171168
        %v6362 = vunpack.c.0.s8 %v6361
        %v6363 = vlaneseq
        %v6364 = vshrl.u32 %v6363, 7
        %v6365 = vsub.s32 %v6362, %v6364
        %v6366 = vrot.slane %v6350, %v6365
        %v6368 = vunpack.c.l.s4 1966171168
        %v6369 = vunpack.c.0.s8 %v6368
        %v6370 = vlaneseq
        %v6371 = vshrl.u32 %v6370, 7
        %v6372 = vsub.s32 %v6369, %v6371
        %v6373 = vrot.slane %v6357, %v6372
        %v6375 = vunpack.c.l.s4 1966171168
        %v6376 = vunpack.c.0.s8 %v6375
        %v6377 = vlaneseq
        %v6378 = vshrl.u32 %v6377, 7
        %v6379 = vsub.s32 %v6376, %v6378
        %v6380 = vrot.slane %v6358, %v6379
        %v6382 = vunpack.c.l.s4 1966171168
        %v6383 = vunpack.c.0.s8 %v6382
        %v6384 = vlaneseq
        %v6385 = vshrl.u32 %v6384, 7
        %v6386 = vsub.s32 %v6383, %v6385
        %v6387 = vrot.slane %v6359, %v6386
        %v6388 = vcombine.high %v6366, %v6366
        %v6389 = vcombine.high %v6373, %v6373
        %v6390 = vcombine.high %v6380, %v6380
        %6398 = vst [vmem:[%s206 + $0x23] sm:$0x1] %v6366
        %6399 = vst [vmem:[%s206 + $0x63] sm:$0x1] %v6380
        %6400 = vst [vmem:[%s206 + $0xa3] sm:$0x1] %v6388
        %6401 = vst [vmem:[%s206 + $0xe3] sm:$0x1] %v6390
        %6402 = vst [vmem:[%s206 + $0x123] sm:$0x1] %v6373
        %6403 = vst [vmem:[%s206 + $0x163] sm:$0x1] %v6387
        %6404 = vst [vmem:[%s206 + $0x1a3] sm:$0x1] %v6389
        %v6405 = vld [vmem:[#allocation3 + $0x10] sm:$0x4]
        %v6406 = vld [vmem:[#allocation3 + $0x30] sm:$0x4]
        %v6407 = vld [vmem:[#allocation3 + $0x50] sm:$0x4]
        %v6408 = vld [vmem:[#allocation3 + $0x70] sm:$0x4]
        %v6409 = vld [vmem:[#allocation3 + $0x90] sm:$0x4]
        %v6410 = vld [vmem:[#allocation3 + $0xb0] sm:$0x4]
        %v6411 = vld [vmem:[#allocation3 + $0xd0] sm:$0x4]
        %v6412 = vld [vmem:[#allocation3 + $0xf0] sm:$0x4]
        %v6421 = vunpack.c.l.b16 %v6405
        %v6422 = vunpack.c.l.b16 %v6406
        %v6423 = vunpack.c.l.b16 %v6407
        %v6424 = vunpack.c.l.b16 %v6408
        %v6425 = vunpack.c.l.b16 %v6409
        %v6426 = vunpack.c.l.b16 %v6410
        %v6427 = vunpack.c.l.b16 %v6411
        %v6428 = vunpack.c.l.b16 %v6412
        %v6429 = vrot.slane %v6421, 4
        %v6430 = vrot.slane %v6422, 3
        %v6431 = vsel %vm1198, %v6430, %v6429
        %v6432 = vrot.slane %v6423, 2
        %v6433 = vsel %vm1201, %v6432, %v6431
        %v6434 = vrot.slane %v6424, 1
        %v6435 = vsel %vm1204, %v6434, %v6433
        %v6436 = vsel %vm1207, %v6425, %v6435
        %v6437 = vrot.slane %v6426, 7
        %v6438 = vsel %vm1210, %v6437, %v6436
        %v6439 = vrot.slane %v6427, 6
        %v6440 = vsel %vm1213, %v6439, %v6438
        %v6441 = vrot.slane %v6428, 5
        %v6442 = vsel %vm1216, %v6441, %v6440
        %v6443 = vpack.c.b16 %v6442, %v6442
        %v6445 = vsel %vm1223, %v6443, 0
        %6447 = vmatprep.subr.bf16.mxu0 0
        %6448 = vmatpush1.bf16.msra.mxu0 %v6445
        %6449 = vmatprep.subr.bf16.mxu0 0
        %6450 = vmatpush1.bf16.msra.mxu0 0
        %6451 = vmatprep.subr.bf16.mxu0 0
        %6452 = vmatpush1.bf16.msra.mxu0 0
        %6453 = vmatprep.subr.bf16.mxu0 0
        %6454 = vmatpush1.bf16.msra.mxu0 0
        %6455 = vmatprep.subr.bf16.mxu0 0
        %6456 = vmatpush1.bf16.msra.mxu0 0
        %6457 = vmatprep.subr.bf16.mxu0 0
        %6458 = vmatpush1.bf16.msra.mxu0 0
        %6459 = vmatprep.subr.bf16.mxu0 0
        %6460 = vmatpush1.bf16.msra.mxu0 0
        %6461 = vmatprep.subr.bf16.mxu0 0
        %6462 = vmatpush1.bf16.msra.mxu0 0
        %6463 = vmatprep.subr.bf16.mxu0 0
        %6464 = vmatpush1.bf16.msra.mxu0 0
        %6465 = vmatprep.subr.bf16.mxu0 0
        %6466 = vmatpush1.bf16.msra.mxu0 0
        %6467 = vmatprep.subr.bf16.mxu0 0
        %6468 = vmatpush1.bf16.msra.mxu0 0
        %6469 = vmatprep.subr.bf16.mxu0 0
        %6470 = vmatpush1.bf16.msra.mxu0 0
        %6471 = vmatprep.subr.bf16.mxu0 0
        %6472 = vmatpush1.bf16.msra.mxu0 0
        %6473 = vmatprep.subr.bf16.mxu0 0
        %6474 = vmatpush1.bf16.msra.mxu0 0
        %6475 = vmatprep.subr.bf16.mxu0 0
        %6476 = vmatpush1.bf16.msra.mxu0 0
        %6477 = vmatprep.subr.bf16.mxu0 0
        %6478 = vmatpush1.bf16.msra.mxu0 0
        %6479 = vmatprep.mubr.bf16.mxu0 0
        %6480 = vmatmul.mubr.bf16.gmra.mrb[0].mxu0 %v1221
        %v6481 = vpop.f32.mrb[0].mxu0
        %v6482 = vadd.f32 0.0, %v6481
        %v6483 = vpop.f32.mrb[0].mxu0
        %v6484 = vpop.f32.mrb[0].mxu0
        %v6485 = vpop.f32.mrb[0].mxu0
        %6486 = vdwg.mxu0
        %v6488 = vcombine.high %v6482, %v6482
        %v6490 = vunpack.c.l.s4 1966171168
        %v6491 = vunpack.c.0.s8 %v6490
        %v6492 = vlaneseq
        %v6493 = vshrl.u32 %v6492, 7
        %v6494 = vsub.s32 %v6491, %v6493
        %v6495 = vrot.slane %v6482, %v6494
        %v6497 = vunpack.c.l.s4 1966171168
        %v6498 = vunpack.c.0.s8 %v6497
        %v6499 = vlaneseq
        %v6500 = vshrl.u32 %v6499, 7
        %v6501 = vsub.s32 %v6498, %v6500
        %v6502 = vrot.slane %v6488, %v6501
        %v6503 = vcombine.high %v6495, %v6495
        %v6504 = vcombine.high %v6502, %v6502
        %v6506 = vunpack.c.l.s4 1966171168
        %v6507 = vunpack.c.0.s8 %v6506
        %v6508 = vlaneseq
        %v6509 = vshrl.u32 %v6508, 7
        %v6510 = vsub.s32 %v6507, %v6509
        %v6511 = vrot.slane %v6495, %v6510
        %v6513 = vunpack.c.l.s4 1966171168
        %v6514 = vunpack.c.0.s8 %v6513
        %v6515 = vlaneseq
        %v6516 = vshrl.u32 %v6515, 7
        %v6517 = vsub.s32 %v6514, %v6516
        %v6518 = vrot.slane %v6502, %v6517
        %v6520 = vunpack.c.l.s4 1966171168
        %v6521 = vunpack.c.0.s8 %v6520
        %v6522 = vlaneseq
        %v6523 = vshrl.u32 %v6522, 7
        %v6524 = vsub.s32 %v6521, %v6523
        %v6525 = vrot.slane %v6503, %v6524
        %v6527 = vunpack.c.l.s4 1966171168
        %v6528 = vunpack.c.0.s8 %v6527
        %v6529 = vlaneseq
        %v6530 = vshrl.u32 %v6529, 7
        %v6531 = vsub.s32 %v6528, %v6530
        %v6532 = vrot.slane %v6504, %v6531
        %v6533 = vcombine.high %v6511, %v6511
        %v6534 = vcombine.high %v6518, %v6518
        %v6535 = vcombine.high %v6525, %v6525
        %6543 = vst [vmem:[%s206 + $0x24] sm:$0x1] %v6511
        %6544 = vst [vmem:[%s206 + $0x64] sm:$0x1] %v6525
        %6545 = vst [vmem:[%s206 + $0xa4] sm:$0x1] %v6533
        %6546 = vst [vmem:[%s206 + $0xe4] sm:$0x1] %v6535
        %6547 = vst [vmem:[%s206 + $0x124] sm:$0x1] %v6518
        %6548 = vst [vmem:[%s206 + $0x164] sm:$0x1] %v6532
        %6549 = vst [vmem:[%s206 + $0x1a4] sm:$0x1] %v6534
        %v6550 = vld [vmem:[#allocation3 + $0x10] sm:$0x4]
        %v6551 = vld [vmem:[#allocation3 + $0x30] sm:$0x4]
        %v6552 = vld [vmem:[#allocation3 + $0x50] sm:$0x4]
        %v6553 = vld [vmem:[#allocation3 + $0x70] sm:$0x4]
        %v6554 = vld [vmem:[#allocation3 + $0x90] sm:$0x4]
        %v6555 = vld [vmem:[#allocation3 + $0xb0] sm:$0x4]
        %v6556 = vld [vmem:[#allocation3 + $0xd0] sm:$0x4]
        %v6557 = vld [vmem:[#allocation3 + $0xf0] sm:$0x4]
        %v6566 = vunpack.c.l.b16 %v6550
        %v6567 = vunpack.c.l.b16 %v6551
        %v6568 = vunpack.c.l.b16 %v6552
        %v6569 = vunpack.c.l.b16 %v6553
        %v6570 = vunpack.c.l.b16 %v6554
        %v6571 = vunpack.c.l.b16 %v6555
        %v6572 = vunpack.c.l.b16 %v6556
        %v6573 = vunpack.c.l.b16 %v6557
        %v6574 = vrot.slane %v6566, 5
        %v6575 = vrot.slane %v6567, 4
        %v6576 = vsel %vm1198, %v6575, %v6574
        %v6577 = vrot.slane %v6568, 3
        %v6578 = vsel %vm1201, %v6577, %v6576
        %v6579 = vrot.slane %v6569, 2
        %v6580 = vsel %vm1204, %v6579, %v6578
        %v6581 = vrot.slane %v6570, 1
        %v6582 = vsel %vm1207, %v6581, %v6580
        %v6583 = vsel %vm1210, %v6571, %v6582
        %v6584 = vrot.slane %v6572, 7
        %v6585 = vsel %vm1213, %v6584, %v6583
        %v6586 = vrot.slane %v6573, 6
        %v6587 = vsel %vm1216, %v6586, %v6585
        %v6588 = vpack.c.b16 %v6587, %v6587
        %v6590 = vsel %vm1223, %v6588, 0
        %6592 = vmatprep.subr.bf16.mxu0 0
        %6593 = vmatpush1.bf16.msra.mxu0 %v6590
        %6594 = vmatprep.subr.bf16.mxu0 0
        %6595 = vmatpush1.bf16.msra.mxu0 0
        %6596 = vmatprep.subr.bf16.mxu0 0
        %6597 = vmatpush1.bf16.msra.mxu0 0
        %6598 = vmatprep.subr.bf16.mxu0 0
        %6599 = vmatpush1.bf16.msra.mxu0 0
        %6600 = vmatprep.subr.bf16.mxu0 0
        %6601 = vmatpush1.bf16.msra.mxu0 0
        %6602 = vmatprep.subr.bf16.mxu0 0
        %6603 = vmatpush1.bf16.msra.mxu0 0
        %6604 = vmatprep.subr.bf16.mxu0 0
        %6605 = vmatpush1.bf16.msra.mxu0 0
        %6606 = vmatprep.subr.bf16.mxu0 0
        %6607 = vmatpush1.bf16.msra.mxu0 0
        %6608 = vmatprep.subr.bf16.mxu0 0
        %6609 = vmatpush1.bf16.msra.mxu0 0
        %6610 = vmatprep.subr.bf16.mxu0 0
        %6611 = vmatpush1.bf16.msra.mxu0 0
        %6612 = vmatprep.subr.bf16.mxu0 0
        %6613 = vmatpush1.bf16.msra.mxu0 0
        %6614 = vmatprep.subr.bf16.mxu0 0
        %6615 = vmatpush1.bf16.msra.mxu0 0
        %6616 = vmatprep.subr.bf16.mxu0 0
        %6617 = vmatpush1.bf16.msra.mxu0 0
        %6618 = vmatprep.subr.bf16.mxu0 0
        %6619 = vmatpush1.bf16.msra.mxu0 0
        %6620 = vmatprep.subr.bf16.mxu0 0
        %6621 = vmatpush1.bf16.msra.mxu0 0
        %6622 = vmatprep.subr.bf16.mxu0 0
        %6623 = vmatpush1.bf16.msra.mxu0 0
        %6624 = vmatprep.mubr.bf16.mxu0 0
        %6625 = vmatmul.mubr.bf16.gmra.mrb[0].mxu0 %v1221
        %v6626 = vpop.f32.mrb[0].mxu0
        %v6627 = vadd.f32 0.0, %v6626
        %v6628 = vpop.f32.mrb[0].mxu0
        %v6629 = vpop.f32.mrb[0].mxu0
        %v6630 = vpop.f32.mrb[0].mxu0
        %6631 = vdwg.mxu0
        %v6633 = vcombine.high %v6627, %v6627
        %v6635 = vunpack.c.l.s4 1966171168
        %v6636 = vunpack.c.0.s8 %v6635
        %v6637 = vlaneseq
        %v6638 = vshrl.u32 %v6637, 7
        %v6639 = vsub.s32 %v6636, %v6638
        %v6640 = vrot.slane %v6627, %v6639
        %v6642 = vunpack.c.l.s4 1966171168
        %v6643 = vunpack.c.0.s8 %v6642
        %v6644 = vlaneseq
        %v6645 = vshrl.u32 %v6644, 7
        %v6646 = vsub.s32 %v6643, %v6645
        %v6647 = vrot.slane %v6633, %v6646
        %v6648 = vcombine.high %v6640, %v6640
        %v6649 = vcombine.high %v6647, %v6647
        %v6651 = vunpack.c.l.s4 1966171168
        %v6652 = vunpack.c.0.s8 %v6651
        %v6653 = vlaneseq
        %v6654 = vshrl.u32 %v6653, 7
        %v6655 = vsub.s32 %v6652, %v6654
        %v6656 = vrot.slane %v6640, %v6655
        %v6658 = vunpack.c.l.s4 1966171168
        %v6659 = vunpack.c.0.s8 %v6658
        %v6660 = vlaneseq
        %v6661 = vshrl.u32 %v6660, 7
        %v6662 = vsub.s32 %v6659, %v6661
        %v6663 = vrot.slane %v6647, %v6662
        %v6665 = vunpack.c.l.s4 1966171168
        %v6666 = vunpack.c.0.s8 %v6665
        %v6667 = vlaneseq
        %v6668 = vshrl.u32 %v6667, 7
        %v6669 = vsub.s32 %v6666, %v6668
        %v6670 = vrot.slane %v6648, %v6669
        %v6672 = vunpack.c.l.s4 1966171168
        %v6673 = vunpack.c.0.s8 %v6672
        %v6674 = vlaneseq
        %v6675 = vshrl.u32 %v6674, 7
        %v6676 = vsub.s32 %v6673, %v6675
        %v6677 = vrot.slane %v6649, %v6676
        %v6678 = vcombine.high %v6656, %v6656
        %v6679 = vcombine.high %v6663, %v6663
        %v6680 = vcombine.high %v6670, %v6670
        %6688 = vst [vmem:[%s206 + $0x25] sm:$0x1] %v6656
        %6689 = vst [vmem:[%s206 + $0x65] sm:$0x1] %v6670
        %6690 = vst [vmem:[%s206 + $0xa5] sm:$0x1] %v6678
        %6691 = vst [vmem:[%s206 + $0xe5] sm:$0x1] %v6680
        %6692 = vst [vmem:[%s206 + $0x125] sm:$0x1] %v6663
        %6693 = vst [vmem:[%s206 + $0x165] sm:$0x1] %v6677
        %6694 = vst [vmem:[%s206 + $0x1a5] sm:$0x1] %v6679
        %v6695 = vld [vmem:[#allocation3 + $0x10] sm:$0x8]
        %v6696 = vld [vmem:[#allocation3 + $0x30] sm:$0x8]
        %v6697 = vld [vmem:[#allocation3 + $0x50] sm:$0x8]
        %v6698 = vld [vmem:[#allocation3 + $0x70] sm:$0x8]
        %v6699 = vld [vmem:[#allocation3 + $0x90] sm:$0x8]
        %v6700 = vld [vmem:[#allocation3 + $0xb0] sm:$0x8]
        %v6701 = vld [vmem:[#allocation3 + $0xd0] sm:$0x8]
        %v6702 = vld [vmem:[#allocation3 + $0xf0] sm:$0x8]
        %v6711 = vunpack.c.l.b16 %v6695
        %v6712 = vunpack.c.l.b16 %v6696
        %v6713 = vunpack.c.l.b16 %v6697
        %v6714 = vunpack.c.l.b16 %v6698
        %v6715 = vunpack.c.l.b16 %v6699
        %v6716 = vunpack.c.l.b16 %v6700
        %v6717 = vunpack.c.l.b16 %v6701
        %v6718 = vunpack.c.l.b16 %v6702
        %v6719 = vrot.slane %v6711, 6
        %v6720 = vrot.slane %v6712, 5
        %v6721 = vsel %vm1198, %v6720, %v6719
        %v6722 = vrot.slane %v6713, 4
        %v6723 = vsel %vm1201, %v6722, %v6721
        %v6724 = vrot.slane %v6714, 3
        %v6725 = vsel %vm1204, %v6724, %v6723
        %v6726 = vrot.slane %v6715, 2
        %v6727 = vsel %vm1207, %v6726, %v6725
        %v6728 = vrot.slane %v6716, 1
        %v6729 = vsel %vm1210, %v6728, %v6727
        %v6730 = vsel %vm1213, %v6717, %v6729
        %v6731 = vrot.slane %v6718, 7
        %v6732 = vsel %vm1216, %v6731, %v6730
        %v6733 = vpack.c.b16 %v6732, %v6732
        %v6735 = vsel %vm1223, %v6733, 0
        %6737 = vmatprep.subr.bf16.mxu0 0
        %6738 = vmatpush1.bf16.msra.mxu0 %v6735
        %6739 = vmatprep.subr.bf16.mxu0 0
        %6740 = vmatpush1.bf16.msra.mxu0 0
        %6741 = vmatprep.subr.bf16.mxu0 0
        %6742 = vmatpush1.bf16.msra.mxu0 0
        %6743 = vmatprep.subr.bf16.mxu0 0
        %6744 = vmatpush1.bf16.msra.mxu0 0
        %6745 = vmatprep.subr.bf16.mxu0 0
        %6746 = vmatpush1.bf16.msra.mxu0 0
        %6747 = vmatprep.subr.bf16.mxu0 0
        %6748 = vmatpush1.bf16.msra.mxu0 0
        %6749 = vmatprep.subr.bf16.mxu0 0
        %6750 = vmatpush1.bf16.msra.mxu0 0
        %6751 = vmatprep.subr.bf16.mxu0 0
        %6752 = vmatpush1.bf16.msra.mxu0 0
        %6753 = vmatprep.subr.bf16.mxu0 0
        %6754 = vmatpush1.bf16.msra.mxu0 0
        %6755 = vmatprep.subr.bf16.mxu0 0
        %6756 = vmatpush1.bf16.msra.mxu0 0
        %6757 = vmatprep.subr.bf16.mxu0 0
        %6758 = vmatpush1.bf16.msra.mxu0 0
        %6759 = vmatprep.subr.bf16.mxu0 0
        %6760 = vmatpush1.bf16.msra.mxu0 0
        %6761 = vmatprep.subr.bf16.mxu0 0
        %6762 = vmatpush1.bf16.msra.mxu0 0
        %6763 = vmatprep.subr.bf16.mxu0 0
        %6764 = vmatpush1.bf16.msra.mxu0 0
        %6765 = vmatprep.subr.bf16.mxu0 0
        %6766 = vmatpush1.bf16.msra.mxu0 0
        %6767 = vmatprep.subr.bf16.mxu0 0
        %6768 = vmatpush1.bf16.msra.mxu0 0
        %6769 = vmatprep.mubr.bf16.mxu0 0
        %6770 = vmatmul.mubr.bf16.gmra.mrb[0].mxu0 %v1221
        %v6771 = vpop.f32.mrb[0].mxu0
        %v6772 = vadd.f32 0.0, %v6771
        %v6773 = vpop.f32.mrb[0].mxu0
        %v6774 = vpop.f32.mrb[0].mxu0
        %v6775 = vpop.f32.mrb[0].mxu0
        %6776 = vdwg.mxu0
        %v6778 = vcombine.high %v6772, %v6772
        %v6780 = vunpack.c.l.s4 1966171168
        %v6781 = vunpack.c.0.s8 %v6780
        %v6782 = vlaneseq
        %v6783 = vshrl.u32 %v6782, 7
        %v6784 = vsub.s32 %v6781, %v6783
        %v6785 = vrot.slane %v6772, %v6784
        %v6787 = vunpack.c.l.s4 1966171168
        %v6788 = vunpack.c.0.s8 %v6787
        %v6789 = vlaneseq
        %v6790 = vshrl.u32 %v6789, 7
        %v6791 = vsub.s32 %v6788, %v6790
        %v6792 = vrot.slane %v6778, %v6791
        %v6793 = vcombine.high %v6785, %v6785
        %v6794 = vcombine.high %v6792, %v6792
        %v6796 = vunpack.c.l.s4 1966171168
        %v6797 = vunpack.c.0.s8 %v6796
        %v6798 = vlaneseq
        %v6799 = vshrl.u32 %v6798, 7
        %v6800 = vsub.s32 %v6797, %v6799
        %v6801 = vrot.slane %v6785, %v6800
        %v6803 = vunpack.c.l.s4 1966171168
        %v6804 = vunpack.c.0.s8 %v6803
        %v6805 = vlaneseq
        %v6806 = vshrl.u32 %v6805, 7
        %v6807 = vsub.s32 %v6804, %v6806
        %v6808 = vrot.slane %v6792, %v6807
        %v6810 = vunpack.c.l.s4 1966171168
        %v6811 = vunpack.c.0.s8 %v6810
        %v6812 = vlaneseq
        %v6813 = vshrl.u32 %v6812, 7
        %v6814 = vsub.s32 %v6811, %v6813
        %v6815 = vrot.slane %v6793, %v6814
        %v6817 = vunpack.c.l.s4 1966171168
        %v6818 = vunpack.c.0.s8 %v6817
        %v6819 = vlaneseq
        %v6820 = vshrl.u32 %v6819, 7
        %v6821 = vsub.s32 %v6818, %v6820
        %v6822 = vrot.slane %v6794, %v6821
        %v6823 = vcombine.high %v6801, %v6801
        %v6824 = vcombine.high %v6808, %v6808
        %v6825 = vcombine.high %v6815, %v6815
        %6833 = vst [vmem:[%s206 + $0x26] sm:$0x1] %v6801
        %6834 = vst [vmem:[%s206 + $0x66] sm:$0x1] %v6815
        %6835 = vst [vmem:[%s206 + $0xa6] sm:$0x1] %v6823
        %6836 = vst [vmem:[%s206 + $0xe6] sm:$0x1] %v6825
        %6837 = vst [vmem:[%s206 + $0x126] sm:$0x1] %v6808
        %6838 = vst [vmem:[%s206 + $0x166] sm:$0x1] %v6822
        %6839 = vst [vmem:[%s206 + $0x1a6] sm:$0x1] %v6824
        %v6840 = vld [vmem:[#allocation3 + $0x10] sm:$0x8]
        %v6841 = vld [vmem:[#allocation3 + $0x30] sm:$0x8]
        %v6842 = vld [vmem:[#allocation3 + $0x50] sm:$0x8]
        %v6843 = vld [vmem:[#allocation3 + $0x70] sm:$0x8]
        %v6844 = vld [vmem:[#allocation3 + $0x90] sm:$0x8]
        %v6845 = vld [vmem:[#allocation3 + $0xb0] sm:$0x8]
        %v6846 = vld [vmem:[#allocation3 + $0xd0] sm:$0x8]
        %v6847 = vld [vmem:[#allocation3 + $0xf0] sm:$0x8]
        %v6856 = vunpack.c.l.b16 %v6840
        %v6857 = vunpack.c.l.b16 %v6841
        %v6858 = vunpack.c.l.b16 %v6842
        %v6859 = vunpack.c.l.b16 %v6843
        %v6860 = vunpack.c.l.b16 %v6844
        %v6861 = vunpack.c.l.b16 %v6845
        %v6862 = vunpack.c.l.b16 %v6846
        %v6863 = vunpack.c.l.b16 %v6847
        %v6864 = vrot.slane %v6856, 7
        %v6865 = vrot.slane %v6857, 6
        %v6866 = vsel %vm1198, %v6865, %v6864
        %v6867 = vrot.slane %v6858, 5
        %v6868 = vsel %vm1201, %v6867, %v6866
        %v6869 = vrot.slane %v6859, 4
        %v6870 = vsel %vm1204, %v6869, %v6868
        %v6871 = vrot.slane %v6860, 3
        %v6872 = vsel %vm1207, %v6871, %v6870
        %v6873 = vrot.slane %v6861, 2
        %v6874 = vsel %vm1210, %v6873, %v6872
        %v6875 = vrot.slane %v6862, 1
        %v6876 = vsel %vm1213, %v6875, %v6874
        %v6877 = vsel %vm1216, %v6863, %v6876
        %v6878 = vpack.c.b16 %v6877, %v6877
        %v6880 = vsel %vm1223, %v6878, 0
        %6882 = vmatprep.subr.bf16.mxu0 0
        %6883 = vmatpush1.bf16.msra.mxu0 %v6880
        %6884 = vmatprep.subr.bf16.mxu0 0
        %6885 = vmatpush1.bf16.msra.mxu0 0
        %6886 = vmatprep.subr.bf16.mxu0 0
        %6887 = vmatpush1.bf16.msra.mxu0 0
        %6888 = vmatprep.subr.bf16.mxu0 0
        %6889 = vmatpush1.bf16.msra.mxu0 0
        %6890 = vmatprep.subr.bf16.mxu0 0
        %6891 = vmatpush1.bf16.msra.mxu0 0
        %6892 = vmatprep.subr.bf16.mxu0 0
        %6893 = vmatpush1.bf16.msra.mxu0 0
        %6894 = vmatprep.subr.bf16.mxu0 0
        %6895 = vmatpush1.bf16.msra.mxu0 0
        %6896 = vmatprep.subr.bf16.mxu0 0
        %6897 = vmatpush1.bf16.msra.mxu0 0
        %6898 = vmatprep.subr.bf16.mxu0 0
        %6899 = vmatpush1.bf16.msra.mxu0 0
        %6900 = vmatprep.subr.bf16.mxu0 0
        %6901 = vmatpush1.bf16.msra.mxu0 0
        %6902 = vmatprep.subr.bf16.mxu0 0
        %6903 = vmatpush1.bf16.msra.mxu0 0
        %6904 = vmatprep.subr.bf16.mxu0 0
        %6905 = vmatpush1.bf16.msra.mxu0 0
        %6906 = vmatprep.subr.bf16.mxu0 0
        %6907 = vmatpush1.bf16.msra.mxu0 0
        %6908 = vmatprep.subr.bf16.mxu0 0
        %6909 = vmatpush1.bf16.msra.mxu0 0
        %6910 = vmatprep.subr.bf16.mxu0 0
        %6911 = vmatpush1.bf16.msra.mxu0 0
        %6912 = vmatprep.subr.bf16.mxu0 0
        %6913 = vmatpush1.bf16.msra.mxu0 0
        %6914 = vmatprep.mubr.bf16.mxu0 0
        %6915 = vmatmul.mubr.bf16.gmra.mrb[0].mxu0 %v1221
        %v6916 = vpop.f32.mrb[0].mxu0
        %v6917 = vadd.f32 0.0, %v6916
        %v6918 = vpop.f32.mrb[0].mxu0
        %v6919 = vpop.f32.mrb[0].mxu0
        %v6920 = vpop.f32.mrb[0].mxu0
        %6921 = vdwg.mxu0
        %v6923 = vcombine.high %v6917, %v6917
        %v6925 = vunpack.c.l.s4 1966171168
        %v6926 = vunpack.c.0.s8 %v6925
        %v6927 = vlaneseq
        %v6928 = vshrl.u32 %v6927, 7
        %v6929 = vsub.s32 %v6926, %v6928
        %v6930 = vrot.slane %v6917, %v6929
        %v6932 = vunpack.c.l.s4 1966171168
        %v6933 = vunpack.c.0.s8 %v6932
        %v6934 = vlaneseq
        %v6935 = vshrl.u32 %v6934, 7
        %v6936 = vsub.s32 %v6933, %v6935
        %v6937 = vrot.slane %v6923, %v6936
        %v6938 = vcombine.high %v6930, %v6930
        %v6939 = vcombine.high %v6937, %v6937
        %v6941 = vunpack.c.l.s4 1966171168
        %v6942 = vunpack.c.0.s8 %v6941
        %v6943 = vlaneseq
        %v6944 = vshrl.u32 %v6943, 7
        %v6945 = vsub.s32 %v6942, %v6944
        %v6946 = vrot.slane %v6930, %v6945
        %v6948 = vunpack.c.l.s4 1966171168
        %v6949 = vunpack.c.0.s8 %v6948
        %v6950 = vlaneseq
        %v6951 = vshrl.u32 %v6950, 7
        %v6952 = vsub.s32 %v6949, %v6951
        %v6953 = vrot.slane %v6937, %v6952
        %v6955 = vunpack.c.l.s4 1966171168
        %v6956 = vunpack.c.0.s8 %v6955
        %v6957 = vlaneseq
        %v6958 = vshrl.u32 %v6957, 7
        %v6959 = vsub.s32 %v6956, %v6958
        %v6960 = vrot.slane %v6938, %v6959
        %v6962 = vunpack.c.l.s4 1966171168
        %v6963 = vunpack.c.0.s8 %v6962
        %v6964 = vlaneseq
        %v6965 = vshrl.u32 %v6964, 7
        %v6966 = vsub.s32 %v6963, %v6965
        %v6967 = vrot.slane %v6939, %v6966
        %v6968 = vcombine.high %v6946, %v6946
        %v6969 = vcombine.high %v6953, %v6953
        %v6970 = vcombine.high %v6960, %v6960
        %6978 = vst [vmem:[%s206 + $0x27] sm:$0x1] %v6946
        %6979 = vst [vmem:[%s206 + $0x67] sm:$0x1] %v6960
        %6980 = vst [vmem:[%s206 + $0xa7] sm:$0x1] %v6968
        %6981 = vst [vmem:[%s206 + $0xe7] sm:$0x1] %v6970
        %6982 = vst [vmem:[%s206 + $0x127] sm:$0x1] %v6953
        %6983 = vst [vmem:[%s206 + $0x167] sm:$0x1] %v6967
        %6984 = vst [vmem:[%s206 + $0x1a7] sm:$0x1] %v6969
        %v6985 = vld [vmem:[#allocation3 + $0x10] sm:$0x10]
        %v6986 = vld [vmem:[#allocation3 + $0x30] sm:$0x10]
        %v6987 = vld [vmem:[#allocation3 + $0x50] sm:$0x10]
        %v6988 = vld [vmem:[#allocation3 + $0x70] sm:$0x10]
        %v6989 = vld [vmem:[#allocation3 + $0x90] sm:$0x10]
        %v6990 = vld [vmem:[#allocation3 + $0xb0] sm:$0x10]
        %v6991 = vld [vmem:[#allocation3 + $0xd0] sm:$0x10]
        %v6992 = vld [vmem:[#allocation3 + $0xf0] sm:$0x10]
        %v7001 = vunpack.c.h.b16 %v6985
        %v7002 = vunpack.c.h.b16 %v6986
        %v7003 = vunpack.c.h.b16 %v6987
        %v7004 = vunpack.c.h.b16 %v6988
        %v7005 = vunpack.c.h.b16 %v6989
        %v7006 = vunpack.c.h.b16 %v6990
        %v7007 = vunpack.c.h.b16 %v6991
        %v7008 = vunpack.c.h.b16 %v6992
        %v7009 = vrot.slane %v7002, 7
        %v7010 = vsel %vm1198, %v7009, %v7001
        %v7011 = vrot.slane %v7003, 6
        %v7012 = vsel %vm1201, %v7011, %v7010
        %v7013 = vrot.slane %v7004, 5
        %v7014 = vsel %vm1204, %v7013, %v7012
        %v7015 = vrot.slane %v7005, 4
        %v7016 = vsel %vm1207, %v7015, %v7014
        %v7017 = vrot.slane %v7006, 3
        %v7018 = vsel %vm1210, %v7017, %v7016
        %v7019 = vrot.slane %v7007, 2
        %v7020 = vsel %vm1213, %v7019, %v7018
        %v7021 = vrot.slane %v7008, 1
        %v7022 = vsel %vm1216, %v7021, %v7020
        %v7023 = vpack.c.b16 %v7022, %v7022
        %v7025 = vsel %vm1223, %v7023, 0
        %7027 = vmatprep.subr.bf16.mxu0 0
        %7028 = vmatpush1.bf16.msra.mxu0 %v7025
        %7029 = vmatprep.subr.bf16.mxu0 0
        %7030 = vmatpush1.bf16.msra.mxu0 0
        %7031 = vmatprep.subr.bf16.mxu0 0
        %7032 = vmatpush1.bf16.msra.mxu0 0
        %7033 = vmatprep.subr.bf16.mxu0 0
        %7034 = vmatpush1.bf16.msra.mxu0 0
        %7035 = vmatprep.subr.bf16.mxu0 0
        %7036 = vmatpush1.bf16.msra.mxu0 0
        %7037 = vmatprep.subr.bf16.mxu0 0
        %7038 = vmatpush1.bf16.msra.mxu0 0
        %7039 = vmatprep.subr.bf16.mxu0 0
        %7040 = vmatpush1.bf16.msra.mxu0 0
        %7041 = vmatprep.subr.bf16.mxu0 0
        %7042 = vmatpush1.bf16.msra.mxu0 0
        %7043 = vmatprep.subr.bf16.mxu0 0
        %7044 = vmatpush1.bf16.msra.mxu0 0
        %7045 = vmatprep.subr.bf16.mxu0 0
        %7046 = vmatpush1.bf16.msra.mxu0 0
        %7047 = vmatprep.subr.bf16.mxu0 0
        %7048 = vmatpush1.bf16.msra.mxu0 0
        %7049 = vmatprep.subr.bf16.mxu0 0
        %7050 = vmatpush1.bf16.msra.mxu0 0
        %7051 = vmatprep.subr.bf16.mxu0 0
        %7052 = vmatpush1.bf16.msra.mxu0 0
        %7053 = vmatprep.subr.bf16.mxu0 0
        %7054 = vmatpush1.bf16.msra.mxu0 0
        %7055 = vmatprep.subr.bf16.mxu0 0
        %7056 = vmatpush1.bf16.msra.mxu0 0
        %7057 = vmatprep.subr.bf16.mxu0 0
        %7058 = vmatpush1.bf16.msra.mxu0 0
        %7059 = vmatprep.mubr.bf16.mxu0 0
        %7060 = vmatmul.mubr.bf16.gmra.mrb[0].mxu0 %v1221
        %v7061 = vpop.f32.mrb[0].mxu0
        %v7062 = vadd.f32 0.0, %v7061
        %v7063 = vpop.f32.mrb[0].mxu0
        %v7064 = vpop.f32.mrb[0].mxu0
        %v7065 = vpop.f32.mrb[0].mxu0
        %7066 = vdwg.mxu0
        %v7068 = vcombine.high %v7062, %v7062
        %v7070 = vunpack.c.l.s4 1966171168
        %v7071 = vunpack.c.0.s8 %v7070
        %v7072 = vlaneseq
        %v7073 = vshrl.u32 %v7072, 7
        %v7074 = vsub.s32 %v7071, %v7073
        %v7075 = vrot.slane %v7062, %v7074
        %v7077 = vunpack.c.l.s4 1966171168
        %v7078 = vunpack.c.0.s8 %v7077
        %v7079 = vlaneseq
        %v7080 = vshrl.u32 %v7079, 7
        %v7081 = vsub.s32 %v7078, %v7080
        %v7082 = vrot.slane %v7068, %v7081
        %v7083 = vcombine.high %v7075, %v7075
        %v7084 = vcombine.high %v7082, %v7082
        %v7086 = vunpack.c.l.s4 1966171168
        %v7087 = vunpack.c.0.s8 %v7086
        %v7088 = vlaneseq
        %v7089 = vshrl.u32 %v7088, 7
        %v7090 = vsub.s32 %v7087, %v7089
        %v7091 = vrot.slane %v7075, %v7090
        %v7093 = vunpack.c.l.s4 1966171168
        %v7094 = vunpack.c.0.s8 %v7093
        %v7095 = vlaneseq
        %v7096 = vshrl.u32 %v7095, 7
        %v7097 = vsub.s32 %v7094, %v7096
        %v7098 = vrot.slane %v7082, %v7097
        %v7100 = vunpack.c.l.s4 1966171168
        %v7101 = vunpack.c.0.s8 %v7100
        %v7102 = vlaneseq
        %v7103 = vshrl.u32 %v7102, 7
        %v7104 = vsub.s32 %v7101, %v7103
        %v7105 = vrot.slane %v7083, %v7104
        %v7107 = vunpack.c.l.s4 1966171168
        %v7108 = vunpack.c.0.s8 %v7107
        %v7109 = vlaneseq
        %v7110 = vshrl.u32 %v7109, 7
        %v7111 = vsub.s32 %v7108, %v7110
        %v7112 = vrot.slane %v7084, %v7111
        %v7113 = vcombine.high %v7091, %v7091
        %v7114 = vcombine.high %v7098, %v7098
        %v7115 = vcombine.high %v7105, %v7105
        %7123 = vst [vmem:[%s206 + $0x28] sm:$0x1] %v7091
        %7124 = vst [vmem:[%s206 + $0x68] sm:$0x1] %v7105
        %7125 = vst [vmem:[%s206 + $0xa8] sm:$0x1] %v7113
        %7126 = vst [vmem:[%s206 + $0xe8] sm:$0x1] %v7115
        %7127 = vst [vmem:[%s206 + $0x128] sm:$0x1] %v7098
        %7128 = vst [vmem:[%s206 + $0x168] sm:$0x1] %v7112
        %7129 = vst [vmem:[%s206 + $0x1a8] sm:$0x1] %v7114
        %v7130 = vld [vmem:[#allocation3 + $0x10] sm:$0x10]
        %v7131 = vld [vmem:[#allocation3 + $0x30] sm:$0x10]
        %v7132 = vld [vmem:[#allocation3 + $0x50] sm:$0x10]
        %v7133 = vld [vmem:[#allocation3 + $0x70] sm:$0x10]
        %v7134 = vld [vmem:[#allocation3 + $0x90] sm:$0x10]
        %v7135 = vld [vmem:[#allocation3 + $0xb0] sm:$0x10]
        %v7136 = vld [vmem:[#allocation3 + $0xd0] sm:$0x10]
        %v7137 = vld [vmem:[#allocation3 + $0xf0] sm:$0x10]
        %v7146 = vunpack.c.h.b16 %v7130
        %v7147 = vunpack.c.h.b16 %v7131
        %v7148 = vunpack.c.h.b16 %v7132
        %v7149 = vunpack.c.h.b16 %v7133
        %v7150 = vunpack.c.h.b16 %v7134
        %v7151 = vunpack.c.h.b16 %v7135
        %v7152 = vunpack.c.h.b16 %v7136
        %v7153 = vunpack.c.h.b16 %v7137
        %v7154 = vrot.slane %v7146, 1
        %v7155 = vsel %vm1198, %v7147, %v7154
        %v7156 = vrot.slane %v7148, 7
        %v7157 = vsel %vm1201, %v7156, %v7155
        %v7158 = vrot.slane %v7149, 6
        %v7159 = vsel %vm1204, %v7158, %v7157
        %v7160 = vrot.slane %v7150, 5
        %v7161 = vsel %vm1207, %v7160, %v7159
        %v7162 = vrot.slane %v7151, 4
        %v7163 = vsel %vm1210, %v7162, %v7161
        %v7164 = vrot.slane %v7152, 3
        %v7165 = vsel %vm1213, %v7164, %v7163
        %v7166 = vrot.slane %v7153, 2
        %v7167 = vsel %vm1216, %v7166, %v7165
        %v7168 = vpack.c.b16 %v7167, %v7167
        %v7170 = vsel %vm1223, %v7168, 0
        %7172 = vmatprep.subr.bf16.mxu0 0
        %7173 = vmatpush1.bf16.msra.mxu0 %v7170
        %7174 = vmatprep.subr.bf16.mxu0 0
        %7175 = vmatpush1.bf16.msra.mxu0 0
        %7176 = vmatprep.subr.bf16.mxu0 0
        %7177 = vmatpush1.bf16.msra.mxu0 0
        %7178 = vmatprep.subr.bf16.mxu0 0
        %7179 = vmatpush1.bf16.msra.mxu0 0
        %7180 = vmatprep.subr.bf16.mxu0 0
        %7181 = vmatpush1.bf16.msra.mxu0 0
        %7182 = vmatprep.subr.bf16.mxu0 0
        %7183 = vmatpush1.bf16.msra.mxu0 0
        %7184 = vmatprep.subr.bf16.mxu0 0
        %7185 = vmatpush1.bf16.msra.mxu0 0
        %7186 = vmatprep.subr.bf16.mxu0 0
        %7187 = vmatpush1.bf16.msra.mxu0 0
        %7188 = vmatprep.subr.bf16.mxu0 0
        %7189 = vmatpush1.bf16.msra.mxu0 0
        %7190 = vmatprep.subr.bf16.mxu0 0
        %7191 = vmatpush1.bf16.msra.mxu0 0
        %7192 = vmatprep.subr.bf16.mxu0 0
        %7193 = vmatpush1.bf16.msra.mxu0 0
        %7194 = vmatprep.subr.bf16.mxu0 0
        %7195 = vmatpush1.bf16.msra.mxu0 0
        %7196 = vmatprep.subr.bf16.mxu0 0
        %7197 = vmatpush1.bf16.msra.mxu0 0
        %7198 = vmatprep.subr.bf16.mxu0 0
        %7199 = vmatpush1.bf16.msra.mxu0 0
        %7200 = vmatprep.subr.bf16.mxu0 0
        %7201 = vmatpush1.bf16.msra.mxu0 0
        %7202 = vmatprep.subr.bf16.mxu0 0
        %7203 = vmatpush1.bf16.msra.mxu0 0
        %7204 = vmatprep.mubr.bf16.mxu0 0
        %7205 = vmatmul.mubr.bf16.gmra.mrb[0].mxu0 %v1221
        %v7206 = vpop.f32.mrb[0].mxu0
        %v7207 = vadd.f32 0.0, %v7206
        %v7208 = vpop.f32.mrb[0].mxu0
        %v7209 = vpop.f32.mrb[0].mxu0
        %v7210 = vpop.f32.mrb[0].mxu0
        %7211 = vdwg.mxu0
        %v7213 = vcombine.high %v7207, %v7207
        %v7215 = vunpack.c.l.s4 1966171168
        %v7216 = vunpack.c.0.s8 %v7215
        %v7217 = vlaneseq
        %v7218 = vshrl.u32 %v7217, 7
        %v7219 = vsub.s32 %v7216, %v7218
        %v7220 = vrot.slane %v7207, %v7219
        %v7222 = vunpack.c.l.s4 1966171168
        %v7223 = vunpack.c.0.s8 %v7222
        %v7224 = vlaneseq
        %v7225 = vshrl.u32 %v7224, 7
        %v7226 = vsub.s32 %v7223, %v7225
        %v7227 = vrot.slane %v7213, %v7226
        %v7228 = vcombine.high %v7220, %v7220
        %v7229 = vcombine.high %v7227, %v7227
        %v7231 = vunpack.c.l.s4 1966171168
        %v7232 = vunpack.c.0.s8 %v7231
        %v7233 = vlaneseq
        %v7234 = vshrl.u32 %v7233, 7
        %v7235 = vsub.s32 %v7232, %v7234
        %v7236 = vrot.slane %v7220, %v7235
        %v7238 = vunpack.c.l.s4 1966171168
        %v7239 = vunpack.c.0.s8 %v7238
        %v7240 = vlaneseq
        %v7241 = vshrl.u32 %v7240, 7
        %v7242 = vsub.s32 %v7239, %v7241
        %v7243 = vrot.slane %v7227, %v7242
        %v7245 = vunpack.c.l.s4 1966171168
        %v7246 = vunpack.c.0.s8 %v7245
        %v7247 = vlaneseq
        %v7248 = vshrl.u32 %v7247, 7
        %v7249 = vsub.s32 %v7246, %v7248
        %v7250 = vrot.slane %v7228, %v7249
        %v7252 = vunpack.c.l.s4 1966171168
        %v7253 = vunpack.c.0.s8 %v7252
        %v7254 = vlaneseq
        %v7255 = vshrl.u32 %v7254, 7
        %v7256 = vsub.s32 %v7253, %v7255
        %v7257 = vrot.slane %v7229, %v7256
        %v7258 = vcombine.high %v7236, %v7236
        %v7259 = vcombine.high %v7243, %v7243
        %v7260 = vcombine.high %v7250, %v7250
        %7268 = vst [vmem:[%s206 + $0x29] sm:$0x1] %v7236
        %7269 = vst [vmem:[%s206 + $0x69] sm:$0x1] %v7250
        %7270 = vst [vmem:[%s206 + $0xa9] sm:$0x1] %v7258
        %7271 = vst [vmem:[%s206 + $0xe9] sm:$0x1] %v7260
        %7272 = vst [vmem:[%s206 + $0x129] sm:$0x1] %v7243
        %7273 = vst [vmem:[%s206 + $0x169] sm:$0x1] %v7257
        %7274 = vst [vmem:[%s206 + $0x1a9] sm:$0x1] %v7259
        %v7275 = vld [vmem:[#allocation3 + $0x10] sm:$0x20]
        %v7276 = vld [vmem:[#allocation3 + $0x30] sm:$0x20]
        %v7277 = vld [vmem:[#allocation3 + $0x50] sm:$0x20]
        %v7278 = vld [vmem:[#allocation3 + $0x70] sm:$0x20]
        %v7279 = vld [vmem:[#allocation3 + $0x90] sm:$0x20]
        %v7280 = vld [vmem:[#allocation3 + $0xb0] sm:$0x20]
        %v7281 = vld [vmem:[#allocation3 + $0xd0] sm:$0x20]
        %v7282 = vld [vmem:[#allocation3 + $0xf0] sm:$0x20]
        %v7291 = vunpack.c.h.b16 %v7275
        %v7292 = vunpack.c.h.b16 %v7276
        %v7293 = vunpack.c.h.b16 %v7277
        %v7294 = vunpack.c.h.b16 %v7278
        %v7295 = vunpack.c.h.b16 %v7279
        %v7296 = vunpack.c.h.b16 %v7280
        %v7297 = vunpack.c.h.b16 %v7281
        %v7298 = vunpack.c.h.b16 %v7282
        %v7299 = vrot.slane %v7291, 2
        %v7300 = vrot.slane %v7292, 1
        %v7301 = vsel %vm1198, %v7300, %v7299
        %v7302 = vsel %vm1201, %v7293, %v7301
        %v7303 = vrot.slane %v7294, 7
        %v7304 = vsel %vm1204, %v7303, %v7302
        %v7305 = vrot.slane %v7295, 6
        %v7306 = vsel %vm1207, %v7305, %v7304
        %v7307 = vrot.slane %v7296, 5
        %v7308 = vsel %vm1210, %v7307, %v7306
        %v7309 = vrot.slane %v7297, 4
        %v7310 = vsel %vm1213, %v7309, %v7308
        %v7311 = vrot.slane %v7298, 3
        %v7312 = vsel %vm1216, %v7311, %v7310
        %v7313 = vpack.c.b16 %v7312, %v7312
        %v7315 = vsel %vm1223, %v7313, 0
        %7317 = vmatprep.subr.bf16.mxu0 0
        %7318 = vmatpush1.bf16.msra.mxu0 %v7315
        %7319 = vmatprep.subr.bf16.mxu0 0
        %7320 = vmatpush1.bf16.msra.mxu0 0
        %7321 = vmatprep.subr.bf16.mxu0 0
        %7322 = vmatpush1.bf16.msra.mxu0 0
        %7323 = vmatprep.subr.bf16.mxu0 0
        %7324 = vmatpush1.bf16.msra.mxu0 0
        %7325 = vmatprep.subr.bf16.mxu0 0
        %7326 = vmatpush1.bf16.msra.mxu0 0
        %7327 = vmatprep.subr.bf16.mxu0 0
        %7328 = vmatpush1.bf16.msra.mxu0 0
        %7329 = vmatprep.subr.bf16.mxu0 0
        %7330 = vmatpush1.bf16.msra.mxu0 0
        %7331 = vmatprep.subr.bf16.mxu0 0
        %7332 = vmatpush1.bf16.msra.mxu0 0
        %7333 = vmatprep.subr.bf16.mxu0 0
        %7334 = vmatpush1.bf16.msra.mxu0 0
        %7335 = vmatprep.subr.bf16.mxu0 0
        %7336 = vmatpush1.bf16.msra.mxu0 0
        %7337 = vmatprep.subr.bf16.mxu0 0
        %7338 = vmatpush1.bf16.msra.mxu0 0
        %7339 = vmatprep.subr.bf16.mxu0 0
        %7340 = vmatpush1.bf16.msra.mxu0 0
        %7341 = vmatprep.subr.bf16.mxu0 0
        %7342 = vmatpush1.bf16.msra.mxu0 0
        %7343 = vmatprep.subr.bf16.mxu0 0
        %7344 = vmatpush1.bf16.msra.mxu0 0
        %7345 = vmatprep.subr.bf16.mxu0 0
        %7346 = vmatpush1.bf16.msra.mxu0 0
        %7347 = vmatprep.subr.bf16.mxu0 0
        %7348 = vmatpush1.bf16.msra.mxu0 0
        %7349 = vmatprep.mubr.bf16.mxu0 0
        %7350 = vmatmul.mubr.bf16.gmra.mrb[0].mxu0 %v1221
        %v7351 = vpop.f32.mrb[0].mxu0
        %v7352 = vadd.f32 0.0, %v7351
        %v7353 = vpop.f32.mrb[0].mxu0
        %v7354 = vpop.f32.mrb[0].mxu0
        %v7355 = vpop.f32.mrb[0].mxu0
        %7356 = vdwg.mxu0
        %v7358 = vcombine.high %v7352, %v7352
        %v7360 = vunpack.c.l.s4 1966171168
        %v7361 = vunpack.c.0.s8 %v7360
        %v7362 = vlaneseq
        %v7363 = vshrl.u32 %v7362, 7
        %v7364 = vsub.s32 %v7361, %v7363
        %v7365 = vrot.slane %v7352, %v7364
        %v7367 = vunpack.c.l.s4 1966171168
        %v7368 = vunpack.c.0.s8 %v7367
        %v7369 = vlaneseq
        %v7370 = vshrl.u32 %v7369, 7
        %v7371 = vsub.s32 %v7368, %v7370
        %v7372 = vrot.slane %v7358, %v7371
        %v7373 = vcombine.high %v7365, %v7365
        %v7374 = vcombine.high %v7372, %v7372
        %v7376 = vunpack.c.l.s4 1966171168
        %v7377 = vunpack.c.0.s8 %v7376
        %v7378 = vlaneseq
        %v7379 = vshrl.u32 %v7378, 7
        %v7380 = vsub.s32 %v7377, %v7379
        %v7381 = vrot.slane %v7365, %v7380
        %v7383 = vunpack.c.l.s4 1966171168
        %v7384 = vunpack.c.0.s8 %v7383
        %v7385 = vlaneseq
        %v7386 = vshrl.u32 %v7385, 7
        %v7387 = vsub.s32 %v7384, %v7386
        %v7388 = vrot.slane %v7372, %v7387
        %v7390 = vunpack.c.l.s4 1966171168
        %v7391 = vunpack.c.0.s8 %v7390
        %v7392 = vlaneseq
        %v7393 = vshrl.u32 %v7392, 7
        %v7394 = vsub.s32 %v7391, %v7393
        %v7395 = vrot.slane %v7373, %v7394
        %v7397 = vunpack.c.l.s4 1966171168
        %v7398 = vunpack.c.0.s8 %v7397
        %v7399 = vlaneseq
        %v7400 = vshrl.u32 %v7399, 7
        %v7401 = vsub.s32 %v7398, %v7400
        %v7402 = vrot.slane %v7374, %v7401
        %v7403 = vcombine.high %v7381, %v7381
        %v7404 = vcombine.high %v7388, %v7388
        %v7405 = vcombine.high %v7395, %v7395
        %7413 = vst [vmem:[%s206 + $0x2a] sm:$0x1] %v7381
        %7414 = vst [vmem:[%s206 + $0x6a] sm:$0x1] %v7395
        %7415 = vst [vmem:[%s206 + $0xaa] sm:$0x1] %v7403
        %7416 = vst [vmem:[%s206 + $0xea] sm:$0x1] %v7405
        %7417 = vst [vmem:[%s206 + $0x12a] sm:$0x1] %v7388
        %7418 = vst [vmem:[%s206 + $0x16a] sm:$0x1] %v7402
        %7419 = vst [vmem:[%s206 + $0x1aa] sm:$0x1] %v7404
        %v7420 = vld [vmem:[#allocation3 + $0x10] sm:$0x20]
        %v7421 = vld [vmem:[#allocation3 + $0x30] sm:$0x20]
        %v7422 = vld [vmem:[#allocation3 + $0x50] sm:$0x20]
        %v7423 = vld [vmem:[#allocation3 + $0x70] sm:$0x20]
        %v7424 = vld [vmem:[#allocation3 + $0x90] sm:$0x20]
        %v7425 = vld [vmem:[#allocation3 + $0xb0] sm:$0x20]
        %v7426 = vld [vmem:[#allocation3 + $0xd0] sm:$0x20]
        %v7427 = vld [vmem:[#allocation3 + $0xf0] sm:$0x20]
        %v7436 = vunpack.c.h.b16 %v7420
        %v7437 = vunpack.c.h.b16 %v7421
        %v7438 = vunpack.c.h.b16 %v7422
        %v7439 = vunpack.c.h.b16 %v7423
        %v7440 = vunpack.c.h.b16 %v7424
        %v7441 = vunpack.c.h.b16 %v7425
        %v7442 = vunpack.c.h.b16 %v7426
        %v7443 = vunpack.c.h.b16 %v7427
        %v7444 = vrot.slane %v7436, 3
        %v7445 = vrot.slane %v7437, 2
        %v7446 = vsel %vm1198, %v7445, %v7444
        %v7447 = vrot.slane %v7438, 1
        %v7448 = vsel %vm1201, %v7447, %v7446
        %v7449 = vsel %vm1204, %v7439, %v7448
        %v7450 = vrot.slane %v7440, 7
        %v7451 = vsel %vm1207, %v7450, %v7449
        %v7452 = vrot.slane %v7441, 6
        %v7453 = vsel %vm1210, %v7452, %v7451
        %v7454 = vrot.slane %v7442, 5
        %v7455 = vsel %vm1213, %v7454, %v7453
        %v7456 = vrot.slane %v7443, 4
        %v7457 = vsel %vm1216, %v7456, %v7455
        %v7458 = vpack.c.b16 %v7457, %v7457
        %v7460 = vsel %vm1223, %v7458, 0
        %7462 = vmatprep.subr.bf16.mxu0 0
        %7463 = vmatpush1.bf16.msra.mxu0 %v7460
        %7464 = vmatprep.subr.bf16.mxu0 0
        %7465 = vmatpush1.bf16.msra.mxu0 0
        %7466 = vmatprep.subr.bf16.mxu0 0
        %7467 = vmatpush1.bf16.msra.mxu0 0
        %7468 = vmatprep.subr.bf16.mxu0 0
        %7469 = vmatpush1.bf16.msra.mxu0 0
        %7470 = vmatprep.subr.bf16.mxu0 0
        %7471 = vmatpush1.bf16.msra.mxu0 0
        %7472 = vmatprep.subr.bf16.mxu0 0
        %7473 = vmatpush1.bf16.msra.mxu0 0
        %7474 = vmatprep.subr.bf16.mxu0 0
        %7475 = vmatpush1.bf16.msra.mxu0 0
        %7476 = vmatprep.subr.bf16.mxu0 0
        %7477 = vmatpush1.bf16.msra.mxu0 0
        %7478 = vmatprep.subr.bf16.mxu0 0
        %7479 = vmatpush1.bf16.msra.mxu0 0
        %7480 = vmatprep.subr.bf16.mxu0 0
        %7481 = vmatpush1.bf16.msra.mxu0 0
        %7482 = vmatprep.subr.bf16.mxu0 0
        %7483 = vmatpush1.bf16.msra.mxu0 0
        %7484 = vmatprep.subr.bf16.mxu0 0
        %7485 = vmatpush1.bf16.msra.mxu0 0
        %7486 = vmatprep.subr.bf16.mxu0 0
        %7487 = vmatpush1.bf16.msra.mxu0 0
        %7488 = vmatprep.subr.bf16.mxu0 0
        %7489 = vmatpush1.bf16.msra.mxu0 0
        %7490 = vmatprep.subr.bf16.mxu0 0
        %7491 = vmatpush1.bf16.msra.mxu0 0
        %7492 = vmatprep.subr.bf16.mxu0 0
        %7493 = vmatpush1.bf16.msra.mxu0 0
        %7494 = vmatprep.mubr.bf16.mxu0 0
        %7495 = vmatmul.mubr.bf16.gmra.mrb[0].mxu0 %v1221
        %v7496 = vpop.f32.mrb[0].mxu0
        %v7497 = vadd.f32 0.0, %v7496
        %v7498 = vpop.f32.mrb[0].mxu0
        %v7499 = vpop.f32.mrb[0].mxu0
        %v7500 = vpop.f32.mrb[0].mxu0
        %7501 = vdwg.mxu0
        %v7503 = vcombine.high %v7497, %v7497
        %v7505 = vunpack.c.l.s4 1966171168
        %v7506 = vunpack.c.0.s8 %v7505
        %v7507 = vlaneseq
        %v7508 = vshrl.u32 %v7507, 7
        %v7509 = vsub.s32 %v7506, %v7508
        %v7510 = vrot.slane %v7497, %v7509
        %v7512 = vunpack.c.l.s4 1966171168
        %v7513 = vunpack.c.0.s8 %v7512
        %v7514 = vlaneseq
        %v7515 = vshrl.u32 %v7514, 7
        %v7516 = vsub.s32 %v7513, %v7515
        %v7517 = vrot.slane %v7503, %v7516
        %v7518 = vcombine.high %v7510, %v7510
        %v7519 = vcombine.high %v7517, %v7517
        %v7521 = vunpack.c.l.s4 1966171168
        %v7522 = vunpack.c.0.s8 %v7521
        %v7523 = vlaneseq
        %v7524 = vshrl.u32 %v7523, 7
        %v7525 = vsub.s32 %v7522, %v7524
        %v7526 = vrot.slane %v7510, %v7525
        %v7528 = vunpack.c.l.s4 1966171168
        %v7529 = vunpack.c.0.s8 %v7528
        %v7530 = vlaneseq
        %v7531 = vshrl.u32 %v7530, 7
        %v7532 = vsub.s32 %v7529, %v7531
        %v7533 = vrot.slane %v7517, %v7532
        %v7535 = vunpack.c.l.s4 1966171168
        %v7536 = vunpack.c.0.s8 %v7535
        %v7537 = vlaneseq
        %v7538 = vshrl.u32 %v7537, 7
        %v7539 = vsub.s32 %v7536, %v7538
        %v7540 = vrot.slane %v7518, %v7539
        %v7542 = vunpack.c.l.s4 1966171168
        %v7543 = vunpack.c.0.s8 %v7542
        %v7544 = vlaneseq
        %v7545 = vshrl.u32 %v7544, 7
        %v7546 = vsub.s32 %v7543, %v7545
        %v7547 = vrot.slane %v7519, %v7546
        %v7548 = vcombine.high %v7526, %v7526
        %v7549 = vcombine.high %v7533, %v7533
        %v7550 = vcombine.high %v7540, %v7540
        %7558 = vst [vmem:[%s206 + $0x2b] sm:$0x1] %v7526
        %7559 = vst [vmem:[%s206 + $0x6b] sm:$0x1] %v7540
        %7560 = vst [vmem:[%s206 + $0xab] sm:$0x1] %v7548
        %7561 = vst [vmem:[%s206 + $0xeb] sm:$0x1] %v7550
        %7562 = vst [vmem:[%s206 + $0x12b] sm:$0x1] %v7533
        %7563 = vst [vmem:[%s206 + $0x16b] sm:$0x1] %v7547
        %7564 = vst [vmem:[%s206 + $0x1ab] sm:$0x1] %v7549
        %v7565 = vld [vmem:[#allocation3 + $0x10] sm:$0x40]
        %v7566 = vld [vmem:[#allocation3 + $0x30] sm:$0x40]
        %v7567 = vld [vmem:[#allocation3 + $0x50] sm:$0x40]
        %v7568 = vld [vmem:[#allocation3 + $0x70] sm:$0x40]
        %v7569 = vld [vmem:[#allocation3 + $0x90] sm:$0x40]
        %v7570 = vld [vmem:[#allocation3 + $0xb0] sm:$0x40]
        %v7571 = vld [vmem:[#allocation3 + $0xd0] sm:$0x40]
        %v7572 = vld [vmem:[#allocation3 + $0xf0] sm:$0x40]
        %v7581 = vunpack.c.h.b16 %v7565
        %v7582 = vunpack.c.h.b16 %v7566
        %v7583 = vunpack.c.h.b16 %v7567
        %v7584 = vunpack.c.h.b16 %v7568
        %v7585 = vunpack.c.h.b16 %v7569
        %v7586 = vunpack.c.h.b16 %v7570
        %v7587 = vunpack.c.h.b16 %v7571
        %v7588 = vunpack.c.h.b16 %v7572
        %v7589 = vrot.slane %v7581, 4
        %v7590 = vrot.slane %v7582, 3
        %v7591 = vsel %vm1198, %v7590, %v7589
        %v7592 = vrot.slane %v7583, 2
        %v7593 = vsel %vm1201, %v7592, %v7591
        %v7594 = vrot.slane %v7584, 1
        %v7595 = vsel %vm1204, %v7594, %v7593
        %v7596 = vsel %vm1207, %v7585, %v7595
        %v7597 = vrot.slane %v7586, 7
        %v7598 = vsel %vm1210, %v7597, %v7596
        %v7599 = vrot.slane %v7587, 6
        %v7600 = vsel %vm1213, %v7599, %v7598
        %v7601 = vrot.slane %v7588, 5
        %v7602 = vsel %vm1216, %v7601, %v7600
        %v7603 = vpack.c.b16 %v7602, %v7602
        %v7605 = vsel %vm1223, %v7603, 0
        %7607 = vmatprep.subr.bf16.mxu0 0
        %7608 = vmatpush1.bf16.msra.mxu0 %v7605
        %7609 = vmatprep.subr.bf16.mxu0 0
        %7610 = vmatpush1.bf16.msra.mxu0 0
        %7611 = vmatprep.subr.bf16.mxu0 0
        %7612 = vmatpush1.bf16.msra.mxu0 0
        %7613 = vmatprep.subr.bf16.mxu0 0
        %7614 = vmatpush1.bf16.msra.mxu0 0
        %7615 = vmatprep.subr.bf16.mxu0 0
        %7616 = vmatpush1.bf16.msra.mxu0 0
        %7617 = vmatprep.subr.bf16.mxu0 0
        %7618 = vmatpush1.bf16.msra.mxu0 0
        %7619 = vmatprep.subr.bf16.mxu0 0
        %7620 = vmatpush1.bf16.msra.mxu0 0
        %7621 = vmatprep.subr.bf16.mxu0 0
        %7622 = vmatpush1.bf16.msra.mxu0 0
        %7623 = vmatprep.subr.bf16.mxu0 0
        %7624 = vmatpush1.bf16.msra.mxu0 0
        %7625 = vmatprep.subr.bf16.mxu0 0
        %7626 = vmatpush1.bf16.msra.mxu0 0
        %7627 = vmatprep.subr.bf16.mxu0 0
        %7628 = vmatpush1.bf16.msra.mxu0 0
        %7629 = vmatprep.subr.bf16.mxu0 0
        %7630 = vmatpush1.bf16.msra.mxu0 0
        %7631 = vmatprep.subr.bf16.mxu0 0
        %7632 = vmatpush1.bf16.msra.mxu0 0
        %7633 = vmatprep.subr.bf16.mxu0 0
        %7634 = vmatpush1.bf16.msra.mxu0 0
        %7635 = vmatprep.subr.bf16.mxu0 0
        %7636 = vmatpush1.bf16.msra.mxu0 0
        %7637 = vmatprep.subr.bf16.mxu0 0
        %7638 = vmatpush1.bf16.msra.mxu0 0
        %7639 = vmatprep.mubr.bf16.mxu0 0
        %7640 = vmatmul.mubr.bf16.gmra.mrb[0].mxu0 %v1221
        %v7641 = vpop.f32.mrb[0].mxu0
        %v7642 = vadd.f32 0.0, %v7641
        %v7643 = vpop.f32.mrb[0].mxu0
        %v7644 = vpop.f32.mrb[0].mxu0
        %v7645 = vpop.f32.mrb[0].mxu0
        %7646 = vdwg.mxu0
        %v7648 = vcombine.high %v7642, %v7642
        %v7650 = vunpack.c.l.s4 1966171168
        %v7651 = vunpack.c.0.s8 %v7650
        %v7652 = vlaneseq
        %v7653 = vshrl.u32 %v7652, 7
        %v7654 = vsub.s32 %v7651, %v7653
        %v7655 = vrot.slane %v7642, %v7654
        %v7657 = vunpack.c.l.s4 1966171168
        %v7658 = vunpack.c.0.s8 %v7657
        %v7659 = vlaneseq
        %v7660 = vshrl.u32 %v7659, 7
        %v7661 = vsub.s32 %v7658, %v7660
        %v7662 = vrot.slane %v7648, %v7661
        %v7663 = vcombine.high %v7655, %v7655
        %v7664 = vcombine.high %v7662, %v7662
        %v7666 = vunpack.c.l.s4 1966171168
        %v7667 = vunpack.c.0.s8 %v7666
        %v7668 = vlaneseq
        %v7669 = vshrl.u32 %v7668, 7
        %v7670 = vsub.s32 %v7667, %v7669
        %v7671 = vrot.slane %v7655, %v7670
        %v7673 = vunpack.c.l.s4 1966171168
        %v7674 = vunpack.c.0.s8 %v7673
        %v7675 = vlaneseq
        %v7676 = vshrl.u32 %v7675, 7
        %v7677 = vsub.s32 %v7674, %v7676
        %v7678 = vrot.slane %v7662, %v7677
        %v7680 = vunpack.c.l.s4 1966171168
        %v7681 = vunpack.c.0.s8 %v7680
        %v7682 = vlaneseq
        %v7683 = vshrl.u32 %v7682, 7
        %v7684 = vsub.s32 %v7681, %v7683
        %v7685 = vrot.slane %v7663, %v7684
        %v7687 = vunpack.c.l.s4 1966171168
        %v7688 = vunpack.c.0.s8 %v7687
        %v7689 = vlaneseq
        %v7690 = vshrl.u32 %v7689, 7
        %v7691 = vsub.s32 %v7688, %v7690
        %v7692 = vrot.slane %v7664, %v7691
        %v7693 = vcombine.high %v7671, %v7671
        %v7694 = vcombine.high %v7678, %v7678
        %v7695 = vcombine.high %v7685, %v7685
        %7703 = vst [vmem:[%s206 + $0x2c] sm:$0x1] %v7671
        %7704 = vst [vmem:[%s206 + $0x6c] sm:$0x1] %v7685
        %7705 = vst [vmem:[%s206 + $0xac] sm:$0x1] %v7693
        %7706 = vst [vmem:[%s206 + $0xec] sm:$0x1] %v7695
        %7707 = vst [vmem:[%s206 + $0x12c] sm:$0x1] %v7678
        %7708 = vst [vmem:[%s206 + $0x16c] sm:$0x1] %v7692
        %7709 = vst [vmem:[%s206 + $0x1ac] sm:$0x1] %v7694
        %v7710 = vld [vmem:[#allocation3 + $0x10] sm:$0x40]
        %v7711 = vld [vmem:[#allocation3 + $0x30] sm:$0x40]
        %v7712 = vld [vmem:[#allocation3 + $0x50] sm:$0x40]
        %v7713 = vld [vmem:[#allocation3 + $0x70] sm:$0x40]
        %v7714 = vld [vmem:[#allocation3 + $0x90] sm:$0x40]
        %v7715 = vld [vmem:[#allocation3 + $0xb0] sm:$0x40]
        %v7716 = vld [vmem:[#allocation3 + $0xd0] sm:$0x40]
        %v7717 = vld [vmem:[#allocation3 + $0xf0] sm:$0x40]
        %v7726 = vunpack.c.h.b16 %v7710
        %v7727 = vunpack.c.h.b16 %v7711
        %v7728 = vunpack.c.h.b16 %v7712
        %v7729 = vunpack.c.h.b16 %v7713
        %v7730 = vunpack.c.h.b16 %v7714
        %v7731 = vunpack.c.h.b16 %v7715
        %v7732 = vunpack.c.h.b16 %v7716
        %v7733 = vunpack.c.h.b16 %v7717
        %v7734 = vrot.slane %v7726, 5
        %v7735 = vrot.slane %v7727, 4
        %v7736 = vsel %vm1198, %v7735, %v7734
        %v7737 = vrot.slane %v7728, 3
        %v7738 = vsel %vm1201, %v7737, %v7736
        %v7739 = vrot.slane %v7729, 2
        %v7740 = vsel %vm1204, %v7739, %v7738
        %v7741 = vrot.slane %v7730, 1
        %v7742 = vsel %vm1207, %v7741, %v7740
        %v7743 = vsel %vm1210, %v7731, %v7742
        %v7744 = vrot.slane %v7732, 7
        %v7745 = vsel %vm1213, %v7744, %v7743
        %v7746 = vrot.slane %v7733, 6
        %v7747 = vsel %vm1216, %v7746, %v7745
        %v7748 = vpack.c.b16 %v7747, %v7747
        %v7750 = vsel %vm1223, %v7748, 0
        %7752 = vmatprep.subr.bf16.mxu0 0
        %7753 = vmatpush1.bf16.msra.mxu0 %v7750
        %7754 = vmatprep.subr.bf16.mxu0 0
        %7755 = vmatpush1.bf16.msra.mxu0 0
        %7756 = vmatprep.subr.bf16.mxu0 0
        %7757 = vmatpush1.bf16.msra.mxu0 0
        %7758 = vmatprep.subr.bf16.mxu0 0
        %7759 = vmatpush1.bf16.msra.mxu0 0
        %7760 = vmatprep.subr.bf16.mxu0 0
        %7761 = vmatpush1.bf16.msra.mxu0 0
        %7762 = vmatprep.subr.bf16.mxu0 0
        %7763 = vmatpush1.bf16.msra.mxu0 0
        %7764 = vmatprep.subr.bf16.mxu0 0
        %7765 = vmatpush1.bf16.msra.mxu0 0
        %7766 = vmatprep.subr.bf16.mxu0 0
        %7767 = vmatpush1.bf16.msra.mxu0 0
        %7768 = vmatprep.subr.bf16.mxu0 0
        %7769 = vmatpush1.bf16.msra.mxu0 0
        %7770 = vmatprep.subr.bf16.mxu0 0
        %7771 = vmatpush1.bf16.msra.mxu0 0
        %7772 = vmatprep.subr.bf16.mxu0 0
        %7773 = vmatpush1.bf16.msra.mxu0 0
        %7774 = vmatprep.subr.bf16.mxu0 0
        %7775 = vmatpush1.bf16.msra.mxu0 0
        %7776 = vmatprep.subr.bf16.mxu0 0
        %7777 = vmatpush1.bf16.msra.mxu0 0
        %7778 = vmatprep.subr.bf16.mxu0 0
        %7779 = vmatpush1.bf16.msra.mxu0 0
        %7780 = vmatprep.subr.bf16.mxu0 0
        %7781 = vmatpush1.bf16.msra.mxu0 0
        %7782 = vmatprep.subr.bf16.mxu0 0
        %7783 = vmatpush1.bf16.msra.mxu0 0
        %7784 = vmatprep.mubr.bf16.mxu0 0
        %7785 = vmatmul.mubr.bf16.gmra.mrb[0].mxu0 %v1221
        %v7786 = vpop.f32.mrb[0].mxu0
        %v7787 = vadd.f32 0.0, %v7786
        %v7788 = vpop.f32.mrb[0].mxu0
        %v7789 = vpop.f32.mrb[0].mxu0
        %v7790 = vpop.f32.mrb[0].mxu0
        %7791 = vdwg.mxu0
        %v7793 = vcombine.high %v7787, %v7787
        %v7795 = vunpack.c.l.s4 1966171168
        %v7796 = vunpack.c.0.s8 %v7795
        %v7797 = vlaneseq
        %v7798 = vshrl.u32 %v7797, 7
        %v7799 = vsub.s32 %v7796, %v7798
        %v7800 = vrot.slane %v7787, %v7799
        %v7802 = vunpack.c.l.s4 1966171168
        %v7803 = vunpack.c.0.s8 %v7802
        %v7804 = vlaneseq
        %v7805 = vshrl.u32 %v7804, 7
        %v7806 = vsub.s32 %v7803, %v7805
        %v7807 = vrot.slane %v7793, %v7806
        %v7808 = vcombine.high %v7800, %v7800
        %v7809 = vcombine.high %v7807, %v7807
        %v7811 = vunpack.c.l.s4 1966171168
        %v7812 = vunpack.c.0.s8 %v7811
        %v7813 = vlaneseq
        %v7814 = vshrl.u32 %v7813, 7
        %v7815 = vsub.s32 %v7812, %v7814
        %v7816 = vrot.slane %v7800, %v7815
        %v7818 = vunpack.c.l.s4 1966171168
        %v7819 = vunpack.c.0.s8 %v7818
        %v7820 = vlaneseq
        %v7821 = vshrl.u32 %v7820, 7
        %v7822 = vsub.s32 %v7819, %v7821
        %v7823 = vrot.slane %v7807, %v7822
        %v7825 = vunpack.c.l.s4 1966171168
        %v7826 = vunpack.c.0.s8 %v7825
        %v7827 = vlaneseq
        %v7828 = vshrl.u32 %v7827, 7
        %v7829 = vsub.s32 %v7826, %v7828
        %v7830 = vrot.slane %v7808, %v7829
        %v7832 = vunpack.c.l.s4 1966171168
        %v7833 = vunpack.c.0.s8 %v7832
        %v7834 = vlaneseq
        %v7835 = vshrl.u32 %v7834, 7
        %v7836 = vsub.s32 %v7833, %v7835
        %v7837 = vrot.slane %v7809, %v7836
        %v7838 = vcombine.high %v7816, %v7816
        %v7839 = vcombine.high %v7823, %v7823
        %v7840 = vcombine.high %v7830, %v7830
        %7848 = vst [vmem:[%s206 + $0x2d] sm:$0x1] %v7816
        %7849 = vst [vmem:[%s206 + $0x6d] sm:$0x1] %v7830
        %7850 = vst [vmem:[%s206 + $0xad] sm:$0x1] %v7838
        %7851 = vst [vmem:[%s206 + $0xed] sm:$0x1] %v7840
        %7852 = vst [vmem:[%s206 + $0x12d] sm:$0x1] %v7823
        %7853 = vst [vmem:[%s206 + $0x16d] sm:$0x1] %v7837
        %7854 = vst [vmem:[%s206 + $0x1ad] sm:$0x1] %v7839
        %v7855 = vld [vmem:[#allocation3 + $0x10] sm:$0x80]
        %v7856 = vld [vmem:[#allocation3 + $0x30] sm:$0x80]
        %v7857 = vld [vmem:[#allocation3 + $0x50] sm:$0x80]
        %v7858 = vld [vmem:[#allocation3 + $0x70] sm:$0x80]
        %v7859 = vld [vmem:[#allocation3 + $0x90] sm:$0x80]
        %v7860 = vld [vmem:[#allocation3 + $0xb0] sm:$0x80]
        %v7861 = vld [vmem:[#allocation3 + $0xd0] sm:$0x80]
        %v7862 = vld [vmem:[#allocation3 + $0xf0] sm:$0x80]
        %v7871 = vunpack.c.h.b16 %v7855
        %v7872 = vunpack.c.h.b16 %v7856
        %v7873 = vunpack.c.h.b16 %v7857
        %v7874 = vunpack.c.h.b16 %v7858
        %v7875 = vunpack.c.h.b16 %v7859
        %v7876 = vunpack.c.h.b16 %v7860
        %v7877 = vunpack.c.h.b16 %v7861
        %v7878 = vunpack.c.h.b16 %v7862
        %v7879 = vrot.slane %v7871, 6
        %v7880 = vrot.slane %v7872, 5
        %v7881 = vsel %vm1198, %v7880, %v7879
        %v7882 = vrot.slane %v7873, 4
        %v7883 = vsel %vm1201, %v7882, %v7881
        %v7884 = vrot.slane %v7874, 3
        %v7885 = vsel %vm1204, %v7884, %v7883
        %v7886 = vrot.slane %v7875, 2
        %v7887 = vsel %vm1207, %v7886, %v7885
        %v7888 = vrot.slane %v7876, 1
        %v7889 = vsel %vm1210, %v7888, %v7887
        %v7890 = vsel %vm1213, %v7877, %v7889
        %v7891 = vrot.slane %v7878, 7
        %v7892 = vsel %vm1216, %v7891, %v7890
        %v7893 = vpack.c.b16 %v7892, %v7892
        %v7895 = vsel %vm1223, %v7893, 0
        %7897 = vmatprep.subr.bf16.mxu0 0
        %7898 = vmatpush1.bf16.msra.mxu0 %v7895
        %7899 = vmatprep.subr.bf16.mxu0 0
        %7900 = vmatpush1.bf16.msra.mxu0 0
        %7901 = vmatprep.subr.bf16.mxu0 0
        %7902 = vmatpush1.bf16.msra.mxu0 0
        %7903 = vmatprep.subr.bf16.mxu0 0
        %7904 = vmatpush1.bf16.msra.mxu0 0
        %7905 = vmatprep.subr.bf16.mxu0 0
        %7906 = vmatpush1.bf16.msra.mxu0 0
        %7907 = vmatprep.subr.bf16.mxu0 0
        %7908 = vmatpush1.bf16.msra.mxu0 0
        %7909 = vmatprep.subr.bf16.mxu0 0
        %7910 = vmatpush1.bf16.msra.mxu0 0
        %7911 = vmatprep.subr.bf16.mxu0 0
        %7912 = vmatpush1.bf16.msra.mxu0 0
        %7913 = vmatprep.subr.bf16.mxu0 0
        %7914 = vmatpush1.bf16.msra.mxu0 0
        %7915 = vmatprep.subr.bf16.mxu0 0
        %7916 = vmatpush1.bf16.msra.mxu0 0
        %7917 = vmatprep.subr.bf16.mxu0 0
        %7918 = vmatpush1.bf16.msra.mxu0 0
        %7919 = vmatprep.subr.bf16.mxu0 0
        %7920 = vmatpush1.bf16.msra.mxu0 0
        %7921 = vmatprep.subr.bf16.mxu0 0
        %7922 = vmatpush1.bf16.msra.mxu0 0
        %7923 = vmatprep.subr.bf16.mxu0 0
        %7924 = vmatpush1.bf16.msra.mxu0 0
        %7925 = vmatprep.subr.bf16.mxu0 0
        %7926 = vmatpush1.bf16.msra.mxu0 0
        %7927 = vmatprep.subr.bf16.mxu0 0
        %7928 = vmatpush1.bf16.msra.mxu0 0
        %7929 = vmatprep.mubr.bf16.mxu0 0
        %7930 = vmatmul.mubr.bf16.gmra.mrb[0].mxu0 %v1221
        %v7931 = vpop.f32.mrb[0].mxu0
        %v7932 = vadd.f32 0.0, %v7931
        %v7933 = vpop.f32.mrb[0].mxu0
        %v7934 = vpop.f32.mrb[0].mxu0
        %v7935 = vpop.f32.mrb[0].mxu0
        %7936 = vdwg.mxu0
        %v7938 = vcombine.high %v7932, %v7932
        %v7940 = vunpack.c.l.s4 1966171168
        %v7941 = vunpack.c.0.s8 %v7940
        %v7942 = vlaneseq
        %v7943 = vshrl.u32 %v7942, 7
        %v7944 = vsub.s32 %v7941, %v7943
        %v7945 = vrot.slane %v7932, %v7944
        %v7947 = vunpack.c.l.s4 1966171168
        %v7948 = vunpack.c.0.s8 %v7947
        %v7949 = vlaneseq
        %v7950 = vshrl.u32 %v7949, 7
        %v7951 = vsub.s32 %v7948, %v7950
        %v7952 = vrot.slane %v7938, %v7951
        %v7953 = vcombine.high %v7945, %v7945
        %v7954 = vcombine.high %v7952, %v7952
        %v7956 = vunpack.c.l.s4 1966171168
        %v7957 = vunpack.c.0.s8 %v7956
        %v7958 = vlaneseq
        %v7959 = vshrl.u32 %v7958, 7
        %v7960 = vsub.s32 %v7957, %v7959
        %v7961 = vrot.slane %v7945, %v7960
        %v7963 = vunpack.c.l.s4 1966171168
        %v7964 = vunpack.c.0.s8 %v7963
        %v7965 = vlaneseq
        %v7966 = vshrl.u32 %v7965, 7
        %v7967 = vsub.s32 %v7964, %v7966
        %v7968 = vrot.slane %v7952, %v7967
        %v7970 = vunpack.c.l.s4 1966171168
        %v7971 = vunpack.c.0.s8 %v7970
        %v7972 = vlaneseq
        %v7973 = vshrl.u32 %v7972, 7
        %v7974 = vsub.s32 %v7971, %v7973
        %v7975 = vrot.slane %v7953, %v7974
        %v7977 = vunpack.c.l.s4 1966171168
        %v7978 = vunpack.c.0.s8 %v7977
        %v7979 = vlaneseq
        %v7980 = vshrl.u32 %v7979, 7
        %v7981 = vsub.s32 %v7978, %v7980
        %v7982 = vrot.slane %v7954, %v7981
        %v7983 = vcombine.high %v7961, %v7961
        %v7984 = vcombine.high %v7968, %v7968
        %v7985 = vcombine.high %v7975, %v7975
        %7993 = vst [vmem:[%s206 + $0x2e] sm:$0x1] %v7961
        %7994 = vst [vmem:[%s206 + $0x6e] sm:$0x1] %v7975
        %7995 = vst [vmem:[%s206 + $0xae] sm:$0x1] %v7983
        %7996 = vst [vmem:[%s206 + $0xee] sm:$0x1] %v7985
        %7997 = vst [vmem:[%s206 + $0x12e] sm:$0x1] %v7968
        %7998 = vst [vmem:[%s206 + $0x16e] sm:$0x1] %v7982
        %7999 = vst [vmem:[%s206 + $0x1ae] sm:$0x1] %v7984
        %v8000 = vld [vmem:[#allocation3 + $0x10] sm:$0x80]
        %v8001 = vld [vmem:[#allocation3 + $0x30] sm:$0x80]
        %v8002 = vld [vmem:[#allocation3 + $0x50] sm:$0x80]
        %v8003 = vld [vmem:[#allocation3 + $0x70] sm:$0x80]
        %v8004 = vld [vmem:[#allocation3 + $0x90] sm:$0x80]
        %v8005 = vld [vmem:[#allocation3 + $0xb0] sm:$0x80]
        %v8006 = vld [vmem:[#allocation3 + $0xd0] sm:$0x80]
        %v8007 = vld [vmem:[#allocation3 + $0xf0] sm:$0x80]
        %v8016 = vunpack.c.h.b16 %v8000
        %v8017 = vunpack.c.h.b16 %v8001
        %v8018 = vunpack.c.h.b16 %v8002
        %v8019 = vunpack.c.h.b16 %v8003
        %v8020 = vunpack.c.h.b16 %v8004
        %v8021 = vunpack.c.h.b16 %v8005
        %v8022 = vunpack.c.h.b16 %v8006
        %v8023 = vunpack.c.h.b16 %v8007
        %v8024 = vrot.slane %v8016, 7
        %v8025 = vrot.slane %v8017, 6
        %v8026 = vsel %vm1198, %v8025, %v8024
        %v8027 = vrot.slane %v8018, 5
        %v8028 = vsel %vm1201, %v8027, %v8026
        %v8029 = vrot.slane %v8019, 4
        %v8030 = vsel %vm1204, %v8029, %v8028
        %v8031 = vrot.slane %v8020, 3
        %v8032 = vsel %vm1207, %v8031, %v8030
        %v8033 = vrot.slane %v8021, 2
        %v8034 = vsel %vm1210, %v8033, %v8032
        %v8035 = vrot.slane %v8022, 1
        %v8036 = vsel %vm1213, %v8035, %v8034
        %v8037 = vsel %vm1216, %v8023, %v8036
        %v8038 = vpack.c.b16 %v8037, %v8037
        %v8040 = vsel %vm1223, %v8038, 0
        %8042 = vmatprep.subr.bf16.mxu0 0
        %8043 = vmatpush1.bf16.msra.mxu0 %v8040
        %8044 = vmatprep.subr.bf16.mxu0 0
        %8045 = vmatpush1.bf16.msra.mxu0 0
        %8046 = vmatprep.subr.bf16.mxu0 0
        %8047 = vmatpush1.bf16.msra.mxu0 0
        %8048 = vmatprep.subr.bf16.mxu0 0
        %8049 = vmatpush1.bf16.msra.mxu0 0
        %8050 = vmatprep.subr.bf16.mxu0 0
        %8051 = vmatpush1.bf16.msra.mxu0 0
        %8052 = vmatprep.subr.bf16.mxu0 0
        %8053 = vmatpush1.bf16.msra.mxu0 0
        %8054 = vmatprep.subr.bf16.mxu0 0
        %8055 = vmatpush1.bf16.msra.mxu0 0
        %8056 = vmatprep.subr.bf16.mxu0 0
        %8057 = vmatpush1.bf16.msra.mxu0 0
        %8058 = vmatprep.subr.bf16.mxu0 0
        %8059 = vmatpush1.bf16.msra.mxu0 0
        %8060 = vmatprep.subr.bf16.mxu0 0
        %8061 = vmatpush1.bf16.msra.mxu0 0
        %8062 = vmatprep.subr.bf16.mxu0 0
        %8063 = vmatpush1.bf16.msra.mxu0 0
        %8064 = vmatprep.subr.bf16.mxu0 0
        %8065 = vmatpush1.bf16.msra.mxu0 0
        %8066 = vmatprep.subr.bf16.mxu0 0
        %8067 = vmatpush1.bf16.msra.mxu0 0
        %8068 = vmatprep.subr.bf16.mxu0 0
        %8069 = vmatpush1.bf16.msra.mxu0 0
        %8070 = vmatprep.subr.bf16.mxu0 0
        %8071 = vmatpush1.bf16.msra.mxu0 0
        %8072 = vmatprep.subr.bf16.mxu0 0
        %8073 = vmatpush1.bf16.msra.mxu0 0
        %8074 = vmatprep.mubr.bf16.mxu0 0
        %8075 = vmatmul.mubr.bf16.gmra.mrb[0].mxu0 %v1221
        %v8076 = vpop.f32.mrb[0].mxu0
        %v8077 = vadd.f32 0.0, %v8076
        %v8078 = vpop.f32.mrb[0].mxu0
        %v8079 = vpop.f32.mrb[0].mxu0
        %v8080 = vpop.f32.mrb[0].mxu0
        %8081 = vdwg.mxu0
        %v8083 = vcombine.high %v8077, %v8077
        %v8085 = vunpack.c.l.s4 1966171168
        %v8086 = vunpack.c.0.s8 %v8085
        %v8087 = vlaneseq
        %v8088 = vshrl.u32 %v8087, 7
        %v8089 = vsub.s32 %v8086, %v8088
        %v8090 = vrot.slane %v8077, %v8089
        %v8092 = vunpack.c.l.s4 1966171168
        %v8093 = vunpack.c.0.s8 %v8092
        %v8094 = vlaneseq
        %v8095 = vshrl.u32 %v8094, 7
        %v8096 = vsub.s32 %v8093, %v8095
        %v8097 = vrot.slane %v8083, %v8096
        %v8098 = vcombine.high %v8090, %v8090
        %v8099 = vcombine.high %v8097, %v8097
        %v8101 = vunpack.c.l.s4 1966171168
        %v8102 = vunpack.c.0.s8 %v8101
        %v8103 = vlaneseq
        %v8104 = vshrl.u32 %v8103, 7
        %v8105 = vsub.s32 %v8102, %v8104
        %v8106 = vrot.slane %v8090, %v8105
        %v8108 = vunpack.c.l.s4 1966171168
        %v8109 = vunpack.c.0.s8 %v8108
        %v8110 = vlaneseq
        %v8111 = vshrl.u32 %v8110, 7
        %v8112 = vsub.s32 %v8109, %v8111
        %v8113 = vrot.slane %v8097, %v8112
        %v8115 = vunpack.c.l.s4 1966171168
        %v8116 = vunpack.c.0.s8 %v8115
        %v8117 = vlaneseq
        %v8118 = vshrl.u32 %v8117, 7
        %v8119 = vsub.s32 %v8116, %v8118
        %v8120 = vrot.slane %v8098, %v8119
        %v8122 = vunpack.c.l.s4 1966171168
        %v8123 = vunpack.c.0.s8 %v8122
        %v8124 = vlaneseq
        %v8125 = vshrl.u32 %v8124, 7
        %v8126 = vsub.s32 %v8123, %v8125
        %v8127 = vrot.slane %v8099, %v8126
        %v8128 = vcombine.high %v8106, %v8106
        %v8129 = vcombine.high %v8113, %v8113
        %v8130 = vcombine.high %v8120, %v8120
        %8138 = vst [vmem:[%s206 + $0x2f] sm:$0x1] %v8106
        %8139 = vst [vmem:[%s206 + $0x6f] sm:$0x1] %v8120
        %8140 = vst [vmem:[%s206 + $0xaf] sm:$0x1] %v8128
        %8141 = vst [vmem:[%s206 + $0xef] sm:$0x1] %v8130
        %8142 = vst [vmem:[%s206 + $0x12f] sm:$0x1] %v8113
        %8143 = vst [vmem:[%s206 + $0x16f] sm:$0x1] %v8127
        %8144 = vst [vmem:[%s206 + $0x1af] sm:$0x1] %v8129
        %v8145 = vld [vmem:[#allocation3 + $0x18] sm:$0x1]
        %v8146 = vld [vmem:[#allocation3 + $0x38] sm:$0x1]
        %v8147 = vld [vmem:[#allocation3 + $0x58] sm:$0x1]
        %v8148 = vld [vmem:[#allocation3 + $0x78] sm:$0x1]
        %v8149 = vld [vmem:[#allocation3 + $0x98] sm:$0x1]
        %v8150 = vld [vmem:[#allocation3 + $0xb8] sm:$0x1]
        %v8151 = vld [vmem:[#allocation3 + $0xd8] sm:$0x1]
        %v8152 = vld [vmem:[#allocation3 + $0xf8] sm:$0x1]
        %v8161 = vunpack.c.l.b16 %v8145
        %v8162 = vunpack.c.l.b16 %v8146
        %v8163 = vunpack.c.l.b16 %v8147
        %v8164 = vunpack.c.l.b16 %v8148
        %v8165 = vunpack.c.l.b16 %v8149
        %v8166 = vunpack.c.l.b16 %v8150
        %v8167 = vunpack.c.l.b16 %v8151
        %v8168 = vunpack.c.l.b16 %v8152
        %v8169 = vrot.slane %v8162, 7
        %v8170 = vsel %vm1198, %v8169, %v8161
        %v8171 = vrot.slane %v8163, 6
        %v8172 = vsel %vm1201, %v8171, %v8170
        %v8173 = vrot.slane %v8164, 5
        %v8174 = vsel %vm1204, %v8173, %v8172
        %v8175 = vrot.slane %v8165, 4
        %v8176 = vsel %vm1207, %v8175, %v8174
        %v8177 = vrot.slane %v8166, 3
        %v8178 = vsel %vm1210, %v8177, %v8176
        %v8179 = vrot.slane %v8167, 2
        %v8180 = vsel %vm1213, %v8179, %v8178
        %v8181 = vrot.slane %v8168, 1
        %v8182 = vsel %vm1216, %v8181, %v8180
        %v8183 = vpack.c.b16 %v8182, %v8182
        %v8185 = vsel %vm1223, %v8183, 0
        %8187 = vmatprep.subr.bf16.mxu0 0
        %8188 = vmatpush1.bf16.msra.mxu0 %v8185
        %8189 = vmatprep.subr.bf16.mxu0 0
        %8190 = vmatpush1.bf16.msra.mxu0 0
        %8191 = vmatprep.subr.bf16.mxu0 0
        %8192 = vmatpush1.bf16.msra.mxu0 0
        %8193 = vmatprep.subr.bf16.mxu0 0
        %8194 = vmatpush1.bf16.msra.mxu0 0
        %8195 = vmatprep.subr.bf16.mxu0 0
        %8196 = vmatpush1.bf16.msra.mxu0 0
        %8197 = vmatprep.subr.bf16.mxu0 0
        %8198 = vmatpush1.bf16.msra.mxu0 0
        %8199 = vmatprep.subr.bf16.mxu0 0
        %8200 = vmatpush1.bf16.msra.mxu0 0
        %8201 = vmatprep.subr.bf16.mxu0 0
        %8202 = vmatpush1.bf16.msra.mxu0 0
        %8203 = vmatprep.subr.bf16.mxu0 0
        %8204 = vmatpush1.bf16.msra.mxu0 0
        %8205 = vmatprep.subr.bf16.mxu0 0
        %8206 = vmatpush1.bf16.msra.mxu0 0
        %8207 = vmatprep.subr.bf16.mxu0 0
        %8208 = vmatpush1.bf16.msra.mxu0 0
        %8209 = vmatprep.subr.bf16.mxu0 0
        %8210 = vmatpush1.bf16.msra.mxu0 0
        %8211 = vmatprep.subr.bf16.mxu0 0
        %8212 = vmatpush1.bf16.msra.mxu0 0
        %8213 = vmatprep.subr.bf16.mxu0 0
        %8214 = vmatpush1.bf16.msra.mxu0 0
        %8215 = vmatprep.subr.bf16.mxu0 0
        %8216 = vmatpush1.bf16.msra.mxu0 0
        %8217 = vmatprep.subr.bf16.mxu0 0
        %8218 = vmatpush1.bf16.msra.mxu0 0
        %8219 = vmatprep.mubr.bf16.mxu0 0
        %8220 = vmatmul.mubr.bf16.gmra.mrb[0].mxu0 %v1221
        %v8221 = vpop.f32.mrb[0].mxu0
        %v8222 = vadd.f32 0.0, %v8221
        %v8223 = vpop.f32.mrb[0].mxu0
        %v8224 = vpop.f32.mrb[0].mxu0
        %v8225 = vpop.f32.mrb[0].mxu0
        %8226 = vdwg.mxu0
        %v8228 = vcombine.high %v8222, %v8222
        %v8230 = vunpack.c.l.s4 1966171168
        %v8231 = vunpack.c.0.s8 %v8230
        %v8232 = vlaneseq
        %v8233 = vshrl.u32 %v8232, 7
        %v8234 = vsub.s32 %v8231, %v8233
        %v8235 = vrot.slane %v8222, %v8234
        %v8237 = vunpack.c.l.s4 1966171168
        %v8238 = vunpack.c.0.s8 %v8237
        %v8239 = vlaneseq
        %v8240 = vshrl.u32 %v8239, 7
        %v8241 = vsub.s32 %v8238, %v8240
        %v8242 = vrot.slane %v8228, %v8241
        %v8243 = vcombine.high %v8235, %v8235
        %v8244 = vcombine.high %v8242, %v8242
        %v8246 = vunpack.c.l.s4 1966171168
        %v8247 = vunpack.c.0.s8 %v8246
        %v8248 = vlaneseq
        %v8249 = vshrl.u32 %v8248, 7
        %v8250 = vsub.s32 %v8247, %v8249
        %v8251 = vrot.slane %v8235, %v8250
        %v8253 = vunpack.c.l.s4 1966171168
        %v8254 = vunpack.c.0.s8 %v8253
        %v8255 = vlaneseq
        %v8256 = vshrl.u32 %v8255, 7
        %v8257 = vsub.s32 %v8254, %v8256
        %v8258 = vrot.slane %v8242, %v8257
        %v8260 = vunpack.c.l.s4 1966171168
        %v8261 = vunpack.c.0.s8 %v8260
        %v8262 = vlaneseq
        %v8263 = vshrl.u32 %v8262, 7
        %v8264 = vsub.s32 %v8261, %v8263
        %v8265 = vrot.slane %v8243, %v8264
        %v8267 = vunpack.c.l.s4 1966171168
        %v8268 = vunpack.c.0.s8 %v8267
        %v8269 = vlaneseq
        %v8270 = vshrl.u32 %v8269, 7
        %v8271 = vsub.s32 %v8268, %v8270
        %v8272 = vrot.slane %v8244, %v8271
        %v8273 = vcombine.high %v8251, %v8251
        %v8274 = vcombine.high %v8258, %v8258
        %v8275 = vcombine.high %v8265, %v8265
        %8283 = vst [vmem:[%s206 + $0x30] sm:$0x1] %v8251
        %8284 = vst [vmem:[%s206 + $0x70] sm:$0x1] %v8265
        %8285 = vst [vmem:[%s206 + $0xb0] sm:$0x1] %v8273
        %8286 = vst [vmem:[%s206 + $0xf0] sm:$0x1] %v8275
        %8287 = vst [vmem:[%s206 + $0x130] sm:$0x1] %v8258
        %8288 = vst [vmem:[%s206 + $0x170] sm:$0x1] %v8272
        %8289 = vst [vmem:[%s206 + $0x1b0] sm:$0x1] %v8274
        %v8290 = vld [vmem:[#allocation3 + $0x18] sm:$0x1]
        %v8291 = vld [vmem:[#allocation3 + $0x38] sm:$0x1]
        %v8292 = vld [vmem:[#allocation3 + $0x58] sm:$0x1]
        %v8293 = vld [vmem:[#allocation3 + $0x78] sm:$0x1]
        %v8294 = vld [vmem:[#allocation3 + $0x98] sm:$0x1]
        %v8295 = vld [vmem:[#allocation3 + $0xb8] sm:$0x1]
        %v8296 = vld [vmem:[#allocation3 + $0xd8] sm:$0x1]
        %v8297 = vld [vmem:[#allocation3 + $0xf8] sm:$0x1]
        %v8306 = vunpack.c.l.b16 %v8290
        %v8307 = vunpack.c.l.b16 %v8291
        %v8308 = vunpack.c.l.b16 %v8292
        %v8309 = vunpack.c.l.b16 %v8293
        %v8310 = vunpack.c.l.b16 %v8294
        %v8311 = vunpack.c.l.b16 %v8295
        %v8312 = vunpack.c.l.b16 %v8296
        %v8313 = vunpack.c.l.b16 %v8297
        %v8314 = vrot.slane %v8306, 1
        %v8315 = vsel %vm1198, %v8307, %v8314
        %v8316 = vrot.slane %v8308, 7
        %v8317 = vsel %vm1201, %v8316, %v8315
        %v8318 = vrot.slane %v8309, 6
        %v8319 = vsel %vm1204, %v8318, %v8317
        %v8320 = vrot.slane %v8310, 5
        %v8321 = vsel %vm1207, %v8320, %v8319
        %v8322 = vrot.slane %v8311, 4
        %v8323 = vsel %vm1210, %v8322, %v8321
        %v8324 = vrot.slane %v8312, 3
        %v8325 = vsel %vm1213, %v8324, %v8323
        %v8326 = vrot.slane %v8313, 2
        %v8327 = vsel %vm1216, %v8326, %v8325
        %v8328 = vpack.c.b16 %v8327, %v8327
        %v8330 = vsel %vm1223, %v8328, 0
        %8332 = vmatprep.subr.bf16.mxu0 0
        %8333 = vmatpush1.bf16.msra.mxu0 %v8330
        %8334 = vmatprep.subr.bf16.mxu0 0
        %8335 = vmatpush1.bf16.msra.mxu0 0
        %8336 = vmatprep.subr.bf16.mxu0 0
        %8337 = vmatpush1.bf16.msra.mxu0 0
        %8338 = vmatprep.subr.bf16.mxu0 0
        %8339 = vmatpush1.bf16.msra.mxu0 0
        %8340 = vmatprep.subr.bf16.mxu0 0
        %8341 = vmatpush1.bf16.msra.mxu0 0
        %8342 = vmatprep.subr.bf16.mxu0 0
        %8343 = vmatpush1.bf16.msra.mxu0 0
        %8344 = vmatprep.subr.bf16.mxu0 0
        %8345 = vmatpush1.bf16.msra.mxu0 0
        %8346 = vmatprep.subr.bf16.mxu0 0
        %8347 = vmatpush1.bf16.msra.mxu0 0
        %8348 = vmatprep.subr.bf16.mxu0 0
        %8349 = vmatpush1.bf16.msra.mxu0 0
        %8350 = vmatprep.subr.bf16.mxu0 0
        %8351 = vmatpush1.bf16.msra.mxu0 0
        %8352 = vmatprep.subr.bf16.mxu0 0
        %8353 = vmatpush1.bf16.msra.mxu0 0
        %8354 = vmatprep.subr.bf16.mxu0 0
        %8355 = vmatpush1.bf16.msra.mxu0 0
        %8356 = vmatprep.subr.bf16.mxu0 0
        %8357 = vmatpush1.bf16.msra.mxu0 0
        %8358 = vmatprep.subr.bf16.mxu0 0
        %8359 = vmatpush1.bf16.msra.mxu0 0
        %8360 = vmatprep.subr.bf16.mxu0 0
        %8361 = vmatpush1.bf16.msra.mxu0 0
        %8362 = vmatprep.subr.bf16.mxu0 0
        %8363 = vmatpush1.bf16.msra.mxu0 0
        %8364 = vmatprep.mubr.bf16.mxu0 0
        %8365 = vmatmul.mubr.bf16.gmra.mrb[0].mxu0 %v1221
        %v8366 = vpop.f32.mrb[0].mxu0
        %v8367 = vadd.f32 0.0, %v8366
        %v8368 = vpop.f32.mrb[0].mxu0
        %v8369 = vpop.f32.mrb[0].mxu0
        %v8370 = vpop.f32.mrb[0].mxu0
        %8371 = vdwg.mxu0
        %v8373 = vcombine.high %v8367, %v8367
        %v8375 = vunpack.c.l.s4 1966171168
        %v8376 = vunpack.c.0.s8 %v8375
        %v8377 = vlaneseq
        %v8378 = vshrl.u32 %v8377, 7
        %v8379 = vsub.s32 %v8376, %v8378
        %v8380 = vrot.slane %v8367, %v8379
        %v8382 = vunpack.c.l.s4 1966171168
        %v8383 = vunpack.c.0.s8 %v8382
        %v8384 = vlaneseq
        %v8385 = vshrl.u32 %v8384, 7
        %v8386 = vsub.s32 %v8383, %v8385
        %v8387 = vrot.slane %v8373, %v8386
        %v8388 = vcombine.high %v8380, %v8380
        %v8389 = vcombine.high %v8387, %v8387
        %v8391 = vunpack.c.l.s4 1966171168
        %v8392 = vunpack.c.0.s8 %v8391
        %v8393 = vlaneseq
        %v8394 = vshrl.u32 %v8393, 7
        %v8395 = vsub.s32 %v8392, %v8394
        %v8396 = vrot.slane %v8380, %v8395
        %v8398 = vunpack.c.l.s4 1966171168
        %v8399 = vunpack.c.0.s8 %v8398
        %v8400 = vlaneseq
        %v8401 = vshrl.u32 %v8400, 7
        %v8402 = vsub.s32 %v8399, %v8401
        %v8403 = vrot.slane %v8387, %v8402
        %v8405 = vunpack.c.l.s4 1966171168
        %v8406 = vunpack.c.0.s8 %v8405
        %v8407 = vlaneseq
        %v8408 = vshrl.u32 %v8407, 7
        %v8409 = vsub.s32 %v8406, %v8408
        %v8410 = vrot.slane %v8388, %v8409
        %v8412 = vunpack.c.l.s4 1966171168
        %v8413 = vunpack.c.0.s8 %v8412
        %v8414 = vlaneseq
        %v8415 = vshrl.u32 %v8414, 7
        %v8416 = vsub.s32 %v8413, %v8415
        %v8417 = vrot.slane %v8389, %v8416
        %v8418 = vcombine.high %v8396, %v8396
        %v8419 = vcombine.high %v8403, %v8403
        %v8420 = vcombine.high %v8410, %v8410
        %8428 = vst [vmem:[%s206 + $0x31] sm:$0x1] %v8396
        %8429 = vst [vmem:[%s206 + $0x71] sm:$0x1] %v8410
        %8430 = vst [vmem:[%s206 + $0xb1] sm:$0x1] %v8418
        %8431 = vst [vmem:[%s206 + $0xf1] sm:$0x1] %v8420
        %8432 = vst [vmem:[%s206 + $0x131] sm:$0x1] %v8403
        %8433 = vst [vmem:[%s206 + $0x171] sm:$0x1] %v8417
        %8434 = vst [vmem:[%s206 + $0x1b1] sm:$0x1] %v8419
        %v8435 = vld [vmem:[#allocation3 + $0x18] sm:$0x2]
        %v8436 = vld [vmem:[#allocation3 + $0x38] sm:$0x2]
        %v8437 = vld [vmem:[#allocation3 + $0x58] sm:$0x2]
        %v8438 = vld [vmem:[#allocation3 + $0x78] sm:$0x2]
        %v8439 = vld [vmem:[#allocation3 + $0x98] sm:$0x2]
        %v8440 = vld [vmem:[#allocation3 + $0xb8] sm:$0x2]
        %v8441 = vld [vmem:[#allocation3 + $0xd8] sm:$0x2]
        %v8442 = vld [vmem:[#allocation3 + $0xf8] sm:$0x2]
        %v8451 = vunpack.c.l.b16 %v8435
        %v8452 = vunpack.c.l.b16 %v8436
        %v8453 = vunpack.c.l.b16 %v8437
        %v8454 = vunpack.c.l.b16 %v8438
        %v8455 = vunpack.c.l.b16 %v8439
        %v8456 = vunpack.c.l.b16 %v8440
        %v8457 = vunpack.c.l.b16 %v8441
        %v8458 = vunpack.c.l.b16 %v8442
        %v8459 = vrot.slane %v8451, 2
        %v8460 = vrot.slane %v8452, 1
        %v8461 = vsel %vm1198, %v8460, %v8459
        %v8462 = vsel %vm1201, %v8453, %v8461
        %v8463 = vrot.slane %v8454, 7
        %v8464 = vsel %vm1204, %v8463, %v8462
        %v8465 = vrot.slane %v8455, 6
        %v8466 = vsel %vm1207, %v8465, %v8464
        %v8467 = vrot.slane %v8456, 5
        %v8468 = vsel %vm1210, %v8467, %v8466
        %v8469 = vrot.slane %v8457, 4
        %v8470 = vsel %vm1213, %v8469, %v8468
        %v8471 = vrot.slane %v8458, 3
        %v8472 = vsel %vm1216, %v8471, %v8470
        %v8473 = vpack.c.b16 %v8472, %v8472
        %v8475 = vsel %vm1223, %v8473, 0
        %8477 = vmatprep.subr.bf16.mxu0 0
        %8478 = vmatpush1.bf16.msra.mxu0 %v8475
        %8479 = vmatprep.subr.bf16.mxu0 0
        %8480 = vmatpush1.bf16.msra.mxu0 0
        %8481 = vmatprep.subr.bf16.mxu0 0
        %8482 = vmatpush1.bf16.msra.mxu0 0
        %8483 = vmatprep.subr.bf16.mxu0 0
        %8484 = vmatpush1.bf16.msra.mxu0 0
        %8485 = vmatprep.subr.bf16.mxu0 0
        %8486 = vmatpush1.bf16.msra.mxu0 0
        %8487 = vmatprep.subr.bf16.mxu0 0
        %8488 = vmatpush1.bf16.msra.mxu0 0
        %8489 = vmatprep.subr.bf16.mxu0 0
        %8490 = vmatpush1.bf16.msra.mxu0 0
        %8491 = vmatprep.subr.bf16.mxu0 0
        %8492 = vmatpush1.bf16.msra.mxu0 0
        %8493 = vmatprep.subr.bf16.mxu0 0
        %8494 = vmatpush1.bf16.msra.mxu0 0
        %8495 = vmatprep.subr.bf16.mxu0 0
        %8496 = vmatpush1.bf16.msra.mxu0 0
        %8497 = vmatprep.subr.bf16.mxu0 0
        %8498 = vmatpush1.bf16.msra.mxu0 0
        %8499 = vmatprep.subr.bf16.mxu0 0
        %8500 = vmatpush1.bf16.msra.mxu0 0
        %8501 = vmatprep.subr.bf16.mxu0 0
        %8502 = vmatpush1.bf16.msra.mxu0 0
        %8503 = vmatprep.subr.bf16.mxu0 0
        %8504 = vmatpush1.bf16.msra.mxu0 0
        %8505 = vmatprep.subr.bf16.mxu0 0
        %8506 = vmatpush1.bf16.msra.mxu0 0
        %8507 = vmatprep.subr.bf16.mxu0 0
        %8508 = vmatpush1.bf16.msra.mxu0 0
        %8509 = vmatprep.mubr.bf16.mxu0 0
        %8510 = vmatmul.mubr.bf16.gmra.mrb[0].mxu0 %v1221
        %v8511 = vpop.f32.mrb[0].mxu0
        %v8512 = vadd.f32 0.0, %v8511
        %v8513 = vpop.f32.mrb[0].mxu0
        %v8514 = vpop.f32.mrb[0].mxu0
        %v8515 = vpop.f32.mrb[0].mxu0
        %8516 = vdwg.mxu0
        %v8518 = vcombine.high %v8512, %v8512
        %v8520 = vunpack.c.l.s4 1966171168
        %v8521 = vunpack.c.0.s8 %v8520
        %v8522 = vlaneseq
        %v8523 = vshrl.u32 %v8522, 7
        %v8524 = vsub.s32 %v8521, %v8523
        %v8525 = vrot.slane %v8512, %v8524
        %v8527 = vunpack.c.l.s4 1966171168
        %v8528 = vunpack.c.0.s8 %v8527
        %v8529 = vlaneseq
        %v8530 = vshrl.u32 %v8529, 7
        %v8531 = vsub.s32 %v8528, %v8530
        %v8532 = vrot.slane %v8518, %v8531
        %v8533 = vcombine.high %v8525, %v8525
        %v8534 = vcombine.high %v8532, %v8532
        %v8536 = vunpack.c.l.s4 1966171168
        %v8537 = vunpack.c.0.s8 %v8536
        %v8538 = vlaneseq
        %v8539 = vshrl.u32 %v8538, 7
        %v8540 = vsub.s32 %v8537, %v8539
        %v8541 = vrot.slane %v8525, %v8540
        %v8543 = vunpack.c.l.s4 1966171168
        %v8544 = vunpack.c.0.s8 %v8543
        %v8545 = vlaneseq
        %v8546 = vshrl.u32 %v8545, 7
        %v8547 = vsub.s32 %v8544, %v8546
        %v8548 = vrot.slane %v8532, %v8547
        %v8550 = vunpack.c.l.s4 1966171168
        %v8551 = vunpack.c.0.s8 %v8550
        %v8552 = vlaneseq
        %v8553 = vshrl.u32 %v8552, 7
        %v8554 = vsub.s32 %v8551, %v8553
        %v8555 = vrot.slane %v8533, %v8554
        %v8557 = vunpack.c.l.s4 1966171168
        %v8558 = vunpack.c.0.s8 %v8557
        %v8559 = vlaneseq
        %v8560 = vshrl.u32 %v8559, 7
        %v8561 = vsub.s32 %v8558, %v8560
        %v8562 = vrot.slane %v8534, %v8561
        %v8563 = vcombine.high %v8541, %v8541
        %v8564 = vcombine.high %v8548, %v8548
        %v8565 = vcombine.high %v8555, %v8555
        %8573 = vst [vmem:[%s206 + $0x32] sm:$0x1] %v8541
        %8574 = vst [vmem:[%s206 + $0x72] sm:$0x1] %v8555
        %8575 = vst [vmem:[%s206 + $0xb2] sm:$0x1] %v8563
        %8576 = vst [vmem:[%s206 + $0xf2] sm:$0x1] %v8565
        %8577 = vst [vmem:[%s206 + $0x132] sm:$0x1] %v8548
        %8578 = vst [vmem:[%s206 + $0x172] sm:$0x1] %v8562
        %8579 = vst [vmem:[%s206 + $0x1b2] sm:$0x1] %v8564
        %v8580 = vld [vmem:[#allocation3 + $0x18] sm:$0x2]
        %v8581 = vld [vmem:[#allocation3 + $0x38] sm:$0x2]
        %v8582 = vld [vmem:[#allocation3 + $0x58] sm:$0x2]
        %v8583 = vld [vmem:[#allocation3 + $0x78] sm:$0x2]
        %v8584 = vld [vmem:[#allocation3 + $0x98] sm:$0x2]
        %v8585 = vld [vmem:[#allocation3 + $0xb8] sm:$0x2]
        %v8586 = vld [vmem:[#allocation3 + $0xd8] sm:$0x2]
        %v8587 = vld [vmem:[#allocation3 + $0xf8] sm:$0x2]
        %v8596 = vunpack.c.l.b16 %v8580
        %v8597 = vunpack.c.l.b16 %v8581
        %v8598 = vunpack.c.l.b16 %v8582
        %v8599 = vunpack.c.l.b16 %v8583
        %v8600 = vunpack.c.l.b16 %v8584
        %v8601 = vunpack.c.l.b16 %v8585
        %v8602 = vunpack.c.l.b16 %v8586
        %v8603 = vunpack.c.l.b16 %v8587
        %v8604 = vrot.slane %v8596, 3
        %v8605 = vrot.slane %v8597, 2
        %v8606 = vsel %vm1198, %v8605, %v8604
        %v8607 = vrot.slane %v8598, 1
        %v8608 = vsel %vm1201, %v8607, %v8606
        %v8609 = vsel %vm1204, %v8599, %v8608
        %v8610 = vrot.slane %v8600, 7
        %v8611 = vsel %vm1207, %v8610, %v8609
        %v8612 = vrot.slane %v8601, 6
        %v8613 = vsel %vm1210, %v8612, %v8611
        %v8614 = vrot.slane %v8602, 5
        %v8615 = vsel %vm1213, %v8614, %v8613
        %v8616 = vrot.slane %v8603, 4
        %v8617 = vsel %vm1216, %v8616, %v8615
        %v8618 = vpack.c.b16 %v8617, %v8617
        %v8620 = vsel %vm1223, %v8618, 0
        %8622 = vmatprep.subr.bf16.mxu0 0
        %8623 = vmatpush1.bf16.msra.mxu0 %v8620
        %8624 = vmatprep.subr.bf16.mxu0 0
        %8625 = vmatpush1.bf16.msra.mxu0 0
        %8626 = vmatprep.subr.bf16.mxu0 0
        %8627 = vmatpush1.bf16.msra.mxu0 0
        %8628 = vmatprep.subr.bf16.mxu0 0
        %8629 = vmatpush1.bf16.msra.mxu0 0
        %8630 = vmatprep.subr.bf16.mxu0 0
        %8631 = vmatpush1.bf16.msra.mxu0 0
        %8632 = vmatprep.subr.bf16.mxu0 0
        %8633 = vmatpush1.bf16.msra.mxu0 0
        %8634 = vmatprep.subr.bf16.mxu0 0
        %8635 = vmatpush1.bf16.msra.mxu0 0
        %8636 = vmatprep.subr.bf16.mxu0 0
        %8637 = vmatpush1.bf16.msra.mxu0 0
        %8638 = vmatprep.subr.bf16.mxu0 0
        %8639 = vmatpush1.bf16.msra.mxu0 0
        %8640 = vmatprep.subr.bf16.mxu0 0
        %8641 = vmatpush1.bf16.msra.mxu0 0
        %8642 = vmatprep.subr.bf16.mxu0 0
        %8643 = vmatpush1.bf16.msra.mxu0 0
        %8644 = vmatprep.subr.bf16.mxu0 0
        %8645 = vmatpush1.bf16.msra.mxu0 0
        %8646 = vmatprep.subr.bf16.mxu0 0
        %8647 = vmatpush1.bf16.msra.mxu0 0
        %8648 = vmatprep.subr.bf16.mxu0 0
        %8649 = vmatpush1.bf16.msra.mxu0 0
        %8650 = vmatprep.subr.bf16.mxu0 0
        %8651 = vmatpush1.bf16.msra.mxu0 0
        %8652 = vmatprep.subr.bf16.mxu0 0
        %8653 = vmatpush1.bf16.msra.mxu0 0
        %8654 = vmatprep.mubr.bf16.mxu0 0
        %8655 = vmatmul.mubr.bf16.gmra.mrb[0].mxu0 %v1221
        %v8656 = vpop.f32.mrb[0].mxu0
        %v8657 = vadd.f32 0.0, %v8656
        %v8658 = vpop.f32.mrb[0].mxu0
        %v8659 = vpop.f32.mrb[0].mxu0
        %v8660 = vpop.f32.mrb[0].mxu0
        %8661 = vdwg.mxu0
        %v8663 = vcombine.high %v8657, %v8657
        %v8665 = vunpack.c.l.s4 1966171168
        %v8666 = vunpack.c.0.s8 %v8665
        %v8667 = vlaneseq
        %v8668 = vshrl.u32 %v8667, 7
        %v8669 = vsub.s32 %v8666, %v8668
        %v8670 = vrot.slane %v8657, %v8669
        %v8672 = vunpack.c.l.s4 1966171168
        %v8673 = vunpack.c.0.s8 %v8672
        %v8674 = vlaneseq
        %v8675 = vshrl.u32 %v8674, 7
        %v8676 = vsub.s32 %v8673, %v8675
        %v8677 = vrot.slane %v8663, %v8676
        %v8678 = vcombine.high %v8670, %v8670
        %v8679 = vcombine.high %v8677, %v8677
        %v8681 = vunpack.c.l.s4 1966171168
        %v8682 = vunpack.c.0.s8 %v8681
        %v8683 = vlaneseq
        %v8684 = vshrl.u32 %v8683, 7
        %v8685 = vsub.s32 %v8682, %v8684
        %v8686 = vrot.slane %v8670, %v8685
        %v8688 = vunpack.c.l.s4 1966171168
        %v8689 = vunpack.c.0.s8 %v8688
        %v8690 = vlaneseq
        %v8691 = vshrl.u32 %v8690, 7
        %v8692 = vsub.s32 %v8689, %v8691
        %v8693 = vrot.slane %v8677, %v8692
        %v8695 = vunpack.c.l.s4 1966171168
        %v8696 = vunpack.c.0.s8 %v8695
        %v8697 = vlaneseq
        %v8698 = vshrl.u32 %v8697, 7
        %v8699 = vsub.s32 %v8696, %v8698
        %v8700 = vrot.slane %v8678, %v8699
        %v8702 = vunpack.c.l.s4 1966171168
        %v8703 = vunpack.c.0.s8 %v8702
        %v8704 = vlaneseq
        %v8705 = vshrl.u32 %v8704, 7
        %v8706 = vsub.s32 %v8703, %v8705
        %v8707 = vrot.slane %v8679, %v8706
        %v8708 = vcombine.high %v8686, %v8686
        %v8709 = vcombine.high %v8693, %v8693
        %v8710 = vcombine.high %v8700, %v8700
        %8718 = vst [vmem:[%s206 + $0x33] sm:$0x1] %v8686
        %8719 = vst [vmem:[%s206 + $0x73] sm:$0x1] %v8700
        %8720 = vst [vmem:[%s206 + $0xb3] sm:$0x1] %v8708
        %8721 = vst [vmem:[%s206 + $0xf3] sm:$0x1] %v8710
        %8722 = vst [vmem:[%s206 + $0x133] sm:$0x1] %v8693
        %8723 = vst [vmem:[%s206 + $0x173] sm:$0x1] %v8707
        %8724 = vst [vmem:[%s206 + $0x1b3] sm:$0x1] %v8709
        %v8725 = vld [vmem:[#allocation3 + $0x18] sm:$0x4]
        %v8726 = vld [vmem:[#allocation3 + $0x38] sm:$0x4]
        %v8727 = vld [vmem:[#allocation3 + $0x58] sm:$0x4]
        %v8728 = vld [vmem:[#allocation3 + $0x78] sm:$0x4]
        %v8729 = vld [vmem:[#allocation3 + $0x98] sm:$0x4]
        %v8730 = vld [vmem:[#allocation3 + $0xb8] sm:$0x4]
        %v8731 = vld [vmem:[#allocation3 + $0xd8] sm:$0x4]
        %v8732 = vld [vmem:[#allocation3 + $0xf8] sm:$0x4]
        %v8741 = vunpack.c.l.b16 %v8725
        %v8742 = vunpack.c.l.b16 %v8726
        %v8743 = vunpack.c.l.b16 %v8727
        %v8744 = vunpack.c.l.b16 %v8728
        %v8745 = vunpack.c.l.b16 %v8729
        %v8746 = vunpack.c.l.b16 %v8730
        %v8747 = vunpack.c.l.b16 %v8731
        %v8748 = vunpack.c.l.b16 %v8732
        %v8749 = vrot.slane %v8741, 4
        %v8750 = vrot.slane %v8742, 3
        %v8751 = vsel %vm1198, %v8750, %v8749
        %v8752 = vrot.slane %v8743, 2
        %v8753 = vsel %vm1201, %v8752, %v8751
        %v8754 = vrot.slane %v8744, 1
        %v8755 = vsel %vm1204, %v8754, %v8753
        %v8756 = vsel %vm1207, %v8745, %v8755
        %v8757 = vrot.slane %v8746, 7
        %v8758 = vsel %vm1210, %v8757, %v8756
        %v8759 = vrot.slane %v8747, 6
        %v8760 = vsel %vm1213, %v8759, %v8758
        %v8761 = vrot.slane %v8748, 5
        %v8762 = vsel %vm1216, %v8761, %v8760
        %v8763 = vpack.c.b16 %v8762, %v8762
        %v8765 = vsel %vm1223, %v8763, 0
        %8767 = vmatprep.subr.bf16.mxu0 0
        %8768 = vmatpush1.bf16.msra.mxu0 %v8765
        %8769 = vmatprep.subr.bf16.mxu0 0
        %8770 = vmatpush1.bf16.msra.mxu0 0
        %8771 = vmatprep.subr.bf16.mxu0 0
        %8772 = vmatpush1.bf16.msra.mxu0 0
        %8773 = vmatprep.subr.bf16.mxu0 0
        %8774 = vmatpush1.bf16.msra.mxu0 0
        %8775 = vmatprep.subr.bf16.mxu0 0
        %8776 = vmatpush1.bf16.msra.mxu0 0
        %8777 = vmatprep.subr.bf16.mxu0 0
        %8778 = vmatpush1.bf16.msra.mxu0 0
        %8779 = vmatprep.subr.bf16.mxu0 0
        %8780 = vmatpush1.bf16.msra.mxu0 0
        %8781 = vmatprep.subr.bf16.mxu0 0
        %8782 = vmatpush1.bf16.msra.mxu0 0
        %8783 = vmatprep.subr.bf16.mxu0 0
        %8784 = vmatpush1.bf16.msra.mxu0 0
        %8785 = vmatprep.subr.bf16.mxu0 0
        %8786 = vmatpush1.bf16.msra.mxu0 0
        %8787 = vmatprep.subr.bf16.mxu0 0
        %8788 = vmatpush1.bf16.msra.mxu0 0
        %8789 = vmatprep.subr.bf16.mxu0 0
        %8790 = vmatpush1.bf16.msra.mxu0 0
        %8791 = vmatprep.subr.bf16.mxu0 0
        %8792 = vmatpush1.bf16.msra.mxu0 0
        %8793 = vmatprep.subr.bf16.mxu0 0
        %8794 = vmatpush1.bf16.msra.mxu0 0
        %8795 = vmatprep.subr.bf16.mxu0 0
        %8796 = vmatpush1.bf16.msra.mxu0 0
        %8797 = vmatprep.subr.bf16.mxu0 0
        %8798 = vmatpush1.bf16.msra.mxu0 0
        %8799 = vmatprep.mubr.bf16.mxu0 0
        %8800 = vmatmul.mubr.bf16.gmra.mrb[0].mxu0 %v1221
        %v8801 = vpop.f32.mrb[0].mxu0
        %v8802 = vadd.f32 0.0, %v8801
        %v8803 = vpop.f32.mrb[0].mxu0
        %v8804 = vpop.f32.mrb[0].mxu0
        %v8805 = vpop.f32.mrb[0].mxu0
        %8806 = vdwg.mxu0
        %v8808 = vcombine.high %v8802, %v8802
        %v8810 = vunpack.c.l.s4 1966171168
        %v8811 = vunpack.c.0.s8 %v8810
        %v8812 = vlaneseq
        %v8813 = vshrl.u32 %v8812, 7
        %v8814 = vsub.s32 %v8811, %v8813
        %v8815 = vrot.slane %v8802, %v8814
        %v8817 = vunpack.c.l.s4 1966171168
        %v8818 = vunpack.c.0.s8 %v8817
        %v8819 = vlaneseq
        %v8820 = vshrl.u32 %v8819, 7
        %v8821 = vsub.s32 %v8818, %v8820
        %v8822 = vrot.slane %v8808, %v8821
        %v8823 = vcombine.high %v8815, %v8815
        %v8824 = vcombine.high %v8822, %v8822
        %v8826 = vunpack.c.l.s4 1966171168
        %v8827 = vunpack.c.0.s8 %v8826
        %v8828 = vlaneseq
        %v8829 = vshrl.u32 %v8828, 7
        %v8830 = vsub.s32 %v8827, %v8829
        %v8831 = vrot.slane %v8815, %v8830
        %v8833 = vunpack.c.l.s4 1966171168
        %v8834 = vunpack.c.0.s8 %v8833
        %v8835 = vlaneseq
        %v8836 = vshrl.u32 %v8835, 7
        %v8837 = vsub.s32 %v8834, %v8836
        %v8838 = vrot.slane %v8822, %v8837
        %v8840 = vunpack.c.l.s4 1966171168
        %v8841 = vunpack.c.0.s8 %v8840
        %v8842 = vlaneseq
        %v8843 = vshrl.u32 %v8842, 7
        %v8844 = vsub.s32 %v8841, %v8843
        %v8845 = vrot.slane %v8823, %v8844
        %v8847 = vunpack.c.l.s4 1966171168
        %v8848 = vunpack.c.0.s8 %v8847
        %v8849 = vlaneseq
        %v8850 = vshrl.u32 %v8849, 7
        %v8851 = vsub.s32 %v8848, %v8850
        %v8852 = vrot.slane %v8824, %v8851
        %v8853 = vcombine.high %v8831, %v8831
        %v8854 = vcombine.high %v8838, %v8838
        %v8855 = vcombine.high %v8845, %v8845
        %8863 = vst [vmem:[%s206 + $0x34] sm:$0x1] %v8831
        %8864 = vst [vmem:[%s206 + $0x74] sm:$0x1] %v8845
        %8865 = vst [vmem:[%s206 + $0xb4] sm:$0x1] %v8853
        %8866 = vst [vmem:[%s206 + $0xf4] sm:$0x1] %v8855
        %8867 = vst [vmem:[%s206 + $0x134] sm:$0x1] %v8838
        %8868 = vst [vmem:[%s206 + $0x174] sm:$0x1] %v8852
        %8869 = vst [vmem:[%s206 + $0x1b4] sm:$0x1] %v8854
        %v8870 = vld [vmem:[#allocation3 + $0x18] sm:$0x4]
        %v8871 = vld [vmem:[#allocation3 + $0x38] sm:$0x4]
        %v8872 = vld [vmem:[#allocation3 + $0x58] sm:$0x4]
        %v8873 = vld [vmem:[#allocation3 + $0x78] sm:$0x4]
        %v8874 = vld [vmem:[#allocation3 + $0x98] sm:$0x4]
        %v8875 = vld [vmem:[#allocation3 + $0xb8] sm:$0x4]
        %v8876 = vld [vmem:[#allocation3 + $0xd8] sm:$0x4]
        %v8877 = vld [vmem:[#allocation3 + $0xf8] sm:$0x4]
        %v8886 = vunpack.c.l.b16 %v8870
        %v8887 = vunpack.c.l.b16 %v8871
        %v8888 = vunpack.c.l.b16 %v8872
        %v8889 = vunpack.c.l.b16 %v8873
        %v8890 = vunpack.c.l.b16 %v8874
        %v8891 = vunpack.c.l.b16 %v8875
        %v8892 = vunpack.c.l.b16 %v8876
        %v8893 = vunpack.c.l.b16 %v8877
        %v8894 = vrot.slane %v8886, 5
        %v8895 = vrot.slane %v8887, 4
        %v8896 = vsel %vm1198, %v8895, %v8894
        %v8897 = vrot.slane %v8888, 3
        %v8898 = vsel %vm1201, %v8897, %v8896
        %v8899 = vrot.slane %v8889, 2
        %v8900 = vsel %vm1204, %v8899, %v8898
        %v8901 = vrot.slane %v8890, 1
        %v8902 = vsel %vm1207, %v8901, %v8900
        %v8903 = vsel %vm1210, %v8891, %v8902
        %v8904 = vrot.slane %v8892, 7
        %v8905 = vsel %vm1213, %v8904, %v8903
        %v8906 = vrot.slane %v8893, 6
        %v8907 = vsel %vm1216, %v8906, %v8905
        %v8908 = vpack.c.b16 %v8907, %v8907
        %v8910 = vsel %vm1223, %v8908, 0
        %8912 = vmatprep.subr.bf16.mxu0 0
        %8913 = vmatpush1.bf16.msra.mxu0 %v8910
        %8914 = vmatprep.subr.bf16.mxu0 0
        %8915 = vmatpush1.bf16.msra.mxu0 0
        %8916 = vmatprep.subr.bf16.mxu0 0
        %8917 = vmatpush1.bf16.msra.mxu0 0
        %8918 = vmatprep.subr.bf16.mxu0 0
        %8919 = vmatpush1.bf16.msra.mxu0 0
        %8920 = vmatprep.subr.bf16.mxu0 0
        %8921 = vmatpush1.bf16.msra.mxu0 0
        %8922 = vmatprep.subr.bf16.mxu0 0
        %8923 = vmatpush1.bf16.msra.mxu0 0
        %8924 = vmatprep.subr.bf16.mxu0 0
        %8925 = vmatpush1.bf16.msra.mxu0 0
        %8926 = vmatprep.subr.bf16.mxu0 0
        %8927 = vmatpush1.bf16.msra.mxu0 0
        %8928 = vmatprep.subr.bf16.mxu0 0
        %8929 = vmatpush1.bf16.msra.mxu0 0
        %8930 = vmatprep.subr.bf16.mxu0 0
        %8931 = vmatpush1.bf16.msra.mxu0 0
        %8932 = vmatprep.subr.bf16.mxu0 0
        %8933 = vmatpush1.bf16.msra.mxu0 0
        %8934 = vmatprep.subr.bf16.mxu0 0
        %8935 = vmatpush1.bf16.msra.mxu0 0
        %8936 = vmatprep.subr.bf16.mxu0 0
        %8937 = vmatpush1.bf16.msra.mxu0 0
        %8938 = vmatprep.subr.bf16.mxu0 0
        %8939 = vmatpush1.bf16.msra.mxu0 0
        %8940 = vmatprep.subr.bf16.mxu0 0
        %8941 = vmatpush1.bf16.msra.mxu0 0
        %8942 = vmatprep.subr.bf16.mxu0 0
        %8943 = vmatpush1.bf16.msra.mxu0 0
        %8944 = vmatprep.mubr.bf16.mxu0 0
        %8945 = vmatmul.mubr.bf16.gmra.mrb[0].mxu0 %v1221
        %v8946 = vpop.f32.mrb[0].mxu0
        %v8947 = vadd.f32 0.0, %v8946
        %v8948 = vpop.f32.mrb[0].mxu0
        %v8949 = vpop.f32.mrb[0].mxu0
        %v8950 = vpop.f32.mrb[0].mxu0
        %8951 = vdwg.mxu0
        %v8953 = vcombine.high %v8947, %v8947
        %v8955 = vunpack.c.l.s4 1966171168
        %v8956 = vunpack.c.0.s8 %v8955
        %v8957 = vlaneseq
        %v8958 = vshrl.u32 %v8957, 7
        %v8959 = vsub.s32 %v8956, %v8958
        %v8960 = vrot.slane %v8947, %v8959
        %v8962 = vunpack.c.l.s4 1966171168
        %v8963 = vunpack.c.0.s8 %v8962
        %v8964 = vlaneseq
        %v8965 = vshrl.u32 %v8964, 7
        %v8966 = vsub.s32 %v8963, %v8965
        %v8967 = vrot.slane %v8953, %v8966
        %v8968 = vcombine.high %v8960, %v8960
        %v8969 = vcombine.high %v8967, %v8967
        %v8971 = vunpack.c.l.s4 1966171168
        %v8972 = vunpack.c.0.s8 %v8971
        %v8973 = vlaneseq
        %v8974 = vshrl.u32 %v8973, 7
        %v8975 = vsub.s32 %v8972, %v8974
        %v8976 = vrot.slane %v8960, %v8975
        %v8978 = vunpack.c.l.s4 1966171168
        %v8979 = vunpack.c.0.s8 %v8978
        %v8980 = vlaneseq
        %v8981 = vshrl.u32 %v8980, 7
        %v8982 = vsub.s32 %v8979, %v8981
        %v8983 = vrot.slane %v8967, %v8982
        %v8985 = vunpack.c.l.s4 1966171168
        %v8986 = vunpack.c.0.s8 %v8985
        %v8987 = vlaneseq
        %v8988 = vshrl.u32 %v8987, 7
        %v8989 = vsub.s32 %v8986, %v8988
        %v8990 = vrot.slane %v8968, %v8989
        %v8992 = vunpack.c.l.s4 1966171168
        %v8993 = vunpack.c.0.s8 %v8992
        %v8994 = vlaneseq
        %v8995 = vshrl.u32 %v8994, 7
        %v8996 = vsub.s32 %v8993, %v8995
        %v8997 = vrot.slane %v8969, %v8996
        %v8998 = vcombine.high %v8976, %v8976
        %v8999 = vcombine.high %v8983, %v8983
        %v9000 = vcombine.high %v8990, %v8990
        %9008 = vst [vmem:[%s206 + $0x35] sm:$0x1] %v8976
        %9009 = vst [vmem:[%s206 + $0x75] sm:$0x1] %v8990
        %9010 = vst [vmem:[%s206 + $0xb5] sm:$0x1] %v8998
        %9011 = vst [vmem:[%s206 + $0xf5] sm:$0x1] %v9000
        %9012 = vst [vmem:[%s206 + $0x135] sm:$0x1] %v8983
        %9013 = vst [vmem:[%s206 + $0x175] sm:$0x1] %v8997
        %9014 = vst [vmem:[%s206 + $0x1b5] sm:$0x1] %v8999
        %v9015 = vld [vmem:[#allocation3 + $0x18] sm:$0x8]
        %v9016 = vld [vmem:[#allocation3 + $0x38] sm:$0x8]
        %v9017 = vld [vmem:[#allocation3 + $0x58] sm:$0x8]
        %v9018 = vld [vmem:[#allocation3 + $0x78] sm:$0x8]
        %v9019 = vld [vmem:[#allocation3 + $0x98] sm:$0x8]
        %v9020 = vld [vmem:[#allocation3 + $0xb8] sm:$0x8]
        %v9021 = vld [vmem:[#allocation3 + $0xd8] sm:$0x8]
        %v9022 = vld [vmem:[#allocation3 + $0xf8] sm:$0x8]
        %v9031 = vunpack.c.l.b16 %v9015
        %v9032 = vunpack.c.l.b16 %v9016
        %v9033 = vunpack.c.l.b16 %v9017
        %v9034 = vunpack.c.l.b16 %v9018
        %v9035 = vunpack.c.l.b16 %v9019
        %v9036 = vunpack.c.l.b16 %v9020
        %v9037 = vunpack.c.l.b16 %v9021
        %v9038 = vunpack.c.l.b16 %v9022
        %v9039 = vrot.slane %v9031, 6
        %v9040 = vrot.slane %v9032, 5
        %v9041 = vsel %vm1198, %v9040, %v9039
        %v9042 = vrot.slane %v9033, 4
        %v9043 = vsel %vm1201, %v9042, %v9041
        %v9044 = vrot.slane %v9034, 3
        %v9045 = vsel %vm1204, %v9044, %v9043
        %v9046 = vrot.slane %v9035, 2
        %v9047 = vsel %vm1207, %v9046, %v9045
        %v9048 = vrot.slane %v9036, 1
        %v9049 = vsel %vm1210, %v9048, %v9047
        %v9050 = vsel %vm1213, %v9037, %v9049
        %v9051 = vrot.slane %v9038, 7
        %v9052 = vsel %vm1216, %v9051, %v9050
        %v9053 = vpack.c.b16 %v9052, %v9052
        %v9055 = vsel %vm1223, %v9053, 0
        %9057 = vmatprep.subr.bf16.mxu0 0
        %9058 = vmatpush1.bf16.msra.mxu0 %v9055
        %9059 = vmatprep.subr.bf16.mxu0 0
        %9060 = vmatpush1.bf16.msra.mxu0 0
        %9061 = vmatprep.subr.bf16.mxu0 0
        %9062 = vmatpush1.bf16.msra.mxu0 0
        %9063 = vmatprep.subr.bf16.mxu0 0
        %9064 = vmatpush1.bf16.msra.mxu0 0
        %9065 = vmatprep.subr.bf16.mxu0 0
        %9066 = vmatpush1.bf16.msra.mxu0 0
        %9067 = vmatprep.subr.bf16.mxu0 0
        %9068 = vmatpush1.bf16.msra.mxu0 0
        %9069 = vmatprep.subr.bf16.mxu0 0
        %9070 = vmatpush1.bf16.msra.mxu0 0
        %9071 = vmatprep.subr.bf16.mxu0 0
        %9072 = vmatpush1.bf16.msra.mxu0 0
        %9073 = vmatprep.subr.bf16.mxu0 0
        %9074 = vmatpush1.bf16.msra.mxu0 0
        %9075 = vmatprep.subr.bf16.mxu0 0
        %9076 = vmatpush1.bf16.msra.mxu0 0
        %9077 = vmatprep.subr.bf16.mxu0 0
        %9078 = vmatpush1.bf16.msra.mxu0 0
        %9079 = vmatprep.subr.bf16.mxu0 0
        %9080 = vmatpush1.bf16.msra.mxu0 0
        %9081 = vmatprep.subr.bf16.mxu0 0
        %9082 = vmatpush1.bf16.msra.mxu0 0
        %9083 = vmatprep.subr.bf16.mxu0 0
        %9084 = vmatpush1.bf16.msra.mxu0 0
        %9085 = vmatprep.subr.bf16.mxu0 0
        %9086 = vmatpush1.bf16.msra.mxu0 0
        %9087 = vmatprep.subr.bf16.mxu0 0
        %9088 = vmatpush1.bf16.msra.mxu0 0
        %9089 = vmatprep.mubr.bf16.mxu0 0
        %9090 = vmatmul.mubr.bf16.gmra.mrb[0].mxu0 %v1221
        %v9091 = vpop.f32.mrb[0].mxu0
        %v9092 = vadd.f32 0.0, %v9091
        %v9093 = vpop.f32.mrb[0].mxu0
        %v9094 = vpop.f32.mrb[0].mxu0
        %v9095 = vpop.f32.mrb[0].mxu0
        %9096 = vdwg.mxu0
        %v9098 = vcombine.high %v9092, %v9092
        %v9100 = vunpack.c.l.s4 1966171168
        %v9101 = vunpack.c.0.s8 %v9100
        %v9102 = vlaneseq
        %v9103 = vshrl.u32 %v9102, 7
        %v9104 = vsub.s32 %v9101, %v9103
        %v9105 = vrot.slane %v9092, %v9104
        %v9107 = vunpack.c.l.s4 1966171168
        %v9108 = vunpack.c.0.s8 %v9107
        %v9109 = vlaneseq
        %v9110 = vshrl.u32 %v9109, 7
        %v9111 = vsub.s32 %v9108, %v9110
        %v9112 = vrot.slane %v9098, %v9111
        %v9113 = vcombine.high %v9105, %v9105
        %v9114 = vcombine.high %v9112, %v9112
        %v9116 = vunpack.c.l.s4 1966171168
        %v9117 = vunpack.c.0.s8 %v9116
        %v9118 = vlaneseq
        %v9119 = vshrl.u32 %v9118, 7
        %v9120 = vsub.s32 %v9117, %v9119
        %v9121 = vrot.slane %v9105, %v9120
        %v9123 = vunpack.c.l.s4 1966171168
        %v9124 = vunpack.c.0.s8 %v9123
        %v9125 = vlaneseq
        %v9126 = vshrl.u32 %v9125, 7
        %v9127 = vsub.s32 %v9124, %v9126
        %v9128 = vrot.slane %v9112, %v9127
        %v9130 = vunpack.c.l.s4 1966171168
        %v9131 = vunpack.c.0.s8 %v9130
        %v9132 = vlaneseq
        %v9133 = vshrl.u32 %v9132, 7
        %v9134 = vsub.s32 %v9131, %v9133
        %v9135 = vrot.slane %v9113, %v9134
        %v9137 = vunpack.c.l.s4 1966171168
        %v9138 = vunpack.c.0.s8 %v9137
        %v9139 = vlaneseq
        %v9140 = vshrl.u32 %v9139, 7
        %v9141 = vsub.s32 %v9138, %v9140
        %v9142 = vrot.slane %v9114, %v9141
        %v9143 = vcombine.high %v9121, %v9121
        %v9144 = vcombine.high %v9128, %v9128
        %v9145 = vcombine.high %v9135, %v9135
        %9153 = vst [vmem:[%s206 + $0x36] sm:$0x1] %v9121
        %9154 = vst [vmem:[%s206 + $0x76] sm:$0x1] %v9135
        %9155 = vst [vmem:[%s206 + $0xb6] sm:$0x1] %v9143
        %9156 = vst [vmem:[%s206 + $0xf6] sm:$0x1] %v9145
        %9157 = vst [vmem:[%s206 + $0x136] sm:$0x1] %v9128
        %9158 = vst [vmem:[%s206 + $0x176] sm:$0x1] %v9142
        %9159 = vst [vmem:[%s206 + $0x1b6] sm:$0x1] %v9144
        %v9160 = vld [vmem:[#allocation3 + $0x18] sm:$0x8]
        %v9161 = vld [vmem:[#allocation3 + $0x38] sm:$0x8]
        %v9162 = vld [vmem:[#allocation3 + $0x58] sm:$0x8]
        %v9163 = vld [vmem:[#allocation3 + $0x78] sm:$0x8]
        %v9164 = vld [vmem:[#allocation3 + $0x98] sm:$0x8]
        %v9165 = vld [vmem:[#allocation3 + $0xb8] sm:$0x8]
        %v9166 = vld [vmem:[#allocation3 + $0xd8] sm:$0x8]
        %v9167 = vld [vmem:[#allocation3 + $0xf8] sm:$0x8]
        %v9176 = vunpack.c.l.b16 %v9160
        %v9177 = vunpack.c.l.b16 %v9161
        %v9178 = vunpack.c.l.b16 %v9162
        %v9179 = vunpack.c.l.b16 %v9163
        %v9180 = vunpack.c.l.b16 %v9164
        %v9181 = vunpack.c.l.b16 %v9165
        %v9182 = vunpack.c.l.b16 %v9166
        %v9183 = vunpack.c.l.b16 %v9167
        %v9184 = vrot.slane %v9176, 7
        %v9185 = vrot.slane %v9177, 6
        %v9186 = vsel %vm1198, %v9185, %v9184
        %v9187 = vrot.slane %v9178, 5
        %v9188 = vsel %vm1201, %v9187, %v9186
        %v9189 = vrot.slane %v9179, 4
        %v9190 = vsel %vm1204, %v9189, %v9188
        %v9191 = vrot.slane %v9180, 3
        %v9192 = vsel %vm1207, %v9191, %v9190
        %v9193 = vrot.slane %v9181, 2
        %v9194 = vsel %vm1210, %v9193, %v9192
        %v9195 = vrot.slane %v9182, 1
        %v9196 = vsel %vm1213, %v9195, %v9194
        %v9197 = vsel %vm1216, %v9183, %v9196
        %v9198 = vpack.c.b16 %v9197, %v9197
        %v9200 = vsel %vm1223, %v9198, 0
        %9202 = vmatprep.subr.bf16.mxu0 0
        %9203 = vmatpush1.bf16.msra.mxu0 %v9200
        %9204 = vmatprep.subr.bf16.mxu0 0
        %9205 = vmatpush1.bf16.msra.mxu0 0
        %9206 = vmatprep.subr.bf16.mxu0 0
        %9207 = vmatpush1.bf16.msra.mxu0 0
        %9208 = vmatprep.subr.bf16.mxu0 0
        %9209 = vmatpush1.bf16.msra.mxu0 0
        %9210 = vmatprep.subr.bf16.mxu0 0
        %9211 = vmatpush1.bf16.msra.mxu0 0
        %9212 = vmatprep.subr.bf16.mxu0 0
        %9213 = vmatpush1.bf16.msra.mxu0 0
        %9214 = vmatprep.subr.bf16.mxu0 0
        %9215 = vmatpush1.bf16.msra.mxu0 0
        %9216 = vmatprep.subr.bf16.mxu0 0
        %9217 = vmatpush1.bf16.msra.mxu0 0
        %9218 = vmatprep.subr.bf16.mxu0 0
        %9219 = vmatpush1.bf16.msra.mxu0 0
        %9220 = vmatprep.subr.bf16.mxu0 0
        %9221 = vmatpush1.bf16.msra.mxu0 0
        %9222 = vmatprep.subr.bf16.mxu0 0
        %9223 = vmatpush1.bf16.msra.mxu0 0
        %9224 = vmatprep.subr.bf16.mxu0 0
        %9225 = vmatpush1.bf16.msra.mxu0 0
        %9226 = vmatprep.subr.bf16.mxu0 0
        %9227 = vmatpush1.bf16.msra.mxu0 0
        %9228 = vmatprep.subr.bf16.mxu0 0
        %9229 = vmatpush1.bf16.msra.mxu0 0
        %9230 = vmatprep.subr.bf16.mxu0 0
        %9231 = vmatpush1.bf16.msra.mxu0 0
        %9232 = vmatprep.subr.bf16.mxu0 0
        %9233 = vmatpush1.bf16.msra.mxu0 0
        %9234 = vmatprep.mubr.bf16.mxu0 0
        %9235 = vmatmul.mubr.bf16.gmra.mrb[0].mxu0 %v1221
        %v9236 = vpop.f32.mrb[0].mxu0
        %v9237 = vadd.f32 0.0, %v9236
        %v9238 = vpop.f32.mrb[0].mxu0
        %v9239 = vpop.f32.mrb[0].mxu0
        %v9240 = vpop.f32.mrb[0].mxu0
        %9241 = vdwg.mxu0
        %v9243 = vcombine.high %v9237, %v9237
        %v9245 = vunpack.c.l.s4 1966171168
        %v9246 = vunpack.c.0.s8 %v9245
        %v9247 = vlaneseq
        %v9248 = vshrl.u32 %v9247, 7
        %v9249 = vsub.s32 %v9246, %v9248
        %v9250 = vrot.slane %v9237, %v9249
        %v9252 = vunpack.c.l.s4 1966171168
        %v9253 = vunpack.c.0.s8 %v9252
        %v9254 = vlaneseq
        %v9255 = vshrl.u32 %v9254, 7
        %v9256 = vsub.s32 %v9253, %v9255
        %v9257 = vrot.slane %v9243, %v9256
        %v9258 = vcombine.high %v9250, %v9250
        %v9259 = vcombine.high %v9257, %v9257
        %v9261 = vunpack.c.l.s4 1966171168
        %v9262 = vunpack.c.0.s8 %v9261
        %v9263 = vlaneseq
        %v9264 = vshrl.u32 %v9263, 7
        %v9265 = vsub.s32 %v9262, %v9264
        %v9266 = vrot.slane %v9250, %v9265
        %v9268 = vunpack.c.l.s4 1966171168
        %v9269 = vunpack.c.0.s8 %v9268
        %v9270 = vlaneseq
        %v9271 = vshrl.u32 %v9270, 7
        %v9272 = vsub.s32 %v9269, %v9271
        %v9273 = vrot.slane %v9257, %v9272
        %v9275 = vunpack.c.l.s4 1966171168
        %v9276 = vunpack.c.0.s8 %v9275
        %v9277 = vlaneseq
        %v9278 = vshrl.u32 %v9277, 7
        %v9279 = vsub.s32 %v9276, %v9278
        %v9280 = vrot.slane %v9258, %v9279
        %v9282 = vunpack.c.l.s4 1966171168
        %v9283 = vunpack.c.0.s8 %v9282
        %v9284 = vlaneseq
        %v9285 = vshrl.u32 %v9284, 7
        %v9286 = vsub.s32 %v9283, %v9285
        %v9287 = vrot.slane %v9259, %v9286
        %v9288 = vcombine.high %v9266, %v9266
        %v9289 = vcombine.high %v9273, %v9273
        %v9290 = vcombine.high %v9280, %v9280
        %9298 = vst [vmem:[%s206 + $0x37] sm:$0x1] %v9266
        %9299 = vst [vmem:[%s206 + $0x77] sm:$0x1] %v9280
        %9300 = vst [vmem:[%s206 + $0xb7] sm:$0x1] %v9288
        %9301 = vst [vmem:[%s206 + $0xf7] sm:$0x1] %v9290
        %9302 = vst [vmem:[%s206 + $0x137] sm:$0x1] %v9273
        %9303 = vst [vmem:[%s206 + $0x177] sm:$0x1] %v9287
        %9304 = vst [vmem:[%s206 + $0x1b7] sm:$0x1] %v9289
        %v9305 = vld [vmem:[#allocation3 + $0x18] sm:$0x10]
        %v9306 = vld [vmem:[#allocation3 + $0x38] sm:$0x10]
        %v9307 = vld [vmem:[#allocation3 + $0x58] sm:$0x10]
        %v9308 = vld [vmem:[#allocation3 + $0x78] sm:$0x10]
        %v9309 = vld [vmem:[#allocation3 + $0x98] sm:$0x10]
        %v9310 = vld [vmem:[#allocation3 + $0xb8] sm:$0x10]
        %v9311 = vld [vmem:[#allocation3 + $0xd8] sm:$0x10]
        %v9312 = vld [vmem:[#allocation3 + $0xf8] sm:$0x10]
        %v9321 = vunpack.c.h.b16 %v9305
        %v9322 = vunpack.c.h.b16 %v9306
        %v9323 = vunpack.c.h.b16 %v9307
        %v9324 = vunpack.c.h.b16 %v9308
        %v9325 = vunpack.c.h.b16 %v9309
        %v9326 = vunpack.c.h.b16 %v9310
        %v9327 = vunpack.c.h.b16 %v9311
        %v9328 = vunpack.c.h.b16 %v9312
        %v9329 = vrot.slane %v9322, 7
        %v9330 = vsel %vm1198, %v9329, %v9321
        %v9331 = vrot.slane %v9323, 6
        %v9332 = vsel %vm1201, %v9331, %v9330
        %v9333 = vrot.slane %v9324, 5
        %v9334 = vsel %vm1204, %v9333, %v9332
        %v9335 = vrot.slane %v9325, 4
        %v9336 = vsel %vm1207, %v9335, %v9334
        %v9337 = vrot.slane %v9326, 3
        %v9338 = vsel %vm1210, %v9337, %v9336
        %v9339 = vrot.slane %v9327, 2
        %v9340 = vsel %vm1213, %v9339, %v9338
        %v9341 = vrot.slane %v9328, 1
        %v9342 = vsel %vm1216, %v9341, %v9340
        %v9343 = vpack.c.b16 %v9342, %v9342
        %v9345 = vsel %vm1223, %v9343, 0
        %9347 = vmatprep.subr.bf16.mxu0 0
        %9348 = vmatpush1.bf16.msra.mxu0 %v9345
        %9349 = vmatprep.subr.bf16.mxu0 0
        %9350 = vmatpush1.bf16.msra.mxu0 0
        %9351 = vmatprep.subr.bf16.mxu0 0
        %9352 = vmatpush1.bf16.msra.mxu0 0
        %9353 = vmatprep.subr.bf16.mxu0 0
        %9354 = vmatpush1.bf16.msra.mxu0 0
        %9355 = vmatprep.subr.bf16.mxu0 0
        %9356 = vmatpush1.bf16.msra.mxu0 0
        %9357 = vmatprep.subr.bf16.mxu0 0
        %9358 = vmatpush1.bf16.msra.mxu0 0
        %9359 = vmatprep.subr.bf16.mxu0 0
        %9360 = vmatpush1.bf16.msra.mxu0 0
        %9361 = vmatprep.subr.bf16.mxu0 0
        %9362 = vmatpush1.bf16.msra.mxu0 0
        %9363 = vmatprep.subr.bf16.mxu0 0
        %9364 = vmatpush1.bf16.msra.mxu0 0
        %9365 = vmatprep.subr.bf16.mxu0 0
        %9366 = vmatpush1.bf16.msra.mxu0 0
        %9367 = vmatprep.subr.bf16.mxu0 0
        %9368 = vmatpush1.bf16.msra.mxu0 0
        %9369 = vmatprep.subr.bf16.mxu0 0
        %9370 = vmatpush1.bf16.msra.mxu0 0
        %9371 = vmatprep.subr.bf16.mxu0 0
        %9372 = vmatpush1.bf16.msra.mxu0 0
        %9373 = vmatprep.subr.bf16.mxu0 0
        %9374 = vmatpush1.bf16.msra.mxu0 0
        %9375 = vmatprep.subr.bf16.mxu0 0
        %9376 = vmatpush1.bf16.msra.mxu0 0
        %9377 = vmatprep.subr.bf16.mxu0 0
        %9378 = vmatpush1.bf16.msra.mxu0 0
        %9379 = vmatprep.mubr.bf16.mxu0 0
        %9380 = vmatmul.mubr.bf16.gmra.mrb[0].mxu0 %v1221
        %v9381 = vpop.f32.mrb[0].mxu0
        %v9382 = vadd.f32 0.0, %v9381
        %v9383 = vpop.f32.mrb[0].mxu0
        %v9384 = vpop.f32.mrb[0].mxu0
        %v9385 = vpop.f32.mrb[0].mxu0
        %9386 = vdwg.mxu0
        %v9388 = vcombine.high %v9382, %v9382
        %v9390 = vunpack.c.l.s4 1966171168
        %v9391 = vunpack.c.0.s8 %v9390
        %v9392 = vlaneseq
        %v9393 = vshrl.u32 %v9392, 7
        %v9394 = vsub.s32 %v9391, %v9393
        %v9395 = vrot.slane %v9382, %v9394
        %v9397 = vunpack.c.l.s4 1966171168
        %v9398 = vunpack.c.0.s8 %v9397
        %v9399 = vlaneseq
        %v9400 = vshrl.u32 %v9399, 7
        %v9401 = vsub.s32 %v9398, %v9400
        %v9402 = vrot.slane %v9388, %v9401
        %v9403 = vcombine.high %v9395, %v9395
        %v9404 = vcombine.high %v9402, %v9402
        %v9406 = vunpack.c.l.s4 1966171168
        %v9407 = vunpack.c.0.s8 %v9406
        %v9408 = vlaneseq
        %v9409 = vshrl.u32 %v9408, 7
        %v9410 = vsub.s32 %v9407, %v9409
        %v9411 = vrot.slane %v9395, %v9410
        %v9413 = vunpack.c.l.s4 1966171168
        %v9414 = vunpack.c.0.s8 %v9413
        %v9415 = vlaneseq
        %v9416 = vshrl.u32 %v9415, 7
        %v9417 = vsub.s32 %v9414, %v9416
        %v9418 = vrot.slane %v9402, %v9417
        %v9420 = vunpack.c.l.s4 1966171168
        %v9421 = vunpack.c.0.s8 %v9420
        %v9422 = vlaneseq
        %v9423 = vshrl.u32 %v9422, 7
        %v9424 = vsub.s32 %v9421, %v9423
        %v9425 = vrot.slane %v9403, %v9424
        %v9427 = vunpack.c.l.s4 1966171168
        %v9428 = vunpack.c.0.s8 %v9427
        %v9429 = vlaneseq
        %v9430 = vshrl.u32 %v9429, 7
        %v9431 = vsub.s32 %v9428, %v9430
        %v9432 = vrot.slane %v9404, %v9431
        %v9433 = vcombine.high %v9411, %v9411
        %v9434 = vcombine.high %v9418, %v9418
        %v9435 = vcombine.high %v9425, %v9425
        %9443 = vst [vmem:[%s206 + $0x38] sm:$0x1] %v9411
        %9444 = vst [vmem:[%s206 + $0x78] sm:$0x1] %v9425
        %9445 = vst [vmem:[%s206 + $0xb8] sm:$0x1] %v9433
        %9446 = vst [vmem:[%s206 + $0xf8] sm:$0x1] %v9435
        %9447 = vst [vmem:[%s206 + $0x138] sm:$0x1] %v9418
        %9448 = vst [vmem:[%s206 + $0x178] sm:$0x1] %v9432
        %9449 = vst [vmem:[%s206 + $0x1b8] sm:$0x1] %v9434
        %v9450 = vld [vmem:[#allocation3 + $0x18] sm:$0x10]
        %v9451 = vld [vmem:[#allocation3 + $0x38] sm:$0x10]
        %v9452 = vld [vmem:[#allocation3 + $0x58] sm:$0x10]
        %v9453 = vld [vmem:[#allocation3 + $0x78] sm:$0x10]
        %v9454 = vld [vmem:[#allocation3 + $0x98] sm:$0x10]
        %v9455 = vld [vmem:[#allocation3 + $0xb8] sm:$0x10]
        %v9456 = vld [vmem:[#allocation3 + $0xd8] sm:$0x10]
        %v9457 = vld [vmem:[#allocation3 + $0xf8] sm:$0x10]
        %v9466 = vunpack.c.h.b16 %v9450
        %v9467 = vunpack.c.h.b16 %v9451
        %v9468 = vunpack.c.h.b16 %v9452
        %v9469 = vunpack.c.h.b16 %v9453
        %v9470 = vunpack.c.h.b16 %v9454
        %v9471 = vunpack.c.h.b16 %v9455
        %v9472 = vunpack.c.h.b16 %v9456
        %v9473 = vunpack.c.h.b16 %v9457
        %v9474 = vrot.slane %v9466, 1
        %v9475 = vsel %vm1198, %v9467, %v9474
        %v9476 = vrot.slane %v9468, 7
        %v9477 = vsel %vm1201, %v9476, %v9475
        %v9478 = vrot.slane %v9469, 6
        %v9479 = vsel %vm1204, %v9478, %v9477
        %v9480 = vrot.slane %v9470, 5
        %v9481 = vsel %vm1207, %v9480, %v9479
        %v9482 = vrot.slane %v9471, 4
        %v9483 = vsel %vm1210, %v9482, %v9481
        %v9484 = vrot.slane %v9472, 3
        %v9485 = vsel %vm1213, %v9484, %v9483
        %v9486 = vrot.slane %v9473, 2
        %v9487 = vsel %vm1216, %v9486, %v9485
        %v9488 = vpack.c.b16 %v9487, %v9487
        %v9490 = vsel %vm1223, %v9488, 0
        %9492 = vmatprep.subr.bf16.mxu0 0
        %9493 = vmatpush1.bf16.msra.mxu0 %v9490
        %9494 = vmatprep.subr.bf16.mxu0 0
        %9495 = vmatpush1.bf16.msra.mxu0 0
        %9496 = vmatprep.subr.bf16.mxu0 0
        %9497 = vmatpush1.bf16.msra.mxu0 0
        %9498 = vmatprep.subr.bf16.mxu0 0
        %9499 = vmatpush1.bf16.msra.mxu0 0
        %9500 = vmatprep.subr.bf16.mxu0 0
        %9501 = vmatpush1.bf16.msra.mxu0 0
        %9502 = vmatprep.subr.bf16.mxu0 0
        %9503 = vmatpush1.bf16.msra.mxu0 0
        %9504 = vmatprep.subr.bf16.mxu0 0
        %9505 = vmatpush1.bf16.msra.mxu0 0
        %9506 = vmatprep.subr.bf16.mxu0 0
        %9507 = vmatpush1.bf16.msra.mxu0 0
        %9508 = vmatprep.subr.bf16.mxu0 0
        %9509 = vmatpush1.bf16.msra.mxu0 0
        %9510 = vmatprep.subr.bf16.mxu0 0
        %9511 = vmatpush1.bf16.msra.mxu0 0
        %9512 = vmatprep.subr.bf16.mxu0 0
        %9513 = vmatpush1.bf16.msra.mxu0 0
        %9514 = vmatprep.subr.bf16.mxu0 0
        %9515 = vmatpush1.bf16.msra.mxu0 0
        %9516 = vmatprep.subr.bf16.mxu0 0
        %9517 = vmatpush1.bf16.msra.mxu0 0
        %9518 = vmatprep.subr.bf16.mxu0 0
        %9519 = vmatpush1.bf16.msra.mxu0 0
        %9520 = vmatprep.subr.bf16.mxu0 0
        %9521 = vmatpush1.bf16.msra.mxu0 0
        %9522 = vmatprep.subr.bf16.mxu0 0
        %9523 = vmatpush1.bf16.msra.mxu0 0
        %9524 = vmatprep.mubr.bf16.mxu0 0
        %9525 = vmatmul.mubr.bf16.gmra.mrb[0].mxu0 %v1221
        %v9526 = vpop.f32.mrb[0].mxu0
        %v9527 = vadd.f32 0.0, %v9526
        %v9528 = vpop.f32.mrb[0].mxu0
        %v9529 = vpop.f32.mrb[0].mxu0
        %v9530 = vpop.f32.mrb[0].mxu0
        %9531 = vdwg.mxu0
        %v9533 = vcombine.high %v9527, %v9527
        %v9535 = vunpack.c.l.s4 1966171168
        %v9536 = vunpack.c.0.s8 %v9535
        %v9537 = vlaneseq
        %v9538 = vshrl.u32 %v9537, 7
        %v9539 = vsub.s32 %v9536, %v9538
        %v9540 = vrot.slane %v9527, %v9539
        %v9542 = vunpack.c.l.s4 1966171168
        %v9543 = vunpack.c.0.s8 %v9542
        %v9544 = vlaneseq
        %v9545 = vshrl.u32 %v9544, 7
        %v9546 = vsub.s32 %v9543, %v9545
        %v9547 = vrot.slane %v9533, %v9546
        %v9548 = vcombine.high %v9540, %v9540
        %v9549 = vcombine.high %v9547, %v9547
        %v9551 = vunpack.c.l.s4 1966171168
        %v9552 = vunpack.c.0.s8 %v9551
        %v9553 = vlaneseq
        %v9554 = vshrl.u32 %v9553, 7
        %v9555 = vsub.s32 %v9552, %v9554
        %v9556 = vrot.slane %v9540, %v9555
        %v9558 = vunpack.c.l.s4 1966171168
        %v9559 = vunpack.c.0.s8 %v9558
        %v9560 = vlaneseq
        %v9561 = vshrl.u32 %v9560, 7
        %v9562 = vsub.s32 %v9559, %v9561
        %v9563 = vrot.slane %v9547, %v9562
        %v9565 = vunpack.c.l.s4 1966171168
        %v9566 = vunpack.c.0.s8 %v9565
        %v9567 = vlaneseq
        %v9568 = vshrl.u32 %v9567, 7
        %v9569 = vsub.s32 %v9566, %v9568
        %v9570 = vrot.slane %v9548, %v9569
        %v9572 = vunpack.c.l.s4 1966171168
        %v9573 = vunpack.c.0.s8 %v9572
        %v9574 = vlaneseq
        %v9575 = vshrl.u32 %v9574, 7
        %v9576 = vsub.s32 %v9573, %v9575
        %v9577 = vrot.slane %v9549, %v9576
        %v9578 = vcombine.high %v9556, %v9556
        %v9579 = vcombine.high %v9563, %v9563
        %v9580 = vcombine.high %v9570, %v9570
        %9588 = vst [vmem:[%s206 + $0x39] sm:$0x1] %v9556
        %9589 = vst [vmem:[%s206 + $0x79] sm:$0x1] %v9570
        %9590 = vst [vmem:[%s206 + $0xb9] sm:$0x1] %v9578
        %9591 = vst [vmem:[%s206 + $0xf9] sm:$0x1] %v9580
        %9592 = vst [vmem:[%s206 + $0x139] sm:$0x1] %v9563
        %9593 = vst [vmem:[%s206 + $0x179] sm:$0x1] %v9577
        %9594 = vst [vmem:[%s206 + $0x1b9] sm:$0x1] %v9579
        %v9595 = vld [vmem:[#allocation3 + $0x18] sm:$0x20]
        %v9596 = vld [vmem:[#allocation3 + $0x38] sm:$0x20]
        %v9597 = vld [vmem:[#allocation3 + $0x58] sm:$0x20]
        %v9598 = vld [vmem:[#allocation3 + $0x78] sm:$0x20]
        %v9599 = vld [vmem:[#allocation3 + $0x98] sm:$0x20]
        %v9600 = vld [vmem:[#allocation3 + $0xb8] sm:$0x20]
        %v9601 = vld [vmem:[#allocation3 + $0xd8] sm:$0x20]
        %v9602 = vld [vmem:[#allocation3 + $0xf8] sm:$0x20]
        %v9611 = vunpack.c.h.b16 %v9595
        %v9612 = vunpack.c.h.b16 %v9596
        %v9613 = vunpack.c.h.b16 %v9597
        %v9614 = vunpack.c.h.b16 %v9598
        %v9615 = vunpack.c.h.b16 %v9599
        %v9616 = vunpack.c.h.b16 %v9600
        %v9617 = vunpack.c.h.b16 %v9601
        %v9618 = vunpack.c.h.b16 %v9602
        %v9619 = vrot.slane %v9611, 2
        %v9620 = vrot.slane %v9612, 1
        %v9621 = vsel %vm1198, %v9620, %v9619
        %v9622 = vsel %vm1201, %v9613, %v9621
        %v9623 = vrot.slane %v9614, 7
        %v9624 = vsel %vm1204, %v9623, %v9622
        %v9625 = vrot.slane %v9615, 6
        %v9626 = vsel %vm1207, %v9625, %v9624
        %v9627 = vrot.slane %v9616, 5
        %v9628 = vsel %vm1210, %v9627, %v9626
        %v9629 = vrot.slane %v9617, 4
        %v9630 = vsel %vm1213, %v9629, %v9628
        %v9631 = vrot.slane %v9618, 3
        %v9632 = vsel %vm1216, %v9631, %v9630
        %v9633 = vpack.c.b16 %v9632, %v9632
        %v9635 = vsel %vm1223, %v9633, 0
        %9637 = vmatprep.subr.bf16.mxu0 0
        %9638 = vmatpush1.bf16.msra.mxu0 %v9635
        %9639 = vmatprep.subr.bf16.mxu0 0
        %9640 = vmatpush1.bf16.msra.mxu0 0
        %9641 = vmatprep.subr.bf16.mxu0 0
        %9642 = vmatpush1.bf16.msra.mxu0 0
        %9643 = vmatprep.subr.bf16.mxu0 0
        %9644 = vmatpush1.bf16.msra.mxu0 0
        %9645 = vmatprep.subr.bf16.mxu0 0
        %9646 = vmatpush1.bf16.msra.mxu0 0
        %9647 = vmatprep.subr.bf16.mxu0 0
        %9648 = vmatpush1.bf16.msra.mxu0 0
        %9649 = vmatprep.subr.bf16.mxu0 0
        %9650 = vmatpush1.bf16.msra.mxu0 0
        %9651 = vmatprep.subr.bf16.mxu0 0
        %9652 = vmatpush1.bf16.msra.mxu0 0
        %9653 = vmatprep.subr.bf16.mxu0 0
        %9654 = vmatpush1.bf16.msra.mxu0 0
        %9655 = vmatprep.subr.bf16.mxu0 0
        %9656 = vmatpush1.bf16.msra.mxu0 0
        %9657 = vmatprep.subr.bf16.mxu0 0
        %9658 = vmatpush1.bf16.msra.mxu0 0
        %9659 = vmatprep.subr.bf16.mxu0 0
        %9660 = vmatpush1.bf16.msra.mxu0 0
        %9661 = vmatprep.subr.bf16.mxu0 0
        %9662 = vmatpush1.bf16.msra.mxu0 0
        %9663 = vmatprep.subr.bf16.mxu0 0
        %9664 = vmatpush1.bf16.msra.mxu0 0
        %9665 = vmatprep.subr.bf16.mxu0 0
        %9666 = vmatpush1.bf16.msra.mxu0 0
        %9667 = vmatprep.subr.bf16.mxu0 0
        %9668 = vmatpush1.bf16.msra.mxu0 0
        %9669 = vmatprep.mubr.bf16.mxu0 0
        %9670 = vmatmul.mubr.bf16.gmra.mrb[0].mxu0 %v1221
        %v9671 = vpop.f32.mrb[0].mxu0
        %v9672 = vadd.f32 0.0, %v9671
        %v9673 = vpop.f32.mrb[0].mxu0
        %v9674 = vpop.f32.mrb[0].mxu0
        %v9675 = vpop.f32.mrb[0].mxu0
        %9676 = vdwg.mxu0
        %v9678 = vcombine.high %v9672, %v9672
        %v9680 = vunpack.c.l.s4 1966171168
        %v9681 = vunpack.c.0.s8 %v9680
        %v9682 = vlaneseq
        %v9683 = vshrl.u32 %v9682, 7
        %v9684 = vsub.s32 %v9681, %v9683
        %v9685 = vrot.slane %v9672, %v9684
        %v9687 = vunpack.c.l.s4 1966171168
        %v9688 = vunpack.c.0.s8 %v9687
        %v9689 = vlaneseq
        %v9690 = vshrl.u32 %v9689, 7
        %v9691 = vsub.s32 %v9688, %v9690
        %v9692 = vrot.slane %v9678, %v9691
        %v9693 = vcombine.high %v9685, %v9685
        %v9694 = vcombine.high %v9692, %v9692
        %v9696 = vunpack.c.l.s4 1966171168
        %v9697 = vunpack.c.0.s8 %v9696
        %v9698 = vlaneseq
        %v9699 = vshrl.u32 %v9698, 7
        %v9700 = vsub.s32 %v9697, %v9699
        %v9701 = vrot.slane %v9685, %v9700
        %v9703 = vunpack.c.l.s4 1966171168
        %v9704 = vunpack.c.0.s8 %v9703
        %v9705 = vlaneseq
        %v9706 = vshrl.u32 %v9705, 7
        %v9707 = vsub.s32 %v9704, %v9706
        %v9708 = vrot.slane %v9692, %v9707
        %v9710 = vunpack.c.l.s4 1966171168
        %v9711 = vunpack.c.0.s8 %v9710
        %v9712 = vlaneseq
        %v9713 = vshrl.u32 %v9712, 7
        %v9714 = vsub.s32 %v9711, %v9713
        %v9715 = vrot.slane %v9693, %v9714
        %v9717 = vunpack.c.l.s4 1966171168
        %v9718 = vunpack.c.0.s8 %v9717
        %v9719 = vlaneseq
        %v9720 = vshrl.u32 %v9719, 7
        %v9721 = vsub.s32 %v9718, %v9720
        %v9722 = vrot.slane %v9694, %v9721
        %v9723 = vcombine.high %v9701, %v9701
        %v9724 = vcombine.high %v9708, %v9708
        %v9725 = vcombine.high %v9715, %v9715
        %9733 = vst [vmem:[%s206 + $0x3a] sm:$0x1] %v9701
        %9734 = vst [vmem:[%s206 + $0x7a] sm:$0x1] %v9715
        %9735 = vst [vmem:[%s206 + $0xba] sm:$0x1] %v9723
        %9736 = vst [vmem:[%s206 + $0xfa] sm:$0x1] %v9725
        %9737 = vst [vmem:[%s206 + $0x13a] sm:$0x1] %v9708
        %9738 = vst [vmem:[%s206 + $0x17a] sm:$0x1] %v9722
        %9739 = vst [vmem:[%s206 + $0x1ba] sm:$0x1] %v9724
        %v9740 = vld [vmem:[#allocation3 + $0x18] sm:$0x20]
        %v9741 = vld [vmem:[#allocation3 + $0x38] sm:$0x20]
        %v9742 = vld [vmem:[#allocation3 + $0x58] sm:$0x20]
        %v9743 = vld [vmem:[#allocation3 + $0x78] sm:$0x20]
        %v9744 = vld [vmem:[#allocation3 + $0x98] sm:$0x20]
        %v9745 = vld [vmem:[#allocation3 + $0xb8] sm:$0x20]
        %v9746 = vld [vmem:[#allocation3 + $0xd8] sm:$0x20]
        %v9747 = vld [vmem:[#allocation3 + $0xf8] sm:$0x20]
        %v9756 = vunpack.c.h.b16 %v9740
        %v9757 = vunpack.c.h.b16 %v9741
        %v9758 = vunpack.c.h.b16 %v9742
        %v9759 = vunpack.c.h.b16 %v9743
        %v9760 = vunpack.c.h.b16 %v9744
        %v9761 = vunpack.c.h.b16 %v9745
        %v9762 = vunpack.c.h.b16 %v9746
        %v9763 = vunpack.c.h.b16 %v9747
        %v9764 = vrot.slane %v9756, 3
        %v9765 = vrot.slane %v9757, 2
        %v9766 = vsel %vm1198, %v9765, %v9764
        %v9767 = vrot.slane %v9758, 1
        %v9768 = vsel %vm1201, %v9767, %v9766
        %v9769 = vsel %vm1204, %v9759, %v9768
        %v9770 = vrot.slane %v9760, 7
        %v9771 = vsel %vm1207, %v9770, %v9769
        %v9772 = vrot.slane %v9761, 6
        %v9773 = vsel %vm1210, %v9772, %v9771
        %v9774 = vrot.slane %v9762, 5
        %v9775 = vsel %vm1213, %v9774, %v9773
        %v9776 = vrot.slane %v9763, 4
        %v9777 = vsel %vm1216, %v9776, %v9775
        %v9778 = vpack.c.b16 %v9777, %v9777
        %v9780 = vsel %vm1223, %v9778, 0
        %9782 = vmatprep.subr.bf16.mxu0 0
        %9783 = vmatpush1.bf16.msra.mxu0 %v9780
        %9784 = vmatprep.subr.bf16.mxu0 0
        %9785 = vmatpush1.bf16.msra.mxu0 0
        %9786 = vmatprep.subr.bf16.mxu0 0
        %9787 = vmatpush1.bf16.msra.mxu0 0
        %9788 = vmatprep.subr.bf16.mxu0 0
        %9789 = vmatpush1.bf16.msra.mxu0 0
        %9790 = vmatprep.subr.bf16.mxu0 0
        %9791 = vmatpush1.bf16.msra.mxu0 0
        %9792 = vmatprep.subr.bf16.mxu0 0
        %9793 = vmatpush1.bf16.msra.mxu0 0
        %9794 = vmatprep.subr.bf16.mxu0 0
        %9795 = vmatpush1.bf16.msra.mxu0 0
        %9796 = vmatprep.subr.bf16.mxu0 0
        %9797 = vmatpush1.bf16.msra.mxu0 0
        %9798 = vmatprep.subr.bf16.mxu0 0
        %9799 = vmatpush1.bf16.msra.mxu0 0
        %9800 = vmatprep.subr.bf16.mxu0 0
        %9801 = vmatpush1.bf16.msra.mxu0 0
        %9802 = vmatprep.subr.bf16.mxu0 0
        %9803 = vmatpush1.bf16.msra.mxu0 0
        %9804 = vmatprep.subr.bf16.mxu0 0
        %9805 = vmatpush1.bf16.msra.mxu0 0
        %9806 = vmatprep.subr.bf16.mxu0 0
        %9807 = vmatpush1.bf16.msra.mxu0 0
        %9808 = vmatprep.subr.bf16.mxu0 0
        %9809 = vmatpush1.bf16.msra.mxu0 0
        %9810 = vmatprep.subr.bf16.mxu0 0
        %9811 = vmatpush1.bf16.msra.mxu0 0
        %9812 = vmatprep.subr.bf16.mxu0 0
        %9813 = vmatpush1.bf16.msra.mxu0 0
        %9814 = vmatprep.mubr.bf16.mxu0 0
        %9815 = vmatmul.mubr.bf16.gmra.mrb[0].mxu0 %v1221
        %v9816 = vpop.f32.mrb[0].mxu0
        %v9817 = vadd.f32 0.0, %v9816
        %v9818 = vpop.f32.mrb[0].mxu0
        %v9819 = vpop.f32.mrb[0].mxu0
        %v9820 = vpop.f32.mrb[0].mxu0
        %9821 = vdwg.mxu0
        %v9823 = vcombine.high %v9817, %v9817
        %v9825 = vunpack.c.l.s4 1966171168
        %v9826 = vunpack.c.0.s8 %v9825
        %v9827 = vlaneseq
        %v9828 = vshrl.u32 %v9827, 7
        %v9829 = vsub.s32 %v9826, %v9828
        %v9830 = vrot.slane %v9817, %v9829
        %v9832 = vunpack.c.l.s4 1966171168
        %v9833 = vunpack.c.0.s8 %v9832
        %v9834 = vlaneseq
        %v9835 = vshrl.u32 %v9834, 7
        %v9836 = vsub.s32 %v9833, %v9835
        %v9837 = vrot.slane %v9823, %v9836
        %v9838 = vcombine.high %v9830, %v9830
        %v9839 = vcombine.high %v9837, %v9837
        %v9841 = vunpack.c.l.s4 1966171168
        %v9842 = vunpack.c.0.s8 %v9841
        %v9843 = vlaneseq
        %v9844 = vshrl.u32 %v9843, 7
        %v9845 = vsub.s32 %v9842, %v9844
        %v9846 = vrot.slane %v9830, %v9845
        %v9848 = vunpack.c.l.s4 1966171168
        %v9849 = vunpack.c.0.s8 %v9848
        %v9850 = vlaneseq
        %v9851 = vshrl.u32 %v9850, 7
        %v9852 = vsub.s32 %v9849, %v9851
        %v9853 = vrot.slane %v9837, %v9852
        %v9855 = vunpack.c.l.s4 1966171168
        %v9856 = vunpack.c.0.s8 %v9855
        %v9857 = vlaneseq
        %v9858 = vshrl.u32 %v9857, 7
        %v9859 = vsub.s32 %v9856, %v9858
        %v9860 = vrot.slane %v9838, %v9859
        %v9862 = vunpack.c.l.s4 1966171168
        %v9863 = vunpack.c.0.s8 %v9862
        %v9864 = vlaneseq
        %v9865 = vshrl.u32 %v9864, 7
        %v9866 = vsub.s32 %v9863, %v9865
        %v9867 = vrot.slane %v9839, %v9866
        %v9868 = vcombine.high %v9846, %v9846
        %v9869 = vcombine.high %v9853, %v9853
        %v9870 = vcombine.high %v9860, %v9860
        %9878 = vst [vmem:[%s206 + $0x3b] sm:$0x1] %v9846
        %9879 = vst [vmem:[%s206 + $0x7b] sm:$0x1] %v9860
        %9880 = vst [vmem:[%s206 + $0xbb] sm:$0x1] %v9868
        %9881 = vst [vmem:[%s206 + $0xfb] sm:$0x1] %v9870
        %9882 = vst [vmem:[%s206 + $0x13b] sm:$0x1] %v9853
        %9883 = vst [vmem:[%s206 + $0x17b] sm:$0x1] %v9867
        %9884 = vst [vmem:[%s206 + $0x1bb] sm:$0x1] %v9869
        %v9885 = vld [vmem:[#allocation3 + $0x18] sm:$0x40]
        %v9886 = vld [vmem:[#allocation3 + $0x38] sm:$0x40]
        %v9887 = vld [vmem:[#allocation3 + $0x58] sm:$0x40]
        %v9888 = vld [vmem:[#allocation3 + $0x78] sm:$0x40]
        %v9889 = vld [vmem:[#allocation3 + $0x98] sm:$0x40]
        %v9890 = vld [vmem:[#allocation3 + $0xb8] sm:$0x40]
        %v9891 = vld [vmem:[#allocation3 + $0xd8] sm:$0x40]
        %v9892 = vld [vmem:[#allocation3 + $0xf8] sm:$0x40]
        %v9901 = vunpack.c.h.b16 %v9885
        %v9902 = vunpack.c.h.b16 %v9886
        %v9903 = vunpack.c.h.b16 %v9887
        %v9904 = vunpack.c.h.b16 %v9888
        %v9905 = vunpack.c.h.b16 %v9889
        %v9906 = vunpack.c.h.b16 %v9890
        %v9907 = vunpack.c.h.b16 %v9891
        %v9908 = vunpack.c.h.b16 %v9892
        %v9909 = vrot.slane %v9901, 4
        %v9910 = vrot.slane %v9902, 3
        %v9911 = vsel %vm1198, %v9910, %v9909
        %v9912 = vrot.slane %v9903, 2
        %v9913 = vsel %vm1201, %v9912, %v9911
        %v9914 = vrot.slane %v9904, 1
        %v9915 = vsel %vm1204, %v9914, %v9913
        %v9916 = vsel %vm1207, %v9905, %v9915
        %v9917 = vrot.slane %v9906, 7
        %v9918 = vsel %vm1210, %v9917, %v9916
        %v9919 = vrot.slane %v9907, 6
        %v9920 = vsel %vm1213, %v9919, %v9918
        %v9921 = vrot.slane %v9908, 5
        %v9922 = vsel %vm1216, %v9921, %v9920
        %v9923 = vpack.c.b16 %v9922, %v9922
        %v9925 = vsel %vm1223, %v9923, 0
        %9927 = vmatprep.subr.bf16.mxu0 0
        %9928 = vmatpush1.bf16.msra.mxu0 %v9925
        %9929 = vmatprep.subr.bf16.mxu0 0
        %9930 = vmatpush1.bf16.msra.mxu0 0
        %9931 = vmatprep.subr.bf16.mxu0 0
        %9932 = vmatpush1.bf16.msra.mxu0 0
        %9933 = vmatprep.subr.bf16.mxu0 0
        %9934 = vmatpush1.bf16.msra.mxu0 0
        %9935 = vmatprep.subr.bf16.mxu0 0
        %9936 = vmatpush1.bf16.msra.mxu0 0
        %9937 = vmatprep.subr.bf16.mxu0 0
        %9938 = vmatpush1.bf16.msra.mxu0 0
        %9939 = vmatprep.subr.bf16.mxu0 0
        %9940 = vmatpush1.bf16.msra.mxu0 0
        %9941 = vmatprep.subr.bf16.mxu0 0
        %9942 = vmatpush1.bf16.msra.mxu0 0
        %9943 = vmatprep.subr.bf16.mxu0 0
        %9944 = vmatpush1.bf16.msra.mxu0 0
        %9945 = vmatprep.subr.bf16.mxu0 0
        %9946 = vmatpush1.bf16.msra.mxu0 0
        %9947 = vmatprep.subr.bf16.mxu0 0
        %9948 = vmatpush1.bf16.msra.mxu0 0
        %9949 = vmatprep.subr.bf16.mxu0 0
        %9950 = vmatpush1.bf16.msra.mxu0 0
        %9951 = vmatprep.subr.bf16.mxu0 0
        %9952 = vmatpush1.bf16.msra.mxu0 0
        %9953 = vmatprep.subr.bf16.mxu0 0
        %9954 = vmatpush1.bf16.msra.mxu0 0
        %9955 = vmatprep.subr.bf16.mxu0 0
        %9956 = vmatpush1.bf16.msra.mxu0 0
        %9957 = vmatprep.subr.bf16.mxu0 0
        %9958 = vmatpush1.bf16.msra.mxu0 0
        %9959 = vmatprep.mubr.bf16.mxu0 0
        %9960 = vmatmul.mubr.bf16.gmra.mrb[0].mxu0 %v1221
        %v9961 = vpop.f32.mrb[0].mxu0
        %v9962 = vadd.f32 0.0, %v9961
        %v9963 = vpop.f32.mrb[0].mxu0
        %v9964 = vpop.f32.mrb[0].mxu0
        %v9965 = vpop.f32.mrb[0].mxu0
        %9966 = vdwg.mxu0
        %v9968 = vcombine.high %v9962, %v9962
        %v9970 = vunpack.c.l.s4 1966171168
        %v9971 = vunpack.c.0.s8 %v9970
        %v9972 = vlaneseq
        %v9973 = vshrl.u32 %v9972, 7
        %v9974 = vsub.s32 %v9971, %v9973
        %v9975 = vrot.slane %v9962, %v9974
        %v9977 = vunpack.c.l.s4 1966171168
        %v9978 = vunpack.c.0.s8 %v9977
        %v9979 = vlaneseq
        %v9980 = vshrl.u32 %v9979, 7
        %v9981 = vsub.s32 %v9978, %v9980
        %v9982 = vrot.slane %v9968, %v9981
        %v9983 = vcombine.high %v9975, %v9975
        %v9984 = vcombine.high %v9982, %v9982
        %v9986 = vunpack.c.l.s4 1966171168
        %v9987 = vunpack.c.0.s8 %v9986
        %v9988 = vlaneseq
        %v9989 = vshrl.u32 %v9988, 7
        %v9990 = vsub.s32 %v9987, %v9989
        %v9991 = vrot.slane %v9975, %v9990
        %v9993 = vunpack.c.l.s4 1966171168
        %v9994 = vunpack.c.0.s8 %v9993
        %v9995 = vlaneseq
        %v9996 = vshrl.u32 %v9995, 7
        %v9997 = vsub.s32 %v9994, %v9996
        %v9998 = vrot.slane %v9982, %v9997
        %v10000 = vunpack.c.l.s4 1966171168
        %v10001 = vunpack.c.0.s8 %v10000
        %v10002 = vlaneseq
        %v10003 = vshrl.u32 %v10002, 7
        %v10004 = vsub.s32 %v10001, %v10003
        %v10005 = vrot.slane %v9983, %v10004
        %v10007 = vunpack.c.l.s4 1966171168
        %v10008 = vunpack.c.0.s8 %v10007
        %v10009 = vlaneseq
        %v10010 = vshrl.u32 %v10009, 7
        %v10011 = vsub.s32 %v10008, %v10010
        %v10012 = vrot.slane %v9984, %v10011
        %v10013 = vcombine.high %v9991, %v9991
        %v10014 = vcombine.high %v9998, %v9998
        %v10015 = vcombine.high %v10005, %v10005
        %10023 = vst [vmem:[%s206 + $0x3c] sm:$0x1] %v9991
        %10024 = vst [vmem:[%s206 + $0x7c] sm:$0x1] %v10005
        %10025 = vst [vmem:[%s206 + $0xbc] sm:$0x1] %v10013
        %10026 = vst [vmem:[%s206 + $0xfc] sm:$0x1] %v10015
        %10027 = vst [vmem:[%s206 + $0x13c] sm:$0x1] %v9998
        %10028 = vst [vmem:[%s206 + $0x17c] sm:$0x1] %v10012
        %10029 = vst [vmem:[%s206 + $0x1bc] sm:$0x1] %v10014
        %v10030 = vld [vmem:[#allocation3 + $0x18] sm:$0x40]
        %v10031 = vld [vmem:[#allocation3 + $0x38] sm:$0x40]
        %v10032 = vld [vmem:[#allocation3 + $0x58] sm:$0x40]
        %v10033 = vld [vmem:[#allocation3 + $0x78] sm:$0x40]
        %v10034 = vld [vmem:[#allocation3 + $0x98] sm:$0x40]
        %v10035 = vld [vmem:[#allocation3 + $0xb8] sm:$0x40]
        %v10036 = vld [vmem:[#allocation3 + $0xd8] sm:$0x40]
        %v10037 = vld [vmem:[#allocation3 + $0xf8] sm:$0x40]
        %v10046 = vunpack.c.h.b16 %v10030
        %v10047 = vunpack.c.h.b16 %v10031
        %v10048 = vunpack.c.h.b16 %v10032
        %v10049 = vunpack.c.h.b16 %v10033
        %v10050 = vunpack.c.h.b16 %v10034
        %v10051 = vunpack.c.h.b16 %v10035
        %v10052 = vunpack.c.h.b16 %v10036
        %v10053 = vunpack.c.h.b16 %v10037
        %v10054 = vrot.slane %v10046, 5
        %v10055 = vrot.slane %v10047, 4
        %v10056 = vsel %vm1198, %v10055, %v10054
        %v10057 = vrot.slane %v10048, 3
        %v10058 = vsel %vm1201, %v10057, %v10056
        %v10059 = vrot.slane %v10049, 2
        %v10060 = vsel %vm1204, %v10059, %v10058
        %v10061 = vrot.slane %v10050, 1
        %v10062 = vsel %vm1207, %v10061, %v10060
        %v10063 = vsel %vm1210, %v10051, %v10062
        %v10064 = vrot.slane %v10052, 7
        %v10065 = vsel %vm1213, %v10064, %v10063
        %v10066 = vrot.slane %v10053, 6
        %v10067 = vsel %vm1216, %v10066, %v10065
        %v10068 = vpack.c.b16 %v10067, %v10067
        %v10070 = vsel %vm1223, %v10068, 0
        %10072 = vmatprep.subr.bf16.mxu0 0
        %10073 = vmatpush1.bf16.msra.mxu0 %v10070
        %10074 = vmatprep.subr.bf16.mxu0 0
        %10075 = vmatpush1.bf16.msra.mxu0 0
        %10076 = vmatprep.subr.bf16.mxu0 0
        %10077 = vmatpush1.bf16.msra.mxu0 0
        %10078 = vmatprep.subr.bf16.mxu0 0
        %10079 = vmatpush1.bf16.msra.mxu0 0
        %10080 = vmatprep.subr.bf16.mxu0 0
        %10081 = vmatpush1.bf16.msra.mxu0 0
        %10082 = vmatprep.subr.bf16.mxu0 0
        %10083 = vmatpush1.bf16.msra.mxu0 0
        %10084 = vmatprep.subr.bf16.mxu0 0
        %10085 = vmatpush1.bf16.msra.mxu0 0
        %10086 = vmatprep.subr.bf16.mxu0 0
        %10087 = vmatpush1.bf16.msra.mxu0 0
        %10088 = vmatprep.subr.bf16.mxu0 0
        %10089 = vmatpush1.bf16.msra.mxu0 0
        %10090 = vmatprep.subr.bf16.mxu0 0
        %10091 = vmatpush1.bf16.msra.mxu0 0
        %10092 = vmatprep.subr.bf16.mxu0 0
        %10093 = vmatpush1.bf16.msra.mxu0 0
        %10094 = vmatprep.subr.bf16.mxu0 0
        %10095 = vmatpush1.bf16.msra.mxu0 0
        %10096 = vmatprep.subr.bf16.mxu0 0
        %10097 = vmatpush1.bf16.msra.mxu0 0
        %10098 = vmatprep.subr.bf16.mxu0 0
        %10099 = vmatpush1.bf16.msra.mxu0 0
        %10100 = vmatprep.subr.bf16.mxu0 0
        %10101 = vmatpush1.bf16.msra.mxu0 0
        %10102 = vmatprep.subr.bf16.mxu0 0
        %10103 = vmatpush1.bf16.msra.mxu0 0
        %10104 = vmatprep.mubr.bf16.mxu0 0
        %10105 = vmatmul.mubr.bf16.gmra.mrb[0].mxu0 %v1221
        %v10106 = vpop.f32.mrb[0].mxu0
        %v10107 = vadd.f32 0.0, %v10106
        %v10108 = vpop.f32.mrb[0].mxu0
        %v10109 = vpop.f32.mrb[0].mxu0
        %v10110 = vpop.f32.mrb[0].mxu0
        %10111 = vdwg.mxu0
        %v10113 = vcombine.high %v10107, %v10107
        %v10115 = vunpack.c.l.s4 1966171168
        %v10116 = vunpack.c.0.s8 %v10115
        %v10117 = vlaneseq
        %v10118 = vshrl.u32 %v10117, 7
        %v10119 = vsub.s32 %v10116, %v10118
        %v10120 = vrot.slane %v10107, %v10119
        %v10122 = vunpack.c.l.s4 1966171168
        %v10123 = vunpack.c.0.s8 %v10122
        %v10124 = vlaneseq
        %v10125 = vshrl.u32 %v10124, 7
        %v10126 = vsub.s32 %v10123, %v10125
        %v10127 = vrot.slane %v10113, %v10126
        %v10128 = vcombine.high %v10120, %v10120
        %v10129 = vcombine.high %v10127, %v10127
        %v10131 = vunpack.c.l.s4 1966171168
        %v10132 = vunpack.c.0.s8 %v10131
        %v10133 = vlaneseq
        %v10134 = vshrl.u32 %v10133, 7
        %v10135 = vsub.s32 %v10132, %v10134
        %v10136 = vrot.slane %v10120, %v10135
        %v10138 = vunpack.c.l.s4 1966171168
        %v10139 = vunpack.c.0.s8 %v10138
        %v10140 = vlaneseq
        %v10141 = vshrl.u32 %v10140, 7
        %v10142 = vsub.s32 %v10139, %v10141
        %v10143 = vrot.slane %v10127, %v10142
        %v10145 = vunpack.c.l.s4 1966171168
        %v10146 = vunpack.c.0.s8 %v10145
        %v10147 = vlaneseq
        %v10148 = vshrl.u32 %v10147, 7
        %v10149 = vsub.s32 %v10146, %v10148
        %v10150 = vrot.slane %v10128, %v10149
        %v10152 = vunpack.c.l.s4 1966171168
        %v10153 = vunpack.c.0.s8 %v10152
        %v10154 = vlaneseq
        %v10155 = vshrl.u32 %v10154, 7
        %v10156 = vsub.s32 %v10153, %v10155
        %v10157 = vrot.slane %v10129, %v10156
        %v10158 = vcombine.high %v10136, %v10136
        %v10159 = vcombine.high %v10143, %v10143
        %v10160 = vcombine.high %v10150, %v10150
        %10168 = vst [vmem:[%s206 + $0x3d] sm:$0x1] %v10136
        %10169 = vst [vmem:[%s206 + $0x7d] sm:$0x1] %v10150
        %10170 = vst [vmem:[%s206 + $0xbd] sm:$0x1] %v10158
        %10171 = vst [vmem:[%s206 + $0xfd] sm:$0x1] %v10160
        %10172 = vst [vmem:[%s206 + $0x13d] sm:$0x1] %v10143
        %10173 = vst [vmem:[%s206 + $0x17d] sm:$0x1] %v10157
        %10174 = vst [vmem:[%s206 + $0x1bd] sm:$0x1] %v10159
        %v10175 = vld [vmem:[#allocation3 + $0x18] sm:$0x80]
        %v10176 = vld [vmem:[#allocation3 + $0x38] sm:$0x80]
        %v10177 = vld [vmem:[#allocation3 + $0x58] sm:$0x80]
        %v10178 = vld [vmem:[#allocation3 + $0x78] sm:$0x80]
        %v10179 = vld [vmem:[#allocation3 + $0x98] sm:$0x80]
        %v10180 = vld [vmem:[#allocation3 + $0xb8] sm:$0x80]
        %v10181 = vld [vmem:[#allocation3 + $0xd8] sm:$0x80]
        %v10182 = vld [vmem:[#allocation3 + $0xf8] sm:$0x80]
        %v10191 = vunpack.c.h.b16 %v10175
        %v10192 = vunpack.c.h.b16 %v10176
        %v10193 = vunpack.c.h.b16 %v10177
        %v10194 = vunpack.c.h.b16 %v10178
        %v10195 = vunpack.c.h.b16 %v10179
        %v10196 = vunpack.c.h.b16 %v10180
        %v10197 = vunpack.c.h.b16 %v10181
        %v10198 = vunpack.c.h.b16 %v10182
        %v10199 = vrot.slane %v10191, 6
        %v10200 = vrot.slane %v10192, 5
        %v10201 = vsel %vm1198, %v10200, %v10199
        %v10202 = vrot.slane %v10193, 4
        %v10203 = vsel %vm1201, %v10202, %v10201
        %v10204 = vrot.slane %v10194, 3
        %v10205 = vsel %vm1204, %v10204, %v10203
        %v10206 = vrot.slane %v10195, 2
        %v10207 = vsel %vm1207, %v10206, %v10205
        %v10208 = vrot.slane %v10196, 1
        %v10209 = vsel %vm1210, %v10208, %v10207
        %v10210 = vsel %vm1213, %v10197, %v10209
        %v10211 = vrot.slane %v10198, 7
        %v10212 = vsel %vm1216, %v10211, %v10210
        %v10213 = vpack.c.b16 %v10212, %v10212
        %v10215 = vsel %vm1223, %v10213, 0
        %10217 = vmatprep.subr.bf16.mxu0 0
        %10218 = vmatpush1.bf16.msra.mxu0 %v10215
        %10219 = vmatprep.subr.bf16.mxu0 0
        %10220 = vmatpush1.bf16.msra.mxu0 0
        %10221 = vmatprep.subr.bf16.mxu0 0
        %10222 = vmatpush1.bf16.msra.mxu0 0
        %10223 = vmatprep.subr.bf16.mxu0 0
        %10224 = vmatpush1.bf16.msra.mxu0 0
        %10225 = vmatprep.subr.bf16.mxu0 0
        %10226 = vmatpush1.bf16.msra.mxu0 0
        %10227 = vmatprep.subr.bf16.mxu0 0
        %10228 = vmatpush1.bf16.msra.mxu0 0
        %10229 = vmatprep.subr.bf16.mxu0 0
        %10230 = vmatpush1.bf16.msra.mxu0 0
        %10231 = vmatprep.subr.bf16.mxu0 0
        %10232 = vmatpush1.bf16.msra.mxu0 0
        %10233 = vmatprep.subr.bf16.mxu0 0
        %10234 = vmatpush1.bf16.msra.mxu0 0
        %10235 = vmatprep.subr.bf16.mxu0 0
        %10236 = vmatpush1.bf16.msra.mxu0 0
        %10237 = vmatprep.subr.bf16.mxu0 0
        %10238 = vmatpush1.bf16.msra.mxu0 0
        %10239 = vmatprep.subr.bf16.mxu0 0
        %10240 = vmatpush1.bf16.msra.mxu0 0
        %10241 = vmatprep.subr.bf16.mxu0 0
        %10242 = vmatpush1.bf16.msra.mxu0 0
        %10243 = vmatprep.subr.bf16.mxu0 0
        %10244 = vmatpush1.bf16.msra.mxu0 0
        %10245 = vmatprep.subr.bf16.mxu0 0
        %10246 = vmatpush1.bf16.msra.mxu0 0
        %10247 = vmatprep.subr.bf16.mxu0 0
        %10248 = vmatpush1.bf16.msra.mxu0 0
        %10249 = vmatprep.mubr.bf16.mxu0 0
        %10250 = vmatmul.mubr.bf16.gmra.mrb[0].mxu0 %v1221
        %v10251 = vpop.f32.mrb[0].mxu0
        %v10252 = vadd.f32 0.0, %v10251
        %v10253 = vpop.f32.mrb[0].mxu0
        %v10254 = vpop.f32.mrb[0].mxu0
        %v10255 = vpop.f32.mrb[0].mxu0
        %10256 = vdwg.mxu0
        %v10258 = vcombine.high %v10252, %v10252
        %v10260 = vunpack.c.l.s4 1966171168
        %v10261 = vunpack.c.0.s8 %v10260
        %v10262 = vlaneseq
        %v10263 = vshrl.u32 %v10262, 7
        %v10264 = vsub.s32 %v10261, %v10263
        %v10265 = vrot.slane %v10252, %v10264
        %v10267 = vunpack.c.l.s4 1966171168
        %v10268 = vunpack.c.0.s8 %v10267
        %v10269 = vlaneseq
        %v10270 = vshrl.u32 %v10269, 7
        %v10271 = vsub.s32 %v10268, %v10270
        %v10272 = vrot.slane %v10258, %v10271
        %v10273 = vcombine.high %v10265, %v10265
        %v10274 = vcombine.high %v10272, %v10272
        %v10276 = vunpack.c.l.s4 1966171168
        %v10277 = vunpack.c.0.s8 %v10276
        %v10278 = vlaneseq
        %v10279 = vshrl.u32 %v10278, 7
        %v10280 = vsub.s32 %v10277, %v10279
        %v10281 = vrot.slane %v10265, %v10280
        %v10283 = vunpack.c.l.s4 1966171168
        %v10284 = vunpack.c.0.s8 %v10283
        %v10285 = vlaneseq
        %v10286 = vshrl.u32 %v10285, 7
        %v10287 = vsub.s32 %v10284, %v10286
        %v10288 = vrot.slane %v10272, %v10287
        %v10290 = vunpack.c.l.s4 1966171168
        %v10291 = vunpack.c.0.s8 %v10290
        %v10292 = vlaneseq
        %v10293 = vshrl.u32 %v10292, 7
        %v10294 = vsub.s32 %v10291, %v10293
        %v10295 = vrot.slane %v10273, %v10294
        %v10297 = vunpack.c.l.s4 1966171168
        %v10298 = vunpack.c.0.s8 %v10297
        %v10299 = vlaneseq
        %v10300 = vshrl.u32 %v10299, 7
        %v10301 = vsub.s32 %v10298, %v10300
        %v10302 = vrot.slane %v10274, %v10301
        %v10303 = vcombine.high %v10281, %v10281
        %v10304 = vcombine.high %v10288, %v10288
        %v10305 = vcombine.high %v10295, %v10295
        %10313 = vst [vmem:[%s206 + $0x3e] sm:$0x1] %v10281
        %10314 = vst [vmem:[%s206 + $0x7e] sm:$0x1] %v10295
        %10315 = vst [vmem:[%s206 + $0xbe] sm:$0x1] %v10303
        %10316 = vst [vmem:[%s206 + $0xfe] sm:$0x1] %v10305
        %10317 = vst [vmem:[%s206 + $0x13e] sm:$0x1] %v10288
        %10318 = vst [vmem:[%s206 + $0x17e] sm:$0x1] %v10302
        %10319 = vst [vmem:[%s206 + $0x1be] sm:$0x1] %v10304
        %v10320 = vld [vmem:[#allocation3 + $0x18] sm:$0x80]
        %v10321 = vld [vmem:[#allocation3 + $0x38] sm:$0x80]
        %v10322 = vld [vmem:[#allocation3 + $0x58] sm:$0x80]
        %v10323 = vld [vmem:[#allocation3 + $0x78] sm:$0x80]
        %v10324 = vld [vmem:[#allocation3 + $0x98] sm:$0x80]
        %v10325 = vld [vmem:[#allocation3 + $0xb8] sm:$0x80]
        %v10326 = vld [vmem:[#allocation3 + $0xd8] sm:$0x80]
        %v10327 = vld [vmem:[#allocation3 + $0xf8] sm:$0x80]
        %v10336 = vunpack.c.h.b16 %v10320
        %v10337 = vunpack.c.h.b16 %v10321
        %v10338 = vunpack.c.h.b16 %v10322
        %v10339 = vunpack.c.h.b16 %v10323
        %v10340 = vunpack.c.h.b16 %v10324
        %v10341 = vunpack.c.h.b16 %v10325
        %v10342 = vunpack.c.h.b16 %v10326
        %v10343 = vunpack.c.h.b16 %v10327
        %v10344 = vrot.slane %v10336, 7
        %v10345 = vrot.slane %v10337, 6
        %v10346 = vsel %vm1198, %v10345, %v10344
        %v10347 = vrot.slane %v10338, 5
        %v10348 = vsel %vm1201, %v10347, %v10346
        %v10349 = vrot.slane %v10339, 4
        %v10350 = vsel %vm1204, %v10349, %v10348
        %v10351 = vrot.slane %v10340, 3
        %v10352 = vsel %vm1207, %v10351, %v10350
        %v10353 = vrot.slane %v10341, 2
        %v10354 = vsel %vm1210, %v10353, %v10352
        %v10355 = vrot.slane %v10342, 1
        %v10356 = vsel %vm1213, %v10355, %v10354
        %v10357 = vsel %vm1216, %v10343, %v10356
        %v10358 = vpack.c.b16 %v10357, %v10357
        %v10360 = vsel %vm1223, %v10358, 0
        %10362 = vmatprep.subr.bf16.mxu0 0
        %10363 = vmatpush1.bf16.msra.mxu0 %v10360
        %10364 = vmatprep.subr.bf16.mxu0 0
        %10365 = vmatpush1.bf16.msra.mxu0 0
        %10366 = vmatprep.subr.bf16.mxu0 0
        %10367 = vmatpush1.bf16.msra.mxu0 0
        %10368 = vmatprep.subr.bf16.mxu0 0
        %10369 = vmatpush1.bf16.msra.mxu0 0
        %10370 = vmatprep.subr.bf16.mxu0 0
        %10371 = vmatpush1.bf16.msra.mxu0 0
        %10372 = vmatprep.subr.bf16.mxu0 0
        %10373 = vmatpush1.bf16.msra.mxu0 0
        %10374 = vmatprep.subr.bf16.mxu0 0
        %10375 = vmatpush1.bf16.msra.mxu0 0
        %10376 = vmatprep.subr.bf16.mxu0 0
        %10377 = vmatpush1.bf16.msra.mxu0 0
        %10378 = vmatprep.subr.bf16.mxu0 0
        %10379 = vmatpush1.bf16.msra.mxu0 0
        %10380 = vmatprep.subr.bf16.mxu0 0
        %10381 = vmatpush1.bf16.msra.mxu0 0
        %10382 = vmatprep.subr.bf16.mxu0 0
        %10383 = vmatpush1.bf16.msra.mxu0 0
        %10384 = vmatprep.subr.bf16.mxu0 0
        %10385 = vmatpush1.bf16.msra.mxu0 0
        %10386 = vmatprep.subr.bf16.mxu0 0
        %10387 = vmatpush1.bf16.msra.mxu0 0
        %10388 = vmatprep.subr.bf16.mxu0 0
        %10389 = vmatpush1.bf16.msra.mxu0 0
        %10390 = vmatprep.subr.bf16.mxu0 0
        %10391 = vmatpush1.bf16.msra.mxu0 0
        %10392 = vmatprep.subr.bf16.mxu0 0
        %10393 = vmatpush1.bf16.msra.mxu0 0
        %10394 = vmatprep.mubr.bf16.mxu0 0
        %10395 = vmatmul.mubr.bf16.gmra.mrb[0].mxu0 %v1221
        %v10396 = vpop.f32.mrb[0].mxu0
        %v10397 = vadd.f32 0.0, %v10396
        %v10398 = vpop.f32.mrb[0].mxu0
        %v10399 = vpop.f32.mrb[0].mxu0
        %v10400 = vpop.f32.mrb[0].mxu0
        %10401 = vdwg.mxu0
        %v10403 = vcombine.high %v10397, %v10397
        %v10405 = vunpack.c.l.s4 1966171168
        %v10406 = vunpack.c.0.s8 %v10405
        %v10407 = vlaneseq
        %v10408 = vshrl.u32 %v10407, 7
        %v10409 = vsub.s32 %v10406, %v10408
        %v10410 = vrot.slane %v10397, %v10409
        %v10412 = vunpack.c.l.s4 1966171168
        %v10413 = vunpack.c.0.s8 %v10412
        %v10414 = vlaneseq
        %v10415 = vshrl.u32 %v10414, 7
        %v10416 = vsub.s32 %v10413, %v10415
        %v10417 = vrot.slane %v10403, %v10416
        %v10418 = vcombine.high %v10410, %v10410
        %v10419 = vcombine.high %v10417, %v10417
        %v10421 = vunpack.c.l.s4 1966171168
        %v10422 = vunpack.c.0.s8 %v10421
        %v10423 = vlaneseq
        %v10424 = vshrl.u32 %v10423, 7
        %v10425 = vsub.s32 %v10422, %v10424
        %v10426 = vrot.slane %v10410, %v10425
        %v10428 = vunpack.c.l.s4 1966171168
        %v10429 = vunpack.c.0.s8 %v10428
        %v10430 = vlaneseq
        %v10431 = vshrl.u32 %v10430, 7
        %v10432 = vsub.s32 %v10429, %v10431
        %v10433 = vrot.slane %v10417, %v10432
        %v10435 = vunpack.c.l.s4 1966171168
        %v10436 = vunpack.c.0.s8 %v10435
        %v10437 = vlaneseq
        %v10438 = vshrl.u32 %v10437, 7
        %v10439 = vsub.s32 %v10436, %v10438
        %v10440 = vrot.slane %v10418, %v10439
        %v10442 = vunpack.c.l.s4 1966171168
        %v10443 = vunpack.c.0.s8 %v10442
        %v10444 = vlaneseq
        %v10445 = vshrl.u32 %v10444, 7
        %v10446 = vsub.s32 %v10443, %v10445
        %v10447 = vrot.slane %v10419, %v10446
        %v10448 = vcombine.high %v10426, %v10426
        %v10449 = vcombine.high %v10433, %v10433
        %v10450 = vcombine.high %v10440, %v10440
        %10458 = vst [vmem:[%s206 + $0x3f] sm:$0x1] %v10426
        %10459 = vst [vmem:[%s206 + $0x7f] sm:$0x1] %v10440
        %10460 = vst [vmem:[%s206 + $0xbf] sm:$0x1] %v10448
        %10461 = vst [vmem:[%s206 + $0xff] sm:$0x1] %v10450
        %10462 = vst [vmem:[%s206 + $0x13f] sm:$0x1] %v10433
        %10463 = vst [vmem:[%s206 + $0x17f] sm:$0x1] %v10447
        %10464 = vst [vmem:[%s206 + $0x1bf] sm:$0x1] %v10449
        %s10465 = sand.u32 %s117, 1
        %s10466 = scalar_lea.sflag [#allocation5], %s10465
        %s10467 = sand.u32 %s117, 1
        %s10468 = smul.addr %s10467, 448
        %s10469 = scalar_lea.vmem [#allocation4], %s10468
        // Predicated region
        $region33: #{maskformer_forward.1} parent=31 // pred_check
          %p10470 = pneg %p127
        $region34: #{maskformer_forward.1} parent=31 // pred_check_branch
          %10472 = sbr.rel (%p10470) target = $region36
        $region35: #{maskformer_forward.1} parent=31 // pred_region
          #allocation7 [shape = 'u32[6]{0}', space=smem, size = 0x18, scoped, tag = 'DMA stride descriptor']
          %s10473 = smul.u32 8, %s22
          %s10475 = ssub.s32 7168, 7168
          %10476 = vsyncadd %s10466, %s10475
          %s10477 = smul.addr %s21, 112
          %s10478 = sadd.s32 %s10473, %s10477
          %s10479 = smul.addr %s10478, 128
          %s10480 = scalar_lea.hbm %s3, %s10479
          %s10482 = sshll.u32 1, 14
          %s10483 = sxor.u32 4294967295, %s10482
          %s10486 = sshll.u32 7, 18
          %s10487 = sxor.u32 4294967295, %s10486
          %s10488 = sand.u32 0, %s10487
          %s10490 = sor.u32 %s10488, 0
          %s10492 = sshll.u32 3, 24
          %s10493 = sxor.u32 4294967295, %s10492
          %s10494 = sand.u32 %s10490, %s10493
          %s10496 = sor.u32 %s10494, 0
          %s10497 = sshll.u32 %s10469, 4
          %s10498 = int_to_ptr.vmem [resolvable:$true] %s10497
          %10504 = sst [smem:[#allocation7]] 1024
          %s10505 = scalar_lea.smem [#allocation7], 1
          %10506 = sst [smem:[%s10505]] 2048
          %s10507 = scalar_lea.smem [#allocation7], 2
          %10508 = sst [smem:[%s10507]] 8
          %s10509 = scalar_lea.smem [#allocation7], 3
          %10510 = sst [smem:[%s10509]] 128
          %s10511 = scalar_lea.smem [#allocation7], 4
          %10512 = sst [smem:[%s10511]] 128
          %s10513 = scalar_lea.smem [#allocation7], 5
          %10514 = sst [smem:[%s10513]] 8
          %10516 = dma.general %s10498, 7168, %s10480, %s10466, [#allocation6], [#allocation7], %s10496, 0
        $region36: #{maskformer_forward.1} parent=31 // pred_fallthru
          _
      $region32: #{maskformer_forward.1} parent=5 // pred_fallthru
        _
      %p10517 = scmp.le.s32.totalorder 2, %s12
      // Predicated region
      $region37: #{maskformer_forward.1} parent=5 // pred_check
        %p10518 = pneg %p10517
      $region38: #{maskformer_forward.1} parent=5 // pred_check_branch
        %10520 = sbr.rel (%p10518) target = $region40
      $region39: #{maskformer_forward.1} parent=5 // pred_region
        %s10521 = ssub.s32 %s12, 2
        // Predicated region
        $region41: #{maskformer_forward.1} parent=39 // pred_check
          %p10522 = pneg %p133
        $region42: #{maskformer_forward.1} parent=39 // pred_check_branch
          %10524 = sbr.rel (%p10522) target = $region44
        $region43: #{maskformer_forward.1} parent=39 // pred_region
          %s10525 = sand.u32 %s118, 1
          %s10526 = scalar_lea.sflag [#allocation5], %s10525
          %s10527 = sand.u32 %s118, 1
          %s10528 = smul.addr %s10527, 448
          %s10529 = scalar_lea.vmem [#allocation4], %s10528
          %10530 = dma.done %s10526, 7168
        $region44: #{maskformer_forward.1} parent=39 // pred_fallthru
          _
      $region40: #{maskformer_forward.1} parent=5 // pred_fallthru
        _
    $region6: #{maskformer_forward.1} parent=1 // loop_footer
      %s16 = sadd.s32 1, %s12
    $region7: #{maskformer_forward.1} parent=1 // loop_footer_branch
      %11 = sbr.rel target = $region3
    $region8: #{maskformer_forward.1} parent=1 // loop_exit
      _
    %10531 = vsyncpa [#allocation5], 1
    %s10532 = scalar_lea.sflag [#allocation5], 1
    %10533 = vsyncpa %s10532, 1

</llo_original>
